<compile_context>
chip_gen: v7x
topology: tpu7x:2x2x1
jax: 0.10.0
libtpu: 0.0.40
codegen_flags: <defaults>
</compile_context>

<pallas_src>
import functools

import jax
import jax.numpy as jnp
from jax import lax
from jax.experimental import pallas as pl
from jax.experimental.pallas import tpu as pltpu


# --------------------------------------------------------------------------- #
# Fused DiT block kernel
# --------------------------------------------------------------------------- #
def _dit_block_kernel(x_ref, c_ref,
                      ada_w_ref, ada_b_ref,
                      qkv_w_ref, qkv_b_ref,
                      proj_w_ref, proj_b_ref,
                      fc1_w_ref, fc1_b_ref,
                      fc2_w_ref, fc2_b_ref,
                      o_ref, *, heads, head_dim):
    D = heads * head_dim

    x = x_ref[0].astype(jnp.float32)          # (N, D)  tokens of one (b*t) row
    c = c_ref[0].astype(jnp.float32)          # (1, D)  conditioning row

    def mxu(a, w_ref):                        # bf16 operands, f32 accumulate
        return jnp.dot(a.astype(jnp.bfloat16), w_ref[...],
                       preferred_element_type=jnp.float32)

    def layernorm(v):                         # LayerNorm(eps=1e-6), no affine
        mu = jnp.mean(v, axis=-1, keepdims=True)
        vc = v - mu
        var = jnp.mean(vc * vc, axis=-1, keepdims=True)
        return vc * lax.rsqrt(var + 1e-6)

    # ---- adaLN_modulation: Linear(SiLU(c)) -> 6 modulation rows (in-kernel) --
    c_act = c * jax.nn.sigmoid(c)
    ada = mxu(c_act, ada_w_ref) + ada_b_ref[...]          # (1, 6D)
    sh_msa = ada[:, 0 * D:1 * D]
    sc_msa = ada[:, 1 * D:2 * D]
    g_msa = ada[:, 2 * D:3 * D]
    sh_mlp = ada[:, 3 * D:4 * D]
    sc_mlp = ada[:, 4 * D:5 * D]
    g_mlp = ada[:, 5 * D:6 * D]

    # ---- attention branch ----------------------------------------------------
    xm = layernorm(x) * (1.0 + sc_msa) + sh_msa           # broadcast (1,D)->(N,D)
    qkv = mxu(xm, qkv_w_ref) + qkv_b_ref[...]             # (N, 3D); q pre-scaled

    # Per-head attention with the out-projection folded into the head loop:
    #   attn_out = sum_h softmax(q_h k_h^T) v_h @ proj_w[h*Dh:(h+1)*Dh, :]
    # (proj_w / proj_b carry the x2 motion-identity factor, see init).
    attn_acc = None
    for h in range(heads):                                # static unroll (tiny)
        q = qkv[:, h * head_dim:(h + 1) * head_dim].astype(jnp.bfloat16)
        k = qkv[:, D + h * head_dim:D + (h + 1) * head_dim].astype(jnp.bfloat16)
        v = qkv[:, 2 * D + h * head_dim:2 * D + (h + 1) * head_dim].astype(jnp.bfloat16)
        # QK^T as a dot_general contracting over head_dim (no explicit k.T).
        s = lax.dot_general(q, k, (((1,), (1,)), ((), ())),
                            preferred_element_type=jnp.float32)      # (N, N) f32
        s = s - jnp.max(s, axis=-1, keepdims=True)
        p = jnp.exp(s)
        inv = pl.reciprocal(jnp.sum(p, axis=-1, keepdims=True), approx=True)
        oh = jnp.dot(p.astype(jnp.bfloat16), v,
                     preferred_element_type=jnp.float32)              # (N, Dh)
        oh = (oh * inv).astype(jnp.bfloat16)    # normalize on (N,Dh), not (N,N)
        contrib = jnp.dot(oh, proj_w_ref[h * head_dim:(h + 1) * head_dim, :],
                          preferred_element_type=jnp.float32)         # (N, D)
        attn_acc = contrib if attn_acc is None else attn_acc + contrib
    attn_out = attn_acc + proj_b_ref[...]                             # (N, D)

    x = x + g_msa * attn_out                                          # gated residual

    # ---- MLP branch -----------------------------------------------------------
    xm2 = layernorm(x) * (1.0 + sc_mlp) + sh_mlp
    h1 = mxu(xm2, fc1_w_ref) + fc1_b_ref[...]                         # (N, Dm)
    t = h1 * h1                                                       # GELU(tanh)
    h1 = 0.5 * h1 * (1.0 + jnp.tanh(0.7978845608028654
                                    * (h1 + 0.044715 * h1 * t)))
    h2 = mxu(h1, fc2_w_ref) + fc2_b_ref[...]                          # (N, D)

    o_ref[0] = (x + g_mlp * h2).astype(o_ref.dtype)                   # gated residual


def dit_block_pallas(x, c, static_var, blk, *, heads):
    """Fused DiTBlock.forward(x, c, static_var).

    x: (B, N, D) f32 with B = batch * image_time_length ('(b t)' rows)
    c: (B, D)    f32 conditioning
    static_var:  unused (motion module is identity -> no effect on output)
    blk: prepared params (bf16 weights, f32 (1,K) biases; q-scale and the
         motion-identity x2 folded into qkv / proj weights respectively).
    """
    del static_var  # see fidelity note in the header
    B, N, D = x.shape
    Dm = blk["fc1_w"].shape[1]

    kern = functools.partial(_dit_block_kernel, heads=heads, head_dim=D // heads)

    def full(shape):  # whole-array block, constant index -> DMA'd once, stays in VMEM
        return pl.BlockSpec(shape, lambda i, _n=len(shape): (0,) * _n)

    # Explicit scoped-VMEM budget: resident weights (double-buffered by the
    # default pipeline) + per-step activations + headroom.
    weight_bytes = 2 * (D * 6 * D + D * 3 * D + D * D + D * Dm + Dm * D)   # bf16
    bias_bytes = 4 * (6 * D + 3 * D + D + Dm + D)                          # f32
    act_bytes = 4 * N * (4 * D + 3 * D + Dm + N + 8)                       # f32 (rough)
    vmem_limit = min(100 * 1024 * 1024,
                     2 * (weight_bytes + bias_bytes) + 4 * act_bytes + (8 << 20))
    # TODO(synk): at DiT-XL sizes, single-buffer the constant-index weight specs
    # (pipeline_mode=pl.Buffered(1) or manual staging) and flash-tile N / Dm.

    return pl.pallas_call(
        kern,
        grid=(B,),                      # rows are independent -> v7x megacore split
        out_shape=jax.ShapeDtypeStruct((B, N, D), jnp.float32),
        in_specs=[
            pl.BlockSpec((1, N, D), lambda i: (i, 0, 0)),    # x row
            pl.BlockSpec((1, 1, D), lambda i: (i, 0, 0)),    # c row
            full((D, 6 * D)), full((1, 6 * D)),              # adaLN
            full((D, 3 * D)), full((1, 3 * D)),              # qkv
            full((D, D)),     full((1, D)),                  # proj (x2 folded)
            full((D, Dm)),    full((1, Dm)),                 # fc1
            full((Dm, D)),    full((1, D)),                  # fc2
        ],
        out_specs=pl.BlockSpec((1, N, D), lambda i: (i, 0, 0)),
        compiler_params=pltpu.CompilerParams(
            dimension_semantics=("parallel",),
            vmem_limit_bytes=int(vmem_limit)),
    )(x, c.reshape(B, 1, D),
      blk["ada_w"], blk["ada_b"], blk["qkv_w"], blk["qkv_b"],
      blk["proj_w"], blk["proj_b"], blk["fc1_w"], blk["fc1_b"],
      blk["fc2_w"], blk["fc2_b"])


# --------------------------------------------------------------------------- #
# Pure-JAX reference of the same math (for correctness check)
# --------------------------------------------------------------------------- #
def dit_block_ref(x, c, blk, *, heads):
    B, N, D = x.shape
    Dh = D // heads

    def dot(a, w):
        return jnp.dot(a.astype(jnp.bfloat16), w, preferred_element_type=jnp.float32)

    def ln(v):
        mu = jnp.mean(v, -1, keepdims=True)
        var = jnp.mean((v - mu) ** 2, -1, keepdims=True)
        return (v - mu) * lax.rsqrt(var + 1e-6)

    ada = dot(jax.nn.silu(c), blk["ada_w"]) + blk["ada_b"]        # (B, 6D)
    sh_msa, sc_msa, g_msa, sh_mlp, sc_mlp, g_mlp = jnp.split(ada, 6, axis=-1)

    xm = ln(x) * (1.0 + sc_msa[:, None, :]) + sh_msa[:, None, :]
    qkv = dot(xm.reshape(B * N, D), blk["qkv_w"]) + blk["qkv_b"]
    qkv = qkv.reshape(B, N, 3, heads, Dh).transpose(2, 0, 3, 1, 4)
    q, k, v = qkv[0], qkv[1], qkv[2]            # 1/sqrt(Dh) already folded into q
    a = jax.nn.softmax(jnp.einsum("bhqd,bhkd->bhqk", q, k), axis=-1)
    o = jnp.einsum("bhqk,bhkd->bhqd", a, v)
    o = o.transpose(0, 2, 1, 3).reshape(B * N, D)
    # proj_w / proj_b already carry the motion-module-identity factor 2.
    proj = (dot(o, blk["proj_w"]) + blk["proj_b"]).reshape(B, N, D)
    x = x + g_msa[:, None, :] * proj

    xm2 = ln(x) * (1.0 + sc_mlp[:, None, :]) + sh_mlp[:, None, :]
    h1 = jax.nn.gelu(dot(xm2.reshape(B * N, D), blk["fc1_w"]) + blk["fc1_b"],
                     approximate=True)
    h2 = (dot(h1, blk["fc2_w"]) + blk["fc2_b"]).reshape(B, N, D)
    return x + g_mlp[:, None, :] * h2


# --------------------------------------------------------------------------- #
# Parameters
# --------------------------------------------------------------------------- #
def init_block_params(key, hidden, heads, mlp_ratio):
    """Torch-layout-equivalent params, prepared for the kernel:
    weights cast to bf16 (MXU operands), biases kept f32 as (1,K),
    attention 1/sqrt(head_dim) folded into the q slice of qkv, and the
    motion-module-identity factor 2 folded into proj.
    (The real DiT zero-inits adaLN; small random values are used so the
    kernel does non-trivial math.)"""
    Dh = hidden // heads
    mlp_hidden = int(hidden * mlp_ratio)
    keys = iter(jax.random.split(key, 16))

    def dense(kin, kout, scale=0.02):
        w = jax.random.normal(next(keys), (kin, kout), jnp.float32) * scale
        b = jax.random.normal(next(keys), (kout,), jnp.float32) * scale
        return w, b

    ada_w, ada_b = dense(hidden, 6 * hidden)
    qkv_w, qkv_b = dense(hidden, 3 * hidden)
    scale = Dh ** (-0.5)
    qkv_w = qkv_w.at[:, :hidden].multiply(scale)   # fold attention scale into q
    qkv_b = qkv_b.at[:hidden].multiply(scale)
    proj_w, proj_b = dense(hidden, hidden)
    proj_w = proj_w * 2.0                          # fold motion-identity x2
    proj_b = proj_b * 2.0
    fc1_w, fc1_b = dense(hidden, mlp_hidden)
    fc2_w, fc2_b = dense(mlp_hidden, hidden)

    w = lambda a: a.astype(jnp.bfloat16)
    b = lambda a: a.reshape(1, -1).astype(jnp.float32)
    return {
        "ada_w": w(ada_w), "ada_b": b(ada_b),
        "qkv_w": w(qkv_w), "qkv_b": b(qkv_b),
        "proj_w": w(proj_w), "proj_b": b(proj_b),
        "fc1_w": w(fc1_w), "fc1_b": b(fc1_b),
        "fc2_w": w(fc2_w), "fc2_b": b(fc2_b),
    }


# --------------------------------------------------------------------------- #
# Main
# --------------------------------------------------------------------------- #
if __name__ == "__main__":
    key = jax.random.PRNGKey(0)
    kx, kc, ks, kp = jax.random.split(key, 4)

    # Small but lane-dense shapes consistent with the module: hidden=128,
    # 4 heads, mlp_ratio=4, image_time_length t=4, video batch b=2 ->
    # B='(b t)'=8, 8x8 latent patches -> N=64.
    b, t = 2, 4
    hidden, heads, mlp_ratio = 128, 4, 4.0
    h_noise = 8
    N = h_noise * h_noise
    B = b * t
    depth = 2

    x = jax.random.normal(kx, (B, N, hidden), jnp.float32)
    c = jax.random.normal(kc, (B, hidden), jnp.float32)
    static_var = jax.random.normal(ks, (b, N, hidden), jnp.float32)

    blocks = [init_block_params(k, hidden, heads, mlp_ratio)
              for k in jax.random.split(kp, depth)]

    @jax.jit
    def fwd(x, c, static_var, blocks):
        y = x
        for blk in blocks:
            y = dit_block_pallas(y, c, static_var, blk, heads=heads)
        return y

    out = jax.block_until_ready(fwd(x, c, static_var, blocks))

    # Pure-JAX reference of the same math.
    ref = x
    for blk in blocks:
        ref = dit_block_ref(ref, c, blk, heads=heads)
    ref = jax.block_until_ready(ref)

    assert out.shape == (B, N, hidden), out.shape
    assert bool(jnp.all(jnp.isfinite(out)))
    max_err = float(jnp.max(jnp.abs(out - ref)))
    assert max_err < 2e-2, f"max abs err vs reference: {max_err}"
    print("KERNEL_OK")
</pallas_src>

<mosaic_0001>
module attributes {stable_mosaic.version = 11 : i64} {
  func.func @_dit_block_kernel(%arg0: i32, %arg1: memref<1x64x128xf32, #tpu.memory_space<vmem>>, %arg2: memref<1x1x128xf32, #tpu.memory_space<vmem>>, %arg3: memref<128x768xbf16, #tpu.memory_space<vmem>>, %arg4: memref<1x768xf32, #tpu.memory_space<vmem>>, %arg5: memref<128x384xbf16, #tpu.memory_space<vmem>>, %arg6: memref<1x384xf32, #tpu.memory_space<vmem>>, %arg7: memref<128x128xbf16, #tpu.memory_space<vmem>>, %arg8: memref<1x128xf32, #tpu.memory_space<vmem>>, %arg9: memref<128x512xbf16, #tpu.memory_space<vmem>>, %arg10: memref<1x512xf32, #tpu.memory_space<vmem>>, %arg11: memref<512x128xbf16, #tpu.memory_space<vmem>>, %arg12: memref<1x128xf32, #tpu.memory_space<vmem>>, %arg13: memref<1x64x128xf32, #tpu.memory_space<vmem>>) attributes {dimension_semantics = [#tpu.dimension_semantics<parallel>], iteration_bounds = array<i64: 8>, scalar_prefetch = 0 : i64, scratch_operands = 0 : i64, tpu.core_type = #tpu.core_type<tc>, window_params = [{transform_indices = @transform_0, window_bounds = array<i64: 1, 64, 128>}, {transform_indices = @transform_1, window_bounds = array<i64: 1, 1, 128>}, {pipeline_mode = #tpu.pipeline_mode<synchronous>, transform_indices = @transform_2, window_bounds = array<i64: 128, 768>}, {pipeline_mode = #tpu.pipeline_mode<synchronous>, transform_indices = @transform_3, window_bounds = array<i64: 1, 768>}, {pipeline_mode = #tpu.pipeline_mode<synchronous>, transform_indices = @transform_4, window_bounds = array<i64: 128, 384>}, {pipeline_mode = #tpu.pipeline_mode<synchronous>, transform_indices = @transform_5, window_bounds = array<i64: 1, 384>}, {pipeline_mode = #tpu.pipeline_mode<synchronous>, transform_indices = @transform_6, window_bounds = array<i64: 128, 128>}, {pipeline_mode = #tpu.pipeline_mode<synchronous>, transform_indices = @transform_7, window_bounds = array<i64: 1, 128>}, {pipeline_mode = #tpu.pipeline_mode<synchronous>, transform_indices = @transform_8, window_bounds = array<i64: 128, 512>}, {pipeline_mode = #tpu.pipeline_mode<synchronous>, transform_indices = @transform_9, window_bounds = array<i64: 1, 512>}, {pipeline_mode = #tpu.pipeline_mode<synchronous>, transform_indices = @transform_10, window_bounds = array<i64: 512, 128>}, {pipeline_mode = #tpu.pipeline_mode<synchronous>, transform_indices = @transform_11, window_bounds = array<i64: 1, 128>}, {transform_indices = @transform_12, window_bounds = array<i64: 1, 64, 128>}]} {
    %c0 = arith.constant 0 : index
    %c0_0 = arith.constant 0 : index
    %c0_1 = arith.constant 0 : index
    %0 = vector.load %arg1[%c0, %c0_0, %c0_1] : memref<1x64x128xf32, #tpu.memory_space<vmem>>, vector<1x64x128xf32>
    %1 = vector.shape_cast %0 : vector<1x64x128xf32> to vector<64x128xf32>
    %c0_2 = arith.constant 0 : index
    %c0_3 = arith.constant 0 : index
    %c0_4 = arith.constant 0 : index
    %2 = vector.load %arg2[%c0_2, %c0_3, %c0_4] : memref<1x1x128xf32, #tpu.memory_space<vmem>>, vector<1x1x128xf32>
    %3 = vector.shape_cast %2 : vector<1x1x128xf32> to vector<1x128xf32>
    %4 = arith.negf %3 : vector<1x128xf32>
    %5 = math.exp %4 : vector<1x128xf32>
    %cst = arith.constant 1.000000e+00 : f32
    %6 = vector.broadcast %cst : f32 to vector<1x128xf32>
    %7 = arith.addf %6, %5 : vector<1x128xf32>
    %8 = arith.divf %6, %7 : vector<1x128xf32>
    %9 = arith.mulf %3, %8 : vector<1x128xf32>
    %10 = arith.truncf %9 : vector<1x128xf32> to vector<1x128xbf16>
    %c0_5 = arith.constant 0 : index
    %c0_6 = arith.constant 0 : index
    %11 = vector.load %arg3[%c0_5, %c0_6] : memref<128x768xbf16, #tpu.memory_space<vmem>>, vector<128x768xbf16>
    %cst_7 = arith.constant dense<0.000000e+00> : vector<1x768xf32>
    %12 = tpu.matmul %10, %11, %cst_7 {dimension_numbers = #tpu.dot_dimension_numbers<[1], [0], [0], [1], [0, 0, 1, 1], [], []>} : vector<1x128xbf16>, vector<128x768xbf16>, vector<1x768xf32> -> vector<1x768xf32>
    %c0_8 = arith.constant 0 : index
    %c0_9 = arith.constant 0 : index
    %13 = vector.load %arg4[%c0_8, %c0_9] : memref<1x768xf32, #tpu.memory_space<vmem>>, vector<1x768xf32>
    %14 = arith.addf %12, %13 : vector<1x768xf32>
    %15 = vector.extract_strided_slice %14 {offsets = [0, 0], sizes = [1, 128], strides = [1, 1]} : vector<1x768xf32> to vector<1x128xf32>
    %16 = vector.extract_strided_slice %14 {offsets = [0, 128], sizes = [1, 128], strides = [1, 1]} : vector<1x768xf32> to vector<1x128xf32>
    %17 = vector.extract_strided_slice %14 {offsets = [0, 256], sizes = [1, 128], strides = [1, 1]} : vector<1x768xf32> to vector<1x128xf32>
    %18 = vector.extract_strided_slice %14 {offsets = [0, 384], sizes = [1, 128], strides = [1, 1]} : vector<1x768xf32> to vector<1x128xf32>
    %19 = vector.extract_strided_slice %14 {offsets = [0, 512], sizes = [1, 128], strides = [1, 1]} : vector<1x768xf32> to vector<1x128xf32>
    %20 = vector.extract_strided_slice %14 {offsets = [0, 640], sizes = [1, 128], strides = [1, 1]} : vector<1x768xf32> to vector<1x128xf32>
    %cst_10 = arith.constant dense<0.000000e+00> : vector<64xf32>
    %21 = vector.multi_reduction <add>, %1, %cst_10 [1] : vector<64x128xf32> to vector<64xf32>
    %22 = vector.shape_cast %21 : vector<64xf32> to vector<64x1xf32>
    %cst_11 = arith.constant 1.280000e+02 : f32
    %23 = vector.broadcast %cst_11 : f32 to vector<64x1xf32>
    %24 = arith.divf %22, %23 : vector<64x1xf32>
    %25 = vector.broadcast %24 : vector<64x1xf32> to vector<64x128xf32>
    %26 = arith.subf %1, %25 : vector<64x128xf32>
    %27 = arith.mulf %26, %26 : vector<64x128xf32>
    %cst_12 = arith.constant dense<0.000000e+00> : vector<64xf32>
    %28 = vector.multi_reduction <add>, %27, %cst_12 [1] : vector<64x128xf32> to vector<64xf32>
    %29 = vector.shape_cast %28 : vector<64xf32> to vector<64x1xf32>
    %cst_13 = arith.constant 1.280000e+02 : f32
    %30 = vector.broadcast %cst_13 : f32 to vector<64x1xf32>
    %31 = arith.divf %29, %30 : vector<64x1xf32>
    %cst_14 = arith.constant 9.99999997E-7 : f32
    %32 = vector.broadcast %cst_14 : f32 to vector<64x1xf32>
    %33 = arith.addf %31, %32 : vector<64x1xf32>
    %34 = math.rsqrt %33 : vector<64x1xf32>
    %35 = vector.broadcast %34 : vector<64x1xf32> to vector<64x128xf32>
    %36 = arith.mulf %26, %35 : vector<64x128xf32>
    %cst_15 = arith.constant 1.000000e+00 : f32
    %37 = vector.broadcast %cst_15 : f32 to vector<1x128xf32>
    %38 = arith.addf %37, %16 : vector<1x128xf32>
    %39 = vector.broadcast %38 : vector<1x128xf32> to vector<64x128xf32>
    %40 = arith.mulf %36, %39 : vector<64x128xf32>
    %41 = vector.broadcast %15 : vector<1x128xf32> to vector<64x128xf32>
    %42 = arith.addf %40, %41 : vector<64x128xf32>
    %43 = arith.truncf %42 : vector<64x128xf32> to vector<64x128xbf16>
    %c0_16 = arith.constant 0 : index
    %c0_17 = arith.constant 0 : index
    %44 = vector.load %arg5[%c0_16, %c0_17] : memref<128x384xbf16, #tpu.memory_space<vmem>>, vector<128x384xbf16>
    %cst_18 = arith.constant dense<0.000000e+00> : vector<64x384xf32>
    %45 = tpu.matmul %43, %44, %cst_18 {dimension_numbers = #tpu.dot_dimension_numbers<[1], [0], [0], [1], [0, 0, 1, 1], [], []>} : vector<64x128xbf16>, vector<128x384xbf16>, vector<64x384xf32> -> vector<64x384xf32>
    %c0_19 = arith.constant 0 : index
    %c0_20 = arith.constant 0 : index
    %46 = vector.load %arg6[%c0_19, %c0_20] : memref<1x384xf32, #tpu.memory_space<vmem>>, vector<1x384xf32>
    %47 = vector.broadcast %46 : vector<1x384xf32> to vector<64x384xf32>
    %48 = arith.addf %45, %47 : vector<64x384xf32>
    %49 = vector.extract_strided_slice %48 {offsets = [0, 0], sizes = [64, 32], strides = [1, 1]} : vector<64x384xf32> to vector<64x32xf32>
    %50 = arith.truncf %49 : vector<64x32xf32> to vector<64x32xbf16>
    %51 = vector.extract_strided_slice %48 {offsets = [0, 128], sizes = [64, 32], strides = [1, 1]} : vector<64x384xf32> to vector<64x32xf32>
    %52 = arith.truncf %51 : vector<64x32xf32> to vector<64x32xbf16>
    %53 = vector.extract_strided_slice %48 {offsets = [0, 256], sizes = [64, 32], strides = [1, 1]} : vector<64x384xf32> to vector<64x32xf32>
    %54 = arith.truncf %53 : vector<64x32xf32> to vector<64x32xbf16>
    %cst_21 = arith.constant dense<0.000000e+00> : vector<64x64xf32>
    %55 = tpu.matmul %50, %52, %cst_21 {dimension_numbers = #tpu.dot_dimension_numbers<[1], [1], [0], [0], [0, 0, 1, 0], [], []>} : vector<64x32xbf16>, vector<64x32xbf16>, vector<64x64xf32> -> vector<64x64xf32>
    %cst_22 = arith.constant dense<0xFF800000> : vector<64xf32>
    %56 = vector.multi_reduction <maximumf>, %55, %cst_22 [1] : vector<64x64xf32> to vector<64xf32>
    %57 = vector.shape_cast %56 : vector<64xf32> to vector<64x1xf32>
    %58 = vector.broadcast %57 : vector<64x1xf32> to vector<64x64xf32>
    %59 = arith.subf %55, %58 : vector<64x64xf32>
    %60 = math.exp %59 : vector<64x64xf32>
    %cst_23 = arith.constant dense<0.000000e+00> : vector<64xf32>
    %61 = vector.multi_reduction <add>, %60, %cst_23 [1] : vector<64x64xf32> to vector<64xf32>
    %62 = vector.shape_cast %61 : vector<64xf32> to vector<64x1xf32>
    %63 = tpu.reciprocal %62 {approx = true} : vector<64x1xf32> -> vector<64x1xf32>
    %64 = arith.truncf %60 : vector<64x64xf32> to vector<64x64xbf16>
    %cst_24 = arith.constant dense<0.000000e+00> : vector<64x32xf32>
    %65 = tpu.matmul %64, %54, %cst_24 {dimension_numbers = #tpu.dot_dimension_numbers<[1], [0], [0], [1], [0, 0, 1, 1], [], []>} : vector<64x64xbf16>, vector<64x32xbf16>, vector<64x32xf32> -> vector<64x32xf32>
    %66 = vector.broadcast %63 : vector<64x1xf32> to vector<64x32xf32>
    %67 = arith.mulf %65, %66 : vector<64x32xf32>
    %68 = arith.truncf %67 : vector<64x32xf32> to vector<64x32xbf16>
    %c0_25 = arith.constant 0 : index
    %c0_26 = arith.constant 0 : index
    %69 = vector.load %arg7[%c0_25, %c0_26] : memref<128x128xbf16, #tpu.memory_space<vmem>>, vector<32x128xbf16>
    %cst_27 = arith.constant dense<0.000000e+00> : vector<64x128xf32>
    %70 = tpu.matmul %68, %69, %cst_27 {dimension_numbers = #tpu.dot_dimension_numbers<[1], [0], [0], [1], [0, 0, 1, 1], [], []>} : vector<64x32xbf16>, vector<32x128xbf16>, vector<64x128xf32> -> vector<64x128xf32>
    %71 = vector.extract_strided_slice %48 {offsets = [0, 32], sizes = [64, 32], strides = [1, 1]} : vector<64x384xf32> to vector<64x32xf32>
    %72 = arith.truncf %71 : vector<64x32xf32> to vector<64x32xbf16>
    %73 = vector.extract_strided_slice %48 {offsets = [0, 160], sizes = [64, 32], strides = [1, 1]} : vector<64x384xf32> to vector<64x32xf32>
    %74 = arith.truncf %73 : vector<64x32xf32> to vector<64x32xbf16>
    %75 = vector.extract_strided_slice %48 {offsets = [0, 288], sizes = [64, 32], strides = [1, 1]} : vector<64x384xf32> to vector<64x32xf32>
    %76 = arith.truncf %75 : vector<64x32xf32> to vector<64x32xbf16>
    %cst_28 = arith.constant dense<0.000000e+00> : vector<64x64xf32>
    %77 = tpu.matmul %72, %74, %cst_28 {dimension_numbers = #tpu.dot_dimension_numbers<[1], [1], [0], [0], [0, 0, 1, 0], [], []>} : vector<64x32xbf16>, vector<64x32xbf16>, vector<64x64xf32> -> vector<64x64xf32>
    %cst_29 = arith.constant dense<0xFF800000> : vector<64xf32>
    %78 = vector.multi_reduction <maximumf>, %77, %cst_29 [1] : vector<64x64xf32> to vector<64xf32>
    %79 = vector.shape_cast %78 : vector<64xf32> to vector<64x1xf32>
    %80 = vector.broadcast %79 : vector<64x1xf32> to vector<64x64xf32>
    %81 = arith.subf %77, %80 : vector<64x64xf32>
    %82 = math.exp %81 : vector<64x64xf32>
    %cst_30 = arith.constant dense<0.000000e+00> : vector<64xf32>
    %83 = vector.multi_reduction <add>, %82, %cst_30 [1] : vector<64x64xf32> to vector<64xf32>
    %84 = vector.shape_cast %83 : vector<64xf32> to vector<64x1xf32>
    %85 = tpu.reciprocal %84 {approx = true} : vector<64x1xf32> -> vector<64x1xf32>
    %86 = arith.truncf %82 : vector<64x64xf32> to vector<64x64xbf16>
    %cst_31 = arith.constant dense<0.000000e+00> : vector<64x32xf32>
    %87 = tpu.matmul %86, %76, %cst_31 {dimension_numbers = #tpu.dot_dimension_numbers<[1], [0], [0], [1], [0, 0, 1, 1], [], []>} : vector<64x64xbf16>, vector<64x32xbf16>, vector<64x32xf32> -> vector<64x32xf32>
    %88 = vector.broadcast %85 : vector<64x1xf32> to vector<64x32xf32>
    %89 = arith.mulf %87, %88 : vector<64x32xf32>
    %90 = arith.truncf %89 : vector<64x32xf32> to vector<64x32xbf16>
    %c32 = arith.constant 32 : index
    %c0_32 = arith.constant 0 : index
    %91 = vector.load %arg7[%c32, %c0_32] : memref<128x128xbf16, #tpu.memory_space<vmem>>, vector<32x128xbf16>
    %cst_33 = arith.constant dense<0.000000e+00> : vector<64x128xf32>
    %92 = tpu.matmul %90, %91, %cst_33 {dimension_numbers = #tpu.dot_dimension_numbers<[1], [0], [0], [1], [0, 0, 1, 1], [], []>} : vector<64x32xbf16>, vector<32x128xbf16>, vector<64x128xf32> -> vector<64x128xf32>
    %93 = arith.addf %70, %92 : vector<64x128xf32>
    %94 = vector.extract_strided_slice %48 {offsets = [0, 64], sizes = [64, 32], strides = [1, 1]} : vector<64x384xf32> to vector<64x32xf32>
    %95 = arith.truncf %94 : vector<64x32xf32> to vector<64x32xbf16>
    %96 = vector.extract_strided_slice %48 {offsets = [0, 192], sizes = [64, 32], strides = [1, 1]} : vector<64x384xf32> to vector<64x32xf32>
    %97 = arith.truncf %96 : vector<64x32xf32> to vector<64x32xbf16>
    %98 = vector.extract_strided_slice %48 {offsets = [0, 320], sizes = [64, 32], strides = [1, 1]} : vector<64x384xf32> to vector<64x32xf32>
    %99 = arith.truncf %98 : vector<64x32xf32> to vector<64x32xbf16>
    %cst_34 = arith.constant dense<0.000000e+00> : vector<64x64xf32>
    %100 = tpu.matmul %95, %97, %cst_34 {dimension_numbers = #tpu.dot_dimension_numbers<[1], [1], [0], [0], [0, 0, 1, 0], [], []>} : vector<64x32xbf16>, vector<64x32xbf16>, vector<64x64xf32> -> vector<64x64xf32>
    %cst_35 = arith.constant dense<0xFF800000> : vector<64xf32>
    %101 = vector.multi_reduction <maximumf>, %100, %cst_35 [1] : vector<64x64xf32> to vector<64xf32>
    %102 = vector.shape_cast %101 : vector<64xf32> to vector<64x1xf32>
    %103 = vector.broadcast %102 : vector<64x1xf32> to vector<64x64xf32>
    %104 = arith.subf %100, %103 : vector<64x64xf32>
    %105 = math.exp %104 : vector<64x64xf32>
    %cst_36 = arith.constant dense<0.000000e+00> : vector<64xf32>
    %106 = vector.multi_reduction <add>, %105, %cst_36 [1] : vector<64x64xf32> to vector<64xf32>
    %107 = vector.shape_cast %106 : vector<64xf32> to vector<64x1xf32>
    %108 = tpu.reciprocal %107 {approx = true} : vector<64x1xf32> -> vector<64x1xf32>
    %109 = arith.truncf %105 : vector<64x64xf32> to vector<64x64xbf16>
    %cst_37 = arith.constant dense<0.000000e+00> : vector<64x32xf32>
    %110 = tpu.matmul %109, %99, %cst_37 {dimension_numbers = #tpu.dot_dimension_numbers<[1], [0], [0], [1], [0, 0, 1, 1], [], []>} : vector<64x64xbf16>, vector<64x32xbf16>, vector<64x32xf32> -> vector<64x32xf32>
    %111 = vector.broadcast %108 : vector<64x1xf32> to vector<64x32xf32>
    %112 = arith.mulf %110, %111 : vector<64x32xf32>
    %113 = arith.truncf %112 : vector<64x32xf32> to vector<64x32xbf16>
    %c64 = arith.constant 64 : index
    %c0_38 = arith.constant 0 : index
    %114 = vector.load %arg7[%c64, %c0_38] : memref<128x128xbf16, #tpu.memory_space<vmem>>, vector<32x128xbf16>
    %cst_39 = arith.constant dense<0.000000e+00> : vector<64x128xf32>
    %115 = tpu.matmul %113, %114, %cst_39 {dimension_numbers = #tpu.dot_dimension_numbers<[1], [0], [0], [1], [0, 0, 1, 1], [], []>} : vector<64x32xbf16>, vector<32x128xbf16>, vector<64x128xf32> -> vector<64x128xf32>
    %116 = arith.addf %93, %115 : vector<64x128xf32>
    %117 = vector.extract_strided_slice %48 {offsets = [0, 96], sizes = [64, 32], strides = [1, 1]} : vector<64x384xf32> to vector<64x32xf32>
    %118 = arith.truncf %117 : vector<64x32xf32> to vector<64x32xbf16>
    %119 = vector.extract_strided_slice %48 {offsets = [0, 224], sizes = [64, 32], strides = [1, 1]} : vector<64x384xf32> to vector<64x32xf32>
    %120 = arith.truncf %119 : vector<64x32xf32> to vector<64x32xbf16>
    %121 = vector.extract_strided_slice %48 {offsets = [0, 352], sizes = [64, 32], strides = [1, 1]} : vector<64x384xf32> to vector<64x32xf32>
    %122 = arith.truncf %121 : vector<64x32xf32> to vector<64x32xbf16>
    %cst_40 = arith.constant dense<0.000000e+00> : vector<64x64xf32>
    %123 = tpu.matmul %118, %120, %cst_40 {dimension_numbers = #tpu.dot_dimension_numbers<[1], [1], [0], [0], [0, 0, 1, 0], [], []>} : vector<64x32xbf16>, vector<64x32xbf16>, vector<64x64xf32> -> vector<64x64xf32>
    %cst_41 = arith.constant dense<0xFF800000> : vector<64xf32>
    %124 = vector.multi_reduction <maximumf>, %123, %cst_41 [1] : vector<64x64xf32> to vector<64xf32>
    %125 = vector.shape_cast %124 : vector<64xf32> to vector<64x1xf32>
    %126 = vector.broadcast %125 : vector<64x1xf32> to vector<64x64xf32>
    %127 = arith.subf %123, %126 : vector<64x64xf32>
    %128 = math.exp %127 : vector<64x64xf32>
    %cst_42 = arith.constant dense<0.000000e+00> : vector<64xf32>
    %129 = vector.multi_reduction <add>, %128, %cst_42 [1] : vector<64x64xf32> to vector<64xf32>
    %130 = vector.shape_cast %129 : vector<64xf32> to vector<64x1xf32>
    %131 = tpu.reciprocal %130 {approx = true} : vector<64x1xf32> -> vector<64x1xf32>
    %132 = arith.truncf %128 : vector<64x64xf32> to vector<64x64xbf16>
    %cst_43 = arith.constant dense<0.000000e+00> : vector<64x32xf32>
    %133 = tpu.matmul %132, %122, %cst_43 {dimension_numbers = #tpu.dot_dimension_numbers<[1], [0], [0], [1], [0, 0, 1, 1], [], []>} : vector<64x64xbf16>, vector<64x32xbf16>, vector<64x32xf32> -> vector<64x32xf32>
    %134 = vector.broadcast %131 : vector<64x1xf32> to vector<64x32xf32>
    %135 = arith.mulf %133, %134 : vector<64x32xf32>
    %136 = arith.truncf %135 : vector<64x32xf32> to vector<64x32xbf16>
    %c96 = arith.constant 96 : index
    %c0_44 = arith.constant 0 : index
    %137 = vector.load %arg7[%c96, %c0_44] : memref<128x128xbf16, #tpu.memory_space<vmem>>, vector<32x128xbf16>
    %cst_45 = arith.constant dense<0.000000e+00> : vector<64x128xf32>
    %138 = tpu.matmul %136, %137, %cst_45 {dimension_numbers = #tpu.dot_dimension_numbers<[1], [0], [0], [1], [0, 0, 1, 1], [], []>} : vector<64x32xbf16>, vector<32x128xbf16>, vector<64x128xf32> -> vector<64x128xf32>
    %139 = arith.addf %116, %138 : vector<64x128xf32>
    %c0_46 = arith.constant 0 : index
    %c0_47 = arith.constant 0 : index
    %140 = vector.load %arg8[%c0_46, %c0_47] : memref<1x128xf32, #tpu.memory_space<vmem>>, vector<1x128xf32>
    %141 = vector.broadcast %140 : vector<1x128xf32> to vector<64x128xf32>
    %142 = arith.addf %139, %141 : vector<64x128xf32>
    %143 = vector.broadcast %17 : vector<1x128xf32> to vector<64x128xf32>
    %144 = arith.mulf %143, %142 : vector<64x128xf32>
    %145 = arith.addf %1, %144 : vector<64x128xf32>
    %cst_48 = arith.constant dense<0.000000e+00> : vector<64xf32>
    %146 = vector.multi_reduction <add>, %145, %cst_48 [1] : vector<64x128xf32> to vector<64xf32>
    %147 = vector.shape_cast %146 : vector<64xf32> to vector<64x1xf32>
    %cst_49 = arith.constant 1.280000e+02 : f32
    %148 = vector.broadcast %cst_49 : f32 to vector<64x1xf32>
    %149 = arith.divf %147, %148 : vector<64x1xf32>
    %150 = vector.broadcast %149 : vector<64x1xf32> to vector<64x128xf32>
    %151 = arith.subf %145, %150 : vector<64x128xf32>
    %152 = arith.mulf %151, %151 : vector<64x128xf32>
    %cst_50 = arith.constant dense<0.000000e+00> : vector<64xf32>
    %153 = vector.multi_reduction <add>, %152, %cst_50 [1] : vector<64x128xf32> to vector<64xf32>
    %154 = vector.shape_cast %153 : vector<64xf32> to vector<64x1xf32>
    %cst_51 = arith.constant 1.280000e+02 : f32
    %155 = vector.broadcast %cst_51 : f32 to vector<64x1xf32>
    %156 = arith.divf %154, %155 : vector<64x1xf32>
    %cst_52 = arith.constant 9.99999997E-7 : f32
    %157 = vector.broadcast %cst_52 : f32 to vector<64x1xf32>
    %158 = arith.addf %156, %157 : vector<64x1xf32>
    %159 = math.rsqrt %158 : vector<64x1xf32>
    %160 = vector.broadcast %159 : vector<64x1xf32> to vector<64x128xf32>
    %161 = arith.mulf %151, %160 : vector<64x128xf32>
    %cst_53 = arith.constant 1.000000e+00 : f32
    %162 = vector.broadcast %cst_53 : f32 to vector<1x128xf32>
    %163 = arith.addf %162, %19 : vector<1x128xf32>
    %164 = vector.broadcast %163 : vector<1x128xf32> to vector<64x128xf32>
    %165 = arith.mulf %161, %164 : vector<64x128xf32>
    %166 = vector.broadcast %18 : vector<1x128xf32> to vector<64x128xf32>
    %167 = arith.addf %165, %166 : vector<64x128xf32>
    %168 = arith.truncf %167 : vector<64x128xf32> to vector<64x128xbf16>
    %c0_54 = arith.constant 0 : index
    %c0_55 = arith.constant 0 : index
    %169 = vector.load %arg9[%c0_54, %c0_55] : memref<128x512xbf16, #tpu.memory_space<vmem>>, vector<128x512xbf16>
    %cst_56 = arith.constant dense<0.000000e+00> : vector<64x512xf32>
    %170 = tpu.matmul %168, %169, %cst_56 {dimension_numbers = #tpu.dot_dimension_numbers<[1], [0], [0], [1], [0, 0, 1, 1], [], []>} : vector<64x128xbf16>, vector<128x512xbf16>, vector<64x512xf32> -> vector<64x512xf32>
    %c0_57 = arith.constant 0 : index
    %c0_58 = arith.constant 0 : index
    %171 = vector.load %arg10[%c0_57, %c0_58] : memref<1x512xf32, #tpu.memory_space<vmem>>, vector<1x512xf32>
    %172 = vector.broadcast %171 : vector<1x512xf32> to vector<64x512xf32>
    %173 = arith.addf %170, %172 : vector<64x512xf32>
    %174 = arith.mulf %173, %173 : vector<64x512xf32>
    %cst_59 = arith.constant 5.000000e-01 : f32
    %175 = vector.broadcast %cst_59 : f32 to vector<64x512xf32>
    %176 = arith.mulf %175, %173 : vector<64x512xf32>
    %cst_60 = arith.constant 4.471500e-02 : f32
    %177 = vector.broadcast %cst_60 : f32 to vector<64x512xf32>
    %178 = arith.mulf %177, %173 : vector<64x512xf32>
    %179 = arith.mulf %178, %174 : vector<64x512xf32>
    %180 = arith.addf %173, %179 : vector<64x512xf32>
    %cst_61 = arith.constant 0.797884583 : f32
    %181 = vector.broadcast %cst_61 : f32 to vector<64x512xf32>
    %182 = arith.mulf %181, %180 : vector<64x512xf32>
    %183 = math.tanh %182 : vector<64x512xf32>
    %cst_62 = arith.constant 1.000000e+00 : f32
    %184 = vector.broadcast %cst_62 : f32 to vector<64x512xf32>
    %185 = arith.addf %184, %183 : vector<64x512xf32>
    %186 = arith.mulf %176, %185 : vector<64x512xf32>
    %187 = arith.truncf %186 : vector<64x512xf32> to vector<64x512xbf16>
    %c0_63 = arith.constant 0 : index
    %c0_64 = arith.constant 0 : index
    %188 = vector.load %arg11[%c0_63, %c0_64] : memref<512x128xbf16, #tpu.memory_space<vmem>>, vector<512x128xbf16>
    %cst_65 = arith.constant dense<0.000000e+00> : vector<64x128xf32>
    %189 = tpu.matmul %187, %188, %cst_65 {dimension_numbers = #tpu.dot_dimension_numbers<[1], [0], [0], [1], [0, 0, 1, 1], [], []>} : vector<64x512xbf16>, vector<512x128xbf16>, vector<64x128xf32> -> vector<64x128xf32>
    %c0_66 = arith.constant 0 : index
    %c0_67 = arith.constant 0 : index
    %190 = vector.load %arg12[%c0_66, %c0_67] : memref<1x128xf32, #tpu.memory_space<vmem>>, vector<1x128xf32>
    %191 = vector.broadcast %190 : vector<1x128xf32> to vector<64x128xf32>
    %192 = arith.addf %189, %191 : vector<64x128xf32>
    %193 = vector.broadcast %20 : vector<1x128xf32> to vector<64x128xf32>
    %194 = arith.mulf %193, %192 : vector<64x128xf32>
    %195 = arith.addf %145, %194 : vector<64x128xf32>
    %c0_68 = arith.constant 0 : index
    %c0_69 = arith.constant 0 : index
    %c0_70 = arith.constant 0 : index
    %196 = vector.load %arg13[%c0_68, %c0_69, %c0_70] : memref<1x64x128xf32, #tpu.memory_space<vmem>>, vector<1x64x128xf32>
    %197 = vector.shape_cast %196 : vector<1x64x128xf32> to vector<64x128xf32>
    %198 = vector.shape_cast %195 : vector<64x128xf32> to vector<1x64x128xf32>
    tpu.vector_store %arg13[%c0_68, %c0_69, %c0_70], %198 {strides = array<i32>} : memref<1x64x128xf32, #tpu.memory_space<vmem>>, vector<1x64x128xf32>,
    return
  }
  func.func @transform_0(%arg0: i32) -> (i32, i32, i32) {
    %c0_i32 = arith.constant 0 : i32
    %c0_i32_0 = arith.constant 0 : i32
    %c0_i32_1 = arith.constant 0 : i32
    return %arg0, %c0_i32, %c0_i32_0 : i32, i32, i32
  }
  func.func @transform_1(%arg0: i32) -> (i32, i32, i32) {
    %c0_i32 = arith.constant 0 : i32
    %c0_i32_0 = arith.constant 0 : i32
    %c0_i32_1 = arith.constant 0 : i32
    return %arg0, %c0_i32, %c0_i32_0 : i32, i32, i32
  }
  func.func @transform_2(%arg0: i32) -> (i32, i32) {
    %c0_i32 = arith.constant 0 : i32
    %c0_i32_0 = arith.constant 0 : i32
    %c0_i32_1 = arith.constant 0 : i32
    return %c0_i32, %c0_i32_0 : i32, i32
  }
  func.func @transform_3(%arg0: i32) -> (i32, i32) {
    %c0_i32 = arith.constant 0 : i32
    %c0_i32_0 = arith.constant 0 : i32
    %c0_i32_1 = arith.constant 0 : i32
    return %c0_i32, %c0_i32_0 : i32, i32
  }
  func.func @transform_4(%arg0: i32) -> (i32, i32) {
    %c0_i32 = arith.constant 0 : i32
    %c0_i32_0 = arith.constant 0 : i32
    %c0_i32_1 = arith.constant 0 : i32
    return %c0_i32, %c0_i32_0 : i32, i32
  }
  func.func @transform_5(%arg0: i32) -> (i32, i32) {
    %c0_i32 = arith.constant 0 : i32
    %c0_i32_0 = arith.constant 0 : i32
    %c0_i32_1 = arith.constant 0 : i32
    return %c0_i32, %c0_i32_0 : i32, i32
  }
  func.func @transform_6(%arg0: i32) -> (i32, i32) {
    %c0_i32 = arith.constant 0 : i32
    %c0_i32_0 = arith.constant 0 : i32
    %c0_i32_1 = arith.constant 0 : i32
    return %c0_i32, %c0_i32_0 : i32, i32
  }
  func.func @transform_7(%arg0: i32) -> (i32, i32) {
    %c0_i32 = arith.constant 0 : i32
    %c0_i32_0 = arith.constant 0 : i32
    %c0_i32_1 = arith.constant 0 : i32
    return %c0_i32, %c0_i32_0 : i32, i32
  }
  func.func @transform_8(%arg0: i32) -> (i32, i32) {
    %c0_i32 = arith.constant 0 : i32
    %c0_i32_0 = arith.constant 0 : i32
    %c0_i32_1 = arith.constant 0 : i32
    return %c0_i32, %c0_i32_0 : i32, i32
  }
  func.func @transform_9(%arg0: i32) -> (i32, i32) {
    %c0_i32 = arith.constant 0 : i32
    %c0_i32_0 = arith.constant 0 : i32
    %c0_i32_1 = arith.constant 0 : i32
    return %c0_i32, %c0_i32_0 : i32, i32
  }
  func.func @transform_10(%arg0: i32) -> (i32, i32) {
    %c0_i32 = arith.constant 0 : i32
    %c0_i32_0 = arith.constant 0 : i32
    %c0_i32_1 = arith.constant 0 : i32
    return %c0_i32, %c0_i32_0 : i32, i32
  }
  func.func @transform_11(%arg0: i32) -> (i32, i32) {
    %c0_i32 = arith.constant 0 : i32
    %c0_i32_0 = arith.constant 0 : i32
    %c0_i32_1 = arith.constant 0 : i32
    return %c0_i32, %c0_i32_0 : i32, i32
  }
  func.func @transform_12(%arg0: i32) -> (i32, i32, i32) {
    %c0_i32 = arith.constant 0 : i32
    %c0_i32_0 = arith.constant 0 : i32
    %c0_i32_1 = arith.constant 0 : i32
    return %arg0, %c0_i32, %c0_i32_0 : i32, i32, i32
  }
}

module attributes {stable_mosaic.version = 11 : i64} {
  func.func @_dit_block_kernel(%arg0: i32, %arg1: memref<1x64x128xf32, #tpu.memory_space<vmem>>, %arg2: memref<1x1x128xf32, #tpu.memory_space<vmem>>, %arg3: memref<128x768xbf16, #tpu.memory_space<vmem>>, %arg4: memref<1x768xf32, #tpu.memory_space<vmem>>, %arg5: memref<128x384xbf16, #tpu.memory_space<vmem>>, %arg6: memref<1x384xf32, #tpu.memory_space<vmem>>, %arg7: memref<128x128xbf16, #tpu.memory_space<vmem>>, %arg8: memref<1x128xf32, #tpu.memory_space<vmem>>, %arg9: memref<128x512xbf16, #tpu.memory_space<vmem>>, %arg10: memref<1x512xf32, #tpu.memory_space<vmem>>, %arg11: memref<512x128xbf16, #tpu.memory_space<vmem>>, %arg12: memref<1x128xf32, #tpu.memory_space<vmem>>, %arg13: memref<1x64x128xf32, #tpu.memory_space<vmem>>) attributes {dimension_semantics = [#tpu.dimension_semantics<parallel>], iteration_bounds = array<i64: 8>, scalar_prefetch = 0 : i64, scratch_operands = 0 : i64, tpu.core_type = #tpu.core_type<tc>, window_params = [{transform_indices = @transform_0, window_bounds = array<i64: 1, 64, 128>}, {transform_indices = @transform_1, window_bounds = array<i64: 1, 1, 128>}, {pipeline_mode = #tpu.pipeline_mode<synchronous>, transform_indices = @transform_2, window_bounds = array<i64: 128, 768>}, {pipeline_mode = #tpu.pipeline_mode<synchronous>, transform_indices = @transform_3, window_bounds = array<i64: 1, 768>}, {pipeline_mode = #tpu.pipeline_mode<synchronous>, transform_indices = @transform_4, window_bounds = array<i64: 128, 384>}, {pipeline_mode = #tpu.pipeline_mode<synchronous>, transform_indices = @transform_5, window_bounds = array<i64: 1, 384>}, {pipeline_mode = #tpu.pipeline_mode<synchronous>, transform_indices = @transform_6, window_bounds = array<i64: 128, 128>}, {pipeline_mode = #tpu.pipeline_mode<synchronous>, transform_indices = @transform_7, window_bounds = array<i64: 1, 128>}, {pipeline_mode = #tpu.pipeline_mode<synchronous>, transform_indices = @transform_8, window_bounds = array<i64: 128, 512>}, {pipeline_mode = #tpu.pipeline_mode<synchronous>, transform_indices = @transform_9, window_bounds = array<i64: 1, 512>}, {pipeline_mode = #tpu.pipeline_mode<synchronous>, transform_indices = @transform_10, window_bounds = array<i64: 512, 128>}, {pipeline_mode = #tpu.pipeline_mode<synchronous>, transform_indices = @transform_11, window_bounds = array<i64: 1, 128>}, {transform_indices = @transform_12, window_bounds = array<i64: 1, 64, 128>}]} {
    %c0 = arith.constant 0 : index
    %c0_0 = arith.constant 0 : index
    %c0_1 = arith.constant 0 : index
    %0 = vector.load %arg1[%c0, %c0_0, %c0_1] : memref<1x64x128xf32, #tpu.memory_space<vmem>>, vector<1x64x128xf32>
    %1 = vector.shape_cast %0 : vector<1x64x128xf32> to vector<64x128xf32>
    %c0_2 = arith.constant 0 : index
    %c0_3 = arith.constant 0 : index
    %c0_4 = arith.constant 0 : index
    %2 = vector.load %arg2[%c0_2, %c0_3, %c0_4] : memref<1x1x128xf32, #tpu.memory_space<vmem>>, vector<1x1x128xf32>
    %3 = vector.shape_cast %2 : vector<1x1x128xf32> to vector<1x128xf32>
    %4 = arith.negf %3 : vector<1x128xf32>
    %5 = math.exp %4 : vector<1x128xf32>
    %cst = arith.constant 1.000000e+00 : f32
    %6 = vector.broadcast %cst : f32 to vector<1x128xf32>
    %7 = arith.addf %6, %5 : vector<1x128xf32>
    %8 = arith.divf %6, %7 : vector<1x128xf32>
    %9 = arith.mulf %3, %8 : vector<1x128xf32>
    %10 = arith.truncf %9 : vector<1x128xf32> to vector<1x128xbf16>
    %c0_5 = arith.constant 0 : index
    %c0_6 = arith.constant 0 : index
    %11 = vector.load %arg3[%c0_5, %c0_6] : memref<128x768xbf16, #tpu.memory_space<vmem>>, vector<128x768xbf16>
    %cst_7 = arith.constant dense<0.000000e+00> : vector<1x768xf32>
    %12 = tpu.matmul %10, %11, %cst_7 {dimension_numbers = #tpu.dot_dimension_numbers<[1], [0], [0], [1], [0, 0, 1, 1], [], []>} : vector<1x128xbf16>, vector<128x768xbf16>, vector<1x768xf32> -> vector<1x768xf32>
    %c0_8 = arith.constant 0 : index
    %c0_9 = arith.constant 0 : index
    %13 = vector.load %arg4[%c0_8, %c0_9] : memref<1x768xf32, #tpu.memory_space<vmem>>, vector<1x768xf32>
    %14 = arith.addf %12, %13 : vector<1x768xf32>
    %15 = vector.extract_strided_slice %14 {offsets = [0, 0], sizes = [1, 128], strides = [1, 1]} : vector<1x768xf32> to vector<1x128xf32>
    %16 = vector.extract_strided_slice %14 {offsets = [0, 128], sizes = [1, 128], strides = [1, 1]} : vector<1x768xf32> to vector<1x128xf32>
    %17 = vector.extract_strided_slice %14 {offsets = [0, 256], sizes = [1, 128], strides = [1, 1]} : vector<1x768xf32> to vector<1x128xf32>
    %18 = vector.extract_strided_slice %14 {offsets = [0, 384], sizes = [1, 128], strides = [1, 1]} : vector<1x768xf32> to vector<1x128xf32>
    %19 = vector.extract_strided_slice %14 {offsets = [0, 512], sizes = [1, 128], strides = [1, 1]} : vector<1x768xf32> to vector<1x128xf32>
    %20 = vector.extract_strided_slice %14 {offsets = [0, 640], sizes = [1, 128], strides = [1, 1]} : vector<1x768xf32> to vector<1x128xf32>
    %cst_10 = arith.constant dense<0.000000e+00> : vector<64xf32>
    %21 = vector.multi_reduction <add>, %1, %cst_10 [1] : vector<64x128xf32> to vector<64xf32>
    %22 = vector.shape_cast %21 : vector<64xf32> to vector<64x1xf32>
    %cst_11 = arith.constant 1.280000e+02 : f32
    %23 = vector.broadcast %cst_11 : f32 to vector<64x1xf32>
    %24 = arith.divf %22, %23 : vector<64x1xf32>
    %25 = vector.broadcast %24 : vector<64x1xf32> to vector<64x128xf32>
    %26 = arith.subf %1, %25 : vector<64x128xf32>
    %27 = arith.mulf %26, %26 : vector<64x128xf32>
    %cst_12 = arith.constant dense<0.000000e+00> : vector<64xf32>
    %28 = vector.multi_reduction <add>, %27, %cst_12 [1] : vector<64x128xf32> to vector<64xf32>
    %29 = vector.shape_cast %28 : vector<64xf32> to vector<64x1xf32>
    %cst_13 = arith.constant 1.280000e+02 : f32
    %30 = vector.broadcast %cst_13 : f32 to vector<64x1xf32>
    %31 = arith.divf %29, %30 : vector<64x1xf32>
    %cst_14 = arith.constant 9.99999997E-7 : f32
    %32 = vector.broadcast %cst_14 : f32 to vector<64x1xf32>
    %33 = arith.addf %31, %32 : vector<64x1xf32>
    %34 = math.rsqrt %33 : vector<64x1xf32>
    %35 = vector.broadcast %34 : vector<64x1xf32> to vector<64x128xf32>
    %36 = arith.mulf %26, %35 : vector<64x128xf32>
    %cst_15 = arith.constant 1.000000e+00 : f32
    %37 = vector.broadcast %cst_15 : f32 to vector<1x128xf32>
    %38 = arith.addf %37, %16 : vector<1x128xf32>
    %39 = vector.broadcast %38 : vector<1x128xf32> to vector<64x128xf32>
    %40 = arith.mulf %36, %39 : vector<64x128xf32>
    %41 = vector.broadcast %15 : vector<1x128xf32> to vector<64x128xf32>
    %42 = arith.addf %40, %41 : vector<64x128xf32>
    %43 = arith.truncf %42 : vector<64x128xf32> to vector<64x128xbf16>
    %c0_16 = arith.constant 0 : index
    %c0_17 = arith.constant 0 : index
    %44 = vector.load %arg5[%c0_16, %c0_17] : memref<128x384xbf16, #tpu.memory_space<vmem>>, vector<128x384xbf16>
    %cst_18 = arith.constant dense<0.000000e+00> : vector<64x384xf32>
    %45 = tpu.matmul %43, %44, %cst_18 {dimension_numbers = #tpu.dot_dimension_numbers<[1], [0], [0], [1], [0, 0, 1, 1], [], []>} : vector<64x128xbf16>, vector<128x384xbf16>, vector<64x384xf32> -> vector<64x384xf32>
    %c0_19 = arith.constant 0 : index
    %c0_20 = arith.constant 0 : index
    %46 = vector.load %arg6[%c0_19, %c0_20] : memref<1x384xf32, #tpu.memory_space<vmem>>, vector<1x384xf32>
    %47 = vector.broadcast %46 : vector<1x384xf32> to vector<64x384xf32>
    %48 = arith.addf %45, %47 : vector<64x384xf32>
    %49 = vector.extract_strided_slice %48 {offsets = [0, 0], sizes = [64, 32], strides = [1, 1]} : vector<64x384xf32> to vector<64x32xf32>
    %50 = arith.truncf %49 : vector<64x32xf32> to vector<64x32xbf16>
    %51 = vector.extract_strided_slice %48 {offsets = [0, 128], sizes = [64, 32], strides = [1, 1]} : vector<64x384xf32> to vector<64x32xf32>
    %52 = arith.truncf %51 : vector<64x32xf32> to vector<64x32xbf16>
    %53 = vector.extract_strided_slice %48 {offsets = [0, 256], sizes = [64, 32], strides = [1, 1]} : vector<64x384xf32> to vector<64x32xf32>
    %54 = arith.truncf %53 : vector<64x32xf32> to vector<64x32xbf16>
    %cst_21 = arith.constant dense<0.000000e+00> : vector<64x64xf32>
    %55 = tpu.matmul %50, %52, %cst_21 {dimension_numbers = #tpu.dot_dimension_numbers<[1], [1], [0], [0], [0, 0, 1, 0], [], []>} : vector<64x32xbf16>, vector<64x32xbf16>, vector<64x64xf32> -> vector<64x64xf32>
    %cst_22 = arith.constant dense<0xFF800000> : vector<64xf32>
    %56 = vector.multi_reduction <maximumf>, %55, %cst_22 [1] : vector<64x64xf32> to vector<64xf32>
    %57 = vector.shape_cast %56 : vector<64xf32> to vector<64x1xf32>
    %58 = vector.broadcast %57 : vector<64x1xf32> to vector<64x64xf32>
    %59 = arith.subf %55, %58 : vector<64x64xf32>
    %60 = math.exp %59 : vector<64x64xf32>
    %cst_23 = arith.constant dense<0.000000e+00> : vector<64xf32>
    %61 = vector.multi_reduction <add>, %60, %cst_23 [1] : vector<64x64xf32> to vector<64xf32>
    %62 = vector.shape_cast %61 : vector<64xf32> to vector<64x1xf32>
    %63 = tpu.reciprocal %62 {approx = true} : vector<64x1xf32> -> vector<64x1xf32>
    %64 = arith.truncf %60 : vector<64x64xf32> to vector<64x64xbf16>
    %cst_24 = arith.constant dense<0.000000e+00> : vector<64x32xf32>
    %65 = tpu.matmul %64, %54, %cst_24 {dimension_numbers = #tpu.dot_dimension_numbers<[1], [0], [0], [1], [0, 0, 1, 1], [], []>} : vector<64x64xbf16>, vector<64x32xbf16>, vector<64x32xf32> -> vector<64x32xf32>
    %66 = vector.broadcast %63 : vector<64x1xf32> to vector<64x32xf32>
    %67 = arith.mulf %65, %66 : vector<64x32xf32>
    %68 = arith.truncf %67 : vector<64x32xf32> to vector<64x32xbf16>
    %c0_25 = arith.constant 0 : index
    %c0_26 = arith.constant 0 : index
    %69 = vector.load %arg7[%c0_25, %c0_26] : memref<128x128xbf16, #tpu.memory_space<vmem>>, vector<32x128xbf16>
    %cst_27 = arith.constant dense<0.000000e+00> : vector<64x128xf32>
    %70 = tpu.matmul %68, %69, %cst_27 {dimension_numbers = #tpu.dot_dimension_numbers<[1], [0], [0], [1], [0, 0, 1, 1], [], []>} : vector<64x32xbf16>, vector<32x128xbf16>, vector<64x128xf32> -> vector<64x128xf32>
    %71 = vector.extract_strided_slice %48 {offsets = [0, 32], sizes = [64, 32], strides = [1, 1]} : vector<64x384xf32> to vector<64x32xf32>
    %72 = arith.truncf %71 : vector<64x32xf32> to vector<64x32xbf16>
    %73 = vector.extract_strided_slice %48 {offsets = [0, 160], sizes = [64, 32], strides = [1, 1]} : vector<64x384xf32> to vector<64x32xf32>
    %74 = arith.truncf %73 : vector<64x32xf32> to vector<64x32xbf16>
    %75 = vector.extract_strided_slice %48 {offsets = [0, 288], sizes = [64, 32], strides = [1, 1]} : vector<64x384xf32> to vector<64x32xf32>
    %76 = arith.truncf %75 : vector<64x32xf32> to vector<64x32xbf16>
    %cst_28 = arith.constant dense<0.000000e+00> : vector<64x64xf32>
    %77 = tpu.matmul %72, %74, %cst_28 {dimension_numbers = #tpu.dot_dimension_numbers<[1], [1], [0], [0], [0, 0, 1, 0], [], []>} : vector<64x32xbf16>, vector<64x32xbf16>, vector<64x64xf32> -> vector<64x64xf32>
    %cst_29 = arith.constant dense<0xFF800000> : vector<64xf32>
    %78 = vector.multi_reduction <maximumf>, %77, %cst_29 [1] : vector<64x64xf32> to vector<64xf32>
    %79 = vector.shape_cast %78 : vector<64xf32> to vector<64x1xf32>
    %80 = vector.broadcast %79 : vector<64x1xf32> to vector<64x64xf32>
    %81 = arith.subf %77, %80 : vector<64x64xf32>
    %82 = math.exp %81 : vector<64x64xf32>
    %cst_30 = arith.constant dense<0.000000e+00> : vector<64xf32>
    %83 = vector.multi_reduction <add>, %82, %cst_30 [1] : vector<64x64xf32> to vector<64xf32>
    %84 = vector.shape_cast %83 : vector<64xf32> to vector<64x1xf32>
    %85 = tpu.reciprocal %84 {approx = true} : vector<64x1xf32> -> vector<64x1xf32>
    %86 = arith.truncf %82 : vector<64x64xf32> to vector<64x64xbf16>
    %cst_31 = arith.constant dense<0.000000e+00> : vector<64x32xf32>
    %87 = tpu.matmul %86, %76, %cst_31 {dimension_numbers = #tpu.dot_dimension_numbers<[1], [0], [0], [1], [0, 0, 1, 1], [], []>} : vector<64x64xbf16>, vector<64x32xbf16>, vector<64x32xf32> -> vector<64x32xf32>
    %88 = vector.broadcast %85 : vector<64x1xf32> to vector<64x32xf32>
    %89 = arith.mulf %87, %88 : vector<64x32xf32>
    %90 = arith.truncf %89 : vector<64x32xf32> to vector<64x32xbf16>
    %c32 = arith.constant 32 : index
    %c0_32 = arith.constant 0 : index
    %91 = vector.load %arg7[%c32, %c0_32] : memref<128x128xbf16, #tpu.memory_space<vmem>>, vector<32x128xbf16>
    %cst_33 = arith.constant dense<0.000000e+00> : vector<64x128xf32>
    %92 = tpu.matmul %90, %91, %cst_33 {dimension_numbers = #tpu.dot_dimension_numbers<[1], [0], [0], [1], [0, 0, 1, 1], [], []>} : vector<64x32xbf16>, vector<32x128xbf16>, vector<64x128xf32> -> vector<64x128xf32>
    %93 = arith.addf %70, %92 : vector<64x128xf32>
    %94 = vector.extract_strided_slice %48 {offsets = [0, 64], sizes = [64, 32], strides = [1, 1]} : vector<64x384xf32> to vector<64x32xf32>
    %95 = arith.truncf %94 : vector<64x32xf32> to vector<64x32xbf16>
    %96 = vector.extract_strided_slice %48 {offsets = [0, 192], sizes = [64, 32], strides = [1, 1]} : vector<64x384xf32> to vector<64x32xf32>
    %97 = arith.truncf %96 : vector<64x32xf32> to vector<64x32xbf16>
    %98 = vector.extract_strided_slice %48 {offsets = [0, 320], sizes = [64, 32], strides = [1, 1]} : vector<64x384xf32> to vector<64x32xf32>
    %99 = arith.truncf %98 : vector<64x32xf32> to vector<64x32xbf16>
    %cst_34 = arith.constant dense<0.000000e+00> : vector<64x64xf32>
    %100 = tpu.matmul %95, %97, %cst_34 {dimension_numbers = #tpu.dot_dimension_numbers<[1], [1], [0], [0], [0, 0, 1, 0], [], []>} : vector<64x32xbf16>, vector<64x32xbf16>, vector<64x64xf32> -> vector<64x64xf32>
    %cst_35 = arith.constant dense<0xFF800000> : vector<64xf32>
    %101 = vector.multi_reduction <maximumf>, %100, %cst_35 [1] : vector<64x64xf32> to vector<64xf32>
    %102 = vector.shape_cast %101 : vector<64xf32> to vector<64x1xf32>
    %103 = vector.broadcast %102 : vector<64x1xf32> to vector<64x64xf32>
    %104 = arith.subf %100, %103 : vector<64x64xf32>
    %105 = math.exp %104 : vector<64x64xf32>
    %cst_36 = arith.constant dense<0.000000e+00> : vector<64xf32>
    %106 = vector.multi_reduction <add>, %105, %cst_36 [1] : vector<64x64xf32> to vector<64xf32>
    %107 = vector.shape_cast %106 : vector<64xf32> to vector<64x1xf32>
    %108 = tpu.reciprocal %107 {approx = true} : vector<64x1xf32> -> vector<64x1xf32>
    %109 = arith.truncf %105 : vector<64x64xf32> to vector<64x64xbf16>
    %cst_37 = arith.constant dense<0.000000e+00> : vector<64x32xf32>
    %110 = tpu.matmul %109, %99, %cst_37 {dimension_numbers = #tpu.dot_dimension_numbers<[1], [0], [0], [1], [0, 0, 1, 1], [], []>} : vector<64x64xbf16>, vector<64x32xbf16>, vector<64x32xf32> -> vector<64x32xf32>
    %111 = vector.broadcast %108 : vector<64x1xf32> to vector<64x32xf32>
    %112 = arith.mulf %110, %111 : vector<64x32xf32>
    %113 = arith.truncf %112 : vector<64x32xf32> to vector<64x32xbf16>
    %c64 = arith.constant 64 : index
    %c0_38 = arith.constant 0 : index
    %114 = vector.load %arg7[%c64, %c0_38] : memref<128x128xbf16, #tpu.memory_space<vmem>>, vector<32x128xbf16>
    %cst_39 = arith.constant dense<0.000000e+00> : vector<64x128xf32>
    %115 = tpu.matmul %113, %114, %cst_39 {dimension_numbers = #tpu.dot_dimension_numbers<[1], [0], [0], [1], [0, 0, 1, 1], [], []>} : vector<64x32xbf16>, vector<32x128xbf16>, vector<64x128xf32> -> vector<64x128xf32>
    %116 = arith.addf %93, %115 : vector<64x128xf32>
    %117 = vector.extract_strided_slice %48 {offsets = [0, 96], sizes = [64, 32], strides = [1, 1]} : vector<64x384xf32> to vector<64x32xf32>
    %118 = arith.truncf %117 : vector<64x32xf32> to vector<64x32xbf16>
    %119 = vector.extract_strided_slice %48 {offsets = [0, 224], sizes = [64, 32], strides = [1, 1]} : vector<64x384xf32> to vector<64x32xf32>
    %120 = arith.truncf %119 : vector<64x32xf32> to vector<64x32xbf16>
    %121 = vector.extract_strided_slice %48 {offsets = [0, 352], sizes = [64, 32], strides = [1, 1]} : vector<64x384xf32> to vector<64x32xf32>
    %122 = arith.truncf %121 : vector<64x32xf32> to vector<64x32xbf16>
    %cst_40 = arith.constant dense<0.000000e+00> : vector<64x64xf32>
    %123 = tpu.matmul %118, %120, %cst_40 {dimension_numbers = #tpu.dot_dimension_numbers<[1], [1], [0], [0], [0, 0, 1, 0], [], []>} : vector<64x32xbf16>, vector<64x32xbf16>, vector<64x64xf32> -> vector<64x64xf32>
    %cst_41 = arith.constant dense<0xFF800000> : vector<64xf32>
    %124 = vector.multi_reduction <maximumf>, %123, %cst_41 [1] : vector<64x64xf32> to vector<64xf32>
    %125 = vector.shape_cast %124 : vector<64xf32> to vector<64x1xf32>
    %126 = vector.broadcast %125 : vector<64x1xf32> to vector<64x64xf32>
    %127 = arith.subf %123, %126 : vector<64x64xf32>
    %128 = math.exp %127 : vector<64x64xf32>
    %cst_42 = arith.constant dense<0.000000e+00> : vector<64xf32>
    %129 = vector.multi_reduction <add>, %128, %cst_42 [1] : vector<64x64xf32> to vector<64xf32>
    %130 = vector.shape_cast %129 : vector<64xf32> to vector<64x1xf32>
    %131 = tpu.reciprocal %130 {approx = true} : vector<64x1xf32> -> vector<64x1xf32>
    %132 = arith.truncf %128 : vector<64x64xf32> to vector<64x64xbf16>
    %cst_43 = arith.constant dense<0.000000e+00> : vector<64x32xf32>
    %133 = tpu.matmul %132, %122, %cst_43 {dimension_numbers = #tpu.dot_dimension_numbers<[1], [0], [0], [1], [0, 0, 1, 1], [], []>} : vector<64x64xbf16>, vector<64x32xbf16>, vector<64x32xf32> -> vector<64x32xf32>
    %134 = vector.broadcast %131 : vector<64x1xf32> to vector<64x32xf32>
    %135 = arith.mulf %133, %134 : vector<64x32xf32>
    %136 = arith.truncf %135 : vector<64x32xf32> to vector<64x32xbf16>
    %c96 = arith.constant 96 : index
    %c0_44 = arith.constant 0 : index
    %137 = vector.load %arg7[%c96, %c0_44] : memref<128x128xbf16, #tpu.memory_space<vmem>>, vector<32x128xbf16>
    %cst_45 = arith.constant dense<0.000000e+00> : vector<64x128xf32>
    %138 = tpu.matmul %136, %137, %cst_45 {dimension_numbers = #tpu.dot_dimension_numbers<[1], [0], [0], [1], [0, 0, 1, 1], [], []>} : vector<64x32xbf16>, vector<32x128xbf16>, vector<64x128xf32> -> vector<64x128xf32>
    %139 = arith.addf %116, %138 : vector<64x128xf32>
    %c0_46 = arith.constant 0 : index
    %c0_47 = arith.constant 0 : index
    %140 = vector.load %arg8[%c0_46, %c0_47] : memref<1x128xf32, #tpu.memory_space<vmem>>, vector<1x128xf32>
    %141 = vector.broadcast %140 : vector<1x128xf32> to vector<64x128xf32>
    %142 = arith.addf %139, %141 : vector<64x128xf32>
    %143 = vector.broadcast %17 : vector<1x128xf32> to vector<64x128xf32>
    %144 = arith.mulf %143, %142 : vector<64x128xf32>
    %145 = arith.addf %1, %144 : vector<64x128xf32>
    %cst_48 = arith.constant dense<0.000000e+00> : vector<64xf32>
    %146 = vector.multi_reduction <add>, %145, %cst_48 [1] : vector<64x128xf32> to vector<64xf32>
    %147 = vector.shape_cast %146 : vector<64xf32> to vector<64x1xf32>
    %cst_49 = arith.constant 1.280000e+02 : f32
    %148 = vector.broadcast %cst_49 : f32 to vector<64x1xf32>
    %149 = arith.divf %147, %148 : vector<64x1xf32>
    %150 = vector.broadcast %149 : vector<64x1xf32> to vector<64x128xf32>
    %151 = arith.subf %145, %150 : vector<64x128xf32>
    %152 = arith.mulf %151, %151 : vector<64x128xf32>
    %cst_50 = arith.constant dense<0.000000e+00> : vector<64xf32>
    %153 = vector.multi_reduction <add>, %152, %cst_50 [1] : vector<64x128xf32> to vector<64xf32>
    %154 = vector.shape_cast %153 : vector<64xf32> to vector<64x1xf32>
    %cst_51 = arith.constant 1.280000e+02 : f32
    %155 = vector.broadcast %cst_51 : f32 to vector<64x1xf32>
    %156 = arith.divf %154, %155 : vector<64x1xf32>
    %cst_52 = arith.constant 9.99999997E-7 : f32
    %157 = vector.broadcast %cst_52 : f32 to vector<64x1xf32>
    %158 = arith.addf %156, %157 : vector<64x1xf32>
    %159 = math.rsqrt %158 : vector<64x1xf32>
    %160 = vector.broadcast %159 : vector<64x1xf32> to vector<64x128xf32>
    %161 = arith.mulf %151, %160 : vector<64x128xf32>
    %cst_53 = arith.constant 1.000000e+00 : f32
    %162 = vector.broadcast %cst_53 : f32 to vector<1x128xf32>
    %163 = arith.addf %162, %19 : vector<1x128xf32>
    %164 = vector.broadcast %163 : vector<1x128xf32> to vector<64x128xf32>
    %165 = arith.mulf %161, %164 : vector<64x128xf32>
    %166 = vector.broadcast %18 : vector<1x128xf32> to vector<64x128xf32>
    %167 = arith.addf %165, %166 : vector<64x128xf32>
    %168 = arith.truncf %167 : vector<64x128xf32> to vector<64x128xbf16>
    %c0_54 = arith.constant 0 : index
    %c0_55 = arith.constant 0 : index
    %169 = vector.load %arg9[%c0_54, %c0_55] : memref<128x512xbf16, #tpu.memory_space<vmem>>, vector<128x512xbf16>
    %cst_56 = arith.constant dense<0.000000e+00> : vector<64x512xf32>
    %170 = tpu.matmul %168, %169, %cst_56 {dimension_numbers = #tpu.dot_dimension_numbers<[1], [0], [0], [1], [0, 0, 1, 1], [], []>} : vector<64x128xbf16>, vector<128x512xbf16>, vector<64x512xf32> -> vector<64x512xf32>
    %c0_57 = arith.constant 0 : index
    %c0_58 = arith.constant 0 : index
    %171 = vector.load %arg10[%c0_57, %c0_58] : memref<1x512xf32, #tpu.memory_space<vmem>>, vector<1x512xf32>
    %172 = vector.broadcast %171 : vector<1x512xf32> to vector<64x512xf32>
    %173 = arith.addf %170, %172 : vector<64x512xf32>
    %174 = arith.mulf %173, %173 : vector<64x512xf32>
    %cst_59 = arith.constant 5.000000e-01 : f32
    %175 = vector.broadcast %cst_59 : f32 to vector<64x512xf32>
    %176 = arith.mulf %175, %173 : vector<64x512xf32>
    %cst_60 = arith.constant 4.471500e-02 : f32
    %177 = vector.broadcast %cst_60 : f32 to vector<64x512xf32>
    %178 = arith.mulf %177, %173 : vector<64x512xf32>
    %179 = arith.mulf %178, %174 : vector<64x512xf32>
    %180 = arith.addf %173, %179 : vector<64x512xf32>
    %cst_61 = arith.constant 0.797884583 : f32
    %181 = vector.broadcast %cst_61 : f32 to vector<64x512xf32>
    %182 = arith.mulf %181, %180 : vector<64x512xf32>
    %183 = math.tanh %182 : vector<64x512xf32>
    %cst_62 = arith.constant 1.000000e+00 : f32
    %184 = vector.broadcast %cst_62 : f32 to vector<64x512xf32>
    %185 = arith.addf %184, %183 : vector<64x512xf32>
    %186 = arith.mulf %176, %185 : vector<64x512xf32>
    %187 = arith.truncf %186 : vector<64x512xf32> to vector<64x512xbf16>
    %c0_63 = arith.constant 0 : index
    %c0_64 = arith.constant 0 : index
    %188 = vector.load %arg11[%c0_63, %c0_64] : memref<512x128xbf16, #tpu.memory_space<vmem>>, vector<512x128xbf16>
    %cst_65 = arith.constant dense<0.000000e+00> : vector<64x128xf32>
    %189 = tpu.matmul %187, %188, %cst_65 {dimension_numbers = #tpu.dot_dimension_numbers<[1], [0], [0], [1], [0, 0, 1, 1], [], []>} : vector<64x512xbf16>, vector<512x128xbf16>, vector<64x128xf32> -> vector<64x128xf32>
    %c0_66 = arith.constant 0 : index
    %c0_67 = arith.constant 0 : index
    %190 = vector.load %arg12[%c0_66, %c0_67] : memref<1x128xf32, #tpu.memory_space<vmem>>, vector<1x128xf32>
    %191 = vector.broadcast %190 : vector<1x128xf32> to vector<64x128xf32>
    %192 = arith.addf %189, %191 : vector<64x128xf32>
    %193 = vector.broadcast %20 : vector<1x128xf32> to vector<64x128xf32>
    %194 = arith.mulf %193, %192 : vector<64x128xf32>
    %195 = arith.addf %145, %194 : vector<64x128xf32>
    %c0_68 = arith.constant 0 : index
    %c0_69 = arith.constant 0 : index
    %c0_70 = arith.constant 0 : index
    %196 = vector.load %arg13[%c0_68, %c0_69, %c0_70] : memref<1x64x128xf32, #tpu.memory_space<vmem>>, vector<1x64x128xf32>
    %197 = vector.shape_cast %196 : vector<1x64x128xf32> to vector<64x128xf32>
    %198 = vector.shape_cast %195 : vector<64x128xf32> to vector<1x64x128xf32>
    tpu.vector_store %arg13[%c0_68, %c0_69, %c0_70], %198 {strides = array<i32>} : memref<1x64x128xf32, #tpu.memory_space<vmem>>, vector<1x64x128xf32>,
    return
  }
  func.func @transform_0(%arg0: i32) -> (i32, i32, i32) {
    %c0_i32 = arith.constant 0 : i32
    %c0_i32_0 = arith.constant 0 : i32
    %c0_i32_1 = arith.constant 0 : i32
    return %arg0, %c0_i32, %c0_i32_0 : i32, i32, i32
  }
  func.func @transform_1(%arg0: i32) -> (i32, i32, i32) {
    %c0_i32 = arith.constant 0 : i32
    %c0_i32_0 = arith.constant 0 : i32
    %c0_i32_1 = arith.constant 0 : i32
    return %arg0, %c0_i32, %c0_i32_0 : i32, i32, i32
  }
  func.func @transform_2(%arg0: i32) -> (i32, i32) {
    %c0_i32 = arith.constant 0 : i32
    %c0_i32_0 = arith.constant 0 : i32
    %c0_i32_1 = arith.constant 0 : i32
    return %c0_i32, %c0_i32_0 : i32, i32
  }
  func.func @transform_3(%arg0: i32) -> (i32, i32) {
    %c0_i32 = arith.constant 0 : i32
    %c0_i32_0 = arith.constant 0 : i32
    %c0_i32_1 = arith.constant 0 : i32
    return %c0_i32, %c0_i32_0 : i32, i32
  }
  func.func @transform_4(%arg0: i32) -> (i32, i32) {
    %c0_i32 = arith.constant 0 : i32
    %c0_i32_0 = arith.constant 0 : i32
    %c0_i32_1 = arith.constant 0 : i32
    return %c0_i32, %c0_i32_0 : i32, i32
  }
  func.func @transform_5(%arg0: i32) -> (i32, i32) {
    %c0_i32 = arith.constant 0 : i32
    %c0_i32_0 = arith.constant 0 : i32
    %c0_i32_1 = arith.constant 0 : i32
    return %c0_i32, %c0_i32_0 : i32, i32
  }
  func.func @transform_6(%arg0: i32) -> (i32, i32) {
    %c0_i32 = arith.constant 0 : i32
    %c0_i32_0 = arith.constant 0 : i32
    %c0_i32_1 = arith.constant 0 : i32
    return %c0_i32, %c0_i32_0 : i32, i32
  }
  func.func @transform_7(%arg0: i32) -> (i32, i32) {
    %c0_i32 = arith.constant 0 : i32
    %c0_i32_0 = arith.constant 0 : i32
    %c0_i32_1 = arith.constant 0 : i32
    return %c0_i32, %c0_i32_0 : i32, i32
  }
  func.func @transform_8(%arg0: i32) -> (i32, i32) {
    %c0_i32 = arith.constant 0 : i32
    %c0_i32_0 = arith.constant 0 : i32
    %c0_i32_1 = arith.constant 0 : i32
    return %c0_i32, %c0_i32_0 : i32, i32
  }
  func.func @transform_9(%arg0: i32) -> (i32, i32) {
    %c0_i32 = arith.constant 0 : i32
    %c0_i32_0 = arith.constant 0 : i32
    %c0_i32_1 = arith.constant 0 : i32
    return %c0_i32, %c0_i32_0 : i32, i32
  }
  func.func @transform_10(%arg0: i32) -> (i32, i32) {
    %c0_i32 = arith.constant 0 : i32
    %c0_i32_0 = arith.constant 0 : i32
    %c0_i32_1 = arith.constant 0 : i32
    return %c0_i32, %c0_i32_0 : i32, i32
  }
  func.func @transform_11(%arg0: i32) -> (i32, i32) {
    %c0_i32 = arith.constant 0 : i32
    %c0_i32_0 = arith.constant 0 : i32
    %c0_i32_1 = arith.constant 0 : i32
    return %c0_i32, %c0_i32_0 : i32, i32
  }
  func.func @transform_12(%arg0: i32) -> (i32, i32, i32) {
    %c0_i32 = arith.constant 0 : i32
    %c0_i32_0 = arith.constant 0 : i32
    %c0_i32_1 = arith.constant 0 : i32
    return %arg0, %c0_i32, %c0_i32_0 : i32, i32, i32
  }
}

</mosaic_0001>

<llo_original>
// kernel: fwd.3
$region0: #{fwd.3}
  #allocation0 [shape = 'u32[]', space=smem, size = 0x4, offset = 0x4, fixed_abs, tag = 'smem constant byte address 0x4 - core index']
  #allocation1 [shape = 'u32[144,128]{1,0:T(1,128)}', space=vmem, size = 0x12000, scoped, tag = 'internal scratch']
  %s0 = inlined_call_operand.vmem [shape: f32[8,64,128], index: 0, kind: input, shape index: {}]
  %s1 = inlined_call_operand.vmem [shape: f32[8,1,128], index: 1, kind: input, shape index: {}]
  %s2 = inlined_call_operand.vmem [shape: bf16[128,768], index: 2, kind: input, shape index: {}]
  %s3 = inlined_call_operand.vmem [shape: f32[1,768], index: 3, kind: input, shape index: {}]
  %s4 = inlined_call_operand.vmem [shape: bf16[128,384], index: 4, kind: input, shape index: {}]
  %s5 = inlined_call_operand.vmem [shape: f32[1,384], index: 5, kind: input, shape index: {}]
  %s6 = inlined_call_operand.vmem [shape: bf16[128,128], index: 6, kind: input, shape index: {}]
  %s7 = inlined_call_operand.vmem [shape: f32[1,128], index: 7, kind: input, shape index: {}]
  %s8 = inlined_call_operand.vmem [shape: bf16[128,512], index: 8, kind: input, shape index: {}]
  %s9 = inlined_call_operand.vmem [shape: f32[1,512], index: 9, kind: input, shape index: {}]
  %s10 = inlined_call_operand.vmem [shape: bf16[512,128], index: 10, kind: input, shape index: {}]
  %s11 = inlined_call_operand.vmem [shape: f32[1,128], index: 11, kind: input, shape index: {}]
  %s12 = inlined_call_operand.hbm [shape: f32[8,64,128], index: 12, kind: output, shape index: {}]
  %s13 = sld [smem:[#allocation0]]
  $region81: #{fwd.3} parent=0
    _
  %s15 = ssub.s32 1, %s13
  %s16 = scalar_select 0, %s15, %s13
  $region1: #{fwd.3} parent=0
    #allocation2 [shape = 'u8[65536]{0}', space=vmem, size = 0x10000, scoped, tag = 'output window, operand 0']
    #allocation3 [shape = 's32[2]{0}', space=sflag, size = 0x8, scoped, tag = 'scoped memory for fwd.3']
    %17 = vsyncpa [#allocation3], 0
    %s18 = scalar_lea.sflag [#allocation3], 1
    %19 = vsyncpa %s18, 0
    loop: start=0, step=1, limit=10
    $region2: #{fwd.3} parent=1 // loop_pre_header
      _
    $region3: #{fwd.3} parent=1 // loop_header
      %s21 = sphi 0, %s25
      %p22 = scmp.ge.s32.totalorder %s21, 10
      %s31 = sphi 0, %s33
      %s34 = sphi 0, %s31
      %s35 = sphi 0, %s34
      %s51 = sphi 0, %s35
      %s57 = sphi 0, %s59
      %s60 = sphi 0, %s57
      %s61 = sphi 0, %s60
      %s77 = sphi 0, %s61
      %s81 = sphi 0, %s81
      %s83 = sphi 0, %s81
      %s84 = sphi 0, %s83
      %s98 = sphi 0, %s84
      %s102 = sphi 0, %s102
      %s104 = sphi 0, %s102
      %s105 = sphi 0, %s104
      %s119 = sphi 0, %s105
      %s123 = sphi 0, %s123
      %s125 = sphi 0, %s123
      %s126 = sphi 0, %s125
      %s140 = sphi 0, %s126
      %s144 = sphi 0, %s144
      %s146 = sphi 0, %s144
      %s147 = sphi 0, %s146
      %s161 = sphi 0, %s147
      %s165 = sphi 0, %s165
      %s167 = sphi 0, %s165
      %s168 = sphi 0, %s167
      %s182 = sphi 0, %s168
      %s186 = sphi 0, %s186
      %s188 = sphi 0, %s186
      %s189 = sphi 0, %s188
      %s203 = sphi 0, %s189
      %s207 = sphi 0, %s207
      %s209 = sphi 0, %s207
      %s210 = sphi 0, %s209
      %s224 = sphi 0, %s210
      %s228 = sphi 0, %s228
      %s230 = sphi 0, %s228
      %s231 = sphi 0, %s230
      %s245 = sphi 0, %s231
      %s249 = sphi 0, %s249
      %s251 = sphi 0, %s249
      %s252 = sphi 0, %s251
      %s266 = sphi 0, %s252
      %s270 = sphi 0, %s270
      %s272 = sphi 0, %s270
      %s273 = sphi 0, %s272
      %s287 = sphi 0, %s273
      %s293 = sphi 0, %s295
      %s296 = sphi 0, %s293
      %s297 = sphi 0, %s296
      %s313 = sphi 0, %s297
    $region4: #{fwd.3} parent=1 // loop_header_branch
      %24 = sbr.rel (%p22) target = $region8
    $region5: #{fwd.3} parent=1 // loop_body
      %s26 = ssub.s32 %s21, 1
      %s27 = ssub.s32 %s21, 2
      %s28 = sadd.s32 %s21, 1
      %s29 = ssub.s32 %s21, %s28
      %p30 = scmp.eq.s32.totalorder %s29, 0
      %s32 = sadd.s32 %s31, 1
      %s33 = scalar_select %p30, %s31, %s32
      %p36 = pneg %p30
      %p37 = scmp.eq.s32.totalorder %s21, 7
      %p38 = por %p36, %p37
      %p39 = scmp.ne.s32.totalorder %s31, %s34
      %p40 = scmp.eq.s32.totalorder %s21, 0
      %p41 = por %p39, %p40
      %p42 = scmp.ne.s32.totalorder %s31, %s34
      %p43 = scmp.eq.s32.totalorder %s26, 7
      %p44 = por %p42, %p43
      %p45 = scmp.ne.s32.totalorder %s34, %s35
      %p46 = scmp.eq.s32.totalorder %s26, 0
      %p47 = por %p45, %p46
      %p48 = scmp.ne.s32.totalorder %s34, %s35
      %p49 = scmp.eq.s32.totalorder %s27, 7
      %p50 = por %p48, %p49
      %p52 = scmp.ne.s32.totalorder %s35, %s51
      %p53 = scmp.eq.s32.totalorder %s27, 0
      %p54 = por %p52, %p53
      %s55 = ssub.s32 %s21, %s28
      %p56 = scmp.eq.s32.totalorder %s55, 0
      %s58 = sadd.s32 %s57, 1
      %s59 = scalar_select %p56, %s57, %s58
      %p62 = pneg %p56
      %p63 = scmp.eq.s32.totalorder %s21, 7
      %p64 = por %p62, %p63
      %p65 = scmp.ne.s32.totalorder %s57, %s60
      %p66 = scmp.eq.s32.totalorder %s21, 0
      %p67 = por %p65, %p66
      %p68 = scmp.ne.s32.totalorder %s57, %s60
      %p69 = scmp.eq.s32.totalorder %s26, 7
      %p70 = por %p68, %p69
      %p71 = scmp.ne.s32.totalorder %s60, %s61
      %p72 = scmp.eq.s32.totalorder %s26, 0
      %p73 = por %p71, %p72
      %p74 = scmp.ne.s32.totalorder %s60, %s61
      %p75 = scmp.eq.s32.totalorder %s27, 7
      %p76 = por %p74, %p75
      %p78 = scmp.ne.s32.totalorder %s61, %s77
      %p79 = scmp.eq.s32.totalorder %s27, 0
      %p80 = por %p78, %p79
      %s82 = sadd.s32 %s81, 1
      %p85 = scmp.eq.s32.totalorder %s21, 7
      %p86 = scmp.ne.s32.totalorder %s81, %s83
      %p87 = scmp.eq.s32.totalorder %s21, 0
      %p88 = por %p86, %p87
      %p89 = scmp.ne.s32.totalorder %s81, %s83
      %p90 = scmp.eq.s32.totalorder %s26, 7
      %p91 = por %p89, %p90
      %p92 = scmp.ne.s32.totalorder %s83, %s84
      %p93 = scmp.eq.s32.totalorder %s26, 0
      %p94 = por %p92, %p93
      %p95 = scmp.ne.s32.totalorder %s83, %s84
      %p96 = scmp.eq.s32.totalorder %s27, 7
      %p97 = por %p95, %p96
      %p99 = scmp.ne.s32.totalorder %s84, %s98
      %p100 = scmp.eq.s32.totalorder %s27, 0
      %p101 = por %p99, %p100
      %s103 = sadd.s32 %s102, 1
      %p106 = scmp.eq.s32.totalorder %s21, 7
      %p107 = scmp.ne.s32.totalorder %s102, %s104
      %p108 = scmp.eq.s32.totalorder %s21, 0
      %p109 = por %p107, %p108
      %p110 = scmp.ne.s32.totalorder %s102, %s104
      %p111 = scmp.eq.s32.totalorder %s26, 7
      %p112 = por %p110, %p111
      %p113 = scmp.ne.s32.totalorder %s104, %s105
      %p114 = scmp.eq.s32.totalorder %s26, 0
      %p115 = por %p113, %p114
      %p116 = scmp.ne.s32.totalorder %s104, %s105
      %p117 = scmp.eq.s32.totalorder %s27, 7
      %p118 = por %p116, %p117
      %p120 = scmp.ne.s32.totalorder %s105, %s119
      %p121 = scmp.eq.s32.totalorder %s27, 0
      %p122 = por %p120, %p121
      %s124 = sadd.s32 %s123, 1
      %p127 = scmp.eq.s32.totalorder %s21, 7
      %p128 = scmp.ne.s32.totalorder %s123, %s125
      %p129 = scmp.eq.s32.totalorder %s21, 0
      %p130 = por %p128, %p129
      %p131 = scmp.ne.s32.totalorder %s123, %s125
      %p132 = scmp.eq.s32.totalorder %s26, 7
      %p133 = por %p131, %p132
      %p134 = scmp.ne.s32.totalorder %s125, %s126
      %p135 = scmp.eq.s32.totalorder %s26, 0
      %p136 = por %p134, %p135
      %p137 = scmp.ne.s32.totalorder %s125, %s126
      %p138 = scmp.eq.s32.totalorder %s27, 7
      %p139 = por %p137, %p138
      %p141 = scmp.ne.s32.totalorder %s126, %s140
      %p142 = scmp.eq.s32.totalorder %s27, 0
      %p143 = por %p141, %p142
      %s145 = sadd.s32 %s144, 1
      %p148 = scmp.eq.s32.totalorder %s21, 7
      %p149 = scmp.ne.s32.totalorder %s144, %s146
      %p150 = scmp.eq.s32.totalorder %s21, 0
      %p151 = por %p149, %p150
      %p152 = scmp.ne.s32.totalorder %s144, %s146
      %p153 = scmp.eq.s32.totalorder %s26, 7
      %p154 = por %p152, %p153
      %p155 = scmp.ne.s32.totalorder %s146, %s147
      %p156 = scmp.eq.s32.totalorder %s26, 0
      %p157 = por %p155, %p156
      %p158 = scmp.ne.s32.totalorder %s146, %s147
      %p159 = scmp.eq.s32.totalorder %s27, 7
      %p160 = por %p158, %p159
      %p162 = scmp.ne.s32.totalorder %s147, %s161
      %p163 = scmp.eq.s32.totalorder %s27, 0
      %p164 = por %p162, %p163
      %s166 = sadd.s32 %s165, 1
      %p169 = scmp.eq.s32.totalorder %s21, 7
      %p170 = scmp.ne.s32.totalorder %s165, %s167
      %p171 = scmp.eq.s32.totalorder %s21, 0
      %p172 = por %p170, %p171
      %p173 = scmp.ne.s32.totalorder %s165, %s167
      %p174 = scmp.eq.s32.totalorder %s26, 7
      %p175 = por %p173, %p174
      %p176 = scmp.ne.s32.totalorder %s167, %s168
      %p177 = scmp.eq.s32.totalorder %s26, 0
      %p178 = por %p176, %p177
      %p179 = scmp.ne.s32.totalorder %s167, %s168
      %p180 = scmp.eq.s32.totalorder %s27, 7
      %p181 = por %p179, %p180
      %p183 = scmp.ne.s32.totalorder %s168, %s182
      %p184 = scmp.eq.s32.totalorder %s27, 0
      %p185 = por %p183, %p184
      %s187 = sadd.s32 %s186, 1
      %p190 = scmp.eq.s32.totalorder %s21, 7
      %p191 = scmp.ne.s32.totalorder %s186, %s188
      %p192 = scmp.eq.s32.totalorder %s21, 0
      %p193 = por %p191, %p192
      %p194 = scmp.ne.s32.totalorder %s186, %s188
      %p195 = scmp.eq.s32.totalorder %s26, 7
      %p196 = por %p194, %p195
      %p197 = scmp.ne.s32.totalorder %s188, %s189
      %p198 = scmp.eq.s32.totalorder %s26, 0
      %p199 = por %p197, %p198
      %p200 = scmp.ne.s32.totalorder %s188, %s189
      %p201 = scmp.eq.s32.totalorder %s27, 7
      %p202 = por %p200, %p201
      %p204 = scmp.ne.s32.totalorder %s189, %s203
      %p205 = scmp.eq.s32.totalorder %s27, 0
      %p206 = por %p204, %p205
      %s208 = sadd.s32 %s207, 1
      %p211 = scmp.eq.s32.totalorder %s21, 7
      %p212 = scmp.ne.s32.totalorder %s207, %s209
      %p213 = scmp.eq.s32.totalorder %s21, 0
      %p214 = por %p212, %p213
      %p215 = scmp.ne.s32.totalorder %s207, %s209
      %p216 = scmp.eq.s32.totalorder %s26, 7
      %p217 = por %p215, %p216
      %p218 = scmp.ne.s32.totalorder %s209, %s210
      %p219 = scmp.eq.s32.totalorder %s26, 0
      %p220 = por %p218, %p219
      %p221 = scmp.ne.s32.totalorder %s209, %s210
      %p222 = scmp.eq.s32.totalorder %s27, 7
      %p223 = por %p221, %p222
      %p225 = scmp.ne.s32.totalorder %s210, %s224
      %p226 = scmp.eq.s32.totalorder %s27, 0
      %p227 = por %p225, %p226
      %s229 = sadd.s32 %s228, 1
      %p232 = scmp.eq.s32.totalorder %s21, 7
      %p233 = scmp.ne.s32.totalorder %s228, %s230
      %p234 = scmp.eq.s32.totalorder %s21, 0
      %p235 = por %p233, %p234
      %p236 = scmp.ne.s32.totalorder %s228, %s230
      %p237 = scmp.eq.s32.totalorder %s26, 7
      %p238 = por %p236, %p237
      %p239 = scmp.ne.s32.totalorder %s230, %s231
      %p240 = scmp.eq.s32.totalorder %s26, 0
      %p241 = por %p239, %p240
      %p242 = scmp.ne.s32.totalorder %s230, %s231
      %p243 = scmp.eq.s32.totalorder %s27, 7
      %p244 = por %p242, %p243
      %p246 = scmp.ne.s32.totalorder %s231, %s245
      %p247 = scmp.eq.s32.totalorder %s27, 0
      %p248 = por %p246, %p247
      %s250 = sadd.s32 %s249, 1
      %p253 = scmp.eq.s32.totalorder %s21, 7
      %p254 = scmp.ne.s32.totalorder %s249, %s251
      %p255 = scmp.eq.s32.totalorder %s21, 0
      %p256 = por %p254, %p255
      %p257 = scmp.ne.s32.totalorder %s249, %s251
      %p258 = scmp.eq.s32.totalorder %s26, 7
      %p259 = por %p257, %p258
      %p260 = scmp.ne.s32.totalorder %s251, %s252
      %p261 = scmp.eq.s32.totalorder %s26, 0
      %p262 = por %p260, %p261
      %p263 = scmp.ne.s32.totalorder %s251, %s252
      %p264 = scmp.eq.s32.totalorder %s27, 7
      %p265 = por %p263, %p264
      %p267 = scmp.ne.s32.totalorder %s252, %s266
      %p268 = scmp.eq.s32.totalorder %s27, 0
      %p269 = por %p267, %p268
      %s271 = sadd.s32 %s270, 1
      %p274 = scmp.eq.s32.totalorder %s21, 7
      %p275 = scmp.ne.s32.totalorder %s270, %s272
      %p276 = scmp.eq.s32.totalorder %s21, 0
      %p277 = por %p275, %p276
      %p278 = scmp.ne.s32.totalorder %s270, %s272
      %p279 = scmp.eq.s32.totalorder %s26, 7
      %p280 = por %p278, %p279
      %p281 = scmp.ne.s32.totalorder %s272, %s273
      %p282 = scmp.eq.s32.totalorder %s26, 0
      %p283 = por %p281, %p282
      %p284 = scmp.ne.s32.totalorder %s272, %s273
      %p285 = scmp.eq.s32.totalorder %s27, 7
      %p286 = por %p284, %p285
      %p288 = scmp.ne.s32.totalorder %s273, %s287
      %p289 = scmp.eq.s32.totalorder %s27, 0
      %p290 = por %p288, %p289
      %s291 = ssub.s32 %s21, %s28
      %p292 = scmp.eq.s32.totalorder %s291, 0
      %s294 = sadd.s32 %s293, 1
      %s295 = scalar_select %p292, %s293, %s294
      %p298 = pneg %p292
      %p299 = scmp.eq.s32.totalorder %s21, 7
      %p300 = por %p298, %p299
      %p301 = scmp.ne.s32.totalorder %s293, %s296
      %p302 = scmp.eq.s32.totalorder %s21, 0
      %p303 = por %p301, %p302
      %p304 = scmp.ne.s32.totalorder %s293, %s296
      %p305 = scmp.eq.s32.totalorder %s26, 7
      %p306 = por %p304, %p305
      %p307 = scmp.ne.s32.totalorder %s296, %s297
      %p308 = scmp.eq.s32.totalorder %s26, 0
      %p309 = por %p307, %p308
      %p310 = scmp.ne.s32.totalorder %s296, %s297
      %p311 = scmp.eq.s32.totalorder %s27, 7
      %p312 = por %p310, %p311
      %p314 = scmp.ne.s32.totalorder %s297, %s313
      %p315 = scmp.eq.s32.totalorder %s27, 0
      %p316 = por %p314, %p315
      %p317 = scmp.le.s32.totalorder 1, %s21
      %p318 = scmp.lt.s32.totalorder %s21, 9
      %p319 = pnand %p317, %p318
      %p320 = pneg %p319
      // Predicated region
      $region9: #{fwd.3} parent=5 // pred_check
        _
      $region10: #{fwd.3} parent=5 // pred_check_branch
        %322 = sbr.rel (%p319) target = $region12
      $region11: #{fwd.3} parent=5 // pred_region
        %s323 = ssub.s32 %s21, 1
        // Predicated region
        $region13: #{fwd.3} parent=11 // pred_check
          %p324 = pneg %p94
        $region14: #{fwd.3} parent=11 // pred_check_branch
          %326 = sbr.rel (%p324) target = $region16
        $region15: #{fwd.3} parent=11 // pred_region
          _
        $region16: #{fwd.3} parent=11 // pred_fallthru
          _
        // Predicated region
        $region17: #{fwd.3} parent=11 // pred_check
          %p327 = pneg %p115
        $region18: #{fwd.3} parent=11 // pred_check_branch
          %329 = sbr.rel (%p327) target = $region20
        $region19: #{fwd.3} parent=11 // pred_region
          _
        $region20: #{fwd.3} parent=11 // pred_fallthru
          _
        // Predicated region
        $region21: #{fwd.3} parent=11 // pred_check
          %p330 = pneg %p136
        $region22: #{fwd.3} parent=11 // pred_check_branch
          %332 = sbr.rel (%p330) target = $region24
        $region23: #{fwd.3} parent=11 // pred_region
          _
        $region24: #{fwd.3} parent=11 // pred_fallthru
          _
        // Predicated region
        $region25: #{fwd.3} parent=11 // pred_check
          %p333 = pneg %p157
        $region26: #{fwd.3} parent=11 // pred_check_branch
          %335 = sbr.rel (%p333) target = $region28
        $region27: #{fwd.3} parent=11 // pred_region
          _
        $region28: #{fwd.3} parent=11 // pred_fallthru
          _
        // Predicated region
        $region29: #{fwd.3} parent=11 // pred_check
          %p336 = pneg %p178
        $region30: #{fwd.3} parent=11 // pred_check_branch
          %338 = sbr.rel (%p336) target = $region32
        $region31: #{fwd.3} parent=11 // pred_region
          _
        $region32: #{fwd.3} parent=11 // pred_fallthru
          _
        // Predicated region
        $region33: #{fwd.3} parent=11 // pred_check
          %p339 = pneg %p199
        $region34: #{fwd.3} parent=11 // pred_check_branch
          %341 = sbr.rel (%p339) target = $region36
        $region35: #{fwd.3} parent=11 // pred_region
          _
        $region36: #{fwd.3} parent=11 // pred_fallthru
          _
        // Predicated region
        $region37: #{fwd.3} parent=11 // pred_check
          %p342 = pneg %p220
        $region38: #{fwd.3} parent=11 // pred_check_branch
          %344 = sbr.rel (%p342) target = $region40
        $region39: #{fwd.3} parent=11 // pred_region
          _
        $region40: #{fwd.3} parent=11 // pred_fallthru
          _
        // Predicated region
        $region41: #{fwd.3} parent=11 // pred_check
          %p345 = pneg %p241
        $region42: #{fwd.3} parent=11 // pred_check_branch
          %347 = sbr.rel (%p345) target = $region44
        $region43: #{fwd.3} parent=11 // pred_region
          _
        $region44: #{fwd.3} parent=11 // pred_fallthru
          _
        // Predicated region
        $region45: #{fwd.3} parent=11 // pred_check
          %p348 = pneg %p262
        $region46: #{fwd.3} parent=11 // pred_check_branch
          %350 = sbr.rel (%p348) target = $region48
        $region47: #{fwd.3} parent=11 // pred_region
          _
        $region48: #{fwd.3} parent=11 // pred_fallthru
          _
        // Predicated region
        $region49: #{fwd.3} parent=11 // pred_check
          %p351 = pneg %p283
        $region50: #{fwd.3} parent=11 // pred_check_branch
          %353 = sbr.rel (%p351) target = $region52
        $region51: #{fwd.3} parent=11 // pred_region
          _
        $region52: #{fwd.3} parent=11 // pred_fallthru
          _
      $region12: #{fwd.3} parent=5 // pred_fallthru
        _
      %p354 = scmp.lt.s32.totalorder %s21, 8
      // Predicated region
      $region53: #{fwd.3} parent=5 // pred_check
        %p355 = pneg %p354
      $region54: #{fwd.3} parent=5 // pred_check_branch
        %357 = sbr.rel (%p355) target = $region56
      $region55: #{fwd.3} parent=5 // pred_region
        // Predicated region
        $region57: #{fwd.3} parent=55 // pred_check
          %p358 = pneg %p41
        $region58: #{fwd.3} parent=55 // pred_check_branch
          %360 = sbr.rel (%p358) target = $region60
        $region59: #{fwd.3} parent=55 // pred_region
          %p361 = scmp.lt.s32.totalorder %s21, 7
          %s362 = scalar_select %p361, %s21, 7
          %s363 = smul.addr %s362, 8
          %s364 = smul.addr %s363, 8
          %s365 = scalar_lea.vmem %s0, %s364
        $region60: #{fwd.3} parent=55 // pred_fallthru
          _
        // Predicated region
        $region61: #{fwd.3} parent=55 // pred_check
          %p366 = pneg %p67
        $region62: #{fwd.3} parent=55 // pred_check_branch
          %368 = sbr.rel (%p366) target = $region64
        $region63: #{fwd.3} parent=55 // pred_region
          %p369 = scmp.lt.s32.totalorder %s21, 7
          %s370 = scalar_select %p369, %s21, 7
          %s371 = scalar_lea.vmem %s1, %s370
        $region64: #{fwd.3} parent=55 // pred_fallthru
          _
      $region56: #{fwd.3} parent=5 // pred_fallthru
        _
      %p372 = scmp.le.s32.totalorder 1, %s21
      %p373 = scmp.lt.s32.totalorder %s21, 9
      %p374 = pnand %p372, %p373
      %p375 = pneg %p374
      // Predicated region
      $region65: #{fwd.3} parent=5 // pred_check
        _
      $region66: #{fwd.3} parent=5 // pred_check_branch
        %377 = sbr.rel (%p374) target = $region68
      $region67: #{fwd.3} parent=5 // pred_region
        %s378 = ssub.s32 %s21, 1
        %p379 = scmp.lt.s32.totalorder %s26, 7
        %s380 = scalar_select %p379, %s26, 7
        %s381 = smul.addr %s380, 8
        %s382 = smul.addr %s381, 8
        %s383 = scalar_lea.vmem %s0, %s382
        %p384 = pneg %p47
        %p385 = pneg %p44
        %p386 = scmp.lt.s32.totalorder %s26, 7
        %s387 = scalar_select %p386, %s26, 7
        %s388 = scalar_lea.vmem %s1, %s387
        %p389 = pneg %p73
        %p390 = pneg %p70
        %p391 = pneg %p94
        %p392 = pneg %p91
        %p393 = pneg %p115
        %p394 = pneg %p112
        %p395 = pneg %p136
        %p396 = pneg %p133
        %p397 = pneg %p157
        %p398 = pneg %p154
        %p399 = pneg %p178
        %p400 = pneg %p175
        %p401 = pneg %p199
        %p402 = pneg %p196
        %p403 = pneg %p220
        %p404 = pneg %p217
        %p405 = pneg %p241
        %p406 = pneg %p238
        %p407 = pneg %p262
        %p408 = pneg %p259
        %p409 = pneg %p283
        %p410 = pneg %p280
        %p411 = pneg %p309
        %p412 = pneg %p306
        %s413 = sand.u32 %s296, 1
        %s414 = scalar_lea.sflag [#allocation3], %s413
        %s415 = sand.u32 %s296, 1
        %s416 = smul.addr %s415, 64
        %s417 = scalar_lea.vmem [#allocation2], %s416
        %p418 = scmp.lt.s32.totalorder %s26, 7
        %s419 = scalar_select %p418, %s26, 7
        %s420 = smul.addr %s419, 8
        %s421 = smul.addr %s420, 8
        %s422 = scalar_lea.vmem %s0, %s421
        %p423 = scmp.lt.s32.totalorder %s26, 7
        %s424 = scalar_select %p423, %s26, 7
        %s425 = scalar_lea.vmem %s1, %s424
        %v427 = vld [vmem:[%s422] sm:$0xff]
        %v428 = vld [vmem:[%s422 + $0x8] sm:$0xff]
        %v429 = vld [vmem:[%s422 + $0x10] sm:$0xff]
        %v430 = vld [vmem:[%s422 + $0x18] sm:$0xff]
        %v431 = vld [vmem:[%s422 + $0x20] sm:$0xff]
        %v432 = vld [vmem:[%s422 + $0x28] sm:$0xff]
        %v433 = vld [vmem:[%s422 + $0x30] sm:$0xff]
        %v434 = vld [vmem:[%s422 + $0x38] sm:$0xff]
        %v435 = vld [vmem:[%s425] sm:$0x1]
        %v436 = vxor.u32 %v435, 2147483648
        %v437 = vmul.f32 %v436, 1.442695
        %v438 = vpow.pop %v437
        %v439 = vadd.f32 %v438, 1.0
        %v440 = vrcp.pop %v439
        %v441 = vmul.f32 1.0, %v440
        %v442 = vmul.f32 %v435, %v441
        %v443 = vpack.c.bf16 %v442, %v442
        %v444 = vld [vmem:[%s2] sm:$0xff]
        %v445 = vld [vmem:[%s2 + $0x8] sm:$0xff]
        %v446 = vld [vmem:[%s2 + $0x10] sm:$0xff]
        %v447 = vld [vmem:[%s2 + $0x18] sm:$0xff]
        %v448 = vld [vmem:[%s2 + $0x20] sm:$0xff]
        %v449 = vld [vmem:[%s2 + $0x28] sm:$0xff]
        %v450 = vld [vmem:[%s2 + $0x30] sm:$0xff]
        %v451 = vld [vmem:[%s2 + $0x38] sm:$0xff]
        %v452 = vld [vmem:[%s2 + $0x40] sm:$0xff]
        %v453 = vld [vmem:[%s2 + $0x48] sm:$0xff]
        %v454 = vld [vmem:[%s2 + $0x50] sm:$0xff]
        %v455 = vld [vmem:[%s2 + $0x58] sm:$0xff]
        %v456 = vld [vmem:[%s2 + $0x60] sm:$0xff]
        %v457 = vld [vmem:[%s2 + $0x68] sm:$0xff]
        %v458 = vld [vmem:[%s2 + $0x70] sm:$0xff]
        %v459 = vld [vmem:[%s2 + $0x78] sm:$0xff]
        %v460 = vld [vmem:[%s2 + $0x80] sm:$0xff]
        %v461 = vld [vmem:[%s2 + $0x88] sm:$0xff]
        %v462 = vld [vmem:[%s2 + $0x90] sm:$0xff]
        %v463 = vld [vmem:[%s2 + $0x98] sm:$0xff]
        %v464 = vld [vmem:[%s2 + $0xa0] sm:$0xff]
        %v465 = vld [vmem:[%s2 + $0xa8] sm:$0xff]
        %v466 = vld [vmem:[%s2 + $0xb0] sm:$0xff]
        %v467 = vld [vmem:[%s2 + $0xb8] sm:$0xff]
        %v468 = vld [vmem:[%s2 + $0xc0] sm:$0xff]
        %v469 = vld [vmem:[%s2 + $0xc8] sm:$0xff]
        %v470 = vld [vmem:[%s2 + $0xd0] sm:$0xff]
        %v471 = vld [vmem:[%s2 + $0xd8] sm:$0xff]
        %v472 = vld [vmem:[%s2 + $0xe0] sm:$0xff]
        %v473 = vld [vmem:[%s2 + $0xe8] sm:$0xff]
        %v474 = vld [vmem:[%s2 + $0xf0] sm:$0xff]
        %v475 = vld [vmem:[%s2 + $0xf8] sm:$0xff]
        %v476 = vld [vmem:[%s2 + $0x100] sm:$0xff]
        %v477 = vld [vmem:[%s2 + $0x108] sm:$0xff]
        %v478 = vld [vmem:[%s2 + $0x110] sm:$0xff]
        %v479 = vld [vmem:[%s2 + $0x118] sm:$0xff]
        %v480 = vld [vmem:[%s2 + $0x120] sm:$0xff]
        %v481 = vld [vmem:[%s2 + $0x128] sm:$0xff]
        %v482 = vld [vmem:[%s2 + $0x130] sm:$0xff]
        %v483 = vld [vmem:[%s2 + $0x138] sm:$0xff]
        %v484 = vld [vmem:[%s2 + $0x140] sm:$0xff]
        %v485 = vld [vmem:[%s2 + $0x148] sm:$0xff]
        %v486 = vld [vmem:[%s2 + $0x150] sm:$0xff]
        %v487 = vld [vmem:[%s2 + $0x158] sm:$0xff]
        %v488 = vld [vmem:[%s2 + $0x160] sm:$0xff]
        %v489 = vld [vmem:[%s2 + $0x168] sm:$0xff]
        %v490 = vld [vmem:[%s2 + $0x170] sm:$0xff]
        %v491 = vld [vmem:[%s2 + $0x178] sm:$0xff]
        %v492 = vld [vmem:[%s3] sm:$0x3f]
        %v541 = vunpack.c.l.b16 %v444
        %v542 = vunpack.c.h.b16 %v444
        %v543 = vunpack.c.l.b16 %v445
        %v544 = vunpack.c.h.b16 %v445
        %v545 = vunpack.c.l.b16 %v446
        %v546 = vunpack.c.h.b16 %v446
        %v547 = vunpack.c.l.b16 %v447
        %v548 = vunpack.c.h.b16 %v447
        %v549 = vunpack.c.l.b16 %v448
        %v550 = vunpack.c.h.b16 %v448
        %v551 = vunpack.c.l.b16 %v449
        %v552 = vunpack.c.h.b16 %v449
        %v553 = vunpack.c.l.b16 %v450
        %v554 = vunpack.c.h.b16 %v450
        %v555 = vunpack.c.l.b16 %v451
        %v556 = vunpack.c.h.b16 %v451
        %v557 = vunpack.c.l.b16 %v452
        %v558 = vunpack.c.h.b16 %v452
        %v559 = vunpack.c.l.b16 %v453
        %v560 = vunpack.c.h.b16 %v453
        %v561 = vunpack.c.l.b16 %v454
        %v562 = vunpack.c.h.b16 %v454
        %v563 = vunpack.c.l.b16 %v455
        %v564 = vunpack.c.h.b16 %v455
        %v565 = vunpack.c.l.b16 %v456
        %v566 = vunpack.c.h.b16 %v456
        %v567 = vunpack.c.l.b16 %v457
        %v568 = vunpack.c.h.b16 %v457
        %v569 = vunpack.c.l.b16 %v458
        %v570 = vunpack.c.h.b16 %v458
        %v571 = vunpack.c.l.b16 %v459
        %v572 = vunpack.c.h.b16 %v459
        %v573 = vunpack.c.l.b16 %v460
        %v574 = vunpack.c.h.b16 %v460
        %v575 = vunpack.c.l.b16 %v461
        %v576 = vunpack.c.h.b16 %v461
        %v577 = vunpack.c.l.b16 %v462
        %v578 = vunpack.c.h.b16 %v462
        %v579 = vunpack.c.l.b16 %v463
        %v580 = vunpack.c.h.b16 %v463
        %v581 = vunpack.c.l.b16 %v464
        %v582 = vunpack.c.h.b16 %v464
        %v583 = vunpack.c.l.b16 %v465
        %v584 = vunpack.c.h.b16 %v465
        %v585 = vunpack.c.l.b16 %v466
        %v586 = vunpack.c.h.b16 %v466
        %v587 = vunpack.c.l.b16 %v467
        %v588 = vunpack.c.h.b16 %v467
        %v589 = vunpack.c.l.b16 %v468
        %v590 = vunpack.c.h.b16 %v468
        %v591 = vunpack.c.l.b16 %v469
        %v592 = vunpack.c.h.b16 %v469
        %v593 = vunpack.c.l.b16 %v470
        %v594 = vunpack.c.h.b16 %v470
        %v595 = vunpack.c.l.b16 %v471
        %v596 = vunpack.c.h.b16 %v471
        %v597 = vunpack.c.l.b16 %v472
        %v598 = vunpack.c.h.b16 %v472
        %v599 = vunpack.c.l.b16 %v473
        %v600 = vunpack.c.h.b16 %v473
        %v601 = vunpack.c.l.b16 %v474
        %v602 = vunpack.c.h.b16 %v474
        %v603 = vunpack.c.l.b16 %v475
        %v604 = vunpack.c.h.b16 %v475
        %v605 = vunpack.c.l.b16 %v476
        %v606 = vunpack.c.h.b16 %v476
        %v607 = vunpack.c.l.b16 %v477
        %v608 = vunpack.c.h.b16 %v477
        %v609 = vunpack.c.l.b16 %v478
        %v610 = vunpack.c.h.b16 %v478
        %v611 = vunpack.c.l.b16 %v479
        %v612 = vunpack.c.h.b16 %v479
        %v613 = vunpack.c.l.b16 %v480
        %v614 = vunpack.c.h.b16 %v480
        %v615 = vunpack.c.l.b16 %v481
        %v616 = vunpack.c.h.b16 %v481
        %v617 = vunpack.c.l.b16 %v482
        %v618 = vunpack.c.h.b16 %v482
        %v619 = vunpack.c.l.b16 %v483
        %v620 = vunpack.c.h.b16 %v483
        %v621 = vunpack.c.l.b16 %v484
        %v622 = vunpack.c.h.b16 %v484
        %v623 = vunpack.c.l.b16 %v485
        %v624 = vunpack.c.h.b16 %v485
        %v625 = vunpack.c.l.b16 %v486
        %v626 = vunpack.c.h.b16 %v486
        %v627 = vunpack.c.l.b16 %v487
        %v628 = vunpack.c.h.b16 %v487
        %v629 = vunpack.c.l.b16 %v488
        %v630 = vunpack.c.h.b16 %v488
        %v631 = vunpack.c.l.b16 %v489
        %v632 = vunpack.c.h.b16 %v489
        %v633 = vunpack.c.l.b16 %v490
        %v634 = vunpack.c.h.b16 %v490
        %v635 = vunpack.c.l.b16 %v491
        %v636 = vunpack.c.h.b16 %v491
        %v637 = vpack.c.b16 %v547, %v541
        %v638 = vpack.c.b16 %v548, %v542
        %v639 = vpack.c.b16 %v549, %v543
        %v640 = vpack.c.b16 %v550, %v544
        %v641 = vpack.c.b16 %v551, %v545
        %v642 = vpack.c.b16 %v552, %v546
        %v643 = vpack.c.b16 %v559, %v553
        %v644 = vpack.c.b16 %v560, %v554
        %v645 = vpack.c.b16 %v561, %v555
        %v646 = vpack.c.b16 %v562, %v556
        %v647 = vpack.c.b16 %v563, %v557
        %v648 = vpack.c.b16 %v564, %v558
        %v649 = vpack.c.b16 %v571, %v565
        %v650 = vpack.c.b16 %v572, %v566
        %v651 = vpack.c.b16 %v573, %v567
        %v652 = vpack.c.b16 %v574, %v568
        %v653 = vpack.c.b16 %v575, %v569
        %v654 = vpack.c.b16 %v576, %v570
        %v655 = vpack.c.b16 %v583, %v577
        %v656 = vpack.c.b16 %v584, %v578
        %v657 = vpack.c.b16 %v585, %v579
        %v658 = vpack.c.b16 %v586, %v580
        %v659 = vpack.c.b16 %v587, %v581
        %v660 = vpack.c.b16 %v588, %v582
        %v661 = vpack.c.b16 %v595, %v589
        %v662 = vpack.c.b16 %v596, %v590
        %v663 = vpack.c.b16 %v597, %v591
        %v664 = vpack.c.b16 %v598, %v592
        %v665 = vpack.c.b16 %v599, %v593
        %v666 = vpack.c.b16 %v600, %v594
        %v667 = vpack.c.b16 %v607, %v601
        %v668 = vpack.c.b16 %v608, %v602
        %v669 = vpack.c.b16 %v609, %v603
        %v670 = vpack.c.b16 %v610, %v604
        %v671 = vpack.c.b16 %v611, %v605
        %v672 = vpack.c.b16 %v612, %v606
        %v673 = vpack.c.b16 %v619, %v613
        %v674 = vpack.c.b16 %v620, %v614
        %v675 = vpack.c.b16 %v621, %v615
        %v676 = vpack.c.b16 %v622, %v616
        %v677 = vpack.c.b16 %v623, %v617
        %v678 = vpack.c.b16 %v624, %v618
        %v679 = vpack.c.b16 %v631, %v625
        %v680 = vpack.c.b16 %v632, %v626
        %v681 = vpack.c.b16 %v633, %v627
        %v682 = vpack.c.b16 %v634, %v628
        %v683 = vpack.c.b16 %v635, %v629
        %v684 = vpack.c.b16 %v636, %v630
        %v734 = vlaneseq
        %v735 = vshrl.u32 %v734, 7
        %v736 = vsub.s32 0, %v735
        %v737 = vrot.slane %v492, %v736
        %v738 = vlaneseq
        %v739 = vshrl.u32 %v738, 7
        %v740 = vsub.s32 1, %v739
        %v741 = vrot.slane %v492, %v740
        %v742 = vlaneseq
        %v743 = vshrl.u32 %v742, 7
        %v744 = vsub.s32 2, %v743
        %v745 = vrot.slane %v492, %v744
        %v746 = vlaneseq
        %v747 = vshrl.u32 %v746, 7
        %v748 = vsub.s32 3, %v747
        %v749 = vrot.slane %v492, %v748
        %v750 = vlaneseq
        %v751 = vshrl.u32 %v750, 7
        %v752 = vsub.s32 4, %v751
        %v753 = vrot.slane %v492, %v752
        %v754 = vlaneseq
        %v755 = vshrl.u32 %v754, 7
        %v756 = vsub.s32 5, %v755
        %v757 = vrot.slane %v492, %v756
        %764 = vmatprep.subr.bf16.mxu0 %v638
        %765 = vmatpush1.bf16.msra.mxu0 %v637
        %766 = vmatprep.subr.bf16.mxu0 %v644
        %767 = vmatpush1.bf16.msra.mxu0 %v643
        %768 = vmatprep.subr.bf16.mxu0 %v650
        %769 = vmatpush1.bf16.msra.mxu0 %v649
        %770 = vmatprep.subr.bf16.mxu0 %v656
        %771 = vmatpush1.bf16.msra.mxu0 %v655
        %772 = vmatprep.subr.bf16.mxu0 %v662
        %773 = vmatpush1.bf16.msra.mxu0 %v661
        %774 = vmatprep.subr.bf16.mxu0 %v668
        %775 = vmatpush1.bf16.msra.mxu0 %v667
        %776 = vmatprep.subr.bf16.mxu0 %v674
        %777 = vmatpush1.bf16.msra.mxu0 %v673
        %778 = vmatprep.subr.bf16.mxu0 %v680
        %779 = vmatpush1.bf16.msra.mxu0 %v679
        %780 = vmatprep.subr.bf16.mxu0 0
        %781 = vmatpush1.bf16.msra.mxu0 0
        %782 = vmatprep.subr.bf16.mxu0 0
        %783 = vmatpush1.bf16.msra.mxu0 0
        %784 = vmatprep.subr.bf16.mxu0 0
        %785 = vmatpush1.bf16.msra.mxu0 0
        %786 = vmatprep.subr.bf16.mxu0 0
        %787 = vmatpush1.bf16.msra.mxu0 0
        %788 = vmatprep.subr.bf16.mxu0 0
        %789 = vmatpush1.bf16.msra.mxu0 0
        %790 = vmatprep.subr.bf16.mxu0 0
        %791 = vmatpush1.bf16.msra.mxu0 0
        %792 = vmatprep.subr.bf16.mxu0 0
        %793 = vmatpush1.bf16.msra.mxu0 0
        %794 = vmatprep.subr.bf16.mxu0 0
        %795 = vmatpush1.bf16.msra.mxu0 0
        %796 = vmatprep.mubr.bf16.mxu0 0
        %797 = vmatmul.mubr.bf16.gmra.mrb[0].mxu0 %v443
        %v798 = vpop.f32.mrb[0].mxu0
        %v799 = vadd.f32 %v737, %v798
        %v800 = vpop.f32.mrb[0].mxu0
        %v801 = vadd.f32 %v741, %v800
        %v802 = vpop.f32.mrb[0].mxu0
        %v803 = vpop.f32.mrb[0].mxu0
        %804 = vdwg.mxu0
        %805 = vmatprep.subr.bf16.mxu0 %v640
        %806 = vmatpush1.bf16.msra.mxu0 %v639
        %807 = vmatprep.subr.bf16.mxu0 %v646
        %808 = vmatpush1.bf16.msra.mxu0 %v645
        %809 = vmatprep.subr.bf16.mxu0 %v652
        %810 = vmatpush1.bf16.msra.mxu0 %v651
        %811 = vmatprep.subr.bf16.mxu0 %v658
        %812 = vmatpush1.bf16.msra.mxu0 %v657
        %813 = vmatprep.subr.bf16.mxu0 %v664
        %814 = vmatpush1.bf16.msra.mxu0 %v663
        %815 = vmatprep.subr.bf16.mxu0 %v670
        %816 = vmatpush1.bf16.msra.mxu0 %v669
        %817 = vmatprep.subr.bf16.mxu0 %v676
        %818 = vmatpush1.bf16.msra.mxu0 %v675
        %819 = vmatprep.subr.bf16.mxu0 %v682
        %820 = vmatpush1.bf16.msra.mxu0 %v681
        %821 = vmatprep.subr.bf16.mxu0 0
        %822 = vmatpush1.bf16.msra.mxu0 0
        %823 = vmatprep.subr.bf16.mxu0 0
        %824 = vmatpush1.bf16.msra.mxu0 0
        %825 = vmatprep.subr.bf16.mxu0 0
        %826 = vmatpush1.bf16.msra.mxu0 0
        %827 = vmatprep.subr.bf16.mxu0 0
        %828 = vmatpush1.bf16.msra.mxu0 0
        %829 = vmatprep.subr.bf16.mxu0 0
        %830 = vmatpush1.bf16.msra.mxu0 0
        %831 = vmatprep.subr.bf16.mxu0 0
        %832 = vmatpush1.bf16.msra.mxu0 0
        %833 = vmatprep.subr.bf16.mxu0 0
        %834 = vmatpush1.bf16.msra.mxu0 0
        %835 = vmatprep.subr.bf16.mxu0 0
        %836 = vmatpush1.bf16.msra.mxu0 0
        %837 = vmatprep.mubr.bf16.mxu0 0
        %838 = vmatmul.mubr.bf16.gmra.mrb[0].mxu0 %v443
        %v839 = vpop.f32.mrb[0].mxu0
        %v840 = vadd.f32 %v745, %v839
        %v841 = vpop.f32.mrb[0].mxu0
        %v842 = vadd.f32 %v749, %v841
        %v843 = vpop.f32.mrb[0].mxu0
        %v844 = vpop.f32.mrb[0].mxu0
        %845 = vdwg.mxu0
        %846 = vmatprep.subr.bf16.mxu0 %v642
        %847 = vmatpush1.bf16.msra.mxu0 %v641
        %848 = vmatprep.subr.bf16.mxu0 %v648
        %849 = vmatpush1.bf16.msra.mxu0 %v647
        %850 = vmatprep.subr.bf16.mxu0 %v654
        %851 = vmatpush1.bf16.msra.mxu0 %v653
        %852 = vmatprep.subr.bf16.mxu0 %v660
        %853 = vmatpush1.bf16.msra.mxu0 %v659
        %854 = vmatprep.subr.bf16.mxu0 %v666
        %855 = vmatpush1.bf16.msra.mxu0 %v665
        %856 = vmatprep.subr.bf16.mxu0 %v672
        %857 = vmatpush1.bf16.msra.mxu0 %v671
        %858 = vmatprep.subr.bf16.mxu0 %v678
        %859 = vmatpush1.bf16.msra.mxu0 %v677
        %860 = vmatprep.subr.bf16.mxu0 %v684
        %861 = vmatpush1.bf16.msra.mxu0 %v683
        %862 = vmatprep.subr.bf16.mxu0 0
        %863 = vmatpush1.bf16.msra.mxu0 0
        %864 = vmatprep.subr.bf16.mxu0 0
        %865 = vmatpush1.bf16.msra.mxu0 0
        %866 = vmatprep.subr.bf16.mxu0 0
        %867 = vmatpush1.bf16.msra.mxu0 0
        %868 = vmatprep.subr.bf16.mxu0 0
        %869 = vmatpush1.bf16.msra.mxu0 0
        %870 = vmatprep.subr.bf16.mxu0 0
        %871 = vmatpush1.bf16.msra.mxu0 0
        %872 = vmatprep.subr.bf16.mxu0 0
        %873 = vmatpush1.bf16.msra.mxu0 0
        %874 = vmatprep.subr.bf16.mxu0 0
        %875 = vmatpush1.bf16.msra.mxu0 0
        %876 = vmatprep.subr.bf16.mxu0 0
        %877 = vmatpush1.bf16.msra.mxu0 0
        %878 = vmatprep.mubr.bf16.mxu0 0
        %879 = vmatmul.mubr.bf16.gmra.mrb[0].mxu0 %v443
        %v880 = vpop.f32.mrb[0].mxu0
        %v881 = vadd.f32 %v753, %v880
        %v882 = vpop.f32.mrb[0].mxu0
        %v883 = vadd.f32 %v757, %v882
        %v884 = vpop.f32.mrb[0].mxu0
        %v885 = vpop.f32.mrb[0].mxu0
        %886 = vdwg.mxu0
        %887 = vadd.xlane.f32.xlu0 %v427
        %v888 = vpop.xlane.xlu0 %887
        %889 = vadd.xlane.f32.xlu0 %v428
        %v890 = vpop.xlane.xlu0 %889
        %891 = vadd.xlane.f32.xlu0 %v429
        %v892 = vpop.xlane.xlu0 %891
        %893 = vadd.xlane.f32.xlu0 %v430
        %v894 = vpop.xlane.xlu0 %893
        %895 = vadd.xlane.f32.xlu0 %v431
        %v896 = vpop.xlane.xlu0 %895
        %897 = vadd.xlane.f32.xlu0 %v432
        %v898 = vpop.xlane.xlu0 %897
        %899 = vadd.xlane.f32.xlu0 %v433
        %v900 = vpop.xlane.xlu0 %899
        %901 = vadd.xlane.f32.xlu0 %v434
        %v902 = vpop.xlane.xlu0 %901
        %v903 = vrcp.pop 128.0
        %v904 = vmul.f32 %v888, %v903
        %v905 = vmul.f32 %v890, %v903
        %v906 = vmul.f32 %v892, %v903
        %v907 = vmul.f32 %v894, %v903
        %v908 = vmul.f32 %v896, %v903
        %v909 = vmul.f32 %v898, %v903
        %v910 = vmul.f32 %v900, %v903
        %v911 = vmul.f32 %v902, %v903
        %v912 = vsub.f32 %v427, %v904
        %v913 = vsub.f32 %v428, %v905
        %v914 = vsub.f32 %v429, %v906
        %v915 = vsub.f32 %v430, %v907
        %v916 = vsub.f32 %v431, %v908
        %v917 = vsub.f32 %v432, %v909
        %v918 = vsub.f32 %v433, %v910
        %v919 = vsub.f32 %v434, %v911
        %v920 = vmul.f32 %v912, %v912
        %v921 = vmul.f32 %v913, %v913
        %v922 = vmul.f32 %v914, %v914
        %v923 = vmul.f32 %v915, %v915
        %v924 = vmul.f32 %v916, %v916
        %v925 = vmul.f32 %v917, %v917
        %v926 = vmul.f32 %v918, %v918
        %v927 = vmul.f32 %v919, %v919
        %928 = vadd.xlane.f32.xlu0 %v920
        %v929 = vpop.xlane.xlu0 %928
        %930 = vadd.xlane.f32.xlu0 %v921
        %v931 = vpop.xlane.xlu0 %930
        %932 = vadd.xlane.f32.xlu0 %v922
        %v933 = vpop.xlane.xlu0 %932
        %934 = vadd.xlane.f32.xlu0 %v923
        %v935 = vpop.xlane.xlu0 %934
        %936 = vadd.xlane.f32.xlu0 %v924
        %v937 = vpop.xlane.xlu0 %936
        %938 = vadd.xlane.f32.xlu0 %v925
        %v939 = vpop.xlane.xlu0 %938
        %940 = vadd.xlane.f32.xlu0 %v926
        %v941 = vpop.xlane.xlu0 %940
        %942 = vadd.xlane.f32.xlu0 %v927
        %v943 = vpop.xlane.xlu0 %942
        %v944 = vmul.f32 %v929, %v903
        %v945 = vmul.f32 %v931, %v903
        %v946 = vmul.f32 %v933, %v903
        %v947 = vmul.f32 %v935, %v903
        %v948 = vmul.f32 %v937, %v903
        %v949 = vmul.f32 %v939, %v903
        %v950 = vmul.f32 %v941, %v903
        %v951 = vmul.f32 %v943, %v903
        %v952 = vadd.f32 %v944, 1e-06
        %v953 = vadd.f32 %v945, 1e-06
        %v954 = vadd.f32 %v946, 1e-06
        %v955 = vadd.f32 %v947, 1e-06
        %v956 = vadd.f32 %v948, 1e-06
        %v957 = vadd.f32 %v949, 1e-06
        %v958 = vadd.f32 %v950, 1e-06
        %v959 = vadd.f32 %v951, 1e-06
        %v960 = vrsqrt.pop %v952
        %v961 = vrsqrt.pop %v953
        %v962 = vrsqrt.pop %v954
        %v963 = vrsqrt.pop %v955
        %v964 = vrsqrt.pop %v956
        %v965 = vrsqrt.pop %v957
        %v966 = vrsqrt.pop %v958
        %v967 = vrsqrt.pop %v959
        %v968 = vmul.f32 %v912, %v960
        %v969 = vmul.f32 %v913, %v961
        %v970 = vmul.f32 %v914, %v962
        %v971 = vmul.f32 %v915, %v963
        %v972 = vmul.f32 %v916, %v964
        %v973 = vmul.f32 %v917, %v965
        %v974 = vmul.f32 %v918, %v966
        %v975 = vmul.f32 %v919, %v967
        %v976 = vadd.f32 %v801, 1.0
        %v977 = vlaneseq
        %v978 = vshrl.u32 %v977, 7
        %v979 = vsub.s32 0, %v978
        %v980 = vrot.slane %v976, %v979
        %v981 = vmul.f32 %v968, %v980
        %v982 = vmul.f32 %v969, %v980
        %v983 = vmul.f32 %v970, %v980
        %v984 = vmul.f32 %v971, %v980
        %v985 = vmul.f32 %v972, %v980
        %v986 = vmul.f32 %v973, %v980
        %v987 = vmul.f32 %v974, %v980
        %v988 = vmul.f32 %v975, %v980
        %v989 = vlaneseq
        %v990 = vshrl.u32 %v989, 7
        %v991 = vsub.s32 0, %v990
        %v992 = vrot.slane %v799, %v991
        %v993 = vadd.f32 %v981, %v992
        %v994 = vadd.f32 %v982, %v992
        %v995 = vadd.f32 %v983, %v992
        %v996 = vadd.f32 %v984, %v992
        %v997 = vadd.f32 %v985, %v992
        %v998 = vadd.f32 %v986, %v992
        %v999 = vadd.f32 %v987, %v992
        %v1000 = vadd.f32 %v988, %v992
        %v1001 = vpack.c.bf16 %v994, %v993
        %v1002 = vpack.c.bf16 %v996, %v995
        %v1003 = vpack.c.bf16 %v998, %v997
        %v1004 = vpack.c.bf16 %v1000, %v999
        %v1005 = vld [vmem:[%s4] sm:$0xff]
        %v1006 = vld [vmem:[%s4 + $0x8] sm:$0xf]
        %v1007 = vld [vmem:[%s4 + $0xc] sm:$0xff]
        %v1008 = vld [vmem:[%s4 + $0x14] sm:$0xf]
        %v1009 = vld [vmem:[%s4 + $0x18] sm:$0xff]
        %v1010 = vld [vmem:[%s4 + $0x20] sm:$0xf]
        %v1011 = vld [vmem:[%s4 + $0x24] sm:$0xff]
        %v1012 = vld [vmem:[%s4 + $0x2c] sm:$0xf]
        %v1013 = vld [vmem:[%s4 + $0x30] sm:$0xff]
        %v1014 = vld [vmem:[%s4 + $0x38] sm:$0xf]
        %v1015 = vld [vmem:[%s4 + $0x3c] sm:$0xff]
        %v1016 = vld [vmem:[%s4 + $0x44] sm:$0xf]
        %v1017 = vld [vmem:[%s4 + $0x48] sm:$0xff]
        %v1018 = vld [vmem:[%s4 + $0x50] sm:$0xf]
        %v1019 = vld [vmem:[%s4 + $0x54] sm:$0xff]
        %v1020 = vld [vmem:[%s4 + $0x5c] sm:$0xf]
        %v1021 = vld [vmem:[%s4 + $0x60] sm:$0xff]
        %v1022 = vld [vmem:[%s4 + $0x68] sm:$0xf]
        %v1023 = vld [vmem:[%s4 + $0x6c] sm:$0xff]
        %v1024 = vld [vmem:[%s4 + $0x74] sm:$0xf]
        %v1025 = vld [vmem:[%s4 + $0x78] sm:$0xff]
        %v1026 = vld [vmem:[%s4 + $0x80] sm:$0xf]
        %v1027 = vld [vmem:[%s4 + $0x84] sm:$0xff]
        %v1028 = vld [vmem:[%s4 + $0x8c] sm:$0xf]
        %v1029 = vld [vmem:[%s4 + $0x90] sm:$0xff]
        %v1030 = vld [vmem:[%s4 + $0x98] sm:$0xf]
        %v1031 = vld [vmem:[%s4 + $0x9c] sm:$0xff]
        %v1032 = vld [vmem:[%s4 + $0xa4] sm:$0xf]
        %v1033 = vld [vmem:[%s4 + $0xa8] sm:$0xff]
        %v1034 = vld [vmem:[%s4 + $0xb0] sm:$0xf]
        %v1035 = vld [vmem:[%s4 + $0xb4] sm:$0xff]
        %v1036 = vld [vmem:[%s4 + $0xbc] sm:$0xf]
        %v1037 = vld [vmem:[%s5] sm:$0x7]
        %v1039 = vlaneseq
        %v1040 = vshrl.u32 %v1039, 7
        %v1041 = vsub.s32 0, %v1040
        %v1042 = vrot.slane %v1037, %v1041
        %v1043 = vlaneseq
        %v1044 = vshrl.u32 %v1043, 7
        %v1045 = vsub.s32 1, %v1044
        %v1046 = vrot.slane %v1037, %v1045
        %v1047 = vlaneseq
        %v1048 = vshrl.u32 %v1047, 7
        %v1049 = vsub.s32 2, %v1048
        %v1050 = vrot.slane %v1037, %v1049
        %v1086 = vunpack.c.l.b16 %v1005
        %v1087 = vunpack.c.h.b16 %v1005
        %v1088 = vunpack.c.l.b16 %v1006
        %v1089 = vunpack.c.l.b16 %v1007
        %v1090 = vunpack.c.h.b16 %v1007
        %v1091 = vunpack.c.l.b16 %v1008
        %v1092 = vunpack.c.l.b16 %v1009
        %v1093 = vunpack.c.h.b16 %v1009
        %v1094 = vunpack.c.l.b16 %v1010
        %v1095 = vunpack.c.l.b16 %v1011
        %v1096 = vunpack.c.h.b16 %v1011
        %v1097 = vunpack.c.l.b16 %v1012
        %v1098 = vunpack.c.l.b16 %v1013
        %v1099 = vunpack.c.h.b16 %v1013
        %v1100 = vunpack.c.l.b16 %v1014
        %v1101 = vunpack.c.l.b16 %v1015
        %v1102 = vunpack.c.h.b16 %v1015
        %v1103 = vunpack.c.l.b16 %v1016
        %v1104 = vunpack.c.l.b16 %v1017
        %v1105 = vunpack.c.h.b16 %v1017
        %v1106 = vunpack.c.l.b16 %v1018
        %v1107 = vunpack.c.l.b16 %v1019
        %v1108 = vunpack.c.h.b16 %v1019
        %v1109 = vunpack.c.l.b16 %v1020
        %v1110 = vunpack.c.l.b16 %v1021
        %v1111 = vunpack.c.h.b16 %v1021
        %v1112 = vunpack.c.l.b16 %v1022
        %v1113 = vunpack.c.l.b16 %v1023
        %v1114 = vunpack.c.h.b16 %v1023
        %v1115 = vunpack.c.l.b16 %v1024
        %v1116 = vunpack.c.l.b16 %v1025
        %v1117 = vunpack.c.h.b16 %v1025
        %v1118 = vunpack.c.l.b16 %v1026
        %v1119 = vunpack.c.l.b16 %v1027
        %v1120 = vunpack.c.h.b16 %v1027
        %v1121 = vunpack.c.l.b16 %v1028
        %v1122 = vunpack.c.l.b16 %v1029
        %v1123 = vunpack.c.h.b16 %v1029
        %v1124 = vunpack.c.l.b16 %v1030
        %v1125 = vunpack.c.l.b16 %v1031
        %v1126 = vunpack.c.h.b16 %v1031
        %v1127 = vunpack.c.l.b16 %v1032
        %v1128 = vunpack.c.l.b16 %v1033
        %v1129 = vunpack.c.h.b16 %v1033
        %v1130 = vunpack.c.l.b16 %v1034
        %v1131 = vunpack.c.l.b16 %v1035
        %v1132 = vunpack.c.h.b16 %v1035
        %v1133 = vunpack.c.l.b16 %v1036
        %v1134 = vpack.c.b16 %v1089, %v1086
        %v1135 = vpack.c.b16 %v1090, %v1087
        %v1136 = vpack.c.b16 %v1091, %v1088
        %v1137 = vpack.c.b16 %v1095, %v1092
        %v1138 = vpack.c.b16 %v1096, %v1093
        %v1139 = vpack.c.b16 %v1097, %v1094
        %v1140 = vpack.c.b16 %v1101, %v1098
        %v1141 = vpack.c.b16 %v1102, %v1099
        %v1142 = vpack.c.b16 %v1103, %v1100
        %v1143 = vpack.c.b16 %v1107, %v1104
        %v1144 = vpack.c.b16 %v1108, %v1105
        %v1145 = vpack.c.b16 %v1109, %v1106
        %v1146 = vpack.c.b16 %v1113, %v1110
        %v1147 = vpack.c.b16 %v1114, %v1111
        %v1148 = vpack.c.b16 %v1115, %v1112
        %v1149 = vpack.c.b16 %v1119, %v1116
        %v1150 = vpack.c.b16 %v1120, %v1117
        %v1151 = vpack.c.b16 %v1121, %v1118
        %v1152 = vpack.c.b16 %v1125, %v1122
        %v1153 = vpack.c.b16 %v1126, %v1123
        %v1154 = vpack.c.b16 %v1127, %v1124
        %v1155 = vpack.c.b16 %v1131, %v1128
        %v1156 = vpack.c.b16 %v1132, %v1129
        %v1157 = vpack.c.b16 %v1133, %v1130
        %1182 = vmatprep.subr.bf16.mxu0 %v1135
        %1183 = vmatpush1.bf16.msra.mxu0 %v1134
        %1184 = vmatprep.subr.bf16.mxu0 %v1138
        %1185 = vmatpush1.bf16.msra.mxu0 %v1137
        %1186 = vmatprep.subr.bf16.mxu0 %v1141
        %1187 = vmatpush1.bf16.msra.mxu0 %v1140
        %1188 = vmatprep.subr.bf16.mxu0 %v1144
        %1189 = vmatpush1.bf16.msra.mxu0 %v1143
        %1190 = vmatprep.subr.bf16.mxu0 %v1147
        %1191 = vmatpush1.bf16.msra.mxu0 %v1146
        %1192 = vmatprep.subr.bf16.mxu0 %v1150
        %1193 = vmatpush1.bf16.msra.mxu0 %v1149
        %1194 = vmatprep.subr.bf16.mxu0 %v1153
        %1195 = vmatpush1.bf16.msra.mxu0 %v1152
        %1196 = vmatprep.subr.bf16.mxu0 %v1156
        %1197 = vmatpush1.bf16.msra.mxu0 %v1155
        %1198 = vmatprep.subr.bf16.mxu0 0
        %1199 = vmatpush1.bf16.msra.mxu0 0
        %1200 = vmatprep.subr.bf16.mxu0 0
        %1201 = vmatpush1.bf16.msra.mxu0 0
        %1202 = vmatprep.subr.bf16.mxu0 0
        %1203 = vmatpush1.bf16.msra.mxu0 0
        %1204 = vmatprep.subr.bf16.mxu0 0
        %1205 = vmatpush1.bf16.msra.mxu0 0
        %1206 = vmatprep.subr.bf16.mxu0 0
        %1207 = vmatpush1.bf16.msra.mxu0 0
        %1208 = vmatprep.subr.bf16.mxu0 0
        %1209 = vmatpush1.bf16.msra.mxu0 0
        %1210 = vmatprep.subr.bf16.mxu0 0
        %1211 = vmatpush1.bf16.msra.mxu0 0
        %1212 = vmatprep.subr.bf16.mxu0 0
        %1213 = vmatpush1.bf16.msra.mxu0 0
        %1214 = vmatprep.mubr.bf16.mxu0 0
        %1215 = vmatmul.mubr.bf16.gmra.mrb[0].mxu0 %v1001
        %v1216 = vpop.f32.mrb[0].mxu0
        %v1217 = vadd.f32 %v1042, %v1216
        %v1218 = vpop.f32.mrb[0].mxu0
        %v1219 = vadd.f32 %v1046, %v1218
        %v1220 = vpop.f32.mrb[0].mxu0
        %v1221 = vadd.f32 %v1042, %v1220
        %v1222 = vpop.f32.mrb[0].mxu0
        %v1223 = vadd.f32 %v1046, %v1222
        %1224 = vmatprep.mubr.bf16.mxu0 0
        %1225 = vmatmul.mubr.bf16.gmra.mrb[0].mxu0 %v1002
        %v1226 = vpop.f32.mrb[0].mxu0
        %v1227 = vadd.f32 %v1042, %v1226
        %v1228 = vpop.f32.mrb[0].mxu0
        %v1229 = vadd.f32 %v1046, %v1228
        %v1230 = vpop.f32.mrb[0].mxu0
        %v1231 = vadd.f32 %v1042, %v1230
        %v1232 = vpop.f32.mrb[0].mxu0
        %v1233 = vadd.f32 %v1046, %v1232
        %1234 = vmatprep.mubr.bf16.mxu0 0
        %1235 = vmatmul.mubr.bf16.gmra.mrb[0].mxu0 %v1003
        %v1236 = vpop.f32.mrb[0].mxu0
        %v1237 = vadd.f32 %v1042, %v1236
        %v1238 = vpop.f32.mrb[0].mxu0
        %v1239 = vadd.f32 %v1046, %v1238
        %v1240 = vpop.f32.mrb[0].mxu0
        %v1241 = vadd.f32 %v1042, %v1240
        %v1242 = vpop.f32.mrb[0].mxu0
        %v1243 = vadd.f32 %v1046, %v1242
        %1244 = vmatprep.mubr.bf16.mxu0 0
        %1245 = vmatmul.mubr.bf16.gmra.mrb[0].mxu0 %v1004
        %v1246 = vpop.f32.mrb[0].mxu0
        %v1247 = vadd.f32 %v1042, %v1246
        %v1248 = vpop.f32.mrb[0].mxu0
        %v1249 = vadd.f32 %v1046, %v1248
        %v1250 = vpop.f32.mrb[0].mxu0
        %v1251 = vadd.f32 %v1042, %v1250
        %v1252 = vpop.f32.mrb[0].mxu0
        %v1253 = vadd.f32 %v1046, %v1252
        %1254 = vdwg.mxu0
        %1255 = vmatprep.subr.bf16.mxu0 0
        %1256 = vmatpush1.bf16.msra.mxu0 %v1136
        %1257 = vmatprep.subr.bf16.mxu0 0
        %1258 = vmatpush1.bf16.msra.mxu0 %v1139
        %1259 = vmatprep.subr.bf16.mxu0 0
        %1260 = vmatpush1.bf16.msra.mxu0 %v1142
        %1261 = vmatprep.subr.bf16.mxu0 0
        %1262 = vmatpush1.bf16.msra.mxu0 %v1145
        %1263 = vmatprep.subr.bf16.mxu0 0
        %1264 = vmatpush1.bf16.msra.mxu0 %v1148
        %1265 = vmatprep.subr.bf16.mxu0 0
        %1266 = vmatpush1.bf16.msra.mxu0 %v1151
        %1267 = vmatprep.subr.bf16.mxu0 0
        %1268 = vmatpush1.bf16.msra.mxu0 %v1154
        %1269 = vmatprep.subr.bf16.mxu0 0
        %1270 = vmatpush1.bf16.msra.mxu0 %v1157
        %1271 = vmatprep.subr.bf16.mxu0 0
        %1272 = vmatpush1.bf16.msra.mxu0 0
        %1273 = vmatprep.subr.bf16.mxu0 0
        %1274 = vmatpush1.bf16.msra.mxu0 0
        %1275 = vmatprep.subr.bf16.mxu0 0
        %1276 = vmatpush1.bf16.msra.mxu0 0
        %1277 = vmatprep.subr.bf16.mxu0 0
        %1278 = vmatpush1.bf16.msra.mxu0 0
        %1279 = vmatprep.subr.bf16.mxu0 0
        %1280 = vmatpush1.bf16.msra.mxu0 0
        %1281 = vmatprep.subr.bf16.mxu0 0
        %1282 = vmatpush1.bf16.msra.mxu0 0
        %1283 = vmatprep.subr.bf16.mxu0 0
        %1284 = vmatpush1.bf16.msra.mxu0 0
        %1285 = vmatprep.subr.bf16.mxu0 0
        %1286 = vmatpush1.bf16.msra.mxu0 0
        %1287 = vmatprep.mubr.bf16.mxu0 0
        %1288 = vmatmul.mubr.bf16.gmra.mrb[0].mxu0 %v1001
        %v1289 = vpop.f32.mrb[0].mxu0
        %v1290 = vadd.f32 %v1050, %v1289
        %v1291 = vpop.f32.mrb[0].mxu0
        %v1292 = vpop.f32.mrb[0].mxu0
        %v1293 = vadd.f32 %v1050, %v1292
        %v1294 = vpop.f32.mrb[0].mxu0
        %1295 = vmatprep.mubr.bf16.mxu0 0
        %1296 = vmatmul.mubr.bf16.gmra.mrb[0].mxu0 %v1002
        %v1297 = vpop.f32.mrb[0].mxu0
        %v1298 = vadd.f32 %v1050, %v1297
        %v1299 = vpop.f32.mrb[0].mxu0
        %v1300 = vpop.f32.mrb[0].mxu0
        %v1301 = vadd.f32 %v1050, %v1300
        %v1302 = vpop.f32.mrb[0].mxu0
        %1303 = vmatprep.mubr.bf16.mxu0 0
        %1304 = vmatmul.mubr.bf16.gmra.mrb[0].mxu0 %v1003
        %v1305 = vpop.f32.mrb[0].mxu0
        %v1306 = vadd.f32 %v1050, %v1305
        %v1307 = vpop.f32.mrb[0].mxu0
        %v1308 = vpop.f32.mrb[0].mxu0
        %v1309 = vadd.f32 %v1050, %v1308
        %v1310 = vpop.f32.mrb[0].mxu0
        %1311 = vmatprep.mubr.bf16.mxu0 0
        %1312 = vmatmul.mubr.bf16.gmra.mrb[0].mxu0 %v1004
        %v1313 = vpop.f32.mrb[0].mxu0
        %v1314 = vadd.f32 %v1050, %v1313
        %v1315 = vpop.f32.mrb[0].mxu0
        %v1316 = vpop.f32.mrb[0].mxu0
        %v1317 = vadd.f32 %v1050, %v1316
        %v1318 = vpop.f32.mrb[0].mxu0
        %1319 = vdwg.mxu0
        %v1320 = vpack.c.bf16 %v1221, %v1217
        %v1321 = vpack.c.bf16 %v1231, %v1227
        %v1322 = vpack.c.bf16 %v1241, %v1237
        %v1323 = vpack.c.bf16 %v1251, %v1247
        %v1324 = vpack.c.bf16 %v1223, %v1219
        %v1325 = vpack.c.bf16 %v1233, %v1229
        %v1326 = vpack.c.bf16 %v1243, %v1239
        %v1327 = vpack.c.bf16 %v1253, %v1249
        %v1328 = vpack.c.bf16 %v1293, %v1290
        %v1329 = vpack.c.bf16 %v1301, %v1298
        %v1330 = vpack.c.bf16 %v1309, %v1306
        %v1331 = vpack.c.bf16 %v1317, %v1314
        %vm1332 = vcmask 261120
        %v1334 = vsel %vm1332, %v1320, 0
        %v1337 = vsel %vm1332, %v1321, 0
        %v1340 = vsel %vm1332, %v1322, 0
        %v1343 = vsel %vm1332, %v1323, 0
        %v1346 = vsel %vm1332, %v1324, 0
        %v1349 = vsel %vm1332, %v1325, 0
        %v1352 = vsel %vm1332, %v1326, 0
        %v1355 = vsel %vm1332, %v1327, 0
        %1357 = vmatprep.subr.bf16.mxu0 0
        %1358 = vmatpush1.bf16.xpose.msra.mxu0 %v1346
        %1359 = vmatprep.subr.bf16.mxu0 0
        %1360 = vmatpush1.bf16.xpose.msra.mxu0 %v1349
        %1361 = vmatprep.subr.bf16.mxu0 0
        %1362 = vmatpush1.bf16.xpose.msra.mxu0 %v1352
        %1363 = vmatprep.subr.bf16.mxu0 0
        %1364 = vmatpush1.bf16.xpose.msra.mxu0 %v1355
        %1365 = vmatprep.subr.bf16.mxu0 0
        %1366 = vmatpush1.bf16.xpose.msra.mxu0 0
        %1367 = vmatprep.subr.bf16.mxu0 0
        %1368 = vmatpush1.bf16.xpose.msra.mxu0 0
        %1369 = vmatprep.subr.bf16.mxu0 0
        %1370 = vmatpush1.bf16.xpose.msra.mxu0 0
        %1371 = vmatprep.subr.bf16.mxu0 0
        %1372 = vmatpush1.bf16.xpose.msra.mxu0 0
        %1373 = vmatprep.subr.bf16.mxu0 0
        %1374 = vmatpush1.bf16.xpose.msra.mxu0 0
        %1375 = vmatprep.subr.bf16.mxu0 0
        %1376 = vmatpush1.bf16.xpose.msra.mxu0 0
        %1377 = vmatprep.subr.bf16.mxu0 0
        %1378 = vmatpush1.bf16.xpose.msra.mxu0 0
        %1379 = vmatprep.subr.bf16.mxu0 0
        %1380 = vmatpush1.bf16.xpose.msra.mxu0 0
        %1381 = vmatprep.subr.bf16.mxu0 0
        %1382 = vmatpush1.bf16.xpose.msra.mxu0 0
        %1383 = vmatprep.subr.bf16.mxu0 0
        %1384 = vmatpush1.bf16.xpose.msra.mxu0 0
        %1385 = vmatprep.subr.bf16.mxu0 0
        %1386 = vmatpush1.bf16.xpose.msra.mxu0 0
        %1387 = vmatprep.subr.bf16.mxu0 0
        %1388 = vmatpush1.bf16.xpose.msra.mxu0 0
        %1389 = vmatprep.mubr.bf16.mxu0 0
        %1390 = vmatmul.mubr.bf16.gmra.mrb[0].mxu0 %v1334
        %v1391 = vpop.f32.mrb[0].mxu0
        %v1392 = vadd.f32 0.0, %v1391
        %v1393 = vpop.f32.mrb[0].mxu0
        %v1394 = vpop.f32.mrb[0].mxu0
        %v1395 = vadd.f32 0.0, %v1394
        %v1396 = vpop.f32.mrb[0].mxu0
        %1397 = vmatprep.mubr.bf16.mxu0 0
        %1398 = vmatmul.mubr.bf16.gmra.mrb[0].mxu0 %v1337
        %v1399 = vpop.f32.mrb[0].mxu0
        %v1400 = vadd.f32 0.0, %v1399
        %v1401 = vpop.f32.mrb[0].mxu0
        %v1402 = vpop.f32.mrb[0].mxu0
        %v1403 = vadd.f32 0.0, %v1402
        %v1404 = vpop.f32.mrb[0].mxu0
        %1405 = vmatprep.mubr.bf16.mxu0 0
        %1406 = vmatmul.mubr.bf16.gmra.mrb[0].mxu0 %v1340
        %v1407 = vpop.f32.mrb[0].mxu0
        %v1408 = vadd.f32 0.0, %v1407
        %v1409 = vpop.f32.mrb[0].mxu0
        %v1410 = vpop.f32.mrb[0].mxu0
        %v1411 = vadd.f32 0.0, %v1410
        %v1412 = vpop.f32.mrb[0].mxu0
        %1413 = vmatprep.mubr.bf16.mxu0 0
        %1414 = vmatmul.mubr.bf16.gmra.mrb[0].mxu0 %v1343
        %v1415 = vpop.f32.mrb[0].mxu0
        %v1416 = vadd.f32 0.0, %v1415
        %v1417 = vpop.f32.mrb[0].mxu0
        %v1418 = vpop.f32.mrb[0].mxu0
        %v1419 = vadd.f32 0.0, %v1418
        %v1420 = vpop.f32.mrb[0].mxu0
        %1421 = vdwg.mxu0
        %vm1422 = vcmask 523264
        %v1423 = vsel %vm1422, %v1392, -inf
        %1424 = vmax.xlane.f32.xlu0 %v1423
        %v1425 = vpop.xlane.xlu0 %1424
        %v1426 = vsel %vm1422, %v1395, -inf
        %1427 = vmax.xlane.f32.xlu0 %v1426
        %v1428 = vpop.xlane.xlu0 %1427
        %v1429 = vsel %vm1422, %v1400, -inf
        %1430 = vmax.xlane.f32.xlu0 %v1429
        %v1431 = vpop.xlane.xlu0 %1430
        %v1432 = vsel %vm1422, %v1403, -inf
        %1433 = vmax.xlane.f32.xlu0 %v1432
        %v1434 = vpop.xlane.xlu0 %1433
        %v1435 = vsel %vm1422, %v1408, -inf
        %1436 = vmax.xlane.f32.xlu0 %v1435
        %v1437 = vpop.xlane.xlu0 %1436
        %v1438 = vsel %vm1422, %v1411, -inf
        %1439 = vmax.xlane.f32.xlu0 %v1438
        %v1440 = vpop.xlane.xlu0 %1439
        %v1441 = vsel %vm1422, %v1416, -inf
        %1442 = vmax.xlane.f32.xlu0 %v1441
        %v1443 = vpop.xlane.xlu0 %1442
        %v1444 = vsel %vm1422, %v1419, -inf
        %1445 = vmax.xlane.f32.xlu0 %v1444
        %v1446 = vpop.xlane.xlu0 %1445
        %v1447 = vsub.f32 %v1392, %v1425
        %v1448 = vsub.f32 %v1395, %v1428
        %v1449 = vsub.f32 %v1400, %v1431
        %v1450 = vsub.f32 %v1403, %v1434
        %v1451 = vsub.f32 %v1408, %v1437
        %v1452 = vsub.f32 %v1411, %v1440
        %v1453 = vsub.f32 %v1416, %v1443
        %v1454 = vsub.f32 %v1419, %v1446
        %v1455 = vmul.f32 %v1447, 1.442695
        %v1456 = vpow.pop %v1455
        %v1457 = vmul.f32 %v1448, 1.442695
        %v1458 = vpow.pop %v1457
        %v1459 = vmul.f32 %v1449, 1.442695
        %v1460 = vpow.pop %v1459
        %v1461 = vmul.f32 %v1450, 1.442695
        %v1462 = vpow.pop %v1461
        %v1463 = vmul.f32 %v1451, 1.442695
        %v1464 = vpow.pop %v1463
        %v1465 = vmul.f32 %v1452, 1.442695
        %v1466 = vpow.pop %v1465
        %v1467 = vmul.f32 %v1453, 1.442695
        %v1468 = vpow.pop %v1467
        %v1469 = vmul.f32 %v1454, 1.442695
        %v1470 = vpow.pop %v1469
        %v1471 = vsel %vm1422, %v1456, 0.0
        %1472 = vadd.xlane.f32.xlu0 %v1471
        %v1473 = vpop.xlane.xlu0 %1472
        %v1474 = vsel %vm1422, %v1458, 0.0
        %1475 = vadd.xlane.f32.xlu0 %v1474
        %v1476 = vpop.xlane.xlu0 %1475
        %v1477 = vsel %vm1422, %v1460, 0.0
        %1478 = vadd.xlane.f32.xlu0 %v1477
        %v1479 = vpop.xlane.xlu0 %1478
        %v1480 = vsel %vm1422, %v1462, 0.0
        %1481 = vadd.xlane.f32.xlu0 %v1480
        %v1482 = vpop.xlane.xlu0 %1481
        %v1483 = vsel %vm1422, %v1464, 0.0
        %1484 = vadd.xlane.f32.xlu0 %v1483
        %v1485 = vpop.xlane.xlu0 %1484
        %v1486 = vsel %vm1422, %v1466, 0.0
        %1487 = vadd.xlane.f32.xlu0 %v1486
        %v1488 = vpop.xlane.xlu0 %1487
        %v1489 = vsel %vm1422, %v1468, 0.0
        %1490 = vadd.xlane.f32.xlu0 %v1489
        %v1491 = vpop.xlane.xlu0 %1490
        %v1492 = vsel %vm1422, %v1470, 0.0
        %1493 = vadd.xlane.f32.xlu0 %v1492
        %v1494 = vpop.xlane.xlu0 %1493
        %v1495 = vrcp.pop %v1473
        %v1496 = vrcp.pop %v1476
        %v1497 = vrcp.pop %v1479
        %v1498 = vrcp.pop %v1482
        %v1499 = vrcp.pop %v1485
        %v1500 = vrcp.pop %v1488
        %v1501 = vrcp.pop %v1491
        %v1502 = vrcp.pop %v1494
        %v1503 = vpack.c.bf16 %v1458, %v1456
        %v1504 = vpack.c.bf16 %v1462, %v1460
        %v1505 = vpack.c.bf16 %v1466, %v1464
        %v1506 = vpack.c.bf16 %v1470, %v1468
        %v1508 = vsel %vm1422, %v1503, 0
        %v1511 = vsel %vm1422, %v1504, 0
        %v1514 = vsel %vm1422, %v1505, 0
        %v1517 = vsel %vm1422, %v1506, 0
        %1519 = vmatprep.subr.bf16.mxu0 0
        %1520 = vmatpush1.bf16.msra.mxu0 %v1328
        %1521 = vmatprep.subr.bf16.mxu0 0
        %1522 = vmatpush1.bf16.msra.mxu0 %v1329
        %1523 = vmatprep.subr.bf16.mxu0 0
        %1524 = vmatpush1.bf16.msra.mxu0 %v1330
        %1525 = vmatprep.subr.bf16.mxu0 0
        %1526 = vmatpush1.bf16.msra.mxu0 %v1331
        %1527 = vmatprep.subr.bf16.mxu0 0
        %1528 = vmatpush1.bf16.msra.mxu0 0
        %1529 = vmatprep.subr.bf16.mxu0 0
        %1530 = vmatpush1.bf16.msra.mxu0 0
        %1531 = vmatprep.subr.bf16.mxu0 0
        %1532 = vmatpush1.bf16.msra.mxu0 0
        %1533 = vmatprep.subr.bf16.mxu0 0
        %1534 = vmatpush1.bf16.msra.mxu0 0
        %1535 = vmatprep.subr.bf16.mxu0 0
        %1536 = vmatpush1.bf16.msra.mxu0 0
        %1537 = vmatprep.subr.bf16.mxu0 0
        %1538 = vmatpush1.bf16.msra.mxu0 0
        %1539 = vmatprep.subr.bf16.mxu0 0
        %1540 = vmatpush1.bf16.msra.mxu0 0
        %1541 = vmatprep.subr.bf16.mxu0 0
        %1542 = vmatpush1.bf16.msra.mxu0 0
        %1543 = vmatprep.subr.bf16.mxu0 0
        %1544 = vmatpush1.bf16.msra.mxu0 0
        %1545 = vmatprep.subr.bf16.mxu0 0
        %1546 = vmatpush1.bf16.msra.mxu0 0
        %1547 = vmatprep.subr.bf16.mxu0 0
        %1548 = vmatpush1.bf16.msra.mxu0 0
        %1549 = vmatprep.subr.bf16.mxu0 0
        %1550 = vmatpush1.bf16.msra.mxu0 0
        %1551 = vmatprep.mubr.bf16.mxu0 0
        %1552 = vmatmul.mubr.bf16.gmra.mrb[0].mxu0 %v1508
        %v1553 = vpop.f32.mrb[0].mxu0
        %v1554 = vadd.f32 0.0, %v1553
        %v1555 = vpop.f32.mrb[0].mxu0
        %v1556 = vpop.f32.mrb[0].mxu0
        %v1557 = vadd.f32 0.0, %v1556
        %v1558 = vpop.f32.mrb[0].mxu0
        %1559 = vmatprep.mubr.bf16.mxu0 0
        %1560 = vmatmul.mubr.bf16.gmra.mrb[0].mxu0 %v1511
        %v1561 = vpop.f32.mrb[0].mxu0
        %v1562 = vadd.f32 0.0, %v1561
        %v1563 = vpop.f32.mrb[0].mxu0
        %v1564 = vpop.f32.mrb[0].mxu0
        %v1565 = vadd.f32 0.0, %v1564
        %v1566 = vpop.f32.mrb[0].mxu0
        %1567 = vmatprep.mubr.bf16.mxu0 0
        %1568 = vmatmul.mubr.bf16.gmra.mrb[0].mxu0 %v1514
        %v1569 = vpop.f32.mrb[0].mxu0
        %v1570 = vadd.f32 0.0, %v1569
        %v1571 = vpop.f32.mrb[0].mxu0
        %v1572 = vpop.f32.mrb[0].mxu0
        %v1573 = vadd.f32 0.0, %v1572
        %v1574 = vpop.f32.mrb[0].mxu0
        %1575 = vmatprep.mubr.bf16.mxu0 0
        %1576 = vmatmul.mubr.bf16.gmra.mrb[0].mxu0 %v1517
        %v1577 = vpop.f32.mrb[0].mxu0
        %v1578 = vadd.f32 0.0, %v1577
        %v1579 = vpop.f32.mrb[0].mxu0
        %v1580 = vpop.f32.mrb[0].mxu0
        %v1581 = vadd.f32 0.0, %v1580
        %v1582 = vpop.f32.mrb[0].mxu0
        %1583 = vdwg.mxu0
        %v1584 = vmul.f32 %v1554, %v1495
        %v1585 = vmul.f32 %v1557, %v1496
        %v1586 = vmul.f32 %v1562, %v1497
        %v1587 = vmul.f32 %v1565, %v1498
        %v1588 = vmul.f32 %v1570, %v1499
        %v1589 = vmul.f32 %v1573, %v1500
        %v1590 = vmul.f32 %v1578, %v1501
        %v1591 = vmul.f32 %v1581, %v1502
        %v1592 = vpack.c.bf16 %v1585, %v1584
        %v1593 = vpack.c.bf16 %v1587, %v1586
        %v1594 = vpack.c.bf16 %v1589, %v1588
        %v1595 = vpack.c.bf16 %v1591, %v1590
        %v1596 = vld [vmem:[%s6] sm:$0xf]
        %v1597 = vld [vmem:[%s6 + $0x4] sm:$0xf]
        %v1598 = vld [vmem:[%s6 + $0x8] sm:$0xf]
        %v1599 = vld [vmem:[%s6 + $0xc] sm:$0xf]
        %1604 = vrot.lane.b32.xlu0 %v1320, 96
        %v1605 = vpop.permute.xlu0 %1604
        %1606 = vrot.lane.b32.xlu0 %v1321, 96
        %v1607 = vpop.permute.xlu0 %1606
        %1608 = vrot.lane.b32.xlu0 %v1322, 96
        %v1609 = vpop.permute.xlu0 %1608
        %1610 = vrot.lane.b32.xlu0 %v1323, 96
        %v1611 = vpop.permute.xlu0 %1610
        %1616 = vrot.lane.b32.xlu0 %v1324, 96
        %v1617 = vpop.permute.xlu0 %1616
        %1618 = vrot.lane.b32.xlu0 %v1325, 96
        %v1619 = vpop.permute.xlu0 %1618
        %1620 = vrot.lane.b32.xlu0 %v1326, 96
        %v1621 = vpop.permute.xlu0 %1620
        %1622 = vrot.lane.b32.xlu0 %v1327, 96
        %v1623 = vpop.permute.xlu0 %1622
        %v1625 = vsel %vm1332, %v1605, 0
        %v1628 = vsel %vm1332, %v1607, 0
        %v1631 = vsel %vm1332, %v1609, 0
        %v1634 = vsel %vm1332, %v1611, 0
        %v1637 = vsel %vm1332, %v1617, 0
        %v1640 = vsel %vm1332, %v1619, 0
        %v1643 = vsel %vm1332, %v1621, 0
        %v1646 = vsel %vm1332, %v1623, 0
        %1648 = vmatprep.subr.bf16.mxu0 0
        %1649 = vmatpush1.bf16.xpose.msra.mxu0 %v1637
        %1650 = vmatprep.subr.bf16.mxu0 0
        %1651 = vmatpush1.bf16.xpose.msra.mxu0 %v1640
        %1652 = vmatprep.subr.bf16.mxu0 0
        %1653 = vmatpush1.bf16.xpose.msra.mxu0 %v1643
        %1654 = vmatprep.subr.bf16.mxu0 0
        %1655 = vmatpush1.bf16.xpose.msra.mxu0 %v1646
        %1656 = vmatprep.subr.bf16.mxu0 0
        %1657 = vmatpush1.bf16.xpose.msra.mxu0 0
        %1658 = vmatprep.subr.bf16.mxu0 0
        %1659 = vmatpush1.bf16.xpose.msra.mxu0 0
        %1660 = vmatprep.subr.bf16.mxu0 0
        %1661 = vmatpush1.bf16.xpose.msra.mxu0 0
        %1662 = vmatprep.subr.bf16.mxu0 0
        %1663 = vmatpush1.bf16.xpose.msra.mxu0 0
        %1664 = vmatprep.subr.bf16.mxu0 0
        %1665 = vmatpush1.bf16.xpose.msra.mxu0 0
        %1666 = vmatprep.subr.bf16.mxu0 0
        %1667 = vmatpush1.bf16.xpose.msra.mxu0 0
        %1668 = vmatprep.subr.bf16.mxu0 0
        %1669 = vmatpush1.bf16.xpose.msra.mxu0 0
        %1670 = vmatprep.subr.bf16.mxu0 0
        %1671 = vmatpush1.bf16.xpose.msra.mxu0 0
        %1672 = vmatprep.subr.bf16.mxu0 0
        %1673 = vmatpush1.bf16.xpose.msra.mxu0 0
        %1674 = vmatprep.subr.bf16.mxu0 0
        %1675 = vmatpush1.bf16.xpose.msra.mxu0 0
        %1676 = vmatprep.subr.bf16.mxu0 0
        %1677 = vmatpush1.bf16.xpose.msra.mxu0 0
        %1678 = vmatprep.subr.bf16.mxu0 0
        %1679 = vmatpush1.bf16.xpose.msra.mxu0 0
        %1680 = vmatprep.mubr.bf16.mxu0 0
        %1681 = vmatmul.mubr.bf16.gmra.mrb[0].mxu0 %v1625
        %v1682 = vpop.f32.mrb[0].mxu0
        %v1683 = vadd.f32 0.0, %v1682
        %v1684 = vpop.f32.mrb[0].mxu0
        %v1685 = vpop.f32.mrb[0].mxu0
        %v1686 = vadd.f32 0.0, %v1685
        %v1687 = vpop.f32.mrb[0].mxu0
        %1688 = vmatprep.mubr.bf16.mxu0 0
        %1689 = vmatmul.mubr.bf16.gmra.mrb[0].mxu0 %v1628
        %v1690 = vpop.f32.mrb[0].mxu0
        %v1691 = vadd.f32 0.0, %v1690
        %v1692 = vpop.f32.mrb[0].mxu0
        %v1693 = vpop.f32.mrb[0].mxu0
        %v1694 = vadd.f32 0.0, %v1693
        %v1695 = vpop.f32.mrb[0].mxu0
        %1696 = vmatprep.mubr.bf16.mxu0 0
        %1697 = vmatmul.mubr.bf16.gmra.mrb[0].mxu0 %v1631
        %v1698 = vpop.f32.mrb[0].mxu0
        %v1699 = vadd.f32 0.0, %v1698
        %v1700 = vpop.f32.mrb[0].mxu0
        %v1701 = vpop.f32.mrb[0].mxu0
        %v1702 = vadd.f32 0.0, %v1701
        %v1703 = vpop.f32.mrb[0].mxu0
        %1704 = vmatprep.mubr.bf16.mxu0 0
        %1705 = vmatmul.mubr.bf16.gmra.mrb[0].mxu0 %v1634
        %v1706 = vpop.f32.mrb[0].mxu0
        %v1707 = vadd.f32 0.0, %v1706
        %v1708 = vpop.f32.mrb[0].mxu0
        %v1709 = vpop.f32.mrb[0].mxu0
        %v1710 = vadd.f32 0.0, %v1709
        %v1711 = vpop.f32.mrb[0].mxu0
        %1712 = vdwg.mxu0
        %v1713 = vsel %vm1422, %v1683, -inf
        %1714 = vmax.xlane.f32.xlu0 %v1713
        %v1715 = vpop.xlane.xlu0 %1714
        %v1716 = vsel %vm1422, %v1686, -inf
        %1717 = vmax.xlane.f32.xlu0 %v1716
        %v1718 = vpop.xlane.xlu0 %1717
        %v1719 = vsel %vm1422, %v1691, -inf
        %1720 = vmax.xlane.f32.xlu0 %v1719
        %v1721 = vpop.xlane.xlu0 %1720
        %v1722 = vsel %vm1422, %v1694, -inf
        %1723 = vmax.xlane.f32.xlu0 %v1722
        %v1724 = vpop.xlane.xlu0 %1723
        %v1725 = vsel %vm1422, %v1699, -inf
        %1726 = vmax.xlane.f32.xlu0 %v1725
        %v1727 = vpop.xlane.xlu0 %1726
        %v1728 = vsel %vm1422, %v1702, -inf
        %1729 = vmax.xlane.f32.xlu0 %v1728
        %v1730 = vpop.xlane.xlu0 %1729
        %v1731 = vsel %vm1422, %v1707, -inf
        %1732 = vmax.xlane.f32.xlu0 %v1731
        %v1733 = vpop.xlane.xlu0 %1732
        %v1734 = vsel %vm1422, %v1710, -inf
        %1735 = vmax.xlane.f32.xlu0 %v1734
        %v1736 = vpop.xlane.xlu0 %1735
        %v1737 = vsub.f32 %v1683, %v1715
        %v1738 = vsub.f32 %v1686, %v1718
        %v1739 = vsub.f32 %v1691, %v1721
        %v1740 = vsub.f32 %v1694, %v1724
        %v1741 = vsub.f32 %v1699, %v1727
        %v1742 = vsub.f32 %v1702, %v1730
        %v1743 = vsub.f32 %v1707, %v1733
        %v1744 = vsub.f32 %v1710, %v1736
        %v1745 = vmul.f32 %v1737, 1.442695
        %v1746 = vpow.pop %v1745
        %v1747 = vmul.f32 %v1738, 1.442695
        %v1748 = vpow.pop %v1747
        %v1749 = vmul.f32 %v1739, 1.442695
        %v1750 = vpow.pop %v1749
        %v1751 = vmul.f32 %v1740, 1.442695
        %v1752 = vpow.pop %v1751
        %v1753 = vmul.f32 %v1741, 1.442695
        %v1754 = vpow.pop %v1753
        %v1755 = vmul.f32 %v1742, 1.442695
        %v1756 = vpow.pop %v1755
        %v1757 = vmul.f32 %v1743, 1.442695
        %v1758 = vpow.pop %v1757
        %v1759 = vmul.f32 %v1744, 1.442695
        %v1760 = vpow.pop %v1759
        %v1761 = vsel %vm1422, %v1746, 0.0
        %1762 = vadd.xlane.f32.xlu0 %v1761
        %v1763 = vpop.xlane.xlu0 %1762
        %v1764 = vsel %vm1422, %v1748, 0.0
        %1765 = vadd.xlane.f32.xlu0 %v1764
        %v1766 = vpop.xlane.xlu0 %1765
        %v1767 = vsel %vm1422, %v1750, 0.0
        %1768 = vadd.xlane.f32.xlu0 %v1767
        %v1769 = vpop.xlane.xlu0 %1768
        %v1770 = vsel %vm1422, %v1752, 0.0
        %1771 = vadd.xlane.f32.xlu0 %v1770
        %v1772 = vpop.xlane.xlu0 %1771
        %v1773 = vsel %vm1422, %v1754, 0.0
        %1774 = vadd.xlane.f32.xlu0 %v1773
        %v1775 = vpop.xlane.xlu0 %1774
        %v1776 = vsel %vm1422, %v1756, 0.0
        %1777 = vadd.xlane.f32.xlu0 %v1776
        %v1778 = vpop.xlane.xlu0 %1777
        %v1779 = vsel %vm1422, %v1758, 0.0
        %1780 = vadd.xlane.f32.xlu0 %v1779
        %v1781 = vpop.xlane.xlu0 %1780
        %v1782 = vsel %vm1422, %v1760, 0.0
        %1783 = vadd.xlane.f32.xlu0 %v1782
        %v1784 = vpop.xlane.xlu0 %1783
        %v1785 = vrcp.pop %v1763
        %v1786 = vrcp.pop %v1766
        %v1787 = vrcp.pop %v1769
        %v1788 = vrcp.pop %v1772
        %v1789 = vrcp.pop %v1775
        %v1790 = vrcp.pop %v1778
        %v1791 = vrcp.pop %v1781
        %v1792 = vrcp.pop %v1784
        %v1793 = vpack.c.bf16 %v1748, %v1746
        %v1794 = vpack.c.bf16 %v1752, %v1750
        %v1795 = vpack.c.bf16 %v1756, %v1754
        %v1796 = vpack.c.bf16 %v1760, %v1758
        %1801 = vrot.lane.b32.xlu0 %v1328, 96
        %v1802 = vpop.permute.xlu0 %1801
        %1803 = vrot.lane.b32.xlu0 %v1329, 96
        %v1804 = vpop.permute.xlu0 %1803
        %1805 = vrot.lane.b32.xlu0 %v1330, 96
        %v1806 = vpop.permute.xlu0 %1805
        %1807 = vrot.lane.b32.xlu0 %v1331, 96
        %v1808 = vpop.permute.xlu0 %1807
        %v1814 = vsel %vm1422, %v1793, 0
        %v1817 = vsel %vm1422, %v1794, 0
        %v1820 = vsel %vm1422, %v1795, 0
        %v1823 = vsel %vm1422, %v1796, 0
        %1825 = vmatprep.subr.bf16.mxu0 0
        %1826 = vmatpush1.bf16.msra.mxu0 %v1802
        %1827 = vmatprep.subr.bf16.mxu0 0
        %1828 = vmatpush1.bf16.msra.mxu0 %v1804
        %1829 = vmatprep.subr.bf16.mxu0 0
        %1830 = vmatpush1.bf16.msra.mxu0 %v1806
        %1831 = vmatprep.subr.bf16.mxu0 0
        %1832 = vmatpush1.bf16.msra.mxu0 %v1808
        %1833 = vmatprep.subr.bf16.mxu0 0
        %1834 = vmatpush1.bf16.msra.mxu0 0
        %1835 = vmatprep.subr.bf16.mxu0 0
        %1836 = vmatpush1.bf16.msra.mxu0 0
        %1837 = vmatprep.subr.bf16.mxu0 0
        %1838 = vmatpush1.bf16.msra.mxu0 0
        %1839 = vmatprep.subr.bf16.mxu0 0
        %1840 = vmatpush1.bf16.msra.mxu0 0
        %1841 = vmatprep.subr.bf16.mxu0 0
        %1842 = vmatpush1.bf16.msra.mxu0 0
        %1843 = vmatprep.subr.bf16.mxu0 0
        %1844 = vmatpush1.bf16.msra.mxu0 0
        %1845 = vmatprep.subr.bf16.mxu0 0
        %1846 = vmatpush1.bf16.msra.mxu0 0
        %1847 = vmatprep.subr.bf16.mxu0 0
        %1848 = vmatpush1.bf16.msra.mxu0 0
        %1849 = vmatprep.subr.bf16.mxu0 0
        %1850 = vmatpush1.bf16.msra.mxu0 0
        %1851 = vmatprep.subr.bf16.mxu0 0
        %1852 = vmatpush1.bf16.msra.mxu0 0
        %1853 = vmatprep.subr.bf16.mxu0 0
        %1854 = vmatpush1.bf16.msra.mxu0 0
        %1855 = vmatprep.subr.bf16.mxu0 0
        %1856 = vmatpush1.bf16.msra.mxu0 0
        %1857 = vmatprep.mubr.bf16.mxu0 0
        %1858 = vmatmul.mubr.bf16.gmra.mrb[0].mxu0 %v1814
        %v1859 = vpop.f32.mrb[0].mxu0
        %v1860 = vadd.f32 0.0, %v1859
        %v1861 = vpop.f32.mrb[0].mxu0
        %v1862 = vpop.f32.mrb[0].mxu0
        %v1863 = vadd.f32 0.0, %v1862
        %v1864 = vpop.f32.mrb[0].mxu0
        %1865 = vmatprep.mubr.bf16.mxu0 0
        %1866 = vmatmul.mubr.bf16.gmra.mrb[0].mxu0 %v1817
        %v1867 = vpop.f32.mrb[0].mxu0
        %v1868 = vadd.f32 0.0, %v1867
        %v1869 = vpop.f32.mrb[0].mxu0
        %v1870 = vpop.f32.mrb[0].mxu0
        %v1871 = vadd.f32 0.0, %v1870
        %v1872 = vpop.f32.mrb[0].mxu0
        %1873 = vmatprep.mubr.bf16.mxu0 0
        %1874 = vmatmul.mubr.bf16.gmra.mrb[0].mxu0 %v1820
        %v1875 = vpop.f32.mrb[0].mxu0
        %v1876 = vadd.f32 0.0, %v1875
        %v1877 = vpop.f32.mrb[0].mxu0
        %v1878 = vpop.f32.mrb[0].mxu0
        %v1879 = vadd.f32 0.0, %v1878
        %v1880 = vpop.f32.mrb[0].mxu0
        %1881 = vmatprep.mubr.bf16.mxu0 0
        %1882 = vmatmul.mubr.bf16.gmra.mrb[0].mxu0 %v1823
        %v1883 = vpop.f32.mrb[0].mxu0
        %v1884 = vadd.f32 0.0, %v1883
        %v1885 = vpop.f32.mrb[0].mxu0
        %v1886 = vpop.f32.mrb[0].mxu0
        %v1887 = vadd.f32 0.0, %v1886
        %v1888 = vpop.f32.mrb[0].mxu0
        %1889 = vdwg.mxu0
        %v1890 = vmul.f32 %v1860, %v1785
        %v1891 = vmul.f32 %v1863, %v1786
        %v1892 = vmul.f32 %v1868, %v1787
        %v1893 = vmul.f32 %v1871, %v1788
        %v1894 = vmul.f32 %v1876, %v1789
        %v1895 = vmul.f32 %v1879, %v1790
        %v1896 = vmul.f32 %v1884, %v1791
        %v1897 = vmul.f32 %v1887, %v1792
        %v1898 = vpack.c.bf16 %v1891, %v1890
        %v1899 = vpack.c.bf16 %v1893, %v1892
        %v1900 = vpack.c.bf16 %v1895, %v1894
        %v1901 = vpack.c.bf16 %v1897, %v1896
        %v1902 = vld [vmem:[%s6 + $0x10] sm:$0xf]
        %v1903 = vld [vmem:[%s6 + $0x14] sm:$0xf]
        %v1904 = vld [vmem:[%s6 + $0x18] sm:$0xf]
        %v1905 = vld [vmem:[%s6 + $0x1c] sm:$0xf]
        %v1910 = vunpack.c.l.b16 %v1902
        %v1911 = vunpack.c.l.b16 %v1903
        %v1912 = vunpack.c.l.b16 %v1904
        %v1913 = vunpack.c.l.b16 %v1905
        %v1914 = vpack.c.b16 %v1911, %v1910
        %v1915 = vpack.c.b16 %v1913, %v1912
        %v1919 = vsel %vm1332, %v1898, 0
        %v1922 = vsel %vm1332, %v1899, 0
        %v1925 = vsel %vm1332, %v1900, 0
        %v1928 = vsel %vm1332, %v1901, 0
        %1930 = vmatprep.subr.bf16.mxu0 0
        %1931 = vmatpush1.bf16.msra.mxu0 %v1914
        %1932 = vmatprep.subr.bf16.mxu0 0
        %1933 = vmatpush1.bf16.msra.mxu0 %v1915
        %1934 = vmatprep.subr.bf16.mxu0 0
        %1935 = vmatpush1.bf16.msra.mxu0 0
        %1936 = vmatprep.subr.bf16.mxu0 0
        %1937 = vmatpush1.bf16.msra.mxu0 0
        %1938 = vmatprep.subr.bf16.mxu0 0
        %1939 = vmatpush1.bf16.msra.mxu0 0
        %1940 = vmatprep.subr.bf16.mxu0 0
        %1941 = vmatpush1.bf16.msra.mxu0 0
        %1942 = vmatprep.subr.bf16.mxu0 0
        %1943 = vmatpush1.bf16.msra.mxu0 0
        %1944 = vmatprep.subr.bf16.mxu0 0
        %1945 = vmatpush1.bf16.msra.mxu0 0
        %1946 = vmatprep.subr.bf16.mxu0 0
        %1947 = vmatpush1.bf16.msra.mxu0 0
        %1948 = vmatprep.subr.bf16.mxu0 0
        %1949 = vmatpush1.bf16.msra.mxu0 0
        %1950 = vmatprep.subr.bf16.mxu0 0
        %1951 = vmatpush1.bf16.msra.mxu0 0
        %1952 = vmatprep.subr.bf16.mxu0 0
        %1953 = vmatpush1.bf16.msra.mxu0 0
        %1954 = vmatprep.subr.bf16.mxu0 0
        %1955 = vmatpush1.bf16.msra.mxu0 0
        %1956 = vmatprep.subr.bf16.mxu0 0
        %1957 = vmatpush1.bf16.msra.mxu0 0
        %1958 = vmatprep.subr.bf16.mxu0 0
        %1959 = vmatpush1.bf16.msra.mxu0 0
        %1960 = vmatprep.subr.bf16.mxu0 0
        %1961 = vmatpush1.bf16.msra.mxu0 0
        %1962 = vmatprep.mubr.bf16.mxu0 0
        %1963 = vmatmul.mubr.bf16.gmra.mrb[0].mxu0 %v1919
        %v1964 = vpop.f32.mrb[0].mxu0
        %v1965 = vadd.f32 0.0, %v1964
        %v1966 = vpop.f32.mrb[0].mxu0
        %v1967 = vpop.f32.mrb[0].mxu0
        %v1968 = vadd.f32 0.0, %v1967
        %v1969 = vpop.f32.mrb[0].mxu0
        %1970 = vmatprep.mubr.bf16.mxu0 0
        %1971 = vmatmul.mubr.bf16.gmra.mrb[0].mxu0 %v1922
        %v1972 = vpop.f32.mrb[0].mxu0
        %v1973 = vadd.f32 0.0, %v1972
        %v1974 = vpop.f32.mrb[0].mxu0
        %v1975 = vpop.f32.mrb[0].mxu0
        %v1976 = vadd.f32 0.0, %v1975
        %v1977 = vpop.f32.mrb[0].mxu0
        %1978 = vmatprep.mubr.bf16.mxu0 0
        %1979 = vmatmul.mubr.bf16.gmra.mrb[0].mxu0 %v1925
        %v1980 = vpop.f32.mrb[0].mxu0
        %v1981 = vadd.f32 0.0, %v1980
        %v1982 = vpop.f32.mrb[0].mxu0
        %v1983 = vpop.f32.mrb[0].mxu0
        %v1984 = vadd.f32 0.0, %v1983
        %v1985 = vpop.f32.mrb[0].mxu0
        %1986 = vmatprep.mubr.bf16.mxu0 0
        %1987 = vmatmul.mubr.bf16.gmra.mrb[0].mxu0 %v1928
        %v1988 = vpop.f32.mrb[0].mxu0
        %v1989 = vadd.f32 0.0, %v1988
        %v1990 = vpop.f32.mrb[0].mxu0
        %v1991 = vpop.f32.mrb[0].mxu0
        %v1992 = vadd.f32 0.0, %v1991
        %v1993 = vpop.f32.mrb[0].mxu0
        %1994 = vdwg.mxu0
        %v1999 = vunpack.c.l.b16 %v1596
        %v2000 = vunpack.c.l.b16 %v1597
        %v2001 = vunpack.c.l.b16 %v1598
        %v2002 = vunpack.c.l.b16 %v1599
        %v2003 = vpack.c.b16 %v2000, %v1999
        %v2004 = vpack.c.b16 %v2002, %v2001
        %v2008 = vsel %vm1332, %v1592, 0
        %v2011 = vsel %vm1332, %v1593, 0
        %v2014 = vsel %vm1332, %v1594, 0
        %v2017 = vsel %vm1332, %v1595, 0
        %2019 = vmatprep.subr.bf16.mxu0 0
        %2020 = vmatpush1.bf16.msra.mxu0 %v2003
        %2021 = vmatprep.subr.bf16.mxu0 0
        %2022 = vmatpush1.bf16.msra.mxu0 %v2004
        %2023 = vmatprep.subr.bf16.mxu0 0
        %2024 = vmatpush1.bf16.msra.mxu0 0
        %2025 = vmatprep.subr.bf16.mxu0 0
        %2026 = vmatpush1.bf16.msra.mxu0 0
        %2027 = vmatprep.subr.bf16.mxu0 0
        %2028 = vmatpush1.bf16.msra.mxu0 0
        %2029 = vmatprep.subr.bf16.mxu0 0
        %2030 = vmatpush1.bf16.msra.mxu0 0
        %2031 = vmatprep.subr.bf16.mxu0 0
        %2032 = vmatpush1.bf16.msra.mxu0 0
        %2033 = vmatprep.subr.bf16.mxu0 0
        %2034 = vmatpush1.bf16.msra.mxu0 0
        %2035 = vmatprep.subr.bf16.mxu0 0
        %2036 = vmatpush1.bf16.msra.mxu0 0
        %2037 = vmatprep.subr.bf16.mxu0 0
        %2038 = vmatpush1.bf16.msra.mxu0 0
        %2039 = vmatprep.subr.bf16.mxu0 0
        %2040 = vmatpush1.bf16.msra.mxu0 0
        %2041 = vmatprep.subr.bf16.mxu0 0
        %2042 = vmatpush1.bf16.msra.mxu0 0
        %2043 = vmatprep.subr.bf16.mxu0 0
        %2044 = vmatpush1.bf16.msra.mxu0 0
        %2045 = vmatprep.subr.bf16.mxu0 0
        %2046 = vmatpush1.bf16.msra.mxu0 0
        %2047 = vmatprep.subr.bf16.mxu0 0
        %2048 = vmatpush1.bf16.msra.mxu0 0
        %2049 = vmatprep.subr.bf16.mxu0 0
        %2050 = vmatpush1.bf16.msra.mxu0 0
        %2051 = vmatprep.mubr.bf16.mxu0 0
        %2052 = vmatmul.mubr.bf16.gmra.mrb[0].mxu0 %v2008
        %v2053 = vpop.f32.mrb[0].mxu0
        %v2054 = vadd.f32 %v1965, %v2053
        %v2055 = vpop.f32.mrb[0].mxu0
        %v2056 = vpop.f32.mrb[0].mxu0
        %v2057 = vadd.f32 %v1968, %v2056
        %v2058 = vpop.f32.mrb[0].mxu0
        %2059 = vmatprep.mubr.bf16.mxu0 0
        %2060 = vmatmul.mubr.bf16.gmra.mrb[0].mxu0 %v2011
        %v2061 = vpop.f32.mrb[0].mxu0
        %v2062 = vadd.f32 %v1973, %v2061
        %v2063 = vpop.f32.mrb[0].mxu0
        %v2064 = vpop.f32.mrb[0].mxu0
        %v2065 = vadd.f32 %v1976, %v2064
        %v2066 = vpop.f32.mrb[0].mxu0
        %2067 = vmatprep.mubr.bf16.mxu0 0
        %2068 = vmatmul.mubr.bf16.gmra.mrb[0].mxu0 %v2014
        %v2069 = vpop.f32.mrb[0].mxu0
        %v2070 = vadd.f32 %v1981, %v2069
        %v2071 = vpop.f32.mrb[0].mxu0
        %v2072 = vpop.f32.mrb[0].mxu0
        %v2073 = vadd.f32 %v1984, %v2072
        %v2074 = vpop.f32.mrb[0].mxu0
        %2075 = vmatprep.mubr.bf16.mxu0 0
        %2076 = vmatmul.mubr.bf16.gmra.mrb[0].mxu0 %v2017
        %v2077 = vpop.f32.mrb[0].mxu0
        %v2078 = vadd.f32 %v1989, %v2077
        %v2079 = vpop.f32.mrb[0].mxu0
        %v2080 = vpop.f32.mrb[0].mxu0
        %v2081 = vadd.f32 %v1992, %v2080
        %v2082 = vpop.f32.mrb[0].mxu0
        %2083 = vdwg.mxu0
        %2084 = vrot.lane.b32.xlu0 %v1320, 64
        %v2085 = vpop.permute.xlu0 %2084
        %2086 = vrot.lane.b32.xlu0 %v1321, 64
        %v2087 = vpop.permute.xlu0 %2086
        %2088 = vrot.lane.b32.xlu0 %v1322, 64
        %v2089 = vpop.permute.xlu0 %2088
        %2090 = vrot.lane.b32.xlu0 %v1323, 64
        %v2091 = vpop.permute.xlu0 %2090
        %2092 = vrot.lane.b32.xlu0 %v1324, 64
        %v2093 = vpop.permute.xlu0 %2092
        %2094 = vrot.lane.b32.xlu0 %v1325, 64
        %v2095 = vpop.permute.xlu0 %2094
        %2096 = vrot.lane.b32.xlu0 %v1326, 64
        %v2097 = vpop.permute.xlu0 %2096
        %2098 = vrot.lane.b32.xlu0 %v1327, 64
        %v2099 = vpop.permute.xlu0 %2098
        %v2101 = vsel %vm1332, %v2085, 0
        %v2104 = vsel %vm1332, %v2087, 0
        %v2107 = vsel %vm1332, %v2089, 0
        %v2110 = vsel %vm1332, %v2091, 0
        %v2113 = vsel %vm1332, %v2093, 0
        %v2116 = vsel %vm1332, %v2095, 0
        %v2119 = vsel %vm1332, %v2097, 0
        %v2122 = vsel %vm1332, %v2099, 0
        %2124 = vmatprep.subr.bf16.mxu0 0
        %2125 = vmatpush1.bf16.xpose.msra.mxu0 %v2113
        %2126 = vmatprep.subr.bf16.mxu0 0
        %2127 = vmatpush1.bf16.xpose.msra.mxu0 %v2116
        %2128 = vmatprep.subr.bf16.mxu0 0
        %2129 = vmatpush1.bf16.xpose.msra.mxu0 %v2119
        %2130 = vmatprep.subr.bf16.mxu0 0
        %2131 = vmatpush1.bf16.xpose.msra.mxu0 %v2122
        %2132 = vmatprep.subr.bf16.mxu0 0
        %2133 = vmatpush1.bf16.xpose.msra.mxu0 0
        %2134 = vmatprep.subr.bf16.mxu0 0
        %2135 = vmatpush1.bf16.xpose.msra.mxu0 0
        %2136 = vmatprep.subr.bf16.mxu0 0
        %2137 = vmatpush1.bf16.xpose.msra.mxu0 0
        %2138 = vmatprep.subr.bf16.mxu0 0
        %2139 = vmatpush1.bf16.xpose.msra.mxu0 0
        %2140 = vmatprep.subr.bf16.mxu0 0
        %2141 = vmatpush1.bf16.xpose.msra.mxu0 0
        %2142 = vmatprep.subr.bf16.mxu0 0
        %2143 = vmatpush1.bf16.xpose.msra.mxu0 0
        %2144 = vmatprep.subr.bf16.mxu0 0
        %2145 = vmatpush1.bf16.xpose.msra.mxu0 0
        %2146 = vmatprep.subr.bf16.mxu0 0
        %2147 = vmatpush1.bf16.xpose.msra.mxu0 0
        %2148 = vmatprep.subr.bf16.mxu0 0
        %2149 = vmatpush1.bf16.xpose.msra.mxu0 0
        %2150 = vmatprep.subr.bf16.mxu0 0
        %2151 = vmatpush1.bf16.xpose.msra.mxu0 0
        %2152 = vmatprep.subr.bf16.mxu0 0
        %2153 = vmatpush1.bf16.xpose.msra.mxu0 0
        %2154 = vmatprep.subr.bf16.mxu0 0
        %2155 = vmatpush1.bf16.xpose.msra.mxu0 0
        %2156 = vmatprep.mubr.bf16.mxu0 0
        %2157 = vmatmul.mubr.bf16.gmra.mrb[0].mxu0 %v2101
        %v2158 = vpop.f32.mrb[0].mxu0
        %v2159 = vadd.f32 0.0, %v2158
        %v2160 = vpop.f32.mrb[0].mxu0
        %v2161 = vpop.f32.mrb[0].mxu0
        %v2162 = vadd.f32 0.0, %v2161
        %v2163 = vpop.f32.mrb[0].mxu0
        %2164 = vmatprep.mubr.bf16.mxu0 0
        %2165 = vmatmul.mubr.bf16.gmra.mrb[0].mxu0 %v2104
        %v2166 = vpop.f32.mrb[0].mxu0
        %v2167 = vadd.f32 0.0, %v2166
        %v2168 = vpop.f32.mrb[0].mxu0
        %v2169 = vpop.f32.mrb[0].mxu0
        %v2170 = vadd.f32 0.0, %v2169
        %v2171 = vpop.f32.mrb[0].mxu0
        %2172 = vmatprep.mubr.bf16.mxu0 0
        %2173 = vmatmul.mubr.bf16.gmra.mrb[0].mxu0 %v2107
        %v2174 = vpop.f32.mrb[0].mxu0
        %v2175 = vadd.f32 0.0, %v2174
        %v2176 = vpop.f32.mrb[0].mxu0
        %v2177 = vpop.f32.mrb[0].mxu0
        %v2178 = vadd.f32 0.0, %v2177
        %v2179 = vpop.f32.mrb[0].mxu0
        %2180 = vmatprep.mubr.bf16.mxu0 0
        %2181 = vmatmul.mubr.bf16.gmra.mrb[0].mxu0 %v2110
        %v2182 = vpop.f32.mrb[0].mxu0
        %v2183 = vadd.f32 0.0, %v2182
        %v2184 = vpop.f32.mrb[0].mxu0
        %v2185 = vpop.f32.mrb[0].mxu0
        %v2186 = vadd.f32 0.0, %v2185
        %v2187 = vpop.f32.mrb[0].mxu0
        %2188 = vdwg.mxu0
        %v2189 = vsel %vm1422, %v2159, -inf
        %2190 = vmax.xlane.f32.xlu0 %v2189
        %v2191 = vpop.xlane.xlu0 %2190
        %v2192 = vsel %vm1422, %v2162, -inf
        %2193 = vmax.xlane.f32.xlu0 %v2192
        %v2194 = vpop.xlane.xlu0 %2193
        %v2195 = vsel %vm1422, %v2167, -inf
        %2196 = vmax.xlane.f32.xlu0 %v2195
        %v2197 = vpop.xlane.xlu0 %2196
        %v2198 = vsel %vm1422, %v2170, -inf
        %2199 = vmax.xlane.f32.xlu0 %v2198
        %v2200 = vpop.xlane.xlu0 %2199
        %v2201 = vsel %vm1422, %v2175, -inf
        %2202 = vmax.xlane.f32.xlu0 %v2201
        %v2203 = vpop.xlane.xlu0 %2202
        %v2204 = vsel %vm1422, %v2178, -inf
        %2205 = vmax.xlane.f32.xlu0 %v2204
        %v2206 = vpop.xlane.xlu0 %2205
        %v2207 = vsel %vm1422, %v2183, -inf
        %2208 = vmax.xlane.f32.xlu0 %v2207
        %v2209 = vpop.xlane.xlu0 %2208
        %v2210 = vsel %vm1422, %v2186, -inf
        %2211 = vmax.xlane.f32.xlu0 %v2210
        %v2212 = vpop.xlane.xlu0 %2211
        %v2213 = vsub.f32 %v2159, %v2191
        %v2214 = vsub.f32 %v2162, %v2194
        %v2215 = vsub.f32 %v2167, %v2197
        %v2216 = vsub.f32 %v2170, %v2200
        %v2217 = vsub.f32 %v2175, %v2203
        %v2218 = vsub.f32 %v2178, %v2206
        %v2219 = vsub.f32 %v2183, %v2209
        %v2220 = vsub.f32 %v2186, %v2212
        %v2221 = vmul.f32 %v2213, 1.442695
        %v2222 = vpow.pop %v2221
        %v2223 = vmul.f32 %v2214, 1.442695
        %v2224 = vpow.pop %v2223
        %v2225 = vmul.f32 %v2215, 1.442695
        %v2226 = vpow.pop %v2225
        %v2227 = vmul.f32 %v2216, 1.442695
        %v2228 = vpow.pop %v2227
        %v2229 = vmul.f32 %v2217, 1.442695
        %v2230 = vpow.pop %v2229
        %v2231 = vmul.f32 %v2218, 1.442695
        %v2232 = vpow.pop %v2231
        %v2233 = vmul.f32 %v2219, 1.442695
        %v2234 = vpow.pop %v2233
        %v2235 = vmul.f32 %v2220, 1.442695
        %v2236 = vpow.pop %v2235
        %v2237 = vsel %vm1422, %v2222, 0.0
        %2238 = vadd.xlane.f32.xlu0 %v2237
        %v2239 = vpop.xlane.xlu0 %2238
        %v2240 = vsel %vm1422, %v2224, 0.0
        %2241 = vadd.xlane.f32.xlu0 %v2240
        %v2242 = vpop.xlane.xlu0 %2241
        %v2243 = vsel %vm1422, %v2226, 0.0
        %2244 = vadd.xlane.f32.xlu0 %v2243
        %v2245 = vpop.xlane.xlu0 %2244
        %v2246 = vsel %vm1422, %v2228, 0.0
        %2247 = vadd.xlane.f32.xlu0 %v2246
        %v2248 = vpop.xlane.xlu0 %2247
        %v2249 = vsel %vm1422, %v2230, 0.0
        %2250 = vadd.xlane.f32.xlu0 %v2249
        %v2251 = vpop.xlane.xlu0 %2250
        %v2252 = vsel %vm1422, %v2232, 0.0
        %2253 = vadd.xlane.f32.xlu0 %v2252
        %v2254 = vpop.xlane.xlu0 %2253
        %v2255 = vsel %vm1422, %v2234, 0.0
        %2256 = vadd.xlane.f32.xlu0 %v2255
        %v2257 = vpop.xlane.xlu0 %2256
        %v2258 = vsel %vm1422, %v2236, 0.0
        %2259 = vadd.xlane.f32.xlu0 %v2258
        %v2260 = vpop.xlane.xlu0 %2259
        %v2261 = vrcp.pop %v2239
        %v2262 = vrcp.pop %v2242
        %v2263 = vrcp.pop %v2245
        %v2264 = vrcp.pop %v2248
        %v2265 = vrcp.pop %v2251
        %v2266 = vrcp.pop %v2254
        %v2267 = vrcp.pop %v2257
        %v2268 = vrcp.pop %v2260
        %v2269 = vpack.c.bf16 %v2224, %v2222
        %v2270 = vpack.c.bf16 %v2228, %v2226
        %v2271 = vpack.c.bf16 %v2232, %v2230
        %v2272 = vpack.c.bf16 %v2236, %v2234
        %2273 = vrot.lane.b32.xlu0 %v1328, 64
        %v2274 = vpop.permute.xlu0 %2273
        %2275 = vrot.lane.b32.xlu0 %v1329, 64
        %v2276 = vpop.permute.xlu0 %2275
        %2277 = vrot.lane.b32.xlu0 %v1330, 64
        %v2278 = vpop.permute.xlu0 %2277
        %2279 = vrot.lane.b32.xlu0 %v1331, 64
        %v2280 = vpop.permute.xlu0 %2279
        %v2286 = vsel %vm1422, %v2269, 0
        %v2289 = vsel %vm1422, %v2270, 0
        %v2292 = vsel %vm1422, %v2271, 0
        %v2295 = vsel %vm1422, %v2272, 0
        %2297 = vmatprep.subr.bf16.mxu0 0
        %2298 = vmatpush1.bf16.msra.mxu0 %v2274
        %2299 = vmatprep.subr.bf16.mxu0 0
        %2300 = vmatpush1.bf16.msra.mxu0 %v2276
        %2301 = vmatprep.subr.bf16.mxu0 0
        %2302 = vmatpush1.bf16.msra.mxu0 %v2278
        %2303 = vmatprep.subr.bf16.mxu0 0
        %2304 = vmatpush1.bf16.msra.mxu0 %v2280
        %2305 = vmatprep.subr.bf16.mxu0 0
        %2306 = vmatpush1.bf16.msra.mxu0 0
        %2307 = vmatprep.subr.bf16.mxu0 0
        %2308 = vmatpush1.bf16.msra.mxu0 0
        %2309 = vmatprep.subr.bf16.mxu0 0
        %2310 = vmatpush1.bf16.msra.mxu0 0
        %2311 = vmatprep.subr.bf16.mxu0 0
        %2312 = vmatpush1.bf16.msra.mxu0 0
        %2313 = vmatprep.subr.bf16.mxu0 0
        %2314 = vmatpush1.bf16.msra.mxu0 0
        %2315 = vmatprep.subr.bf16.mxu0 0
        %2316 = vmatpush1.bf16.msra.mxu0 0
        %2317 = vmatprep.subr.bf16.mxu0 0
        %2318 = vmatpush1.bf16.msra.mxu0 0
        %2319 = vmatprep.subr.bf16.mxu0 0
        %2320 = vmatpush1.bf16.msra.mxu0 0
        %2321 = vmatprep.subr.bf16.mxu0 0
        %2322 = vmatpush1.bf16.msra.mxu0 0
        %2323 = vmatprep.subr.bf16.mxu0 0
        %2324 = vmatpush1.bf16.msra.mxu0 0
        %2325 = vmatprep.subr.bf16.mxu0 0
        %2326 = vmatpush1.bf16.msra.mxu0 0
        %2327 = vmatprep.subr.bf16.mxu0 0
        %2328 = vmatpush1.bf16.msra.mxu0 0
        %2329 = vmatprep.mubr.bf16.mxu0 0
        %2330 = vmatmul.mubr.bf16.gmra.mrb[0].mxu0 %v2286
        %v2331 = vpop.f32.mrb[0].mxu0
        %v2332 = vadd.f32 0.0, %v2331
        %v2333 = vpop.f32.mrb[0].mxu0
        %v2334 = vpop.f32.mrb[0].mxu0
        %v2335 = vadd.f32 0.0, %v2334
        %v2336 = vpop.f32.mrb[0].mxu0
        %2337 = vmatprep.mubr.bf16.mxu0 0
        %2338 = vmatmul.mubr.bf16.gmra.mrb[0].mxu0 %v2289
        %v2339 = vpop.f32.mrb[0].mxu0
        %v2340 = vadd.f32 0.0, %v2339
        %v2341 = vpop.f32.mrb[0].mxu0
        %v2342 = vpop.f32.mrb[0].mxu0
        %v2343 = vadd.f32 0.0, %v2342
        %v2344 = vpop.f32.mrb[0].mxu0
        %2345 = vmatprep.mubr.bf16.mxu0 0
        %2346 = vmatmul.mubr.bf16.gmra.mrb[0].mxu0 %v2292
        %v2347 = vpop.f32.mrb[0].mxu0
        %v2348 = vadd.f32 0.0, %v2347
        %v2349 = vpop.f32.mrb[0].mxu0
        %v2350 = vpop.f32.mrb[0].mxu0
        %v2351 = vadd.f32 0.0, %v2350
        %v2352 = vpop.f32.mrb[0].mxu0
        %2353 = vmatprep.mubr.bf16.mxu0 0
        %2354 = vmatmul.mubr.bf16.gmra.mrb[0].mxu0 %v2295
        %v2355 = vpop.f32.mrb[0].mxu0
        %v2356 = vadd.f32 0.0, %v2355
        %v2357 = vpop.f32.mrb[0].mxu0
        %v2358 = vpop.f32.mrb[0].mxu0
        %v2359 = vadd.f32 0.0, %v2358
        %v2360 = vpop.f32.mrb[0].mxu0
        %2361 = vdwg.mxu0
        %v2362 = vmul.f32 %v2332, %v2261
        %v2363 = vmul.f32 %v2335, %v2262
        %v2364 = vmul.f32 %v2340, %v2263
        %v2365 = vmul.f32 %v2343, %v2264
        %v2366 = vmul.f32 %v2348, %v2265
        %v2367 = vmul.f32 %v2351, %v2266
        %v2368 = vmul.f32 %v2356, %v2267
        %v2369 = vmul.f32 %v2359, %v2268
        %v2370 = vpack.c.bf16 %v2363, %v2362
        %v2371 = vpack.c.bf16 %v2365, %v2364
        %v2372 = vpack.c.bf16 %v2367, %v2366
        %v2373 = vpack.c.bf16 %v2369, %v2368
        %v2374 = vld [vmem:[%s6 + $0x20] sm:$0xf]
        %v2375 = vld [vmem:[%s6 + $0x24] sm:$0xf]
        %v2376 = vld [vmem:[%s6 + $0x28] sm:$0xf]
        %v2377 = vld [vmem:[%s6 + $0x2c] sm:$0xf]
        %v2382 = vunpack.c.l.b16 %v2374
        %v2383 = vunpack.c.l.b16 %v2375
        %v2384 = vunpack.c.l.b16 %v2376
        %v2385 = vunpack.c.l.b16 %v2377
        %v2386 = vpack.c.b16 %v2383, %v2382
        %v2387 = vpack.c.b16 %v2385, %v2384
        %v2391 = vsel %vm1332, %v2370, 0
        %v2394 = vsel %vm1332, %v2371, 0
        %v2397 = vsel %vm1332, %v2372, 0
        %v2400 = vsel %vm1332, %v2373, 0
        %2402 = vmatprep.subr.bf16.mxu0 0
        %2403 = vmatpush1.bf16.msra.mxu0 %v2386
        %2404 = vmatprep.subr.bf16.mxu0 0
        %2405 = vmatpush1.bf16.msra.mxu0 %v2387
        %2406 = vmatprep.subr.bf16.mxu0 0
        %2407 = vmatpush1.bf16.msra.mxu0 0
        %2408 = vmatprep.subr.bf16.mxu0 0
        %2409 = vmatpush1.bf16.msra.mxu0 0
        %2410 = vmatprep.subr.bf16.mxu0 0
        %2411 = vmatpush1.bf16.msra.mxu0 0
        %2412 = vmatprep.subr.bf16.mxu0 0
        %2413 = vmatpush1.bf16.msra.mxu0 0
        %2414 = vmatprep.subr.bf16.mxu0 0
        %2415 = vmatpush1.bf16.msra.mxu0 0
        %2416 = vmatprep.subr.bf16.mxu0 0
        %2417 = vmatpush1.bf16.msra.mxu0 0
        %2418 = vmatprep.subr.bf16.mxu0 0
        %2419 = vmatpush1.bf16.msra.mxu0 0
        %2420 = vmatprep.subr.bf16.mxu0 0
        %2421 = vmatpush1.bf16.msra.mxu0 0
        %2422 = vmatprep.subr.bf16.mxu0 0
        %2423 = vmatpush1.bf16.msra.mxu0 0
        %2424 = vmatprep.subr.bf16.mxu0 0
        %2425 = vmatpush1.bf16.msra.mxu0 0
        %2426 = vmatprep.subr.bf16.mxu0 0
        %2427 = vmatpush1.bf16.msra.mxu0 0
        %2428 = vmatprep.subr.bf16.mxu0 0
        %2429 = vmatpush1.bf16.msra.mxu0 0
        %2430 = vmatprep.subr.bf16.mxu0 0
        %2431 = vmatpush1.bf16.msra.mxu0 0
        %2432 = vmatprep.subr.bf16.mxu0 0
        %2433 = vmatpush1.bf16.msra.mxu0 0
        %2434 = vmatprep.mubr.bf16.mxu0 0
        %2435 = vmatmul.mubr.bf16.gmra.mrb[0].mxu0 %v2391
        %v2436 = vpop.f32.mrb[0].mxu0
        %v2437 = vadd.f32 0.0, %v2436
        %v2438 = vpop.f32.mrb[0].mxu0
        %v2439 = vpop.f32.mrb[0].mxu0
        %v2440 = vadd.f32 0.0, %v2439
        %v2441 = vpop.f32.mrb[0].mxu0
        %2442 = vmatprep.mubr.bf16.mxu0 0
        %2443 = vmatmul.mubr.bf16.gmra.mrb[0].mxu0 %v2394
        %v2444 = vpop.f32.mrb[0].mxu0
        %v2445 = vadd.f32 0.0, %v2444
        %v2446 = vpop.f32.mrb[0].mxu0
        %v2447 = vpop.f32.mrb[0].mxu0
        %v2448 = vadd.f32 0.0, %v2447
        %v2449 = vpop.f32.mrb[0].mxu0
        %2450 = vmatprep.mubr.bf16.mxu0 0
        %2451 = vmatmul.mubr.bf16.gmra.mrb[0].mxu0 %v2397
        %v2452 = vpop.f32.mrb[0].mxu0
        %v2453 = vadd.f32 0.0, %v2452
        %v2454 = vpop.f32.mrb[0].mxu0
        %v2455 = vpop.f32.mrb[0].mxu0
        %v2456 = vadd.f32 0.0, %v2455
        %v2457 = vpop.f32.mrb[0].mxu0
        %2458 = vmatprep.mubr.bf16.mxu0 0
        %2459 = vmatmul.mubr.bf16.gmra.mrb[0].mxu0 %v2400
        %v2460 = vpop.f32.mrb[0].mxu0
        %v2461 = vadd.f32 0.0, %v2460
        %v2462 = vpop.f32.mrb[0].mxu0
        %v2463 = vpop.f32.mrb[0].mxu0
        %v2464 = vadd.f32 0.0, %v2463
        %v2465 = vpop.f32.mrb[0].mxu0
        %2466 = vdwg.mxu0
        %v2467 = vadd.f32 %v2054, %v2437
        %v2468 = vadd.f32 %v2057, %v2440
        %v2469 = vadd.f32 %v2062, %v2445
        %v2470 = vadd.f32 %v2065, %v2448
        %v2471 = vadd.f32 %v2070, %v2453
        %v2472 = vadd.f32 %v2073, %v2456
        %v2473 = vadd.f32 %v2078, %v2461
        %v2474 = vadd.f32 %v2081, %v2464
        %2475 = vrot.lane.b32.xlu0 %v1320, 32
        %v2476 = vpop.permute.xlu0 %2475
        %2477 = vrot.lane.b32.xlu0 %v1321, 32
        %v2478 = vpop.permute.xlu0 %2477
        %2479 = vrot.lane.b32.xlu0 %v1322, 32
        %v2480 = vpop.permute.xlu0 %2479
        %2481 = vrot.lane.b32.xlu0 %v1323, 32
        %v2482 = vpop.permute.xlu0 %2481
        %2483 = vrot.lane.b32.xlu0 %v1324, 32
        %v2484 = vpop.permute.xlu0 %2483
        %2485 = vrot.lane.b32.xlu0 %v1325, 32
        %v2486 = vpop.permute.xlu0 %2485
        %2487 = vrot.lane.b32.xlu0 %v1326, 32
        %v2488 = vpop.permute.xlu0 %2487
        %2489 = vrot.lane.b32.xlu0 %v1327, 32
        %v2490 = vpop.permute.xlu0 %2489
        %v2492 = vsel %vm1332, %v2476, 0
        %v2495 = vsel %vm1332, %v2478, 0
        %v2498 = vsel %vm1332, %v2480, 0
        %v2501 = vsel %vm1332, %v2482, 0
        %v2504 = vsel %vm1332, %v2484, 0
        %v2507 = vsel %vm1332, %v2486, 0
        %v2510 = vsel %vm1332, %v2488, 0
        %v2513 = vsel %vm1332, %v2490, 0
        %2515 = vmatprep.subr.bf16.mxu0 0
        %2516 = vmatpush1.bf16.xpose.msra.mxu0 %v2504
        %2517 = vmatprep.subr.bf16.mxu0 0
        %2518 = vmatpush1.bf16.xpose.msra.mxu0 %v2507
        %2519 = vmatprep.subr.bf16.mxu0 0
        %2520 = vmatpush1.bf16.xpose.msra.mxu0 %v2510
        %2521 = vmatprep.subr.bf16.mxu0 0
        %2522 = vmatpush1.bf16.xpose.msra.mxu0 %v2513
        %2523 = vmatprep.subr.bf16.mxu0 0
        %2524 = vmatpush1.bf16.xpose.msra.mxu0 0
        %2525 = vmatprep.subr.bf16.mxu0 0
        %2526 = vmatpush1.bf16.xpose.msra.mxu0 0
        %2527 = vmatprep.subr.bf16.mxu0 0
        %2528 = vmatpush1.bf16.xpose.msra.mxu0 0
        %2529 = vmatprep.subr.bf16.mxu0 0
        %2530 = vmatpush1.bf16.xpose.msra.mxu0 0
        %2531 = vmatprep.subr.bf16.mxu0 0
        %2532 = vmatpush1.bf16.xpose.msra.mxu0 0
        %2533 = vmatprep.subr.bf16.mxu0 0
        %2534 = vmatpush1.bf16.xpose.msra.mxu0 0
        %2535 = vmatprep.subr.bf16.mxu0 0
        %2536 = vmatpush1.bf16.xpose.msra.mxu0 0
        %2537 = vmatprep.subr.bf16.mxu0 0
        %2538 = vmatpush1.bf16.xpose.msra.mxu0 0
        %2539 = vmatprep.subr.bf16.mxu0 0
        %2540 = vmatpush1.bf16.xpose.msra.mxu0 0
        %2541 = vmatprep.subr.bf16.mxu0 0
        %2542 = vmatpush1.bf16.xpose.msra.mxu0 0
        %2543 = vmatprep.subr.bf16.mxu0 0
        %2544 = vmatpush1.bf16.xpose.msra.mxu0 0
        %2545 = vmatprep.subr.bf16.mxu0 0
        %2546 = vmatpush1.bf16.xpose.msra.mxu0 0
        %2547 = vmatprep.mubr.bf16.mxu0 0
        %2548 = vmatmul.mubr.bf16.gmra.mrb[0].mxu0 %v2492
        %v2549 = vpop.f32.mrb[0].mxu0
        %v2550 = vadd.f32 0.0, %v2549
        %v2551 = vpop.f32.mrb[0].mxu0
        %v2552 = vpop.f32.mrb[0].mxu0
        %v2553 = vadd.f32 0.0, %v2552
        %v2554 = vpop.f32.mrb[0].mxu0
        %2555 = vmatprep.mubr.bf16.mxu0 0
        %2556 = vmatmul.mubr.bf16.gmra.mrb[0].mxu0 %v2495
        %v2557 = vpop.f32.mrb[0].mxu0
        %v2558 = vadd.f32 0.0, %v2557
        %v2559 = vpop.f32.mrb[0].mxu0
        %v2560 = vpop.f32.mrb[0].mxu0
        %v2561 = vadd.f32 0.0, %v2560
        %v2562 = vpop.f32.mrb[0].mxu0
        %2563 = vmatprep.mubr.bf16.mxu0 0
        %2564 = vmatmul.mubr.bf16.gmra.mrb[0].mxu0 %v2498
        %v2565 = vpop.f32.mrb[0].mxu0
        %v2566 = vadd.f32 0.0, %v2565
        %v2567 = vpop.f32.mrb[0].mxu0
        %v2568 = vpop.f32.mrb[0].mxu0
        %v2569 = vadd.f32 0.0, %v2568
        %v2570 = vpop.f32.mrb[0].mxu0
        %2571 = vmatprep.mubr.bf16.mxu0 0
        %2572 = vmatmul.mubr.bf16.gmra.mrb[0].mxu0 %v2501
        %v2573 = vpop.f32.mrb[0].mxu0
        %v2574 = vadd.f32 0.0, %v2573
        %v2575 = vpop.f32.mrb[0].mxu0
        %v2576 = vpop.f32.mrb[0].mxu0
        %v2577 = vadd.f32 0.0, %v2576
        %v2578 = vpop.f32.mrb[0].mxu0
        %2579 = vdwg.mxu0
        %v2580 = vsel %vm1422, %v2550, -inf
        %2581 = vmax.xlane.f32.xlu0 %v2580
        %v2582 = vpop.xlane.xlu0 %2581
        %v2583 = vsel %vm1422, %v2553, -inf
        %2584 = vmax.xlane.f32.xlu0 %v2583
        %v2585 = vpop.xlane.xlu0 %2584
        %v2586 = vsel %vm1422, %v2558, -inf
        %2587 = vmax.xlane.f32.xlu0 %v2586
        %v2588 = vpop.xlane.xlu0 %2587
        %v2589 = vsel %vm1422, %v2561, -inf
        %2590 = vmax.xlane.f32.xlu0 %v2589
        %v2591 = vpop.xlane.xlu0 %2590
        %v2592 = vsel %vm1422, %v2566, -inf
        %2593 = vmax.xlane.f32.xlu0 %v2592
        %v2594 = vpop.xlane.xlu0 %2593
        %v2595 = vsel %vm1422, %v2569, -inf
        %2596 = vmax.xlane.f32.xlu0 %v2595
        %v2597 = vpop.xlane.xlu0 %2596
        %v2598 = vsel %vm1422, %v2574, -inf
        %2599 = vmax.xlane.f32.xlu0 %v2598
        %v2600 = vpop.xlane.xlu0 %2599
        %v2601 = vsel %vm1422, %v2577, -inf
        %2602 = vmax.xlane.f32.xlu0 %v2601
        %v2603 = vpop.xlane.xlu0 %2602
        %v2604 = vsub.f32 %v2550, %v2582
        %v2605 = vsub.f32 %v2553, %v2585
        %v2606 = vsub.f32 %v2558, %v2588
        %v2607 = vsub.f32 %v2561, %v2591
        %v2608 = vsub.f32 %v2566, %v2594
        %v2609 = vsub.f32 %v2569, %v2597
        %v2610 = vsub.f32 %v2574, %v2600
        %v2611 = vsub.f32 %v2577, %v2603
        %v2612 = vmul.f32 %v2604, 1.442695
        %v2613 = vpow.pop %v2612
        %v2614 = vmul.f32 %v2605, 1.442695
        %v2615 = vpow.pop %v2614
        %v2616 = vmul.f32 %v2606, 1.442695
        %v2617 = vpow.pop %v2616
        %v2618 = vmul.f32 %v2607, 1.442695
        %v2619 = vpow.pop %v2618
        %v2620 = vmul.f32 %v2608, 1.442695
        %v2621 = vpow.pop %v2620
        %v2622 = vmul.f32 %v2609, 1.442695
        %v2623 = vpow.pop %v2622
        %v2624 = vmul.f32 %v2610, 1.442695
        %v2625 = vpow.pop %v2624
        %v2626 = vmul.f32 %v2611, 1.442695
        %v2627 = vpow.pop %v2626
        %v2628 = vsel %vm1422, %v2613, 0.0
        %2629 = vadd.xlane.f32.xlu0 %v2628
        %v2630 = vpop.xlane.xlu0 %2629
        %v2631 = vsel %vm1422, %v2615, 0.0
        %2632 = vadd.xlane.f32.xlu0 %v2631
        %v2633 = vpop.xlane.xlu0 %2632
        %v2634 = vsel %vm1422, %v2617, 0.0
        %2635 = vadd.xlane.f32.xlu0 %v2634
        %v2636 = vpop.xlane.xlu0 %2635
        %v2637 = vsel %vm1422, %v2619, 0.0
        %2638 = vadd.xlane.f32.xlu0 %v2637
        %v2639 = vpop.xlane.xlu0 %2638
        %v2640 = vsel %vm1422, %v2621, 0.0
        %2641 = vadd.xlane.f32.xlu0 %v2640
        %v2642 = vpop.xlane.xlu0 %2641
        %v2643 = vsel %vm1422, %v2623, 0.0
        %2644 = vadd.xlane.f32.xlu0 %v2643
        %v2645 = vpop.xlane.xlu0 %2644
        %v2646 = vsel %vm1422, %v2625, 0.0
        %2647 = vadd.xlane.f32.xlu0 %v2646
        %v2648 = vpop.xlane.xlu0 %2647
        %v2649 = vsel %vm1422, %v2627, 0.0
        %2650 = vadd.xlane.f32.xlu0 %v2649
        %v2651 = vpop.xlane.xlu0 %2650
        %v2652 = vrcp.pop %v2630
        %v2653 = vrcp.pop %v2633
        %v2654 = vrcp.pop %v2636
        %v2655 = vrcp.pop %v2639
        %v2656 = vrcp.pop %v2642
        %v2657 = vrcp.pop %v2645
        %v2658 = vrcp.pop %v2648
        %v2659 = vrcp.pop %v2651
        %v2660 = vpack.c.bf16 %v2615, %v2613
        %v2661 = vpack.c.bf16 %v2619, %v2617
        %v2662 = vpack.c.bf16 %v2623, %v2621
        %v2663 = vpack.c.bf16 %v2627, %v2625
        %2664 = vrot.lane.b32.xlu0 %v1328, 32
        %v2665 = vpop.permute.xlu0 %2664
        %2666 = vrot.lane.b32.xlu0 %v1329, 32
        %v2667 = vpop.permute.xlu0 %2666
        %2668 = vrot.lane.b32.xlu0 %v1330, 32
        %v2669 = vpop.permute.xlu0 %2668
        %2670 = vrot.lane.b32.xlu0 %v1331, 32
        %v2671 = vpop.permute.xlu0 %2670
        %v2677 = vsel %vm1422, %v2660, 0
        %v2680 = vsel %vm1422, %v2661, 0
        %v2683 = vsel %vm1422, %v2662, 0
        %v2686 = vsel %vm1422, %v2663, 0
        %2688 = vmatprep.subr.bf16.mxu0 0
        %2689 = vmatpush1.bf16.msra.mxu0 %v2665
        %2690 = vmatprep.subr.bf16.mxu0 0
        %2691 = vmatpush1.bf16.msra.mxu0 %v2667
        %2692 = vmatprep.subr.bf16.mxu0 0
        %2693 = vmatpush1.bf16.msra.mxu0 %v2669
        %2694 = vmatprep.subr.bf16.mxu0 0
        %2695 = vmatpush1.bf16.msra.mxu0 %v2671
        %2696 = vmatprep.subr.bf16.mxu0 0
        %2697 = vmatpush1.bf16.msra.mxu0 0
        %2698 = vmatprep.subr.bf16.mxu0 0
        %2699 = vmatpush1.bf16.msra.mxu0 0
        %2700 = vmatprep.subr.bf16.mxu0 0
        %2701 = vmatpush1.bf16.msra.mxu0 0
        %2702 = vmatprep.subr.bf16.mxu0 0
        %2703 = vmatpush1.bf16.msra.mxu0 0
        %2704 = vmatprep.subr.bf16.mxu0 0
        %2705 = vmatpush1.bf16.msra.mxu0 0
        %2706 = vmatprep.subr.bf16.mxu0 0
        %2707 = vmatpush1.bf16.msra.mxu0 0
        %2708 = vmatprep.subr.bf16.mxu0 0
        %2709 = vmatpush1.bf16.msra.mxu0 0
        %2710 = vmatprep.subr.bf16.mxu0 0
        %2711 = vmatpush1.bf16.msra.mxu0 0
        %2712 = vmatprep.subr.bf16.mxu0 0
        %2713 = vmatpush1.bf16.msra.mxu0 0
        %2714 = vmatprep.subr.bf16.mxu0 0
        %2715 = vmatpush1.bf16.msra.mxu0 0
        %2716 = vmatprep.subr.bf16.mxu0 0
        %2717 = vmatpush1.bf16.msra.mxu0 0
        %2718 = vmatprep.subr.bf16.mxu0 0
        %2719 = vmatpush1.bf16.msra.mxu0 0
        %2720 = vmatprep.mubr.bf16.mxu0 0
        %2721 = vmatmul.mubr.bf16.gmra.mrb[0].mxu0 %v2677
        %v2722 = vpop.f32.mrb[0].mxu0
        %v2723 = vadd.f32 0.0, %v2722
        %v2724 = vpop.f32.mrb[0].mxu0
        %v2725 = vpop.f32.mrb[0].mxu0
        %v2726 = vadd.f32 0.0, %v2725
        %v2727 = vpop.f32.mrb[0].mxu0
        %2728 = vmatprep.mubr.bf16.mxu0 0
        %2729 = vmatmul.mubr.bf16.gmra.mrb[0].mxu0 %v2680
        %v2730 = vpop.f32.mrb[0].mxu0
        %v2731 = vadd.f32 0.0, %v2730
        %v2732 = vpop.f32.mrb[0].mxu0
        %v2733 = vpop.f32.mrb[0].mxu0
        %v2734 = vadd.f32 0.0, %v2733
        %v2735 = vpop.f32.mrb[0].mxu0
        %2736 = vmatprep.mubr.bf16.mxu0 0
        %2737 = vmatmul.mubr.bf16.gmra.mrb[0].mxu0 %v2683
        %v2738 = vpop.f32.mrb[0].mxu0
        %v2739 = vadd.f32 0.0, %v2738
        %v2740 = vpop.f32.mrb[0].mxu0
        %v2741 = vpop.f32.mrb[0].mxu0
        %v2742 = vadd.f32 0.0, %v2741
        %v2743 = vpop.f32.mrb[0].mxu0
        %2744 = vmatprep.mubr.bf16.mxu0 0
        %2745 = vmatmul.mubr.bf16.gmra.mrb[0].mxu0 %v2686
        %v2746 = vpop.f32.mrb[0].mxu0
        %v2747 = vadd.f32 0.0, %v2746
        %v2748 = vpop.f32.mrb[0].mxu0
        %v2749 = vpop.f32.mrb[0].mxu0
        %v2750 = vadd.f32 0.0, %v2749
        %v2751 = vpop.f32.mrb[0].mxu0
        %2752 = vdwg.mxu0
        %v2753 = vmul.f32 %v2723, %v2652
        %v2754 = vmul.f32 %v2726, %v2653
        %v2755 = vmul.f32 %v2731, %v2654
        %v2756 = vmul.f32 %v2734, %v2655
        %v2757 = vmul.f32 %v2739, %v2656
        %v2758 = vmul.f32 %v2742, %v2657
        %v2759 = vmul.f32 %v2747, %v2658
        %v2760 = vmul.f32 %v2750, %v2659
        %v2761 = vpack.c.bf16 %v2754, %v2753
        %v2762 = vpack.c.bf16 %v2756, %v2755
        %v2763 = vpack.c.bf16 %v2758, %v2757
        %v2764 = vpack.c.bf16 %v2760, %v2759
        %v2765 = vld [vmem:[%s6 + $0x30] sm:$0xf]
        %v2766 = vld [vmem:[%s6 + $0x34] sm:$0xf]
        %v2767 = vld [vmem:[%s6 + $0x38] sm:$0xf]
        %v2768 = vld [vmem:[%s6 + $0x3c] sm:$0xf]
        %v2773 = vunpack.c.l.b16 %v2765
        %v2774 = vunpack.c.l.b16 %v2766
        %v2775 = vunpack.c.l.b16 %v2767
        %v2776 = vunpack.c.l.b16 %v2768
        %v2777 = vpack.c.b16 %v2774, %v2773
        %v2778 = vpack.c.b16 %v2776, %v2775
        %v2782 = vsel %vm1332, %v2761, 0
        %v2785 = vsel %vm1332, %v2762, 0
        %v2788 = vsel %vm1332, %v2763, 0
        %v2791 = vsel %vm1332, %v2764, 0
        %2793 = vmatprep.subr.bf16.mxu0 0
        %2794 = vmatpush1.bf16.msra.mxu0 %v2777
        %2795 = vmatprep.subr.bf16.mxu0 0
        %2796 = vmatpush1.bf16.msra.mxu0 %v2778
        %2797 = vmatprep.subr.bf16.mxu0 0
        %2798 = vmatpush1.bf16.msra.mxu0 0
        %2799 = vmatprep.subr.bf16.mxu0 0
        %2800 = vmatpush1.bf16.msra.mxu0 0
        %2801 = vmatprep.subr.bf16.mxu0 0
        %2802 = vmatpush1.bf16.msra.mxu0 0
        %2803 = vmatprep.subr.bf16.mxu0 0
        %2804 = vmatpush1.bf16.msra.mxu0 0
        %2805 = vmatprep.subr.bf16.mxu0 0
        %2806 = vmatpush1.bf16.msra.mxu0 0
        %2807 = vmatprep.subr.bf16.mxu0 0
        %2808 = vmatpush1.bf16.msra.mxu0 0
        %2809 = vmatprep.subr.bf16.mxu0 0
        %2810 = vmatpush1.bf16.msra.mxu0 0
        %2811 = vmatprep.subr.bf16.mxu0 0
        %2812 = vmatpush1.bf16.msra.mxu0 0
        %2813 = vmatprep.subr.bf16.mxu0 0
        %2814 = vmatpush1.bf16.msra.mxu0 0
        %2815 = vmatprep.subr.bf16.mxu0 0
        %2816 = vmatpush1.bf16.msra.mxu0 0
        %2817 = vmatprep.subr.bf16.mxu0 0
        %2818 = vmatpush1.bf16.msra.mxu0 0
        %2819 = vmatprep.subr.bf16.mxu0 0
        %2820 = vmatpush1.bf16.msra.mxu0 0
        %2821 = vmatprep.subr.bf16.mxu0 0
        %2822 = vmatpush1.bf16.msra.mxu0 0
        %2823 = vmatprep.subr.bf16.mxu0 0
        %2824 = vmatpush1.bf16.msra.mxu0 0
        %2825 = vmatprep.mubr.bf16.mxu0 0
        %2826 = vmatmul.mubr.bf16.gmra.mrb[0].mxu0 %v2782
        %v2827 = vpop.f32.mrb[0].mxu0
        %v2828 = vadd.f32 0.0, %v2827
        %v2829 = vpop.f32.mrb[0].mxu0
        %v2830 = vpop.f32.mrb[0].mxu0
        %v2831 = vadd.f32 0.0, %v2830
        %v2832 = vpop.f32.mrb[0].mxu0
        %2833 = vmatprep.mubr.bf16.mxu0 0
        %2834 = vmatmul.mubr.bf16.gmra.mrb[0].mxu0 %v2785
        %v2835 = vpop.f32.mrb[0].mxu0
        %v2836 = vadd.f32 0.0, %v2835
        %v2837 = vpop.f32.mrb[0].mxu0
        %v2838 = vpop.f32.mrb[0].mxu0
        %v2839 = vadd.f32 0.0, %v2838
        %v2840 = vpop.f32.mrb[0].mxu0
        %2841 = vmatprep.mubr.bf16.mxu0 0
        %2842 = vmatmul.mubr.bf16.gmra.mrb[0].mxu0 %v2788
        %v2843 = vpop.f32.mrb[0].mxu0
        %v2844 = vadd.f32 0.0, %v2843
        %v2845 = vpop.f32.mrb[0].mxu0
        %v2846 = vpop.f32.mrb[0].mxu0
        %v2847 = vadd.f32 0.0, %v2846
        %v2848 = vpop.f32.mrb[0].mxu0
        %2849 = vmatprep.mubr.bf16.mxu0 0
        %2850 = vmatmul.mubr.bf16.gmra.mrb[0].mxu0 %v2791
        %v2851 = vpop.f32.mrb[0].mxu0
        %v2852 = vadd.f32 0.0, %v2851
        %v2853 = vpop.f32.mrb[0].mxu0
        %v2854 = vpop.f32.mrb[0].mxu0
        %v2855 = vadd.f32 0.0, %v2854
        %v2856 = vpop.f32.mrb[0].mxu0
        %2857 = vdwg.mxu0
        %v2858 = vadd.f32 %v2467, %v2828
        %v2859 = vadd.f32 %v2468, %v2831
        %v2860 = vadd.f32 %v2469, %v2836
        %v2861 = vadd.f32 %v2470, %v2839
        %v2862 = vadd.f32 %v2471, %v2844
        %v2863 = vadd.f32 %v2472, %v2847
        %v2864 = vadd.f32 %v2473, %v2852
        %v2865 = vadd.f32 %v2474, %v2855
        %v2866 = vld [vmem:[%s7] sm:$0x1]
        %v2868 = vlaneseq
        %v2869 = vshrl.u32 %v2868, 7
        %v2870 = vsub.s32 0, %v2869
        %v2871 = vrot.slane %v2866, %v2870
        %v2873 = vadd.f32 %v2858, %v2871
        %v2874 = vadd.f32 %v2859, %v2871
        %v2875 = vadd.f32 %v2860, %v2871
        %v2876 = vadd.f32 %v2861, %v2871
        %v2877 = vadd.f32 %v2862, %v2871
        %v2878 = vadd.f32 %v2863, %v2871
        %v2879 = vadd.f32 %v2864, %v2871
        %v2880 = vadd.f32 %v2865, %v2871
        %v2881 = vlaneseq
        %v2882 = vshrl.u32 %v2881, 7
        %v2883 = vsub.s32 0, %v2882
        %v2884 = vrot.slane %v840, %v2883
        %v2885 = vmul.f32 %v2884, %v2873
        %v2886 = vmul.f32 %v2884, %v2874
        %v2887 = vmul.f32 %v2884, %v2875
        %v2888 = vmul.f32 %v2884, %v2876
        %v2889 = vmul.f32 %v2884, %v2877
        %v2890 = vmul.f32 %v2884, %v2878
        %v2891 = vmul.f32 %v2884, %v2879
        %v2892 = vmul.f32 %v2884, %v2880
        %v2893 = vadd.f32 %v427, %v2885
        %v2894 = vadd.f32 %v428, %v2886
        %v2895 = vadd.f32 %v429, %v2887
        %v2896 = vadd.f32 %v430, %v2888
        %v2897 = vadd.f32 %v431, %v2889
        %v2898 = vadd.f32 %v432, %v2890
        %v2899 = vadd.f32 %v433, %v2891
        %v2900 = vadd.f32 %v434, %v2892
        %2901 = vadd.xlane.f32.xlu0 %v2893
        %v2902 = vpop.xlane.xlu0 %2901
        %2903 = vadd.xlane.f32.xlu0 %v2894
        %v2904 = vpop.xlane.xlu0 %2903
        %2905 = vadd.xlane.f32.xlu0 %v2895
        %v2906 = vpop.xlane.xlu0 %2905
        %2907 = vadd.xlane.f32.xlu0 %v2896
        %v2908 = vpop.xlane.xlu0 %2907
        %2909 = vadd.xlane.f32.xlu0 %v2897
        %v2910 = vpop.xlane.xlu0 %2909
        %2911 = vadd.xlane.f32.xlu0 %v2898
        %v2912 = vpop.xlane.xlu0 %2911
        %2913 = vadd.xlane.f32.xlu0 %v2899
        %v2914 = vpop.xlane.xlu0 %2913
        %2915 = vadd.xlane.f32.xlu0 %v2900
        %v2916 = vpop.xlane.xlu0 %2915
        %v2917 = vmul.f32 %v2902, %v903
        %v2918 = vmul.f32 %v2904, %v903
        %v2919 = vmul.f32 %v2906, %v903
        %v2920 = vmul.f32 %v2908, %v903
        %v2921 = vmul.f32 %v2910, %v903
        %v2922 = vmul.f32 %v2912, %v903
        %v2923 = vmul.f32 %v2914, %v903
        %v2924 = vmul.f32 %v2916, %v903
        %v2925 = vsub.f32 %v2893, %v2917
        %v2926 = vsub.f32 %v2894, %v2918
        %v2927 = vsub.f32 %v2895, %v2919
        %v2928 = vsub.f32 %v2896, %v2920
        %v2929 = vsub.f32 %v2897, %v2921
        %v2930 = vsub.f32 %v2898, %v2922
        %v2931 = vsub.f32 %v2899, %v2923
        %v2932 = vsub.f32 %v2900, %v2924
        %v2933 = vmul.f32 %v2925, %v2925
        %v2934 = vmul.f32 %v2926, %v2926
        %v2935 = vmul.f32 %v2927, %v2927
        %v2936 = vmul.f32 %v2928, %v2928
        %v2937 = vmul.f32 %v2929, %v2929
        %v2938 = vmul.f32 %v2930, %v2930
        %v2939 = vmul.f32 %v2931, %v2931
        %v2940 = vmul.f32 %v2932, %v2932
        %2941 = vadd.xlane.f32.xlu0 %v2933
        %v2942 = vpop.xlane.xlu0 %2941
        %2943 = vadd.xlane.f32.xlu0 %v2934
        %v2944 = vpop.xlane.xlu0 %2943
        %2945 = vadd.xlane.f32.xlu0 %v2935
        %v2946 = vpop.xlane.xlu0 %2945
        %2947 = vadd.xlane.f32.xlu0 %v2936
        %v2948 = vpop.xlane.xlu0 %2947
        %2949 = vadd.xlane.f32.xlu0 %v2937
        %v2950 = vpop.xlane.xlu0 %2949
        %2951 = vadd.xlane.f32.xlu0 %v2938
        %v2952 = vpop.xlane.xlu0 %2951
        %2953 = vadd.xlane.f32.xlu0 %v2939
        %v2954 = vpop.xlane.xlu0 %2953
        %2955 = vadd.xlane.f32.xlu0 %v2940
        %v2956 = vpop.xlane.xlu0 %2955
        %v2957 = vmul.f32 %v2942, %v903
        %v2958 = vmul.f32 %v2944, %v903
        %v2959 = vmul.f32 %v2946, %v903
        %v2960 = vmul.f32 %v2948, %v903
        %v2961 = vmul.f32 %v2950, %v903
        %v2962 = vmul.f32 %v2952, %v903
        %v2963 = vmul.f32 %v2954, %v903
        %v2964 = vmul.f32 %v2956, %v903
        %v2965 = vadd.f32 %v2957, 1e-06
        %v2966 = vadd.f32 %v2958, 1e-06
        %v2967 = vadd.f32 %v2959, 1e-06
        %v2968 = vadd.f32 %v2960, 1e-06
        %v2969 = vadd.f32 %v2961, 1e-06
        %v2970 = vadd.f32 %v2962, 1e-06
        %v2971 = vadd.f32 %v2963, 1e-06
        %v2972 = vadd.f32 %v2964, 1e-06
        %v2973 = vrsqrt.pop %v2965
        %v2974 = vrsqrt.pop %v2966
        %v2975 = vrsqrt.pop %v2967
        %v2976 = vrsqrt.pop %v2968
        %v2977 = vrsqrt.pop %v2969
        %v2978 = vrsqrt.pop %v2970
        %v2979 = vrsqrt.pop %v2971
        %v2980 = vrsqrt.pop %v2972
        %v2981 = vmul.f32 %v2925, %v2973
        %v2982 = vmul.f32 %v2926, %v2974
        %v2983 = vmul.f32 %v2927, %v2975
        %v2984 = vmul.f32 %v2928, %v2976
        %v2985 = vmul.f32 %v2929, %v2977
        %v2986 = vmul.f32 %v2930, %v2978
        %v2987 = vmul.f32 %v2931, %v2979
        %v2988 = vmul.f32 %v2932, %v2980
        %v2989 = vadd.f32 %v881, 1.0
        %v2990 = vlaneseq
        %v2991 = vshrl.u32 %v2990, 7
        %v2992 = vsub.s32 0, %v2991
        %v2993 = vrot.slane %v2989, %v2992
        %v2994 = vmul.f32 %v2981, %v2993
        %v2995 = vmul.f32 %v2982, %v2993
        %v2996 = vmul.f32 %v2983, %v2993
        %v2997 = vmul.f32 %v2984, %v2993
        %v2998 = vmul.f32 %v2985, %v2993
        %v2999 = vmul.f32 %v2986, %v2993
        %v3000 = vmul.f32 %v2987, %v2993
        %v3001 = vmul.f32 %v2988, %v2993
        %v3002 = vlaneseq
        %v3003 = vshrl.u32 %v3002, 7
        %v3004 = vsub.s32 0, %v3003
        %v3005 = vrot.slane %v842, %v3004
        %v3006 = vadd.f32 %v2994, %v3005
        %v3007 = vadd.f32 %v2995, %v3005
        %v3008 = vadd.f32 %v2996, %v3005
        %v3009 = vadd.f32 %v2997, %v3005
        %v3010 = vadd.f32 %v2998, %v3005
        %v3011 = vadd.f32 %v2999, %v3005
        %v3012 = vadd.f32 %v3000, %v3005
        %v3013 = vadd.f32 %v3001, %v3005
        %v3014 = vpack.c.bf16 %v3007, %v3006
        %v3015 = vpack.c.bf16 %v3009, %v3008
        %v3016 = vpack.c.bf16 %v3011, %v3010
        %v3017 = vpack.c.bf16 %v3013, %v3012
        %v3018 = vld [vmem:[%s8] sm:$0xff]
        %v3019 = vld [vmem:[%s8 + $0x8] sm:$0xff]
        %v3020 = vld [vmem:[%s8 + $0x10] sm:$0xff]
        %v3021 = vld [vmem:[%s8 + $0x18] sm:$0xff]
        %v3022 = vld [vmem:[%s8 + $0x20] sm:$0xff]
        %v3023 = vld [vmem:[%s8 + $0x28] sm:$0xff]
        %v3024 = vld [vmem:[%s8 + $0x30] sm:$0xff]
        %v3025 = vld [vmem:[%s8 + $0x38] sm:$0xff]
        %v3026 = vld [vmem:[%s8 + $0x40] sm:$0xff]
        %v3027 = vld [vmem:[%s8 + $0x48] sm:$0xff]
        %v3028 = vld [vmem:[%s8 + $0x50] sm:$0xff]
        %v3029 = vld [vmem:[%s8 + $0x58] sm:$0xff]
        %v3030 = vld [vmem:[%s8 + $0x60] sm:$0xff]
        %v3031 = vld [vmem:[%s8 + $0x68] sm:$0xff]
        %v3032 = vld [vmem:[%s8 + $0x70] sm:$0xff]
        %v3033 = vld [vmem:[%s8 + $0x78] sm:$0xff]
        %v3034 = vld [vmem:[%s8 + $0x80] sm:$0xff]
        %v3035 = vld [vmem:[%s8 + $0x88] sm:$0xff]
        %v3036 = vld [vmem:[%s8 + $0x90] sm:$0xff]
        %v3037 = vld [vmem:[%s8 + $0x98] sm:$0xff]
        %v3038 = vld [vmem:[%s8 + $0xa0] sm:$0xff]
        %v3039 = vld [vmem:[%s8 + $0xa8] sm:$0xff]
        %v3040 = vld [vmem:[%s8 + $0xb0] sm:$0xff]
        %v3041 = vld [vmem:[%s8 + $0xb8] sm:$0xff]
        %v3042 = vld [vmem:[%s8 + $0xc0] sm:$0xff]
        %v3043 = vld [vmem:[%s8 + $0xc8] sm:$0xff]
        %v3044 = vld [vmem:[%s8 + $0xd0] sm:$0xff]
        %v3045 = vld [vmem:[%s8 + $0xd8] sm:$0xff]
        %v3046 = vld [vmem:[%s8 + $0xe0] sm:$0xff]
        %v3047 = vld [vmem:[%s8 + $0xe8] sm:$0xff]
        %v3048 = vld [vmem:[%s8 + $0xf0] sm:$0xff]
        %v3049 = vld [vmem:[%s8 + $0xf8] sm:$0xff]
        %v3050 = vld [vmem:[%s9] sm:$0xf]
        %v3052 = vlaneseq
        %v3053 = vshrl.u32 %v3052, 7
        %v3054 = vsub.s32 0, %v3053
        %v3055 = vrot.slane %v3050, %v3054
        %v3056 = vlaneseq
        %v3057 = vshrl.u32 %v3056, 7
        %v3058 = vsub.s32 1, %v3057
        %v3059 = vrot.slane %v3050, %v3058
        %v3060 = vlaneseq
        %v3061 = vshrl.u32 %v3060, 7
        %v3062 = vsub.s32 2, %v3061
        %v3063 = vrot.slane %v3050, %v3062
        %v3064 = vlaneseq
        %v3065 = vshrl.u32 %v3064, 7
        %v3066 = vsub.s32 3, %v3065
        %v3067 = vrot.slane %v3050, %v3066
        %v3104 = vunpack.c.l.b16 %v3018
        %v3105 = vunpack.c.h.b16 %v3018
        %v3106 = vunpack.c.l.b16 %v3019
        %v3107 = vunpack.c.h.b16 %v3019
        %v3108 = vunpack.c.l.b16 %v3020
        %v3109 = vunpack.c.h.b16 %v3020
        %v3110 = vunpack.c.l.b16 %v3021
        %v3111 = vunpack.c.h.b16 %v3021
        %v3112 = vunpack.c.l.b16 %v3022
        %v3113 = vunpack.c.h.b16 %v3022
        %v3114 = vunpack.c.l.b16 %v3023
        %v3115 = vunpack.c.h.b16 %v3023
        %v3116 = vunpack.c.l.b16 %v3024
        %v3117 = vunpack.c.h.b16 %v3024
        %v3118 = vunpack.c.l.b16 %v3025
        %v3119 = vunpack.c.h.b16 %v3025
        %v3120 = vunpack.c.l.b16 %v3026
        %v3121 = vunpack.c.h.b16 %v3026
        %v3122 = vunpack.c.l.b16 %v3027
        %v3123 = vunpack.c.h.b16 %v3027
        %v3124 = vunpack.c.l.b16 %v3028
        %v3125 = vunpack.c.h.b16 %v3028
        %v3126 = vunpack.c.l.b16 %v3029
        %v3127 = vunpack.c.h.b16 %v3029
        %v3128 = vunpack.c.l.b16 %v3030
        %v3129 = vunpack.c.h.b16 %v3030
        %v3130 = vunpack.c.l.b16 %v3031
        %v3131 = vunpack.c.h.b16 %v3031
        %v3132 = vunpack.c.l.b16 %v3032
        %v3133 = vunpack.c.h.b16 %v3032
        %v3134 = vunpack.c.l.b16 %v3033
        %v3135 = vunpack.c.h.b16 %v3033
        %v3136 = vunpack.c.l.b16 %v3034
        %v3137 = vunpack.c.h.b16 %v3034
        %v3138 = vunpack.c.l.b16 %v3035
        %v3139 = vunpack.c.h.b16 %v3035
        %v3140 = vunpack.c.l.b16 %v3036
        %v3141 = vunpack.c.h.b16 %v3036
        %v3142 = vunpack.c.l.b16 %v3037
        %v3143 = vunpack.c.h.b16 %v3037
        %v3144 = vunpack.c.l.b16 %v3038
        %v3145 = vunpack.c.h.b16 %v3038
        %v3146 = vunpack.c.l.b16 %v3039
        %v3147 = vunpack.c.h.b16 %v3039
        %v3148 = vunpack.c.l.b16 %v3040
        %v3149 = vunpack.c.h.b16 %v3040
        %v3150 = vunpack.c.l.b16 %v3041
        %v3151 = vunpack.c.h.b16 %v3041
        %v3152 = vunpack.c.l.b16 %v3042
        %v3153 = vunpack.c.h.b16 %v3042
        %v3154 = vunpack.c.l.b16 %v3043
        %v3155 = vunpack.c.h.b16 %v3043
        %v3156 = vunpack.c.l.b16 %v3044
        %v3157 = vunpack.c.h.b16 %v3044
        %v3158 = vunpack.c.l.b16 %v3045
        %v3159 = vunpack.c.h.b16 %v3045
        %v3160 = vunpack.c.l.b16 %v3046
        %v3161 = vunpack.c.h.b16 %v3046
        %v3162 = vunpack.c.l.b16 %v3047
        %v3163 = vunpack.c.h.b16 %v3047
        %v3164 = vunpack.c.l.b16 %v3048
        %v3165 = vunpack.c.h.b16 %v3048
        %v3166 = vunpack.c.l.b16 %v3049
        %v3167 = vunpack.c.h.b16 %v3049
        %v3168 = vpack.c.b16 %v3108, %v3104
        %v3169 = vpack.c.b16 %v3109, %v3105
        %v3170 = vpack.c.b16 %v3110, %v3106
        %v3171 = vpack.c.b16 %v3111, %v3107
        %v3172 = vpack.c.b16 %v3116, %v3112
        %v3173 = vpack.c.b16 %v3117, %v3113
        %v3174 = vpack.c.b16 %v3118, %v3114
        %v3175 = vpack.c.b16 %v3119, %v3115
        %v3176 = vpack.c.b16 %v3124, %v3120
        %v3177 = vpack.c.b16 %v3125, %v3121
        %v3178 = vpack.c.b16 %v3126, %v3122
        %v3179 = vpack.c.b16 %v3127, %v3123
        %v3180 = vpack.c.b16 %v3132, %v3128
        %v3181 = vpack.c.b16 %v3133, %v3129
        %v3182 = vpack.c.b16 %v3134, %v3130
        %v3183 = vpack.c.b16 %v3135, %v3131
        %v3184 = vpack.c.b16 %v3140, %v3136
        %v3185 = vpack.c.b16 %v3141, %v3137
        %v3186 = vpack.c.b16 %v3142, %v3138
        %v3187 = vpack.c.b16 %v3143, %v3139
        %v3188 = vpack.c.b16 %v3148, %v3144
        %v3189 = vpack.c.b16 %v3149, %v3145
        %v3190 = vpack.c.b16 %v3150, %v3146
        %v3191 = vpack.c.b16 %v3151, %v3147
        %v3192 = vpack.c.b16 %v3156, %v3152
        %v3193 = vpack.c.b16 %v3157, %v3153
        %v3194 = vpack.c.b16 %v3158, %v3154
        %v3195 = vpack.c.b16 %v3159, %v3155
        %v3196 = vpack.c.b16 %v3164, %v3160
        %v3197 = vpack.c.b16 %v3165, %v3161
        %v3198 = vpack.c.b16 %v3166, %v3162
        %v3199 = vpack.c.b16 %v3167, %v3163
        %3232 = vmatprep.subr.bf16.mxu0 %v3169
        %3233 = vmatpush1.bf16.msra.mxu0 %v3168
        %3234 = vmatprep.subr.bf16.mxu0 %v3173
        %3235 = vmatpush1.bf16.msra.mxu0 %v3172
        %3236 = vmatprep.subr.bf16.mxu0 %v3177
        %3237 = vmatpush1.bf16.msra.mxu0 %v3176
        %3238 = vmatprep.subr.bf16.mxu0 %v3181
        %3239 = vmatpush1.bf16.msra.mxu0 %v3180
        %3240 = vmatprep.subr.bf16.mxu0 %v3185
        %3241 = vmatpush1.bf16.msra.mxu0 %v3184
        %3242 = vmatprep.subr.bf16.mxu0 %v3189
        %3243 = vmatpush1.bf16.msra.mxu0 %v3188
        %3244 = vmatprep.subr.bf16.mxu0 %v3193
        %3245 = vmatpush1.bf16.msra.mxu0 %v3192
        %3246 = vmatprep.subr.bf16.mxu0 %v3197
        %3247 = vmatpush1.bf16.msra.mxu0 %v3196
        %3248 = vmatprep.subr.bf16.mxu0 0
        %3249 = vmatpush1.bf16.msra.mxu0 0
        %3250 = vmatprep.subr.bf16.mxu0 0
        %3251 = vmatpush1.bf16.msra.mxu0 0
        %3252 = vmatprep.subr.bf16.mxu0 0
        %3253 = vmatpush1.bf16.msra.mxu0 0
        %3254 = vmatprep.subr.bf16.mxu0 0
        %3255 = vmatpush1.bf16.msra.mxu0 0
        %3256 = vmatprep.subr.bf16.mxu0 0
        %3257 = vmatpush1.bf16.msra.mxu0 0
        %3258 = vmatprep.subr.bf16.mxu0 0
        %3259 = vmatpush1.bf16.msra.mxu0 0
        %3260 = vmatprep.subr.bf16.mxu0 0
        %3261 = vmatpush1.bf16.msra.mxu0 0
        %3262 = vmatprep.subr.bf16.mxu0 0
        %3263 = vmatpush1.bf16.msra.mxu0 0
        %3264 = vmatprep.mubr.bf16.mxu0 0
        %3265 = vmatmul.mubr.bf16.gmra.mrb[0].mxu0 %v3014
        %v3266 = vpop.f32.mrb[0].mxu0
        %v3267 = vadd.f32 %v3055, %v3266
        %v3268 = vpop.f32.mrb[0].mxu0
        %v3269 = vadd.f32 %v3059, %v3268
        %v3270 = vpop.f32.mrb[0].mxu0
        %v3271 = vadd.f32 %v3055, %v3270
        %v3272 = vpop.f32.mrb[0].mxu0
        %v3273 = vadd.f32 %v3059, %v3272
        %3274 = vmatprep.mubr.bf16.mxu0 0
        %3275 = vmatmul.mubr.bf16.gmra.mrb[0].mxu0 %v3015
        %v3276 = vpop.f32.mrb[0].mxu0
        %v3277 = vadd.f32 %v3055, %v3276
        %v3278 = vpop.f32.mrb[0].mxu0
        %v3279 = vadd.f32 %v3059, %v3278
        %v3280 = vpop.f32.mrb[0].mxu0
        %v3281 = vadd.f32 %v3055, %v3280
        %v3282 = vpop.f32.mrb[0].mxu0
        %v3283 = vadd.f32 %v3059, %v3282
        %3284 = vmatprep.mubr.bf16.mxu0 0
        %3285 = vmatmul.mubr.bf16.gmra.mrb[0].mxu0 %v3016
        %v3286 = vpop.f32.mrb[0].mxu0
        %v3287 = vadd.f32 %v3055, %v3286
        %v3288 = vpop.f32.mrb[0].mxu0
        %v3289 = vadd.f32 %v3059, %v3288
        %v3290 = vpop.f32.mrb[0].mxu0
        %v3291 = vadd.f32 %v3055, %v3290
        %v3292 = vpop.f32.mrb[0].mxu0
        %v3293 = vadd.f32 %v3059, %v3292
        %3294 = vmatprep.mubr.bf16.mxu0 0
        %3295 = vmatmul.mubr.bf16.gmra.mrb[0].mxu0 %v3017
        %v3296 = vpop.f32.mrb[0].mxu0
        %v3297 = vadd.f32 %v3055, %v3296
        %v3298 = vpop.f32.mrb[0].mxu0
        %v3299 = vadd.f32 %v3059, %v3298
        %v3300 = vpop.f32.mrb[0].mxu0
        %v3301 = vadd.f32 %v3055, %v3300
        %v3302 = vpop.f32.mrb[0].mxu0
        %v3303 = vadd.f32 %v3059, %v3302
        %3304 = vdwg.mxu0
        %3305 = vmatprep.subr.bf16.mxu0 %v3171
        %3306 = vmatpush1.bf16.msra.mxu0 %v3170
        %3307 = vmatprep.subr.bf16.mxu0 %v3175
        %3308 = vmatpush1.bf16.msra.mxu0 %v3174
        %3309 = vmatprep.subr.bf16.mxu0 %v3179
        %3310 = vmatpush1.bf16.msra.mxu0 %v3178
        %3311 = vmatprep.subr.bf16.mxu0 %v3183
        %3312 = vmatpush1.bf16.msra.mxu0 %v3182
        %3313 = vmatprep.subr.bf16.mxu0 %v3187
        %3314 = vmatpush1.bf16.msra.mxu0 %v3186
        %3315 = vmatprep.subr.bf16.mxu0 %v3191
        %3316 = vmatpush1.bf16.msra.mxu0 %v3190
        %3317 = vmatprep.subr.bf16.mxu0 %v3195
        %3318 = vmatpush1.bf16.msra.mxu0 %v3194
        %3319 = vmatprep.subr.bf16.mxu0 %v3199
        %3320 = vmatpush1.bf16.msra.mxu0 %v3198
        %3321 = vmatprep.subr.bf16.mxu0 0
        %3322 = vmatpush1.bf16.msra.mxu0 0
        %3323 = vmatprep.subr.bf16.mxu0 0
        %3324 = vmatpush1.bf16.msra.mxu0 0
        %3325 = vmatprep.subr.bf16.mxu0 0
        %3326 = vmatpush1.bf16.msra.mxu0 0
        %3327 = vmatprep.subr.bf16.mxu0 0
        %3328 = vmatpush1.bf16.msra.mxu0 0
        %3329 = vmatprep.subr.bf16.mxu0 0
        %3330 = vmatpush1.bf16.msra.mxu0 0
        %3331 = vmatprep.subr.bf16.mxu0 0
        %3332 = vmatpush1.bf16.msra.mxu0 0
        %3333 = vmatprep.subr.bf16.mxu0 0
        %3334 = vmatpush1.bf16.msra.mxu0 0
        %3335 = vmatprep.subr.bf16.mxu0 0
        %3336 = vmatpush1.bf16.msra.mxu0 0
        %3337 = vmatprep.mubr.bf16.mxu0 0
        %3338 = vmatmul.mubr.bf16.gmra.mrb[0].mxu0 %v3014
        %v3339 = vpop.f32.mrb[0].mxu0
        %v3340 = vadd.f32 %v3063, %v3339
        %v3341 = vpop.f32.mrb[0].mxu0
        %v3342 = vadd.f32 %v3067, %v3341
        %v3343 = vpop.f32.mrb[0].mxu0
        %v3344 = vadd.f32 %v3063, %v3343
        %v3345 = vpop.f32.mrb[0].mxu0
        %v3346 = vadd.f32 %v3067, %v3345
        %3347 = vmatprep.mubr.bf16.mxu0 0
        %3348 = vmatmul.mubr.bf16.gmra.mrb[0].mxu0 %v3015
        %v3349 = vpop.f32.mrb[0].mxu0
        %v3350 = vadd.f32 %v3063, %v3349
        %v3351 = vpop.f32.mrb[0].mxu0
        %v3352 = vadd.f32 %v3067, %v3351
        %v3353 = vpop.f32.mrb[0].mxu0
        %v3354 = vadd.f32 %v3063, %v3353
        %v3355 = vpop.f32.mrb[0].mxu0
        %v3356 = vadd.f32 %v3067, %v3355
        %3357 = vmatprep.mubr.bf16.mxu0 0
        %3358 = vmatmul.mubr.bf16.gmra.mrb[0].mxu0 %v3016
        %v3359 = vpop.f32.mrb[0].mxu0
        %v3360 = vadd.f32 %v3063, %v3359
        %v3361 = vpop.f32.mrb[0].mxu0
        %v3362 = vadd.f32 %v3067, %v3361
        %v3363 = vpop.f32.mrb[0].mxu0
        %v3364 = vadd.f32 %v3063, %v3363
        %v3365 = vpop.f32.mrb[0].mxu0
        %v3366 = vadd.f32 %v3067, %v3365
        %3367 = vmatprep.mubr.bf16.mxu0 0
        %3368 = vmatmul.mubr.bf16.gmra.mrb[0].mxu0 %v3017
        %v3369 = vpop.f32.mrb[0].mxu0
        %v3370 = vadd.f32 %v3063, %v3369
        %v3371 = vpop.f32.mrb[0].mxu0
        %v3372 = vadd.f32 %v3067, %v3371
        %v3373 = vpop.f32.mrb[0].mxu0
        %v3374 = vadd.f32 %v3063, %v3373
        %v3375 = vpop.f32.mrb[0].mxu0
        %v3376 = vadd.f32 %v3067, %v3375
        %3377 = vdwg.mxu0
        %v3378 = vmul.f32 %v3267, %v3267
        %v3379 = vmul.f32 %v3269, %v3269
        %v3380 = vmul.f32 %v3340, %v3340
        %v3381 = vmul.f32 %v3342, %v3342
        %v3382 = vmul.f32 %v3271, %v3271
        %v3383 = vmul.f32 %v3273, %v3273
        %v3384 = vmul.f32 %v3344, %v3344
        %v3385 = vmul.f32 %v3346, %v3346
        %v3386 = vmul.f32 %v3277, %v3277
        %v3387 = vmul.f32 %v3279, %v3279
        %v3388 = vmul.f32 %v3350, %v3350
        %v3389 = vmul.f32 %v3352, %v3352
        %v3390 = vmul.f32 %v3281, %v3281
        %v3391 = vmul.f32 %v3283, %v3283
        %v3392 = vmul.f32 %v3354, %v3354
        %v3393 = vmul.f32 %v3356, %v3356
        %v3394 = vmul.f32 %v3287, %v3287
        %v3395 = vmul.f32 %v3289, %v3289
        %v3396 = vmul.f32 %v3360, %v3360
        %v3397 = vmul.f32 %v3362, %v3362
        %v3398 = vmul.f32 %v3291, %v3291
        %v3399 = vmul.f32 %v3293, %v3293
        %v3400 = vmul.f32 %v3364, %v3364
        %v3401 = vmul.f32 %v3366, %v3366
        %v3402 = vmul.f32 %v3297, %v3297
        %v3403 = vmul.f32 %v3299, %v3299
        %v3404 = vmul.f32 %v3370, %v3370
        %v3405 = vmul.f32 %v3372, %v3372
        %v3406 = vmul.f32 %v3301, %v3301
        %v3407 = vmul.f32 %v3303, %v3303
        %v3408 = vmul.f32 %v3374, %v3374
        %v3409 = vmul.f32 %v3376, %v3376
        %v3410 = vmul.f32 %v3267, 0.5
        %v3411 = vmul.f32 %v3269, 0.5
        %v3412 = vmul.f32 %v3340, 0.5
        %v3413 = vmul.f32 %v3342, 0.5
        %v3414 = vmul.f32 %v3271, 0.5
        %v3415 = vmul.f32 %v3273, 0.5
        %v3416 = vmul.f32 %v3344, 0.5
        %v3417 = vmul.f32 %v3346, 0.5
        %v3418 = vmul.f32 %v3277, 0.5
        %v3419 = vmul.f32 %v3279, 0.5
        %v3420 = vmul.f32 %v3350, 0.5
        %v3421 = vmul.f32 %v3352, 0.5
        %v3422 = vmul.f32 %v3281, 0.5
        %v3423 = vmul.f32 %v3283, 0.5
        %v3424 = vmul.f32 %v3354, 0.5
        %v3425 = vmul.f32 %v3356, 0.5
        %v3426 = vmul.f32 %v3287, 0.5
        %v3427 = vmul.f32 %v3289, 0.5
        %v3428 = vmul.f32 %v3360, 0.5
        %v3429 = vmul.f32 %v3362, 0.5
        %v3430 = vmul.f32 %v3291, 0.5
        %v3431 = vmul.f32 %v3293, 0.5
        %v3432 = vmul.f32 %v3364, 0.5
        %v3433 = vmul.f32 %v3366, 0.5
        %v3434 = vmul.f32 %v3297, 0.5
        %v3435 = vmul.f32 %v3299, 0.5
        %v3436 = vmul.f32 %v3370, 0.5
        %v3437 = vmul.f32 %v3372, 0.5
        %v3438 = vmul.f32 %v3301, 0.5
        %v3439 = vmul.f32 %v3303, 0.5
        %v3440 = vmul.f32 %v3374, 0.5
        %v3441 = vmul.f32 %v3376, 0.5
        %v3442 = vmul.f32 %v3267, 0.044715
        %v3443 = vmul.f32 %v3269, 0.044715
        %v3444 = vmul.f32 %v3340, 0.044715
        %v3445 = vmul.f32 %v3342, 0.044715
        %v3446 = vmul.f32 %v3271, 0.044715
        %v3447 = vmul.f32 %v3273, 0.044715
        %v3448 = vmul.f32 %v3344, 0.044715
        %v3449 = vmul.f32 %v3346, 0.044715
        %v3450 = vmul.f32 %v3277, 0.044715
        %v3451 = vmul.f32 %v3279, 0.044715
        %v3452 = vmul.f32 %v3350, 0.044715
        %v3453 = vmul.f32 %v3352, 0.044715
        %v3454 = vmul.f32 %v3281, 0.044715
        %v3455 = vmul.f32 %v3283, 0.044715
        %v3456 = vmul.f32 %v3354, 0.044715
        %v3457 = vmul.f32 %v3356, 0.044715
        %v3458 = vmul.f32 %v3287, 0.044715
        %v3459 = vmul.f32 %v3289, 0.044715
        %v3460 = vmul.f32 %v3360, 0.044715
        %v3461 = vmul.f32 %v3362, 0.044715
        %v3462 = vmul.f32 %v3291, 0.044715
        %v3463 = vmul.f32 %v3293, 0.044715
        %v3464 = vmul.f32 %v3364, 0.044715
        %v3465 = vmul.f32 %v3366, 0.044715
        %v3466 = vmul.f32 %v3297, 0.044715
        %v3467 = vmul.f32 %v3299, 0.044715
        %v3468 = vmul.f32 %v3370, 0.044715
        %v3469 = vmul.f32 %v3372, 0.044715
        %v3470 = vmul.f32 %v3301, 0.044715
        %v3471 = vmul.f32 %v3303, 0.044715
        %v3472 = vmul.f32 %v3374, 0.044715
        %v3473 = vmul.f32 %v3376, 0.044715
        %v3474 = vmul.f32 %v3442, %v3378
        %v3475 = vmul.f32 %v3443, %v3379
        %v3476 = vmul.f32 %v3444, %v3380
        %v3477 = vmul.f32 %v3445, %v3381
        %v3478 = vmul.f32 %v3446, %v3382
        %v3479 = vmul.f32 %v3447, %v3383
        %v3480 = vmul.f32 %v3448, %v3384
        %v3481 = vmul.f32 %v3449, %v3385
        %v3482 = vmul.f32 %v3450, %v3386
        %v3483 = vmul.f32 %v3451, %v3387
        %v3484 = vmul.f32 %v3452, %v3388
        %v3485 = vmul.f32 %v3453, %v3389
        %v3486 = vmul.f32 %v3454, %v3390
        %v3487 = vmul.f32 %v3455, %v3391
        %v3488 = vmul.f32 %v3456, %v3392
        %v3489 = vmul.f32 %v3457, %v3393
        %v3490 = vmul.f32 %v3458, %v3394
        %v3491 = vmul.f32 %v3459, %v3395
        %v3492 = vmul.f32 %v3460, %v3396
        %v3493 = vmul.f32 %v3461, %v3397
        %v3494 = vmul.f32 %v3462, %v3398
        %v3495 = vmul.f32 %v3463, %v3399
        %v3496 = vmul.f32 %v3464, %v3400
        %v3497 = vmul.f32 %v3465, %v3401
        %v3498 = vmul.f32 %v3466, %v3402
        %v3499 = vmul.f32 %v3467, %v3403
        %v3500 = vmul.f32 %v3468, %v3404
        %v3501 = vmul.f32 %v3469, %v3405
        %v3502 = vmul.f32 %v3470, %v3406
        %v3503 = vmul.f32 %v3471, %v3407
        %v3504 = vmul.f32 %v3472, %v3408
        %v3505 = vmul.f32 %v3473, %v3409
        %v3506 = vadd.f32 %v3267, %v3474
        %v3507 = vadd.f32 %v3269, %v3475
        %v3508 = vadd.f32 %v3340, %v3476
        %v3509 = vadd.f32 %v3342, %v3477
        %v3510 = vadd.f32 %v3271, %v3478
        %v3511 = vadd.f32 %v3273, %v3479
        %v3512 = vadd.f32 %v3344, %v3480
        %v3513 = vadd.f32 %v3346, %v3481
        %v3514 = vadd.f32 %v3277, %v3482
        %v3515 = vadd.f32 %v3279, %v3483
        %v3516 = vadd.f32 %v3350, %v3484
        %v3517 = vadd.f32 %v3352, %v3485
        %v3518 = vadd.f32 %v3281, %v3486
        %v3519 = vadd.f32 %v3283, %v3487
        %v3520 = vadd.f32 %v3354, %v3488
        %v3521 = vadd.f32 %v3356, %v3489
        %v3522 = vadd.f32 %v3287, %v3490
        %v3523 = vadd.f32 %v3289, %v3491
        %v3524 = vadd.f32 %v3360, %v3492
        %v3525 = vadd.f32 %v3362, %v3493
        %v3526 = vadd.f32 %v3291, %v3494
        %v3527 = vadd.f32 %v3293, %v3495
        %v3528 = vadd.f32 %v3364, %v3496
        %v3529 = vadd.f32 %v3366, %v3497
        %v3530 = vadd.f32 %v3297, %v3498
        %v3531 = vadd.f32 %v3299, %v3499
        %v3532 = vadd.f32 %v3370, %v3500
        %v3533 = vadd.f32 %v3372, %v3501
        %v3534 = vadd.f32 %v3301, %v3502
        %v3535 = vadd.f32 %v3303, %v3503
        %v3536 = vadd.f32 %v3374, %v3504
        %v3537 = vadd.f32 %v3376, %v3505
        %v3538 = vmul.f32 %v3506, 0.7978846
        %v3539 = vmul.f32 %v3507, 0.7978846
        %v3540 = vmul.f32 %v3508, 0.7978846
        %v3541 = vmul.f32 %v3509, 0.7978846
        %v3542 = vmul.f32 %v3510, 0.7978846
        %v3543 = vmul.f32 %v3511, 0.7978846
        %v3544 = vmul.f32 %v3512, 0.7978846
        %v3545 = vmul.f32 %v3513, 0.7978846
        %v3546 = vmul.f32 %v3514, 0.7978846
        %v3547 = vmul.f32 %v3515, 0.7978846
        %v3548 = vmul.f32 %v3516, 0.7978846
        %v3549 = vmul.f32 %v3517, 0.7978846
        %v3550 = vmul.f32 %v3518, 0.7978846
        %v3551 = vmul.f32 %v3519, 0.7978846
        %v3552 = vmul.f32 %v3520, 0.7978846
        %v3553 = vmul.f32 %v3521, 0.7978846
        %v3554 = vmul.f32 %v3522, 0.7978846
        %v3555 = vmul.f32 %v3523, 0.7978846
        %v3556 = vmul.f32 %v3524, 0.7978846
        %v3557 = vmul.f32 %v3525, 0.7978846
        %v3558 = vmul.f32 %v3526, 0.7978846
        %v3559 = vmul.f32 %v3527, 0.7978846
        %v3560 = vmul.f32 %v3528, 0.7978846
        %v3561 = vmul.f32 %v3529, 0.7978846
        %v3562 = vmul.f32 %v3530, 0.7978846
        %v3563 = vmul.f32 %v3531, 0.7978846
        %v3564 = vmul.f32 %v3532, 0.7978846
        %v3565 = vmul.f32 %v3533, 0.7978846
        %v3566 = vmul.f32 %v3534, 0.7978846
        %v3567 = vmul.f32 %v3535, 0.7978846
        %v3568 = vmul.f32 %v3536, 0.7978846
        %v3569 = vmul.f32 %v3537, 0.7978846
        %v3570 = vtanh.pop %v3538
        %v3571 = vtanh.pop %v3539
        %v3572 = vtanh.pop %v3540
        %v3573 = vtanh.pop %v3541
        %v3574 = vtanh.pop %v3542
        %v3575 = vtanh.pop %v3543
        %v3576 = vtanh.pop %v3544
        %v3577 = vtanh.pop %v3545
        %v3578 = vtanh.pop %v3546
        %v3579 = vtanh.pop %v3547
        %v3580 = vtanh.pop %v3548
        %v3581 = vtanh.pop %v3549
        %v3582 = vtanh.pop %v3550
        %v3583 = vtanh.pop %v3551
        %v3584 = vtanh.pop %v3552
        %v3585 = vtanh.pop %v3553
        %v3586 = vtanh.pop %v3554
        %v3587 = vtanh.pop %v3555
        %v3588 = vtanh.pop %v3556
        %v3589 = vtanh.pop %v3557
        %v3590 = vtanh.pop %v3558
        %v3591 = vtanh.pop %v3559
        %v3592 = vtanh.pop %v3560
        %v3593 = vtanh.pop %v3561
        %v3594 = vtanh.pop %v3562
        %v3595 = vtanh.pop %v3563
        %v3596 = vtanh.pop %v3564
        %v3597 = vtanh.pop %v3565
        %v3598 = vtanh.pop %v3566
        %v3599 = vtanh.pop %v3567
        %v3600 = vtanh.pop %v3568
        %v3601 = vtanh.pop %v3569
        %v3602 = vadd.f32 %v3570, 1.0
        %v3603 = vadd.f32 %v3571, 1.0
        %v3604 = vadd.f32 %v3572, 1.0
        %v3605 = vadd.f32 %v3573, 1.0
        %v3606 = vadd.f32 %v3574, 1.0
        %v3607 = vadd.f32 %v3575, 1.0
        %v3608 = vadd.f32 %v3576, 1.0
        %v3609 = vadd.f32 %v3577, 1.0
        %v3610 = vadd.f32 %v3578, 1.0
        %v3611 = vadd.f32 %v3579, 1.0
        %v3612 = vadd.f32 %v3580, 1.0
        %v3613 = vadd.f32 %v3581, 1.0
        %v3614 = vadd.f32 %v3582, 1.0
        %v3615 = vadd.f32 %v3583, 1.0
        %v3616 = vadd.f32 %v3584, 1.0
        %v3617 = vadd.f32 %v3585, 1.0
        %v3618 = vadd.f32 %v3586, 1.0
        %v3619 = vadd.f32 %v3587, 1.0
        %v3620 = vadd.f32 %v3588, 1.0
        %v3621 = vadd.f32 %v3589, 1.0
        %v3622 = vadd.f32 %v3590, 1.0
        %v3623 = vadd.f32 %v3591, 1.0
        %v3624 = vadd.f32 %v3592, 1.0
        %v3625 = vadd.f32 %v3593, 1.0
        %v3626 = vadd.f32 %v3594, 1.0
        %v3627 = vadd.f32 %v3595, 1.0
        %v3628 = vadd.f32 %v3596, 1.0
        %v3629 = vadd.f32 %v3597, 1.0
        %v3630 = vadd.f32 %v3598, 1.0
        %v3631 = vadd.f32 %v3599, 1.0
        %v3632 = vadd.f32 %v3600, 1.0
        %v3633 = vadd.f32 %v3601, 1.0
        %v3634 = vmul.f32 %v3410, %v3602
        %v3635 = vmul.f32 %v3411, %v3603
        %v3636 = vmul.f32 %v3412, %v3604
        %v3637 = vmul.f32 %v3413, %v3605
        %v3638 = vmul.f32 %v3414, %v3606
        %v3639 = vmul.f32 %v3415, %v3607
        %v3640 = vmul.f32 %v3416, %v3608
        %v3641 = vmul.f32 %v3417, %v3609
        %v3642 = vmul.f32 %v3418, %v3610
        %v3643 = vmul.f32 %v3419, %v3611
        %v3644 = vmul.f32 %v3420, %v3612
        %v3645 = vmul.f32 %v3421, %v3613
        %v3646 = vmul.f32 %v3422, %v3614
        %v3647 = vmul.f32 %v3423, %v3615
        %v3648 = vmul.f32 %v3424, %v3616
        %v3649 = vmul.f32 %v3425, %v3617
        %v3650 = vmul.f32 %v3426, %v3618
        %v3651 = vmul.f32 %v3427, %v3619
        %v3652 = vmul.f32 %v3428, %v3620
        %v3653 = vmul.f32 %v3429, %v3621
        %v3654 = vmul.f32 %v3430, %v3622
        %v3655 = vmul.f32 %v3431, %v3623
        %v3656 = vmul.f32 %v3432, %v3624
        %v3657 = vmul.f32 %v3433, %v3625
        %v3658 = vmul.f32 %v3434, %v3626
        %v3659 = vmul.f32 %v3435, %v3627
        %v3660 = vmul.f32 %v3436, %v3628
        %v3661 = vmul.f32 %v3437, %v3629
        %v3662 = vmul.f32 %v3438, %v3630
        %v3663 = vmul.f32 %v3439, %v3631
        %v3664 = vmul.f32 %v3440, %v3632
        %v3665 = vmul.f32 %v3441, %v3633
        %v3666 = vpack.c.bf16 %v3638, %v3634
        %v3667 = vpack.c.bf16 %v3639, %v3635
        %v3668 = vpack.c.bf16 %v3640, %v3636
        %v3669 = vpack.c.bf16 %v3641, %v3637
        %v3670 = vpack.c.bf16 %v3646, %v3642
        %v3671 = vpack.c.bf16 %v3647, %v3643
        %v3672 = vpack.c.bf16 %v3648, %v3644
        %v3673 = vpack.c.bf16 %v3649, %v3645
        %v3674 = vpack.c.bf16 %v3654, %v3650
        %v3675 = vpack.c.bf16 %v3655, %v3651
        %v3676 = vpack.c.bf16 %v3656, %v3652
        %v3677 = vpack.c.bf16 %v3657, %v3653
        %v3678 = vpack.c.bf16 %v3662, %v3658
        %v3679 = vpack.c.bf16 %v3663, %v3659
        %v3680 = vpack.c.bf16 %v3664, %v3660
        %v3681 = vpack.c.bf16 %v3665, %v3661
        %v3682 = vld [vmem:[%s10] sm:$0xf]
        %v3683 = vld [vmem:[%s10 + $0x4] sm:$0xf]
        %v3684 = vld [vmem:[%s10 + $0x8] sm:$0xf]
        %v3685 = vld [vmem:[%s10 + $0xc] sm:$0xf]
        %v3686 = vld [vmem:[%s10 + $0x10] sm:$0xf]
        %v3687 = vld [vmem:[%s10 + $0x14] sm:$0xf]
        %v3688 = vld [vmem:[%s10 + $0x18] sm:$0xf]
        %v3689 = vld [vmem:[%s10 + $0x1c] sm:$0xf]
        %v3690 = vld [vmem:[%s10 + $0x20] sm:$0xf]
        %v3691 = vld [vmem:[%s10 + $0x24] sm:$0xf]
        %v3692 = vld [vmem:[%s10 + $0x28] sm:$0xf]
        %v3693 = vld [vmem:[%s10 + $0x2c] sm:$0xf]
        %v3694 = vld [vmem:[%s10 + $0x30] sm:$0xf]
        %v3695 = vld [vmem:[%s10 + $0x34] sm:$0xf]
        %v3696 = vld [vmem:[%s10 + $0x38] sm:$0xf]
        %v3697 = vld [vmem:[%s10 + $0x3c] sm:$0xf]
        %v3698 = vld [vmem:[%s10 + $0x40] sm:$0xf]
        %v3699 = vld [vmem:[%s10 + $0x44] sm:$0xf]
        %v3700 = vld [vmem:[%s10 + $0x48] sm:$0xf]
        %v3701 = vld [vmem:[%s10 + $0x4c] sm:$0xf]
        %v3702 = vld [vmem:[%s10 + $0x50] sm:$0xf]
        %v3703 = vld [vmem:[%s10 + $0x54] sm:$0xf]
        %v3704 = vld [vmem:[%s10 + $0x58] sm:$0xf]
        %v3705 = vld [vmem:[%s10 + $0x5c] sm:$0xf]
        %v3706 = vld [vmem:[%s10 + $0x60] sm:$0xf]
        %v3707 = vld [vmem:[%s10 + $0x64] sm:$0xf]
        %v3708 = vld [vmem:[%s10 + $0x68] sm:$0xf]
        %v3709 = vld [vmem:[%s10 + $0x6c] sm:$0xf]
        %v3710 = vld [vmem:[%s10 + $0x70] sm:$0xf]
        %v3711 = vld [vmem:[%s10 + $0x74] sm:$0xf]
        %v3712 = vld [vmem:[%s10 + $0x78] sm:$0xf]
        %v3713 = vld [vmem:[%s10 + $0x7c] sm:$0xf]
        %v3714 = vld [vmem:[%s10 + $0x80] sm:$0xf]
        %v3715 = vld [vmem:[%s10 + $0x84] sm:$0xf]
        %v3716 = vld [vmem:[%s10 + $0x88] sm:$0xf]
        %v3717 = vld [vmem:[%s10 + $0x8c] sm:$0xf]
        %v3718 = vld [vmem:[%s10 + $0x90] sm:$0xf]
        %v3719 = vld [vmem:[%s10 + $0x94] sm:$0xf]
        %v3720 = vld [vmem:[%s10 + $0x98] sm:$0xf]
        %v3721 = vld [vmem:[%s10 + $0x9c] sm:$0xf]
        %v3722 = vld [vmem:[%s10 + $0xa0] sm:$0xf]
        %v3723 = vld [vmem:[%s10 + $0xa4] sm:$0xf]
        %v3724 = vld [vmem:[%s10 + $0xa8] sm:$0xf]
        %v3725 = vld [vmem:[%s10 + $0xac] sm:$0xf]
        %v3726 = vld [vmem:[%s10 + $0xb0] sm:$0xf]
        %v3727 = vld [vmem:[%s10 + $0xb4] sm:$0xf]
        %v3728 = vld [vmem:[%s10 + $0xb8] sm:$0xf]
        %v3729 = vld [vmem:[%s10 + $0xbc] sm:$0xf]
        %v3730 = vld [vmem:[%s10 + $0xc0] sm:$0xf]
        %v3731 = vld [vmem:[%s10 + $0xc4] sm:$0xf]
        %v3732 = vld [vmem:[%s10 + $0xc8] sm:$0xf]
        %v3733 = vld [vmem:[%s10 + $0xcc] sm:$0xf]
        %v3734 = vld [vmem:[%s10 + $0xd0] sm:$0xf]
        %v3735 = vld [vmem:[%s10 + $0xd4] sm:$0xf]
        %v3736 = vld [vmem:[%s10 + $0xd8] sm:$0xf]
        %v3737 = vld [vmem:[%s10 + $0xdc] sm:$0xf]
        %v3738 = vld [vmem:[%s10 + $0xe0] sm:$0xf]
        %v3739 = vld [vmem:[%s10 + $0xe4] sm:$0xf]
        %v3740 = vld [vmem:[%s10 + $0xe8] sm:$0xf]
        %v3741 = vld [vmem:[%s10 + $0xec] sm:$0xf]
        %v3742 = vld [vmem:[%s10 + $0xf0] sm:$0xf]
        %v3743 = vld [vmem:[%s10 + $0xf4] sm:$0xf]
        %v3744 = vld [vmem:[%s10 + $0xf8] sm:$0xf]
        %v3745 = vld [vmem:[%s10 + $0xfc] sm:$0xf]
        %v3746 = vld [vmem:[%s11] sm:$0x1]
        %v3748 = vlaneseq
        %v3749 = vshrl.u32 %v3748, 7
        %v3750 = vsub.s32 0, %v3749
        %v3751 = vrot.slane %v3746, %v3750
        %v3817 = vunpack.c.l.b16 %v3682
        %v3818 = vunpack.c.l.b16 %v3683
        %v3819 = vunpack.c.l.b16 %v3684
        %v3820 = vunpack.c.l.b16 %v3685
        %v3821 = vunpack.c.l.b16 %v3686
        %v3822 = vunpack.c.l.b16 %v3687
        %v3823 = vunpack.c.l.b16 %v3688
        %v3824 = vunpack.c.l.b16 %v3689
        %v3825 = vunpack.c.l.b16 %v3690
        %v3826 = vunpack.c.l.b16 %v3691
        %v3827 = vunpack.c.l.b16 %v3692
        %v3828 = vunpack.c.l.b16 %v3693
        %v3829 = vunpack.c.l.b16 %v3694
        %v3830 = vunpack.c.l.b16 %v3695
        %v3831 = vunpack.c.l.b16 %v3696
        %v3832 = vunpack.c.l.b16 %v3697
        %v3833 = vunpack.c.l.b16 %v3698
        %v3834 = vunpack.c.l.b16 %v3699
        %v3835 = vunpack.c.l.b16 %v3700
        %v3836 = vunpack.c.l.b16 %v3701
        %v3837 = vunpack.c.l.b16 %v3702
        %v3838 = vunpack.c.l.b16 %v3703
        %v3839 = vunpack.c.l.b16 %v3704
        %v3840 = vunpack.c.l.b16 %v3705
        %v3841 = vunpack.c.l.b16 %v3706
        %v3842 = vunpack.c.l.b16 %v3707
        %v3843 = vunpack.c.l.b16 %v3708
        %v3844 = vunpack.c.l.b16 %v3709
        %v3845 = vunpack.c.l.b16 %v3710
        %v3846 = vunpack.c.l.b16 %v3711
        %v3847 = vunpack.c.l.b16 %v3712
        %v3848 = vunpack.c.l.b16 %v3713
        %v3849 = vunpack.c.l.b16 %v3714
        %v3850 = vunpack.c.l.b16 %v3715
        %v3851 = vunpack.c.l.b16 %v3716
        %v3852 = vunpack.c.l.b16 %v3717
        %v3853 = vunpack.c.l.b16 %v3718
        %v3854 = vunpack.c.l.b16 %v3719
        %v3855 = vunpack.c.l.b16 %v3720
        %v3856 = vunpack.c.l.b16 %v3721
        %v3857 = vunpack.c.l.b16 %v3722
        %v3858 = vunpack.c.l.b16 %v3723
        %v3859 = vunpack.c.l.b16 %v3724
        %v3860 = vunpack.c.l.b16 %v3725
        %v3861 = vunpack.c.l.b16 %v3726
        %v3862 = vunpack.c.l.b16 %v3727
        %v3863 = vunpack.c.l.b16 %v3728
        %v3864 = vunpack.c.l.b16 %v3729
        %v3865 = vunpack.c.l.b16 %v3730
        %v3866 = vunpack.c.l.b16 %v3731
        %v3867 = vunpack.c.l.b16 %v3732
        %v3868 = vunpack.c.l.b16 %v3733
        %v3869 = vunpack.c.l.b16 %v3734
        %v3870 = vunpack.c.l.b16 %v3735
        %v3871 = vunpack.c.l.b16 %v3736
        %v3872 = vunpack.c.l.b16 %v3737
        %v3873 = vunpack.c.l.b16 %v3738
        %v3874 = vunpack.c.l.b16 %v3739
        %v3875 = vunpack.c.l.b16 %v3740
        %v3876 = vunpack.c.l.b16 %v3741
        %v3877 = vunpack.c.l.b16 %v3742
        %v3878 = vunpack.c.l.b16 %v3743
        %v3879 = vunpack.c.l.b16 %v3744
        %v3880 = vunpack.c.l.b16 %v3745
        %v3881 = vpack.c.b16 %v3818, %v3817
        %v3882 = vpack.c.b16 %v3820, %v3819
        %v3883 = vpack.c.b16 %v3822, %v3821
        %v3884 = vpack.c.b16 %v3824, %v3823
        %v3885 = vpack.c.b16 %v3826, %v3825
        %v3886 = vpack.c.b16 %v3828, %v3827
        %v3887 = vpack.c.b16 %v3830, %v3829
        %v3888 = vpack.c.b16 %v3832, %v3831
        %v3889 = vpack.c.b16 %v3834, %v3833
        %v3890 = vpack.c.b16 %v3836, %v3835
        %v3891 = vpack.c.b16 %v3838, %v3837
        %v3892 = vpack.c.b16 %v3840, %v3839
        %v3893 = vpack.c.b16 %v3842, %v3841
        %v3894 = vpack.c.b16 %v3844, %v3843
        %v3895 = vpack.c.b16 %v3846, %v3845
        %v3896 = vpack.c.b16 %v3848, %v3847
        %v3897 = vpack.c.b16 %v3850, %v3849
        %v3898 = vpack.c.b16 %v3852, %v3851
        %v3899 = vpack.c.b16 %v3854, %v3853
        %v3900 = vpack.c.b16 %v3856, %v3855
        %v3901 = vpack.c.b16 %v3858, %v3857
        %v3902 = vpack.c.b16 %v3860, %v3859
        %v3903 = vpack.c.b16 %v3862, %v3861
        %v3904 = vpack.c.b16 %v3864, %v3863
        %v3905 = vpack.c.b16 %v3866, %v3865
        %v3906 = vpack.c.b16 %v3868, %v3867
        %v3907 = vpack.c.b16 %v3870, %v3869
        %v3908 = vpack.c.b16 %v3872, %v3871
        %v3909 = vpack.c.b16 %v3874, %v3873
        %v3910 = vpack.c.b16 %v3876, %v3875
        %v3911 = vpack.c.b16 %v3878, %v3877
        %v3912 = vpack.c.b16 %v3880, %v3879
        %3945 = vmatprep.subr.bf16.mxu0 0
        %3946 = vmatpush1.bf16.msra.mxu0 %v3881
        %3947 = vmatprep.subr.bf16.mxu0 0
        %3948 = vmatpush1.bf16.msra.mxu0 %v3882
        %3949 = vmatprep.subr.bf16.mxu0 0
        %3950 = vmatpush1.bf16.msra.mxu0 %v3883
        %3951 = vmatprep.subr.bf16.mxu0 0
        %3952 = vmatpush1.bf16.msra.mxu0 %v3884
        %3953 = vmatprep.subr.bf16.mxu0 0
        %3954 = vmatpush1.bf16.msra.mxu0 %v3885
        %3955 = vmatprep.subr.bf16.mxu0 0
        %3956 = vmatpush1.bf16.msra.mxu0 %v3886
        %3957 = vmatprep.subr.bf16.mxu0 0
        %3958 = vmatpush1.bf16.msra.mxu0 %v3887
        %3959 = vmatprep.subr.bf16.mxu0 0
        %3960 = vmatpush1.bf16.msra.mxu0 %v3888
        %3961 = vmatprep.subr.bf16.mxu0 0
        %3962 = vmatpush1.bf16.msra.mxu0 %v3889
        %3963 = vmatprep.subr.bf16.mxu0 0
        %3964 = vmatpush1.bf16.msra.mxu0 %v3890
        %3965 = vmatprep.subr.bf16.mxu0 0
        %3966 = vmatpush1.bf16.msra.mxu0 %v3891
        %3967 = vmatprep.subr.bf16.mxu0 0
        %3968 = vmatpush1.bf16.msra.mxu0 %v3892
        %3969 = vmatprep.subr.bf16.mxu0 0
        %3970 = vmatpush1.bf16.msra.mxu0 %v3893
        %3971 = vmatprep.subr.bf16.mxu0 0
        %3972 = vmatpush1.bf16.msra.mxu0 %v3894
        %3973 = vmatprep.subr.bf16.mxu0 0
        %3974 = vmatpush1.bf16.msra.mxu0 %v3895
        %3975 = vmatprep.subr.bf16.mxu0 0
        %3976 = vmatpush1.bf16.msra.mxu0 %v3896
        %3977 = vmatprep.mubr.bf16.mxu0 %v3667
        %3978 = vmatmul.mubr.bf16.gmra.mrb[0].mxu0 %v3666
        %v3979 = vpop.f32.mrb[0].mxu0
        %v3980 = vadd.f32 %v3751, %v3979
        %v3981 = vpop.f32.mrb[0].mxu0
        %v3982 = vpop.f32.mrb[0].mxu0
        %v3983 = vadd.f32 %v3751, %v3982
        %v3984 = vpop.f32.mrb[0].mxu0
        %3985 = vmatprep.mubr.bf16.mxu0 %v3671
        %3986 = vmatmul.mubr.bf16.gmra.mrb[0].mxu0 %v3670
        %v3987 = vpop.f32.mrb[0].mxu0
        %v3988 = vadd.f32 %v3751, %v3987
        %v3989 = vpop.f32.mrb[0].mxu0
        %v3990 = vpop.f32.mrb[0].mxu0
        %v3991 = vadd.f32 %v3751, %v3990
        %v3992 = vpop.f32.mrb[0].mxu0
        %3993 = vmatprep.mubr.bf16.mxu0 %v3675
        %3994 = vmatmul.mubr.bf16.gmra.mrb[0].mxu0 %v3674
        %v3995 = vpop.f32.mrb[0].mxu0
        %v3996 = vadd.f32 %v3751, %v3995
        %v3997 = vpop.f32.mrb[0].mxu0
        %v3998 = vpop.f32.mrb[0].mxu0
        %v3999 = vadd.f32 %v3751, %v3998
        %v4000 = vpop.f32.mrb[0].mxu0
        %4001 = vmatprep.mubr.bf16.mxu0 %v3679
        %4002 = vmatmul.mubr.bf16.gmra.mrb[0].mxu0 %v3678
        %v4003 = vpop.f32.mrb[0].mxu0
        %v4004 = vadd.f32 %v3751, %v4003
        %v4005 = vpop.f32.mrb[0].mxu0
        %v4006 = vpop.f32.mrb[0].mxu0
        %v4007 = vadd.f32 %v3751, %v4006
        %v4008 = vpop.f32.mrb[0].mxu0
        %4009 = vdwg.mxu0
        %4010 = vmatprep.subr.bf16.mxu0 0
        %4011 = vmatpush1.bf16.msra.mxu0 %v3897
        %4012 = vmatprep.subr.bf16.mxu0 0
        %4013 = vmatpush1.bf16.msra.mxu0 %v3898
        %4014 = vmatprep.subr.bf16.mxu0 0
        %4015 = vmatpush1.bf16.msra.mxu0 %v3899
        %4016 = vmatprep.subr.bf16.mxu0 0
        %4017 = vmatpush1.bf16.msra.mxu0 %v3900
        %4018 = vmatprep.subr.bf16.mxu0 0
        %4019 = vmatpush1.bf16.msra.mxu0 %v3901
        %4020 = vmatprep.subr.bf16.mxu0 0
        %4021 = vmatpush1.bf16.msra.mxu0 %v3902
        %4022 = vmatprep.subr.bf16.mxu0 0
        %4023 = vmatpush1.bf16.msra.mxu0 %v3903
        %4024 = vmatprep.subr.bf16.mxu0 0
        %4025 = vmatpush1.bf16.msra.mxu0 %v3904
        %4026 = vmatprep.subr.bf16.mxu0 0
        %4027 = vmatpush1.bf16.msra.mxu0 %v3905
        %4028 = vmatprep.subr.bf16.mxu0 0
        %4029 = vmatpush1.bf16.msra.mxu0 %v3906
        %4030 = vmatprep.subr.bf16.mxu0 0
        %4031 = vmatpush1.bf16.msra.mxu0 %v3907
        %4032 = vmatprep.subr.bf16.mxu0 0
        %4033 = vmatpush1.bf16.msra.mxu0 %v3908
        %4034 = vmatprep.subr.bf16.mxu0 0
        %4035 = vmatpush1.bf16.msra.mxu0 %v3909
        %4036 = vmatprep.subr.bf16.mxu0 0
        %4037 = vmatpush1.bf16.msra.mxu0 %v3910
        %4038 = vmatprep.subr.bf16.mxu0 0
        %4039 = vmatpush1.bf16.msra.mxu0 %v3911
        %4040 = vmatprep.subr.bf16.mxu0 0
        %4041 = vmatpush1.bf16.msra.mxu0 %v3912
        %4042 = vmatprep.mubr.bf16.mxu0 %v3669
        %4043 = vmatmul.mubr.bf16.gmra.mrb[0].mxu0 %v3668
        %v4044 = vpop.f32.mrb[0].mxu0
        %v4045 = vadd.f32 %v3980, %v4044
        %v4046 = vpop.f32.mrb[0].mxu0
        %v4047 = vpop.f32.mrb[0].mxu0
        %v4048 = vadd.f32 %v3983, %v4047
        %v4049 = vpop.f32.mrb[0].mxu0
        %4050 = vmatprep.mubr.bf16.mxu0 %v3673
        %4051 = vmatmul.mubr.bf16.gmra.mrb[0].mxu0 %v3672
        %v4052 = vpop.f32.mrb[0].mxu0
        %v4053 = vadd.f32 %v3988, %v4052
        %v4054 = vpop.f32.mrb[0].mxu0
        %v4055 = vpop.f32.mrb[0].mxu0
        %v4056 = vadd.f32 %v3991, %v4055
        %v4057 = vpop.f32.mrb[0].mxu0
        %4058 = vmatprep.mubr.bf16.mxu0 %v3677
        %4059 = vmatmul.mubr.bf16.gmra.mrb[0].mxu0 %v3676
        %v4060 = vpop.f32.mrb[0].mxu0
        %v4061 = vadd.f32 %v3996, %v4060
        %v4062 = vpop.f32.mrb[0].mxu0
        %v4063 = vpop.f32.mrb[0].mxu0
        %v4064 = vadd.f32 %v3999, %v4063
        %v4065 = vpop.f32.mrb[0].mxu0
        %4066 = vmatprep.mubr.bf16.mxu0 %v3681
        %4067 = vmatmul.mubr.bf16.gmra.mrb[0].mxu0 %v3680
        %v4068 = vpop.f32.mrb[0].mxu0
        %v4069 = vadd.f32 %v4004, %v4068
        %v4070 = vpop.f32.mrb[0].mxu0
        %v4071 = vpop.f32.mrb[0].mxu0
        %v4072 = vadd.f32 %v4007, %v4071
        %v4073 = vpop.f32.mrb[0].mxu0
        %4074 = vdwg.mxu0
        %v4075 = vlaneseq
        %v4076 = vshrl.u32 %v4075, 7
        %v4077 = vsub.s32 0, %v4076
        %v4078 = vrot.slane %v883, %v4077
        %v4079 = vmul.f32 %v4078, %v4045
        %v4080 = vmul.f32 %v4078, %v4048
        %v4081 = vmul.f32 %v4078, %v4053
        %v4082 = vmul.f32 %v4078, %v4056
        %v4083 = vmul.f32 %v4078, %v4061
        %v4084 = vmul.f32 %v4078, %v4064
        %v4085 = vmul.f32 %v4078, %v4069
        %v4086 = vmul.f32 %v4078, %v4072
        %v4087 = vadd.f32 %v2893, %v4079
        %v4088 = vadd.f32 %v2894, %v4080
        %v4089 = vadd.f32 %v2895, %v4081
        %v4090 = vadd.f32 %v2896, %v4082
        %v4091 = vadd.f32 %v2897, %v4083
        %v4092 = vadd.f32 %v2898, %v4084
        %v4093 = vadd.f32 %v2899, %v4085
        %v4094 = vadd.f32 %v2900, %v4086
        %4095 = vst [vmem:[%s417] sm:$0xff] %v4087
        %4096 = vst [vmem:[%s417 + $0x8] sm:$0xff] %v4088
        %4097 = vst [vmem:[%s417 + $0x10] sm:$0xff] %v4089
        %4098 = vst [vmem:[%s417 + $0x18] sm:$0xff] %v4090
        %4099 = vst [vmem:[%s417 + $0x20] sm:$0xff] %v4091
        %4100 = vst [vmem:[%s417 + $0x28] sm:$0xff] %v4092
        %4101 = vst [vmem:[%s417 + $0x30] sm:$0xff] %v4093
        %4102 = vst [vmem:[%s417 + $0x38] sm:$0xff] %v4094
        %s4103 = sand.u32 %s296, 1
        %s4104 = scalar_lea.sflag [#allocation3], %s4103
        %s4105 = sand.u32 %s296, 1
        %s4106 = smul.addr %s4105, 64
        %s4107 = scalar_lea.vmem [#allocation2], %s4106
        // Predicated region
        $region69: #{fwd.3} parent=67 // pred_check
          %p4108 = pneg %p306
        $region70: #{fwd.3} parent=67 // pred_check_branch
          %4110 = sbr.rel (%p4108) target = $region72
        $region71: #{fwd.3} parent=67 // pred_region
          %s4112 = ssub.s32 1024, 1024
          %4113 = vsyncadd %s4104, %s4112
          %s4114 = smul.addr %s26, 8
          %s4115 = smul.addr %s4114, 128
          %s4116 = scalar_lea.hbm %s12, %s4115
          %s4117 = sshll.u32 %s4107, 4
          %s4118 = int_to_ptr.vmem [resolvable:$true] %s4117
          %4123 = dma.vmem_to_hbm [thread:$0]  %s4118, 1024, %s4116, %s4104, 128, 128, 8
        $region72: #{fwd.3} parent=67 // pred_fallthru
          _
      $region68: #{fwd.3} parent=5 // pred_fallthru
        _
      %p4124 = scmp.le.s32.totalorder 2, %s21
      // Predicated region
      $region73: #{fwd.3} parent=5 // pred_check
        %p4125 = pneg %p4124
      $region74: #{fwd.3} parent=5 // pred_check_branch
        %4127 = sbr.rel (%p4125) target = $region76
      $region75: #{fwd.3} parent=5 // pred_region
        %s4128 = ssub.s32 %s21, 2
        // Predicated region
        $region77: #{fwd.3} parent=75 // pred_check
          %p4129 = pneg %p312
        $region78: #{fwd.3} parent=75 // pred_check_branch
          %4131 = sbr.rel (%p4129) target = $region80
        $region79: #{fwd.3} parent=75 // pred_region
          %s4132 = sand.u32 %s297, 1
          %s4133 = scalar_lea.sflag [#allocation3], %s4132
          %s4134 = sand.u32 %s297, 1
          %s4135 = smul.addr %s4134, 64
          %s4136 = scalar_lea.vmem [#allocation2], %s4135
          %4137 = dma.done %s4133, 1024
        $region80: #{fwd.3} parent=75 // pred_fallthru
          _
      $region76: #{fwd.3} parent=5 // pred_fallthru
        _
    $region6: #{fwd.3} parent=1 // loop_footer
      %s25 = sadd.s32 1, %s21
    $region7: #{fwd.3} parent=1 // loop_footer_branch
      %20 = sbr.rel target = $region3
    $region8: #{fwd.3} parent=1 // loop_exit
      _
    %4138 = vsyncpa [#allocation3], 1
    %s4139 = scalar_lea.sflag [#allocation3], 1
    %4140 = vsyncpa %s4139, 1

// kernel: fwd.2
$region0: #{fwd.2}
  #allocation0 [shape = 'u32[]', space=smem, size = 0x4, offset = 0x4, fixed_abs, tag = 'smem constant byte address 0x4 - core index']
  #allocation1 [shape = 'u32[144,128]{1,0:T(1,128)}', space=vmem, size = 0x12000, scoped, tag = 'internal scratch']
  %s0 = inlined_call_operand.hbm [shape: f32[8,64,128], index: 0, kind: input, shape index: {}]
  %s1 = inlined_call_operand.hbm [shape: f32[8,1,128], index: 1, kind: input, shape index: {}]
  %s2 = inlined_call_operand.hbm [shape: bf16[128,768], index: 2, kind: input, shape index: {}]
  %s3 = inlined_call_operand.vmem [shape: f32[1,768], index: 3, kind: input, shape index: {}]
  %s4 = inlined_call_operand.hbm [shape: bf16[128,384], index: 4, kind: input, shape index: {}]
  %s5 = inlined_call_operand.vmem [shape: f32[1,384], index: 5, kind: input, shape index: {}]
  %s6 = inlined_call_operand.hbm [shape: bf16[128,128], index: 6, kind: input, shape index: {}]
  %s7 = inlined_call_operand.vmem [shape: f32[1,128], index: 7, kind: input, shape index: {}]
  %s8 = inlined_call_operand.hbm [shape: bf16[128,512], index: 8, kind: input, shape index: {}]
  %s9 = inlined_call_operand.vmem [shape: f32[1,512], index: 9, kind: input, shape index: {}]
  %s10 = inlined_call_operand.hbm [shape: bf16[512,128], index: 10, kind: input, shape index: {}]
  %s11 = inlined_call_operand.vmem [shape: f32[1,128], index: 11, kind: input, shape index: {}]
  %s12 = inlined_call_operand.vmem [shape: f32[8,64,128], index: 12, kind: output, shape index: {}]
  %s13 = sld [smem:[#allocation0]]
  $region109: #{fwd.2} parent=0
    _
  %s15 = ssub.s32 1, %s13
  %s16 = scalar_select 0, %s15, %s13
  $region1: #{fwd.2} parent=0
    #allocation2 [shape = 'u8[65536]{0}', space=vmem, size = 0x10000, scoped, tag = 'input window, operand 0']
    #allocation3 [shape = 's32[2]{0}', space=sflag, size = 0x8, scoped, tag = 'scoped memory for fwd.2']
    #allocation4 [shape = 'u8[1024]{0}', space=vmem, size = 0x400, scoped, tag = 'input window, operand 1']
    #allocation5 [shape = 's32[2]{0}', space=sflag, size = 0x8, scoped, tag = 'scoped memory for fwd.2']
    #allocation6 [shape = 'u8[196608]{0}', space=vmem, size = 0x30000, scoped, tag = 'input window, operand 2, single buffered']
    #allocation7 [shape = 'u8[98304]{0}', space=vmem, size = 0x18000, scoped, tag = 'input window, operand 4, single buffered']
    #allocation8 [shape = 's32[1]{0}', space=sflag, size = 0x4, scoped, tag = 'scoped memory for fwd.2']
    #allocation9 [shape = 'u8[32768]{0}', space=vmem, size = 0x8000, scoped, tag = 'input window, operand 6, single buffered']
    #allocation10 [shape = 'u8[131072]{0}', space=vmem, size = 0x20000, scoped, tag = 'input window, operand 8, single buffered']
    #allocation11 [shape = 's32[1]{0}', space=sflag, size = 0x4, scoped, tag = 'scoped memory for fwd.2']
    #allocation12 [shape = 'u8[131072]{0}', space=vmem, size = 0x20000, scoped, tag = 'input window, operand 10, single buffered']
    %17 = vsyncpa [#allocation3], 0
    %s18 = scalar_lea.sflag [#allocation3], 1
    %19 = vsyncpa %s18, 0
    %20 = vsyncpa [#allocation5], 0
    %s21 = scalar_lea.sflag [#allocation5], 1
    %22 = vsyncpa %s21, 0
    %23 = vsyncpa [#allocation8], 0
    %24 = vsyncpa [#allocation11], 0
    loop: start=0, step=1, limit=10
    $region2: #{fwd.2} parent=1 // loop_pre_header
      _
    $region3: #{fwd.2} parent=1 // loop_header
      %s26 = sphi 0, %s30
      %p27 = scmp.ge.s32.totalorder %s26, 10
      %s36 = sphi 0, %s38
      %s39 = sphi 0, %s36
      %s40 = sphi 0, %s39
      %s56 = sphi 0, %s40
      %s62 = sphi 0, %s64
      %s65 = sphi 0, %s62
      %s66 = sphi 0, %s65
      %s82 = sphi 0, %s66
      %s86 = sphi 0, %s86
      %s88 = sphi 0, %s86
      %s89 = sphi 0, %s88
      %s103 = sphi 0, %s89
      %s107 = sphi 0, %s107
      %s109 = sphi 0, %s107
      %s110 = sphi 0, %s109
      %s124 = sphi 0, %s110
      %s128 = sphi 0, %s128
      %s130 = sphi 0, %s128
      %s131 = sphi 0, %s130
      %s145 = sphi 0, %s131
      %s149 = sphi 0, %s149
      %s151 = sphi 0, %s149
      %s152 = sphi 0, %s151
      %s166 = sphi 0, %s152
      %s170 = sphi 0, %s170
      %s172 = sphi 0, %s170
      %s173 = sphi 0, %s172
      %s187 = sphi 0, %s173
      %s191 = sphi 0, %s191
      %s193 = sphi 0, %s191
      %s194 = sphi 0, %s193
      %s208 = sphi 0, %s194
      %s212 = sphi 0, %s212
      %s214 = sphi 0, %s212
      %s215 = sphi 0, %s214
      %s229 = sphi 0, %s215
      %s233 = sphi 0, %s233
      %s235 = sphi 0, %s233
      %s236 = sphi 0, %s235
      %s250 = sphi 0, %s236
      %s254 = sphi 0, %s254
      %s256 = sphi 0, %s254
      %s257 = sphi 0, %s256
      %s271 = sphi 0, %s257
      %s275 = sphi 0, %s275
      %s277 = sphi 0, %s275
      %s278 = sphi 0, %s277
      %s292 = sphi 0, %s278
      %s298 = sphi 0, %s300
      %s301 = sphi 0, %s298
      %s302 = sphi 0, %s301
      %s318 = sphi 0, %s302
    $region4: #{fwd.2} parent=1 // loop_header_branch
      %29 = sbr.rel (%p27) target = $region8
    $region5: #{fwd.2} parent=1 // loop_body
      %s31 = ssub.s32 %s26, 1
      %s32 = ssub.s32 %s26, 2
      %s33 = sadd.s32 %s26, 1
      %s34 = ssub.s32 %s26, %s33
      %p35 = scmp.eq.s32.totalorder %s34, 0
      %s37 = sadd.s32 %s36, 1
      %s38 = scalar_select %p35, %s36, %s37
      %p41 = pneg %p35
      %p42 = scmp.eq.s32.totalorder %s26, 7
      %p43 = por %p41, %p42
      %p44 = scmp.ne.s32.totalorder %s36, %s39
      %p45 = scmp.eq.s32.totalorder %s26, 0
      %p46 = por %p44, %p45
      %p47 = scmp.ne.s32.totalorder %s36, %s39
      %p48 = scmp.eq.s32.totalorder %s31, 7
      %p49 = por %p47, %p48
      %p50 = scmp.ne.s32.totalorder %s39, %s40
      %p51 = scmp.eq.s32.totalorder %s31, 0
      %p52 = por %p50, %p51
      %p53 = scmp.ne.s32.totalorder %s39, %s40
      %p54 = scmp.eq.s32.totalorder %s32, 7
      %p55 = por %p53, %p54
      %p57 = scmp.ne.s32.totalorder %s40, %s56
      %p58 = scmp.eq.s32.totalorder %s32, 0
      %p59 = por %p57, %p58
      %s60 = ssub.s32 %s26, %s33
      %p61 = scmp.eq.s32.totalorder %s60, 0
      %s63 = sadd.s32 %s62, 1
      %s64 = scalar_select %p61, %s62, %s63
      %p67 = pneg %p61
      %p68 = scmp.eq.s32.totalorder %s26, 7
      %p69 = por %p67, %p68
      %p70 = scmp.ne.s32.totalorder %s62, %s65
      %p71 = scmp.eq.s32.totalorder %s26, 0
      %p72 = por %p70, %p71
      %p73 = scmp.ne.s32.totalorder %s62, %s65
      %p74 = scmp.eq.s32.totalorder %s31, 7
      %p75 = por %p73, %p74
      %p76 = scmp.ne.s32.totalorder %s65, %s66
      %p77 = scmp.eq.s32.totalorder %s31, 0
      %p78 = por %p76, %p77
      %p79 = scmp.ne.s32.totalorder %s65, %s66
      %p80 = scmp.eq.s32.totalorder %s32, 7
      %p81 = por %p79, %p80
      %p83 = scmp.ne.s32.totalorder %s66, %s82
      %p84 = scmp.eq.s32.totalorder %s32, 0
      %p85 = por %p83, %p84
      %s87 = sadd.s32 %s86, 1
      %p90 = scmp.eq.s32.totalorder %s26, 7
      %p91 = scmp.ne.s32.totalorder %s86, %s88
      %p92 = scmp.eq.s32.totalorder %s26, 0
      %p93 = por %p91, %p92
      %p94 = scmp.ne.s32.totalorder %s86, %s88
      %p95 = scmp.eq.s32.totalorder %s31, 7
      %p96 = por %p94, %p95
      %p97 = scmp.ne.s32.totalorder %s88, %s89
      %p98 = scmp.eq.s32.totalorder %s31, 0
      %p99 = por %p97, %p98
      %p100 = scmp.ne.s32.totalorder %s88, %s89
      %p101 = scmp.eq.s32.totalorder %s32, 7
      %p102 = por %p100, %p101
      %p104 = scmp.ne.s32.totalorder %s89, %s103
      %p105 = scmp.eq.s32.totalorder %s32, 0
      %p106 = por %p104, %p105
      %s108 = sadd.s32 %s107, 1
      %p111 = scmp.eq.s32.totalorder %s26, 7
      %p112 = scmp.ne.s32.totalorder %s107, %s109
      %p113 = scmp.eq.s32.totalorder %s26, 0
      %p114 = por %p112, %p113
      %p115 = scmp.ne.s32.totalorder %s107, %s109
      %p116 = scmp.eq.s32.totalorder %s31, 7
      %p117 = por %p115, %p116
      %p118 = scmp.ne.s32.totalorder %s109, %s110
      %p119 = scmp.eq.s32.totalorder %s31, 0
      %p120 = por %p118, %p119
      %p121 = scmp.ne.s32.totalorder %s109, %s110
      %p122 = scmp.eq.s32.totalorder %s32, 7
      %p123 = por %p121, %p122
      %p125 = scmp.ne.s32.totalorder %s110, %s124
      %p126 = scmp.eq.s32.totalorder %s32, 0
      %p127 = por %p125, %p126
      %s129 = sadd.s32 %s128, 1
      %p132 = scmp.eq.s32.totalorder %s26, 7
      %p133 = scmp.ne.s32.totalorder %s128, %s130
      %p134 = scmp.eq.s32.totalorder %s26, 0
      %p135 = por %p133, %p134
      %p136 = scmp.ne.s32.totalorder %s128, %s130
      %p137 = scmp.eq.s32.totalorder %s31, 7
      %p138 = por %p136, %p137
      %p139 = scmp.ne.s32.totalorder %s130, %s131
      %p140 = scmp.eq.s32.totalorder %s31, 0
      %p141 = por %p139, %p140
      %p142 = scmp.ne.s32.totalorder %s130, %s131
      %p143 = scmp.eq.s32.totalorder %s32, 7
      %p144 = por %p142, %p143
      %p146 = scmp.ne.s32.totalorder %s131, %s145
      %p147 = scmp.eq.s32.totalorder %s32, 0
      %p148 = por %p146, %p147
      %s150 = sadd.s32 %s149, 1
      %p153 = scmp.eq.s32.totalorder %s26, 7
      %p154 = scmp.ne.s32.totalorder %s149, %s151
      %p155 = scmp.eq.s32.totalorder %s26, 0
      %p156 = por %p154, %p155
      %p157 = scmp.ne.s32.totalorder %s149, %s151
      %p158 = scmp.eq.s32.totalorder %s31, 7
      %p159 = por %p157, %p158
      %p160 = scmp.ne.s32.totalorder %s151, %s152
      %p161 = scmp.eq.s32.totalorder %s31, 0
      %p162 = por %p160, %p161
      %p163 = scmp.ne.s32.totalorder %s151, %s152
      %p164 = scmp.eq.s32.totalorder %s32, 7
      %p165 = por %p163, %p164
      %p167 = scmp.ne.s32.totalorder %s152, %s166
      %p168 = scmp.eq.s32.totalorder %s32, 0
      %p169 = por %p167, %p168
      %s171 = sadd.s32 %s170, 1
      %p174 = scmp.eq.s32.totalorder %s26, 7
      %p175 = scmp.ne.s32.totalorder %s170, %s172
      %p176 = scmp.eq.s32.totalorder %s26, 0
      %p177 = por %p175, %p176
      %p178 = scmp.ne.s32.totalorder %s170, %s172
      %p179 = scmp.eq.s32.totalorder %s31, 7
      %p180 = por %p178, %p179
      %p181 = scmp.ne.s32.totalorder %s172, %s173
      %p182 = scmp.eq.s32.totalorder %s31, 0
      %p183 = por %p181, %p182
      %p184 = scmp.ne.s32.totalorder %s172, %s173
      %p185 = scmp.eq.s32.totalorder %s32, 7
      %p186 = por %p184, %p185
      %p188 = scmp.ne.s32.totalorder %s173, %s187
      %p189 = scmp.eq.s32.totalorder %s32, 0
      %p190 = por %p188, %p189
      %s192 = sadd.s32 %s191, 1
      %p195 = scmp.eq.s32.totalorder %s26, 7
      %p196 = scmp.ne.s32.totalorder %s191, %s193
      %p197 = scmp.eq.s32.totalorder %s26, 0
      %p198 = por %p196, %p197
      %p199 = scmp.ne.s32.totalorder %s191, %s193
      %p200 = scmp.eq.s32.totalorder %s31, 7
      %p201 = por %p199, %p200
      %p202 = scmp.ne.s32.totalorder %s193, %s194
      %p203 = scmp.eq.s32.totalorder %s31, 0
      %p204 = por %p202, %p203
      %p205 = scmp.ne.s32.totalorder %s193, %s194
      %p206 = scmp.eq.s32.totalorder %s32, 7
      %p207 = por %p205, %p206
      %p209 = scmp.ne.s32.totalorder %s194, %s208
      %p210 = scmp.eq.s32.totalorder %s32, 0
      %p211 = por %p209, %p210
      %s213 = sadd.s32 %s212, 1
      %p216 = scmp.eq.s32.totalorder %s26, 7
      %p217 = scmp.ne.s32.totalorder %s212, %s214
      %p218 = scmp.eq.s32.totalorder %s26, 0
      %p219 = por %p217, %p218
      %p220 = scmp.ne.s32.totalorder %s212, %s214
      %p221 = scmp.eq.s32.totalorder %s31, 7
      %p222 = por %p220, %p221
      %p223 = scmp.ne.s32.totalorder %s214, %s215
      %p224 = scmp.eq.s32.totalorder %s31, 0
      %p225 = por %p223, %p224
      %p226 = scmp.ne.s32.totalorder %s214, %s215
      %p227 = scmp.eq.s32.totalorder %s32, 7
      %p228 = por %p226, %p227
      %p230 = scmp.ne.s32.totalorder %s215, %s229
      %p231 = scmp.eq.s32.totalorder %s32, 0
      %p232 = por %p230, %p231
      %s234 = sadd.s32 %s233, 1
      %p237 = scmp.eq.s32.totalorder %s26, 7
      %p238 = scmp.ne.s32.totalorder %s233, %s235
      %p239 = scmp.eq.s32.totalorder %s26, 0
      %p240 = por %p238, %p239
      %p241 = scmp.ne.s32.totalorder %s233, %s235
      %p242 = scmp.eq.s32.totalorder %s31, 7
      %p243 = por %p241, %p242
      %p244 = scmp.ne.s32.totalorder %s235, %s236
      %p245 = scmp.eq.s32.totalorder %s31, 0
      %p246 = por %p244, %p245
      %p247 = scmp.ne.s32.totalorder %s235, %s236
      %p248 = scmp.eq.s32.totalorder %s32, 7
      %p249 = por %p247, %p248
      %p251 = scmp.ne.s32.totalorder %s236, %s250
      %p252 = scmp.eq.s32.totalorder %s32, 0
      %p253 = por %p251, %p252
      %s255 = sadd.s32 %s254, 1
      %p258 = scmp.eq.s32.totalorder %s26, 7
      %p259 = scmp.ne.s32.totalorder %s254, %s256
      %p260 = scmp.eq.s32.totalorder %s26, 0
      %p261 = por %p259, %p260
      %p262 = scmp.ne.s32.totalorder %s254, %s256
      %p263 = scmp.eq.s32.totalorder %s31, 7
      %p264 = por %p262, %p263
      %p265 = scmp.ne.s32.totalorder %s256, %s257
      %p266 = scmp.eq.s32.totalorder %s31, 0
      %p267 = por %p265, %p266
      %p268 = scmp.ne.s32.totalorder %s256, %s257
      %p269 = scmp.eq.s32.totalorder %s32, 7
      %p270 = por %p268, %p269
      %p272 = scmp.ne.s32.totalorder %s257, %s271
      %p273 = scmp.eq.s32.totalorder %s32, 0
      %p274 = por %p272, %p273
      %s276 = sadd.s32 %s275, 1
      %p279 = scmp.eq.s32.totalorder %s26, 7
      %p280 = scmp.ne.s32.totalorder %s275, %s277
      %p281 = scmp.eq.s32.totalorder %s26, 0
      %p282 = por %p280, %p281
      %p283 = scmp.ne.s32.totalorder %s275, %s277
      %p284 = scmp.eq.s32.totalorder %s31, 7
      %p285 = por %p283, %p284
      %p286 = scmp.ne.s32.totalorder %s277, %s278
      %p287 = scmp.eq.s32.totalorder %s31, 0
      %p288 = por %p286, %p287
      %p289 = scmp.ne.s32.totalorder %s277, %s278
      %p290 = scmp.eq.s32.totalorder %s32, 7
      %p291 = por %p289, %p290
      %p293 = scmp.ne.s32.totalorder %s278, %s292
      %p294 = scmp.eq.s32.totalorder %s32, 0
      %p295 = por %p293, %p294
      %s296 = ssub.s32 %s26, %s33
      %p297 = scmp.eq.s32.totalorder %s296, 0
      %s299 = sadd.s32 %s298, 1
      %s300 = scalar_select %p297, %s298, %s299
      %p303 = pneg %p297
      %p304 = scmp.eq.s32.totalorder %s26, 7
      %p305 = por %p303, %p304
      %p306 = scmp.ne.s32.totalorder %s298, %s301
      %p307 = scmp.eq.s32.totalorder %s26, 0
      %p308 = por %p306, %p307
      %p309 = scmp.ne.s32.totalorder %s298, %s301
      %p310 = scmp.eq.s32.totalorder %s31, 7
      %p311 = por %p309, %p310
      %p312 = scmp.ne.s32.totalorder %s301, %s302
      %p313 = scmp.eq.s32.totalorder %s31, 0
      %p314 = por %p312, %p313
      %p315 = scmp.ne.s32.totalorder %s301, %s302
      %p316 = scmp.eq.s32.totalorder %s32, 7
      %p317 = por %p315, %p316
      %p319 = scmp.ne.s32.totalorder %s302, %s318
      %p320 = scmp.eq.s32.totalorder %s32, 0
      %p321 = por %p319, %p320
      %p322 = scmp.le.s32.totalorder 1, %s26
      %p323 = scmp.lt.s32.totalorder %s26, 9
      %p324 = pnand %p322, %p323
      %p325 = pneg %p324
      // Predicated region
      $region9: #{fwd.2} parent=5 // pred_check
        _
      $region10: #{fwd.2} parent=5 // pred_check_branch
        %327 = sbr.rel (%p324) target = $region12
      $region11: #{fwd.2} parent=5 // pred_region
        %s328 = ssub.s32 %s26, 1
        // Predicated region
        $region13: #{fwd.2} parent=11 // pred_check
          %p329 = pneg %p99
        $region14: #{fwd.2} parent=11 // pred_check_branch
          %331 = sbr.rel (%p329) target = $region16
        $region15: #{fwd.2} parent=11 // pred_region
          %s333 = ssub.s32 6144, 6144
          %334 = vsyncadd [#allocation5], %s333
          %s335 = sshll.u32 [#allocation6], 4
          %s336 = int_to_ptr.vmem [resolvable:$true] %s335
          %341 = dma.hbm_to_vmem [thread:$0]  %s2, 6144, %s336, [#allocation5], 384, 384, 24
        $region16: #{fwd.2} parent=11 // pred_fallthru
          _
        // Predicated region
        $region17: #{fwd.2} parent=11 // pred_check
          %p342 = pneg %p120
        $region18: #{fwd.2} parent=11 // pred_check_branch
          %344 = sbr.rel (%p342) target = $region20
        $region19: #{fwd.2} parent=11 // pred_region
          _
        $region20: #{fwd.2} parent=11 // pred_fallthru
          _
        // Predicated region
        $region21: #{fwd.2} parent=11 // pred_check
          %p345 = pneg %p141
        $region22: #{fwd.2} parent=11 // pred_check_branch
          %347 = sbr.rel (%p345) target = $region24
        $region23: #{fwd.2} parent=11 // pred_region
          %s349 = ssub.s32 3072, 3072
          %350 = vsyncadd [#allocation8], %s349
          %s351 = sshll.u32 [#allocation7], 4
          %s352 = int_to_ptr.vmem [resolvable:$true] %s351
          %357 = dma.hbm_to_vmem [thread:$0]  %s4, 3072, %s352, [#allocation8], 192, 192, 12
        $region24: #{fwd.2} parent=11 // pred_fallthru
          _
        // Predicated region
        $region25: #{fwd.2} parent=11 // pred_check
          %p358 = pneg %p162
        $region26: #{fwd.2} parent=11 // pred_check_branch
          %360 = sbr.rel (%p358) target = $region28
        $region27: #{fwd.2} parent=11 // pred_region
          _
        $region28: #{fwd.2} parent=11 // pred_fallthru
          _
        // Predicated region
        $region29: #{fwd.2} parent=11 // pred_check
          %p361 = pneg %p183
        $region30: #{fwd.2} parent=11 // pred_check_branch
          %363 = sbr.rel (%p361) target = $region32
        $region31: #{fwd.2} parent=11 // pred_region
          %s365 = ssub.s32 1024, 1024
          %366 = vsyncadd [#allocation8], %s365
          %s367 = sshll.u32 [#allocation9], 4
          %s368 = int_to_ptr.vmem [resolvable:$true] %s367
          %373 = dma.hbm_to_vmem [thread:$0]  %s6, 1024, %s368, [#allocation8], 64, 64, 4
        $region32: #{fwd.2} parent=11 // pred_fallthru
          _
        // Predicated region
        $region33: #{fwd.2} parent=11 // pred_check
          %p374 = pneg %p204
        $region34: #{fwd.2} parent=11 // pred_check_branch
          %376 = sbr.rel (%p374) target = $region36
        $region35: #{fwd.2} parent=11 // pred_region
          _
        $region36: #{fwd.2} parent=11 // pred_fallthru
          _
        // Predicated region
        $region37: #{fwd.2} parent=11 // pred_check
          %p377 = pneg %p225
        $region38: #{fwd.2} parent=11 // pred_check_branch
          %379 = sbr.rel (%p377) target = $region40
        $region39: #{fwd.2} parent=11 // pred_region
          %s381 = ssub.s32 4096, 4096
          %382 = vsyncadd [#allocation11], %s381
          %s383 = sshll.u32 [#allocation10], 4
          %s384 = int_to_ptr.vmem [resolvable:$true] %s383
          %389 = dma.hbm_to_vmem [thread:$0]  %s8, 4096, %s384, [#allocation11], 256, 256, 16
        $region40: #{fwd.2} parent=11 // pred_fallthru
          _
        // Predicated region
        $region41: #{fwd.2} parent=11 // pred_check
          %p390 = pneg %p246
        $region42: #{fwd.2} parent=11 // pred_check_branch
          %392 = sbr.rel (%p390) target = $region44
        $region43: #{fwd.2} parent=11 // pred_region
          _
        $region44: #{fwd.2} parent=11 // pred_fallthru
          _
        // Predicated region
        $region45: #{fwd.2} parent=11 // pred_check
          %p393 = pneg %p267
        $region46: #{fwd.2} parent=11 // pred_check_branch
          %395 = sbr.rel (%p393) target = $region48
        $region47: #{fwd.2} parent=11 // pred_region
          %s397 = ssub.s32 4096, 4096
          %398 = vsyncadd [#allocation11], %s397
          %s399 = sshll.u32 [#allocation12], 4
          %s400 = int_to_ptr.vmem [resolvable:$true] %s399
          %405 = dma.hbm_to_vmem [thread:$0]  %s10, 4096, %s400, [#allocation11], 64, 64, 4
        $region48: #{fwd.2} parent=11 // pred_fallthru
          _
        // Predicated region
        $region49: #{fwd.2} parent=11 // pred_check
          %p406 = pneg %p288
        $region50: #{fwd.2} parent=11 // pred_check_branch
          %408 = sbr.rel (%p406) target = $region52
        $region51: #{fwd.2} parent=11 // pred_region
          _
        $region52: #{fwd.2} parent=11 // pred_fallthru
          _
      $region12: #{fwd.2} parent=5 // pred_fallthru
        _
      %p409 = scmp.lt.s32.totalorder %s26, 8
      // Predicated region
      $region53: #{fwd.2} parent=5 // pred_check
        %p410 = pneg %p409
      $region54: #{fwd.2} parent=5 // pred_check_branch
        %412 = sbr.rel (%p410) target = $region56
      $region55: #{fwd.2} parent=5 // pred_region
        // Predicated region
        $region57: #{fwd.2} parent=55 // pred_check
          %p413 = pneg %p46
        $region58: #{fwd.2} parent=55 // pred_check_branch
          %415 = sbr.rel (%p413) target = $region60
        $region59: #{fwd.2} parent=55 // pred_region
          %s416 = sand.u32 %s36, 1
          %s417 = scalar_lea.sflag [#allocation3], %s416
          %s418 = sand.u32 %s36, 1
          %s419 = smul.addr %s418, 64
          %s420 = scalar_lea.vmem [#allocation2], %s419
          %s422 = ssub.s32 1024, 1024
          %423 = vsyncadd %s417, %s422
          %s424 = smul.addr %s26, 8
          %s425 = smul.addr %s424, 128
          %s426 = scalar_lea.hbm %s0, %s425
          %s427 = sshll.u32 %s420, 4
          %s428 = int_to_ptr.vmem [resolvable:$true] %s427
          %433 = dma.hbm_to_vmem [thread:$0]  %s426, 1024, %s428, %s417, 128, 128, 8
        $region60: #{fwd.2} parent=55 // pred_fallthru
          _
        // Predicated region
        $region61: #{fwd.2} parent=55 // pred_check
          %p434 = pneg %p72
        $region62: #{fwd.2} parent=55 // pred_check_branch
          %436 = sbr.rel (%p434) target = $region64
        $region63: #{fwd.2} parent=55 // pred_region
          %s437 = sand.u32 %s26, 1
          %s438 = scalar_lea.sflag [#allocation5], %s437
          %s439 = sand.u32 %s62, 1
          %s440 = scalar_lea.vmem [#allocation4], %s439
          %s442 = ssub.s32 16, 16
          %443 = vsyncadd %s438, %s442
          %s444 = smul.addr %s26, 16
          %s445 = scalar_lea.hbm %s1, %s444
          %s447 = sshll.u32 %s440, 4
          %s448 = int_to_ptr.vmem [resolvable:$true] %s447
          %450 = dma.hbm_to_vmem [thread:$0]  %s445, 16, %s448, %s438
        $region64: #{fwd.2} parent=55 // pred_fallthru
          _
      $region56: #{fwd.2} parent=5 // pred_fallthru
        _
      %p451 = scmp.le.s32.totalorder 1, %s26
      %p452 = scmp.lt.s32.totalorder %s26, 9
      %p453 = pnand %p451, %p452
      %p454 = pneg %p453
      // Predicated region
      $region65: #{fwd.2} parent=5 // pred_check
        _
      $region66: #{fwd.2} parent=5 // pred_check_branch
        %456 = sbr.rel (%p453) target = $region68
      $region67: #{fwd.2} parent=5 // pred_region
        %s457 = ssub.s32 %s26, 1
        %s458 = sand.u32 %s39, 1
        %s459 = scalar_lea.sflag [#allocation3], %s458
        %s460 = sand.u32 %s39, 1
        %s461 = smul.addr %s460, 64
        %s462 = scalar_lea.vmem [#allocation2], %s461
        // Predicated region
        $region69: #{fwd.2} parent=67 // pred_check
          %p463 = pneg %p52
        $region70: #{fwd.2} parent=67 // pred_check_branch
          %465 = sbr.rel (%p463) target = $region72
        $region71: #{fwd.2} parent=67 // pred_region
          %466 = dma.done %s459, 1024
        $region72: #{fwd.2} parent=67 // pred_fallthru
          _
        %s467 = sand.u32 %s31, 1
        %s468 = scalar_lea.sflag [#allocation5], %s467
        %s469 = sand.u32 %s65, 1
        %s470 = scalar_lea.vmem [#allocation4], %s469
        // Predicated region
        $region73: #{fwd.2} parent=67 // pred_check
          %p471 = pneg %p78
        $region74: #{fwd.2} parent=67 // pred_check_branch
          %473 = sbr.rel (%p471) target = $region76
        $region75: #{fwd.2} parent=67 // pred_region
          %474 = dma.done %s468, 16
        $region76: #{fwd.2} parent=67 // pred_fallthru
          _
        // Predicated region
        $region77: #{fwd.2} parent=67 // pred_check
          %p475 = pneg %p99
        $region78: #{fwd.2} parent=67 // pred_check_branch
          %477 = sbr.rel (%p475) target = $region80
        $region79: #{fwd.2} parent=67 // pred_region
          %478 = dma.done [#allocation5], 6144
        $region80: #{fwd.2} parent=67 // pred_fallthru
          _
        // Predicated region
        $region81: #{fwd.2} parent=67 // pred_check
          %p479 = pneg %p141
        $region82: #{fwd.2} parent=67 // pred_check_branch
          %481 = sbr.rel (%p479) target = $region84
        $region83: #{fwd.2} parent=67 // pred_region
          %482 = dma.done [#allocation8], 3072
        $region84: #{fwd.2} parent=67 // pred_fallthru
          _
        // Predicated region
        $region85: #{fwd.2} parent=67 // pred_check
          %p483 = pneg %p183
        $region86: #{fwd.2} parent=67 // pred_check_branch
          %485 = sbr.rel (%p483) target = $region88
        $region87: #{fwd.2} parent=67 // pred_region
          %486 = dma.done [#allocation8], 1024
        $region88: #{fwd.2} parent=67 // pred_fallthru
          _
        // Predicated region
        $region89: #{fwd.2} parent=67 // pred_check
          %p487 = pneg %p225
        $region90: #{fwd.2} parent=67 // pred_check_branch
          %489 = sbr.rel (%p487) target = $region92
        $region91: #{fwd.2} parent=67 // pred_region
          %490 = dma.done [#allocation11], 4096
        $region92: #{fwd.2} parent=67 // pred_fallthru
          _
        // Predicated region
        $region93: #{fwd.2} parent=67 // pred_check
          %p491 = pneg %p267
        $region94: #{fwd.2} parent=67 // pred_check_branch
          %493 = sbr.rel (%p491) target = $region96
        $region95: #{fwd.2} parent=67 // pred_region
          %494 = dma.done [#allocation11], 4096
        $region96: #{fwd.2} parent=67 // pred_fallthru
          _
        %s495 = sand.u32 %s39, 1
        %s496 = scalar_lea.sflag [#allocation3], %s495
        %s497 = sand.u32 %s39, 1
        %s498 = smul.addr %s497, 64
        %s499 = scalar_lea.vmem [#allocation2], %s498
        %p500 = pneg %p52
        %p501 = pneg %p49
        %s502 = sand.u32 %s31, 1
        %s503 = scalar_lea.sflag [#allocation5], %s502
        %s504 = sand.u32 %s65, 1
        %s505 = scalar_lea.vmem [#allocation4], %s504
        %p506 = pneg %p78
        %p507 = pneg %p75
        %p508 = pneg %p99
        %p509 = pneg %p96
        %p510 = pneg %p120
        %p511 = pneg %p117
        %p512 = pneg %p141
        %p513 = pneg %p138
        %p514 = pneg %p162
        %p515 = pneg %p159
        %p516 = pneg %p183
        %p517 = pneg %p180
        %p518 = pneg %p204
        %p519 = pneg %p201
        %p520 = pneg %p225
        %p521 = pneg %p222
        %p522 = pneg %p246
        %p523 = pneg %p243
        %p524 = pneg %p267
        %p525 = pneg %p264
        %p526 = pneg %p288
        %p527 = pneg %p285
        %p528 = pneg %p314
        %p529 = pneg %p311
        %p530 = scmp.lt.s32.totalorder %s31, 7
        %s531 = scalar_select %p530, %s31, 7
        %s532 = smul.addr %s531, 8
        %s533 = smul.addr %s532, 8
        %s534 = scalar_lea.vmem %s12, %s533
        %p535 = scmp.lt.s32.totalorder %s31, 7
        %s536 = scalar_select %p535, %s31, 7
        %s537 = smul.addr %s536, 8
        %s538 = smul.addr %s537, 8
        %s539 = scalar_lea.vmem %s12, %s538
        %v541 = vld [vmem:[%s462] sm:$0xff]
        %v542 = vld [vmem:[%s462 + $0x8] sm:$0xff]
        %v543 = vld [vmem:[%s462 + $0x10] sm:$0xff]
        %v544 = vld [vmem:[%s462 + $0x18] sm:$0xff]
        %v545 = vld [vmem:[%s462 + $0x20] sm:$0xff]
        %v546 = vld [vmem:[%s462 + $0x28] sm:$0xff]
        %v547 = vld [vmem:[%s462 + $0x30] sm:$0xff]
        %v548 = vld [vmem:[%s462 + $0x38] sm:$0xff]
        %v549 = vld [vmem:[%s470] sm:$0x1]
        %v550 = vxor.u32 %v549, 2147483648
        %v551 = vmul.f32 %v550, 1.442695
        %v552 = vpow.pop %v551
        %v553 = vadd.f32 %v552, 1.0
        %v554 = vrcp.pop %v553
        %v555 = vmul.f32 1.0, %v554
        %v556 = vmul.f32 %v549, %v555
        %v557 = vpack.c.bf16 %v556, %v556
        %v558 = vld [vmem:[#allocation6] sm:$0xff]
        %v559 = vld [vmem:[#allocation6 + $0x8] sm:$0xff]
        %v560 = vld [vmem:[#allocation6 + $0x10] sm:$0xff]
        %v561 = vld [vmem:[#allocation6 + $0x18] sm:$0xff]
        %v562 = vld [vmem:[#allocation6 + $0x20] sm:$0xff]
        %v563 = vld [vmem:[#allocation6 + $0x28] sm:$0xff]
        %v564 = vld [vmem:[#allocation6 + $0x30] sm:$0xff]
        %v565 = vld [vmem:[#allocation6 + $0x38] sm:$0xff]
        %v566 = vld [vmem:[#allocation6 + $0x40] sm:$0xff]
        %v567 = vld [vmem:[#allocation6 + $0x48] sm:$0xff]
        %v568 = vld [vmem:[#allocation6 + $0x50] sm:$0xff]
        %v569 = vld [vmem:[#allocation6 + $0x58] sm:$0xff]
        %v570 = vld [vmem:[#allocation6 + $0x60] sm:$0xff]
        %v571 = vld [vmem:[#allocation6 + $0x68] sm:$0xff]
        %v572 = vld [vmem:[#allocation6 + $0x70] sm:$0xff]
        %v573 = vld [vmem:[#allocation6 + $0x78] sm:$0xff]
        %v574 = vld [vmem:[#allocation6 + $0x80] sm:$0xff]
        %v575 = vld [vmem:[#allocation6 + $0x88] sm:$0xff]
        %v576 = vld [vmem:[#allocation6 + $0x90] sm:$0xff]
        %v577 = vld [vmem:[#allocation6 + $0x98] sm:$0xff]
        %v578 = vld [vmem:[#allocation6 + $0xa0] sm:$0xff]
        %v579 = vld [vmem:[#allocation6 + $0xa8] sm:$0xff]
        %v580 = vld [vmem:[#allocation6 + $0xb0] sm:$0xff]
        %v581 = vld [vmem:[#allocation6 + $0xb8] sm:$0xff]
        %v582 = vld [vmem:[#allocation6 + $0xc0] sm:$0xff]
        %v583 = vld [vmem:[#allocation6 + $0xc8] sm:$0xff]
        %v584 = vld [vmem:[#allocation6 + $0xd0] sm:$0xff]
        %v585 = vld [vmem:[#allocation6 + $0xd8] sm:$0xff]
        %v586 = vld [vmem:[#allocation6 + $0xe0] sm:$0xff]
        %v587 = vld [vmem:[#allocation6 + $0xe8] sm:$0xff]
        %v588 = vld [vmem:[#allocation6 + $0xf0] sm:$0xff]
        %v589 = vld [vmem:[#allocation6 + $0xf8] sm:$0xff]
        %v590 = vld [vmem:[#allocation6 + $0x100] sm:$0xff]
        %v591 = vld [vmem:[#allocation6 + $0x108] sm:$0xff]
        %v592 = vld [vmem:[#allocation6 + $0x110] sm:$0xff]
        %v593 = vld [vmem:[#allocation6 + $0x118] sm:$0xff]
        %v594 = vld [vmem:[#allocation6 + $0x120] sm:$0xff]
        %v595 = vld [vmem:[#allocation6 + $0x128] sm:$0xff]
        %v596 = vld [vmem:[#allocation6 + $0x130] sm:$0xff]
        %v597 = vld [vmem:[#allocation6 + $0x138] sm:$0xff]
        %v598 = vld [vmem:[#allocation6 + $0x140] sm:$0xff]
        %v599 = vld [vmem:[#allocation6 + $0x148] sm:$0xff]
        %v600 = vld [vmem:[#allocation6 + $0x150] sm:$0xff]
        %v601 = vld [vmem:[#allocation6 + $0x158] sm:$0xff]
        %v602 = vld [vmem:[#allocation6 + $0x160] sm:$0xff]
        %v603 = vld [vmem:[#allocation6 + $0x168] sm:$0xff]
        %v604 = vld [vmem:[#allocation6 + $0x170] sm:$0xff]
        %v605 = vld [vmem:[#allocation6 + $0x178] sm:$0xff]
        %v606 = vld [vmem:[%s3] sm:$0x3f]
        %v655 = vunpack.c.l.b16 %v558
        %v656 = vunpack.c.h.b16 %v558
        %v657 = vunpack.c.l.b16 %v559
        %v658 = vunpack.c.h.b16 %v559
        %v659 = vunpack.c.l.b16 %v560
        %v660 = vunpack.c.h.b16 %v560
        %v661 = vunpack.c.l.b16 %v561
        %v662 = vunpack.c.h.b16 %v561
        %v663 = vunpack.c.l.b16 %v562
        %v664 = vunpack.c.h.b16 %v562
        %v665 = vunpack.c.l.b16 %v563
        %v666 = vunpack.c.h.b16 %v563
        %v667 = vunpack.c.l.b16 %v564
        %v668 = vunpack.c.h.b16 %v564
        %v669 = vunpack.c.l.b16 %v565
        %v670 = vunpack.c.h.b16 %v565
        %v671 = vunpack.c.l.b16 %v566
        %v672 = vunpack.c.h.b16 %v566
        %v673 = vunpack.c.l.b16 %v567
        %v674 = vunpack.c.h.b16 %v567
        %v675 = vunpack.c.l.b16 %v568
        %v676 = vunpack.c.h.b16 %v568
        %v677 = vunpack.c.l.b16 %v569
        %v678 = vunpack.c.h.b16 %v569
        %v679 = vunpack.c.l.b16 %v570
        %v680 = vunpack.c.h.b16 %v570
        %v681 = vunpack.c.l.b16 %v571
        %v682 = vunpack.c.h.b16 %v571
        %v683 = vunpack.c.l.b16 %v572
        %v684 = vunpack.c.h.b16 %v572
        %v685 = vunpack.c.l.b16 %v573
        %v686 = vunpack.c.h.b16 %v573
        %v687 = vunpack.c.l.b16 %v574
        %v688 = vunpack.c.h.b16 %v574
        %v689 = vunpack.c.l.b16 %v575
        %v690 = vunpack.c.h.b16 %v575
        %v691 = vunpack.c.l.b16 %v576
        %v692 = vunpack.c.h.b16 %v576
        %v693 = vunpack.c.l.b16 %v577
        %v694 = vunpack.c.h.b16 %v577
        %v695 = vunpack.c.l.b16 %v578
        %v696 = vunpack.c.h.b16 %v578
        %v697 = vunpack.c.l.b16 %v579
        %v698 = vunpack.c.h.b16 %v579
        %v699 = vunpack.c.l.b16 %v580
        %v700 = vunpack.c.h.b16 %v580
        %v701 = vunpack.c.l.b16 %v581
        %v702 = vunpack.c.h.b16 %v581
        %v703 = vunpack.c.l.b16 %v582
        %v704 = vunpack.c.h.b16 %v582
        %v705 = vunpack.c.l.b16 %v583
        %v706 = vunpack.c.h.b16 %v583
        %v707 = vunpack.c.l.b16 %v584
        %v708 = vunpack.c.h.b16 %v584
        %v709 = vunpack.c.l.b16 %v585
        %v710 = vunpack.c.h.b16 %v585
        %v711 = vunpack.c.l.b16 %v586
        %v712 = vunpack.c.h.b16 %v586
        %v713 = vunpack.c.l.b16 %v587
        %v714 = vunpack.c.h.b16 %v587
        %v715 = vunpack.c.l.b16 %v588
        %v716 = vunpack.c.h.b16 %v588
        %v717 = vunpack.c.l.b16 %v589
        %v718 = vunpack.c.h.b16 %v589
        %v719 = vunpack.c.l.b16 %v590
        %v720 = vunpack.c.h.b16 %v590
        %v721 = vunpack.c.l.b16 %v591
        %v722 = vunpack.c.h.b16 %v591
        %v723 = vunpack.c.l.b16 %v592
        %v724 = vunpack.c.h.b16 %v592
        %v725 = vunpack.c.l.b16 %v593
        %v726 = vunpack.c.h.b16 %v593
        %v727 = vunpack.c.l.b16 %v594
        %v728 = vunpack.c.h.b16 %v594
        %v729 = vunpack.c.l.b16 %v595
        %v730 = vunpack.c.h.b16 %v595
        %v731 = vunpack.c.l.b16 %v596
        %v732 = vunpack.c.h.b16 %v596
        %v733 = vunpack.c.l.b16 %v597
        %v734 = vunpack.c.h.b16 %v597
        %v735 = vunpack.c.l.b16 %v598
        %v736 = vunpack.c.h.b16 %v598
        %v737 = vunpack.c.l.b16 %v599
        %v738 = vunpack.c.h.b16 %v599
        %v739 = vunpack.c.l.b16 %v600
        %v740 = vunpack.c.h.b16 %v600
        %v741 = vunpack.c.l.b16 %v601
        %v742 = vunpack.c.h.b16 %v601
        %v743 = vunpack.c.l.b16 %v602
        %v744 = vunpack.c.h.b16 %v602
        %v745 = vunpack.c.l.b16 %v603
        %v746 = vunpack.c.h.b16 %v603
        %v747 = vunpack.c.l.b16 %v604
        %v748 = vunpack.c.h.b16 %v604
        %v749 = vunpack.c.l.b16 %v605
        %v750 = vunpack.c.h.b16 %v605
        %v751 = vpack.c.b16 %v661, %v655
        %v752 = vpack.c.b16 %v662, %v656
        %v753 = vpack.c.b16 %v663, %v657
        %v754 = vpack.c.b16 %v664, %v658
        %v755 = vpack.c.b16 %v665, %v659
        %v756 = vpack.c.b16 %v666, %v660
        %v757 = vpack.c.b16 %v673, %v667
        %v758 = vpack.c.b16 %v674, %v668
        %v759 = vpack.c.b16 %v675, %v669
        %v760 = vpack.c.b16 %v676, %v670
        %v761 = vpack.c.b16 %v677, %v671
        %v762 = vpack.c.b16 %v678, %v672
        %v763 = vpack.c.b16 %v685, %v679
        %v764 = vpack.c.b16 %v686, %v680
        %v765 = vpack.c.b16 %v687, %v681
        %v766 = vpack.c.b16 %v688, %v682
        %v767 = vpack.c.b16 %v689, %v683
        %v768 = vpack.c.b16 %v690, %v684
        %v769 = vpack.c.b16 %v697, %v691
        %v770 = vpack.c.b16 %v698, %v692
        %v771 = vpack.c.b16 %v699, %v693
        %v772 = vpack.c.b16 %v700, %v694
        %v773 = vpack.c.b16 %v701, %v695
        %v774 = vpack.c.b16 %v702, %v696
        %v775 = vpack.c.b16 %v709, %v703
        %v776 = vpack.c.b16 %v710, %v704
        %v777 = vpack.c.b16 %v711, %v705
        %v778 = vpack.c.b16 %v712, %v706
        %v779 = vpack.c.b16 %v713, %v707
        %v780 = vpack.c.b16 %v714, %v708
        %v781 = vpack.c.b16 %v721, %v715
        %v782 = vpack.c.b16 %v722, %v716
        %v783 = vpack.c.b16 %v723, %v717
        %v784 = vpack.c.b16 %v724, %v718
        %v785 = vpack.c.b16 %v725, %v719
        %v786 = vpack.c.b16 %v726, %v720
        %v787 = vpack.c.b16 %v733, %v727
        %v788 = vpack.c.b16 %v734, %v728
        %v789 = vpack.c.b16 %v735, %v729
        %v790 = vpack.c.b16 %v736, %v730
        %v791 = vpack.c.b16 %v737, %v731
        %v792 = vpack.c.b16 %v738, %v732
        %v793 = vpack.c.b16 %v745, %v739
        %v794 = vpack.c.b16 %v746, %v740
        %v795 = vpack.c.b16 %v747, %v741
        %v796 = vpack.c.b16 %v748, %v742
        %v797 = vpack.c.b16 %v749, %v743
        %v798 = vpack.c.b16 %v750, %v744
        %v848 = vlaneseq
        %v849 = vshrl.u32 %v848, 7
        %v850 = vsub.s32 0, %v849
        %v851 = vrot.slane %v606, %v850
        %v852 = vlaneseq
        %v853 = vshrl.u32 %v852, 7
        %v854 = vsub.s32 1, %v853
        %v855 = vrot.slane %v606, %v854
        %v856 = vlaneseq
        %v857 = vshrl.u32 %v856, 7
        %v858 = vsub.s32 2, %v857
        %v859 = vrot.slane %v606, %v858
        %v860 = vlaneseq
        %v861 = vshrl.u32 %v860, 7
        %v862 = vsub.s32 3, %v861
        %v863 = vrot.slane %v606, %v862
        %v864 = vlaneseq
        %v865 = vshrl.u32 %v864, 7
        %v866 = vsub.s32 4, %v865
        %v867 = vrot.slane %v606, %v866
        %v868 = vlaneseq
        %v869 = vshrl.u32 %v868, 7
        %v870 = vsub.s32 5, %v869
        %v871 = vrot.slane %v606, %v870
        %878 = vmatprep.subr.bf16.mxu0 %v752
        %879 = vmatpush1.bf16.msra.mxu0 %v751
        %880 = vmatprep.subr.bf16.mxu0 %v758
        %881 = vmatpush1.bf16.msra.mxu0 %v757
        %882 = vmatprep.subr.bf16.mxu0 %v764
        %883 = vmatpush1.bf16.msra.mxu0 %v763
        %884 = vmatprep.subr.bf16.mxu0 %v770
        %885 = vmatpush1.bf16.msra.mxu0 %v769
        %886 = vmatprep.subr.bf16.mxu0 %v776
        %887 = vmatpush1.bf16.msra.mxu0 %v775
        %888 = vmatprep.subr.bf16.mxu0 %v782
        %889 = vmatpush1.bf16.msra.mxu0 %v781
        %890 = vmatprep.subr.bf16.mxu0 %v788
        %891 = vmatpush1.bf16.msra.mxu0 %v787
        %892 = vmatprep.subr.bf16.mxu0 %v794
        %893 = vmatpush1.bf16.msra.mxu0 %v793
        %894 = vmatprep.subr.bf16.mxu0 0
        %895 = vmatpush1.bf16.msra.mxu0 0
        %896 = vmatprep.subr.bf16.mxu0 0
        %897 = vmatpush1.bf16.msra.mxu0 0
        %898 = vmatprep.subr.bf16.mxu0 0
        %899 = vmatpush1.bf16.msra.mxu0 0
        %900 = vmatprep.subr.bf16.mxu0 0
        %901 = vmatpush1.bf16.msra.mxu0 0
        %902 = vmatprep.subr.bf16.mxu0 0
        %903 = vmatpush1.bf16.msra.mxu0 0
        %904 = vmatprep.subr.bf16.mxu0 0
        %905 = vmatpush1.bf16.msra.mxu0 0
        %906 = vmatprep.subr.bf16.mxu0 0
        %907 = vmatpush1.bf16.msra.mxu0 0
        %908 = vmatprep.subr.bf16.mxu0 0
        %909 = vmatpush1.bf16.msra.mxu0 0
        %910 = vmatprep.mubr.bf16.mxu0 0
        %911 = vmatmul.mubr.bf16.gmra.mrb[0].mxu0 %v557
        %v912 = vpop.f32.mrb[0].mxu0
        %v913 = vadd.f32 %v851, %v912
        %v914 = vpop.f32.mrb[0].mxu0
        %v915 = vadd.f32 %v855, %v914
        %v916 = vpop.f32.mrb[0].mxu0
        %v917 = vpop.f32.mrb[0].mxu0
        %918 = vdwg.mxu0
        %919 = vmatprep.subr.bf16.mxu0 %v754
        %920 = vmatpush1.bf16.msra.mxu0 %v753
        %921 = vmatprep.subr.bf16.mxu0 %v760
        %922 = vmatpush1.bf16.msra.mxu0 %v759
        %923 = vmatprep.subr.bf16.mxu0 %v766
        %924 = vmatpush1.bf16.msra.mxu0 %v765
        %925 = vmatprep.subr.bf16.mxu0 %v772
        %926 = vmatpush1.bf16.msra.mxu0 %v771
        %927 = vmatprep.subr.bf16.mxu0 %v778
        %928 = vmatpush1.bf16.msra.mxu0 %v777
        %929 = vmatprep.subr.bf16.mxu0 %v784
        %930 = vmatpush1.bf16.msra.mxu0 %v783
        %931 = vmatprep.subr.bf16.mxu0 %v790
        %932 = vmatpush1.bf16.msra.mxu0 %v789
        %933 = vmatprep.subr.bf16.mxu0 %v796
        %934 = vmatpush1.bf16.msra.mxu0 %v795
        %935 = vmatprep.subr.bf16.mxu0 0
        %936 = vmatpush1.bf16.msra.mxu0 0
        %937 = vmatprep.subr.bf16.mxu0 0
        %938 = vmatpush1.bf16.msra.mxu0 0
        %939 = vmatprep.subr.bf16.mxu0 0
        %940 = vmatpush1.bf16.msra.mxu0 0
        %941 = vmatprep.subr.bf16.mxu0 0
        %942 = vmatpush1.bf16.msra.mxu0 0
        %943 = vmatprep.subr.bf16.mxu0 0
        %944 = vmatpush1.bf16.msra.mxu0 0
        %945 = vmatprep.subr.bf16.mxu0 0
        %946 = vmatpush1.bf16.msra.mxu0 0
        %947 = vmatprep.subr.bf16.mxu0 0
        %948 = vmatpush1.bf16.msra.mxu0 0
        %949 = vmatprep.subr.bf16.mxu0 0
        %950 = vmatpush1.bf16.msra.mxu0 0
        %951 = vmatprep.mubr.bf16.mxu0 0
        %952 = vmatmul.mubr.bf16.gmra.mrb[0].mxu0 %v557
        %v953 = vpop.f32.mrb[0].mxu0
        %v954 = vadd.f32 %v859, %v953
        %v955 = vpop.f32.mrb[0].mxu0
        %v956 = vadd.f32 %v863, %v955
        %v957 = vpop.f32.mrb[0].mxu0
        %v958 = vpop.f32.mrb[0].mxu0
        %959 = vdwg.mxu0
        %960 = vmatprep.subr.bf16.mxu0 %v756
        %961 = vmatpush1.bf16.msra.mxu0 %v755
        %962 = vmatprep.subr.bf16.mxu0 %v762
        %963 = vmatpush1.bf16.msra.mxu0 %v761
        %964 = vmatprep.subr.bf16.mxu0 %v768
        %965 = vmatpush1.bf16.msra.mxu0 %v767
        %966 = vmatprep.subr.bf16.mxu0 %v774
        %967 = vmatpush1.bf16.msra.mxu0 %v773
        %968 = vmatprep.subr.bf16.mxu0 %v780
        %969 = vmatpush1.bf16.msra.mxu0 %v779
        %970 = vmatprep.subr.bf16.mxu0 %v786
        %971 = vmatpush1.bf16.msra.mxu0 %v785
        %972 = vmatprep.subr.bf16.mxu0 %v792
        %973 = vmatpush1.bf16.msra.mxu0 %v791
        %974 = vmatprep.subr.bf16.mxu0 %v798
        %975 = vmatpush1.bf16.msra.mxu0 %v797
        %976 = vmatprep.subr.bf16.mxu0 0
        %977 = vmatpush1.bf16.msra.mxu0 0
        %978 = vmatprep.subr.bf16.mxu0 0
        %979 = vmatpush1.bf16.msra.mxu0 0
        %980 = vmatprep.subr.bf16.mxu0 0
        %981 = vmatpush1.bf16.msra.mxu0 0
        %982 = vmatprep.subr.bf16.mxu0 0
        %983 = vmatpush1.bf16.msra.mxu0 0
        %984 = vmatprep.subr.bf16.mxu0 0
        %985 = vmatpush1.bf16.msra.mxu0 0
        %986 = vmatprep.subr.bf16.mxu0 0
        %987 = vmatpush1.bf16.msra.mxu0 0
        %988 = vmatprep.subr.bf16.mxu0 0
        %989 = vmatpush1.bf16.msra.mxu0 0
        %990 = vmatprep.subr.bf16.mxu0 0
        %991 = vmatpush1.bf16.msra.mxu0 0
        %992 = vmatprep.mubr.bf16.mxu0 0
        %993 = vmatmul.mubr.bf16.gmra.mrb[0].mxu0 %v557
        %v994 = vpop.f32.mrb[0].mxu0
        %v995 = vadd.f32 %v867, %v994
        %v996 = vpop.f32.mrb[0].mxu0
        %v997 = vadd.f32 %v871, %v996
        %v998 = vpop.f32.mrb[0].mxu0
        %v999 = vpop.f32.mrb[0].mxu0
        %1000 = vdwg.mxu0
        %1001 = vadd.xlane.f32.xlu0 %v541
        %v1002 = vpop.xlane.xlu0 %1001
        %1003 = vadd.xlane.f32.xlu0 %v542
        %v1004 = vpop.xlane.xlu0 %1003
        %1005 = vadd.xlane.f32.xlu0 %v543
        %v1006 = vpop.xlane.xlu0 %1005
        %1007 = vadd.xlane.f32.xlu0 %v544
        %v1008 = vpop.xlane.xlu0 %1007
        %1009 = vadd.xlane.f32.xlu0 %v545
        %v1010 = vpop.xlane.xlu0 %1009
        %1011 = vadd.xlane.f32.xlu0 %v546
        %v1012 = vpop.xlane.xlu0 %1011
        %1013 = vadd.xlane.f32.xlu0 %v547
        %v1014 = vpop.xlane.xlu0 %1013
        %1015 = vadd.xlane.f32.xlu0 %v548
        %v1016 = vpop.xlane.xlu0 %1015
        %v1017 = vrcp.pop 128.0
        %v1018 = vmul.f32 %v1002, %v1017
        %v1019 = vmul.f32 %v1004, %v1017
        %v1020 = vmul.f32 %v1006, %v1017
        %v1021 = vmul.f32 %v1008, %v1017
        %v1022 = vmul.f32 %v1010, %v1017
        %v1023 = vmul.f32 %v1012, %v1017
        %v1024 = vmul.f32 %v1014, %v1017
        %v1025 = vmul.f32 %v1016, %v1017
        %v1026 = vsub.f32 %v541, %v1018
        %v1027 = vsub.f32 %v542, %v1019
        %v1028 = vsub.f32 %v543, %v1020
        %v1029 = vsub.f32 %v544, %v1021
        %v1030 = vsub.f32 %v545, %v1022
        %v1031 = vsub.f32 %v546, %v1023
        %v1032 = vsub.f32 %v547, %v1024
        %v1033 = vsub.f32 %v548, %v1025
        %v1034 = vmul.f32 %v1026, %v1026
        %v1035 = vmul.f32 %v1027, %v1027
        %v1036 = vmul.f32 %v1028, %v1028
        %v1037 = vmul.f32 %v1029, %v1029
        %v1038 = vmul.f32 %v1030, %v1030
        %v1039 = vmul.f32 %v1031, %v1031
        %v1040 = vmul.f32 %v1032, %v1032
        %v1041 = vmul.f32 %v1033, %v1033
        %1042 = vadd.xlane.f32.xlu0 %v1034
        %v1043 = vpop.xlane.xlu0 %1042
        %1044 = vadd.xlane.f32.xlu0 %v1035
        %v1045 = vpop.xlane.xlu0 %1044
        %1046 = vadd.xlane.f32.xlu0 %v1036
        %v1047 = vpop.xlane.xlu0 %1046
        %1048 = vadd.xlane.f32.xlu0 %v1037
        %v1049 = vpop.xlane.xlu0 %1048
        %1050 = vadd.xlane.f32.xlu0 %v1038
        %v1051 = vpop.xlane.xlu0 %1050
        %1052 = vadd.xlane.f32.xlu0 %v1039
        %v1053 = vpop.xlane.xlu0 %1052
        %1054 = vadd.xlane.f32.xlu0 %v1040
        %v1055 = vpop.xlane.xlu0 %1054
        %1056 = vadd.xlane.f32.xlu0 %v1041
        %v1057 = vpop.xlane.xlu0 %1056
        %v1058 = vmul.f32 %v1043, %v1017
        %v1059 = vmul.f32 %v1045, %v1017
        %v1060 = vmul.f32 %v1047, %v1017
        %v1061 = vmul.f32 %v1049, %v1017
        %v1062 = vmul.f32 %v1051, %v1017
        %v1063 = vmul.f32 %v1053, %v1017
        %v1064 = vmul.f32 %v1055, %v1017
        %v1065 = vmul.f32 %v1057, %v1017
        %v1066 = vadd.f32 %v1058, 1e-06
        %v1067 = vadd.f32 %v1059, 1e-06
        %v1068 = vadd.f32 %v1060, 1e-06
        %v1069 = vadd.f32 %v1061, 1e-06
        %v1070 = vadd.f32 %v1062, 1e-06
        %v1071 = vadd.f32 %v1063, 1e-06
        %v1072 = vadd.f32 %v1064, 1e-06
        %v1073 = vadd.f32 %v1065, 1e-06
        %v1074 = vrsqrt.pop %v1066
        %v1075 = vrsqrt.pop %v1067
        %v1076 = vrsqrt.pop %v1068
        %v1077 = vrsqrt.pop %v1069
        %v1078 = vrsqrt.pop %v1070
        %v1079 = vrsqrt.pop %v1071
        %v1080 = vrsqrt.pop %v1072
        %v1081 = vrsqrt.pop %v1073
        %v1082 = vmul.f32 %v1026, %v1074
        %v1083 = vmul.f32 %v1027, %v1075
        %v1084 = vmul.f32 %v1028, %v1076
        %v1085 = vmul.f32 %v1029, %v1077
        %v1086 = vmul.f32 %v1030, %v1078
        %v1087 = vmul.f32 %v1031, %v1079
        %v1088 = vmul.f32 %v1032, %v1080
        %v1089 = vmul.f32 %v1033, %v1081
        %v1090 = vadd.f32 %v915, 1.0
        %v1091 = vlaneseq
        %v1092 = vshrl.u32 %v1091, 7
        %v1093 = vsub.s32 0, %v1092
        %v1094 = vrot.slane %v1090, %v1093
        %v1095 = vmul.f32 %v1082, %v1094
        %v1096 = vmul.f32 %v1083, %v1094
        %v1097 = vmul.f32 %v1084, %v1094
        %v1098 = vmul.f32 %v1085, %v1094
        %v1099 = vmul.f32 %v1086, %v1094
        %v1100 = vmul.f32 %v1087, %v1094
        %v1101 = vmul.f32 %v1088, %v1094
        %v1102 = vmul.f32 %v1089, %v1094
        %v1103 = vlaneseq
        %v1104 = vshrl.u32 %v1103, 7
        %v1105 = vsub.s32 0, %v1104
        %v1106 = vrot.slane %v913, %v1105
        %v1107 = vadd.f32 %v1095, %v1106
        %v1108 = vadd.f32 %v1096, %v1106
        %v1109 = vadd.f32 %v1097, %v1106
        %v1110 = vadd.f32 %v1098, %v1106
        %v1111 = vadd.f32 %v1099, %v1106
        %v1112 = vadd.f32 %v1100, %v1106
        %v1113 = vadd.f32 %v1101, %v1106
        %v1114 = vadd.f32 %v1102, %v1106
        %v1115 = vpack.c.bf16 %v1108, %v1107
        %v1116 = vpack.c.bf16 %v1110, %v1109
        %v1117 = vpack.c.bf16 %v1112, %v1111
        %v1118 = vpack.c.bf16 %v1114, %v1113
        %v1119 = vld [vmem:[#allocation7] sm:$0xff]
        %v1120 = vld [vmem:[#allocation7 + $0x8] sm:$0xf]
        %v1121 = vld [vmem:[#allocation7 + $0xc] sm:$0xff]
        %v1122 = vld [vmem:[#allocation7 + $0x14] sm:$0xf]
        %v1123 = vld [vmem:[#allocation7 + $0x18] sm:$0xff]
        %v1124 = vld [vmem:[#allocation7 + $0x20] sm:$0xf]
        %v1125 = vld [vmem:[#allocation7 + $0x24] sm:$0xff]
        %v1126 = vld [vmem:[#allocation7 + $0x2c] sm:$0xf]
        %v1127 = vld [vmem:[#allocation7 + $0x30] sm:$0xff]
        %v1128 = vld [vmem:[#allocation7 + $0x38] sm:$0xf]
        %v1129 = vld [vmem:[#allocation7 + $0x3c] sm:$0xff]
        %v1130 = vld [vmem:[#allocation7 + $0x44] sm:$0xf]
        %v1131 = vld [vmem:[#allocation7 + $0x48] sm:$0xff]
        %v1132 = vld [vmem:[#allocation7 + $0x50] sm:$0xf]
        %v1133 = vld [vmem:[#allocation7 + $0x54] sm:$0xff]
        %v1134 = vld [vmem:[#allocation7 + $0x5c] sm:$0xf]
        %v1135 = vld [vmem:[#allocation7 + $0x60] sm:$0xff]
        %v1136 = vld [vmem:[#allocation7 + $0x68] sm:$0xf]
        %v1137 = vld [vmem:[#allocation7 + $0x6c] sm:$0xff]
        %v1138 = vld [vmem:[#allocation7 + $0x74] sm:$0xf]
        %v1139 = vld [vmem:[#allocation7 + $0x78] sm:$0xff]
        %v1140 = vld [vmem:[#allocation7 + $0x80] sm:$0xf]
        %v1141 = vld [vmem:[#allocation7 + $0x84] sm:$0xff]
        %v1142 = vld [vmem:[#allocation7 + $0x8c] sm:$0xf]
        %v1143 = vld [vmem:[#allocation7 + $0x90] sm:$0xff]
        %v1144 = vld [vmem:[#allocation7 + $0x98] sm:$0xf]
        %v1145 = vld [vmem:[#allocation7 + $0x9c] sm:$0xff]
        %v1146 = vld [vmem:[#allocation7 + $0xa4] sm:$0xf]
        %v1147 = vld [vmem:[#allocation7 + $0xa8] sm:$0xff]
        %v1148 = vld [vmem:[#allocation7 + $0xb0] sm:$0xf]
        %v1149 = vld [vmem:[#allocation7 + $0xb4] sm:$0xff]
        %v1150 = vld [vmem:[#allocation7 + $0xbc] sm:$0xf]
        %v1151 = vld [vmem:[%s5] sm:$0x7]
        %v1153 = vlaneseq
        %v1154 = vshrl.u32 %v1153, 7
        %v1155 = vsub.s32 0, %v1154
        %v1156 = vrot.slane %v1151, %v1155
        %v1157 = vlaneseq
        %v1158 = vshrl.u32 %v1157, 7
        %v1159 = vsub.s32 1, %v1158
        %v1160 = vrot.slane %v1151, %v1159
        %v1161 = vlaneseq
        %v1162 = vshrl.u32 %v1161, 7
        %v1163 = vsub.s32 2, %v1162
        %v1164 = vrot.slane %v1151, %v1163
        %v1200 = vunpack.c.l.b16 %v1119
        %v1201 = vunpack.c.h.b16 %v1119
        %v1202 = vunpack.c.l.b16 %v1120
        %v1203 = vunpack.c.l.b16 %v1121
        %v1204 = vunpack.c.h.b16 %v1121
        %v1205 = vunpack.c.l.b16 %v1122
        %v1206 = vunpack.c.l.b16 %v1123
        %v1207 = vunpack.c.h.b16 %v1123
        %v1208 = vunpack.c.l.b16 %v1124
        %v1209 = vunpack.c.l.b16 %v1125
        %v1210 = vunpack.c.h.b16 %v1125
        %v1211 = vunpack.c.l.b16 %v1126
        %v1212 = vunpack.c.l.b16 %v1127
        %v1213 = vunpack.c.h.b16 %v1127
        %v1214 = vunpack.c.l.b16 %v1128
        %v1215 = vunpack.c.l.b16 %v1129
        %v1216 = vunpack.c.h.b16 %v1129
        %v1217 = vunpack.c.l.b16 %v1130
        %v1218 = vunpack.c.l.b16 %v1131
        %v1219 = vunpack.c.h.b16 %v1131
        %v1220 = vunpack.c.l.b16 %v1132
        %v1221 = vunpack.c.l.b16 %v1133
        %v1222 = vunpack.c.h.b16 %v1133
        %v1223 = vunpack.c.l.b16 %v1134
        %v1224 = vunpack.c.l.b16 %v1135
        %v1225 = vunpack.c.h.b16 %v1135
        %v1226 = vunpack.c.l.b16 %v1136
        %v1227 = vunpack.c.l.b16 %v1137
        %v1228 = vunpack.c.h.b16 %v1137
        %v1229 = vunpack.c.l.b16 %v1138
        %v1230 = vunpack.c.l.b16 %v1139
        %v1231 = vunpack.c.h.b16 %v1139
        %v1232 = vunpack.c.l.b16 %v1140
        %v1233 = vunpack.c.l.b16 %v1141
        %v1234 = vunpack.c.h.b16 %v1141
        %v1235 = vunpack.c.l.b16 %v1142
        %v1236 = vunpack.c.l.b16 %v1143
        %v1237 = vunpack.c.h.b16 %v1143
        %v1238 = vunpack.c.l.b16 %v1144
        %v1239 = vunpack.c.l.b16 %v1145
        %v1240 = vunpack.c.h.b16 %v1145
        %v1241 = vunpack.c.l.b16 %v1146
        %v1242 = vunpack.c.l.b16 %v1147
        %v1243 = vunpack.c.h.b16 %v1147
        %v1244 = vunpack.c.l.b16 %v1148
        %v1245 = vunpack.c.l.b16 %v1149
        %v1246 = vunpack.c.h.b16 %v1149
        %v1247 = vunpack.c.l.b16 %v1150
        %v1248 = vpack.c.b16 %v1203, %v1200
        %v1249 = vpack.c.b16 %v1204, %v1201
        %v1250 = vpack.c.b16 %v1205, %v1202
        %v1251 = vpack.c.b16 %v1209, %v1206
        %v1252 = vpack.c.b16 %v1210, %v1207
        %v1253 = vpack.c.b16 %v1211, %v1208
        %v1254 = vpack.c.b16 %v1215, %v1212
        %v1255 = vpack.c.b16 %v1216, %v1213
        %v1256 = vpack.c.b16 %v1217, %v1214
        %v1257 = vpack.c.b16 %v1221, %v1218
        %v1258 = vpack.c.b16 %v1222, %v1219
        %v1259 = vpack.c.b16 %v1223, %v1220
        %v1260 = vpack.c.b16 %v1227, %v1224
        %v1261 = vpack.c.b16 %v1228, %v1225
        %v1262 = vpack.c.b16 %v1229, %v1226
        %v1263 = vpack.c.b16 %v1233, %v1230
        %v1264 = vpack.c.b16 %v1234, %v1231
        %v1265 = vpack.c.b16 %v1235, %v1232
        %v1266 = vpack.c.b16 %v1239, %v1236
        %v1267 = vpack.c.b16 %v1240, %v1237
        %v1268 = vpack.c.b16 %v1241, %v1238
        %v1269 = vpack.c.b16 %v1245, %v1242
        %v1270 = vpack.c.b16 %v1246, %v1243
        %v1271 = vpack.c.b16 %v1247, %v1244
        %1296 = vmatprep.subr.bf16.mxu0 %v1249
        %1297 = vmatpush1.bf16.msra.mxu0 %v1248
        %1298 = vmatprep.subr.bf16.mxu0 %v1252
        %1299 = vmatpush1.bf16.msra.mxu0 %v1251
        %1300 = vmatprep.subr.bf16.mxu0 %v1255
        %1301 = vmatpush1.bf16.msra.mxu0 %v1254
        %1302 = vmatprep.subr.bf16.mxu0 %v1258
        %1303 = vmatpush1.bf16.msra.mxu0 %v1257
        %1304 = vmatprep.subr.bf16.mxu0 %v1261
        %1305 = vmatpush1.bf16.msra.mxu0 %v1260
        %1306 = vmatprep.subr.bf16.mxu0 %v1264
        %1307 = vmatpush1.bf16.msra.mxu0 %v1263
        %1308 = vmatprep.subr.bf16.mxu0 %v1267
        %1309 = vmatpush1.bf16.msra.mxu0 %v1266
        %1310 = vmatprep.subr.bf16.mxu0 %v1270
        %1311 = vmatpush1.bf16.msra.mxu0 %v1269
        %1312 = vmatprep.subr.bf16.mxu0 0
        %1313 = vmatpush1.bf16.msra.mxu0 0
        %1314 = vmatprep.subr.bf16.mxu0 0
        %1315 = vmatpush1.bf16.msra.mxu0 0
        %1316 = vmatprep.subr.bf16.mxu0 0
        %1317 = vmatpush1.bf16.msra.mxu0 0
        %1318 = vmatprep.subr.bf16.mxu0 0
        %1319 = vmatpush1.bf16.msra.mxu0 0
        %1320 = vmatprep.subr.bf16.mxu0 0
        %1321 = vmatpush1.bf16.msra.mxu0 0
        %1322 = vmatprep.subr.bf16.mxu0 0
        %1323 = vmatpush1.bf16.msra.mxu0 0
        %1324 = vmatprep.subr.bf16.mxu0 0
        %1325 = vmatpush1.bf16.msra.mxu0 0
        %1326 = vmatprep.subr.bf16.mxu0 0
        %1327 = vmatpush1.bf16.msra.mxu0 0
        %1328 = vmatprep.mubr.bf16.mxu0 0
        %1329 = vmatmul.mubr.bf16.gmra.mrb[0].mxu0 %v1115
        %v1330 = vpop.f32.mrb[0].mxu0
        %v1331 = vadd.f32 %v1156, %v1330
        %v1332 = vpop.f32.mrb[0].mxu0
        %v1333 = vadd.f32 %v1160, %v1332
        %v1334 = vpop.f32.mrb[0].mxu0
        %v1335 = vadd.f32 %v1156, %v1334
        %v1336 = vpop.f32.mrb[0].mxu0
        %v1337 = vadd.f32 %v1160, %v1336
        %1338 = vmatprep.mubr.bf16.mxu0 0
        %1339 = vmatmul.mubr.bf16.gmra.mrb[0].mxu0 %v1116
        %v1340 = vpop.f32.mrb[0].mxu0
        %v1341 = vadd.f32 %v1156, %v1340
        %v1342 = vpop.f32.mrb[0].mxu0
        %v1343 = vadd.f32 %v1160, %v1342
        %v1344 = vpop.f32.mrb[0].mxu0
        %v1345 = vadd.f32 %v1156, %v1344
        %v1346 = vpop.f32.mrb[0].mxu0
        %v1347 = vadd.f32 %v1160, %v1346
        %1348 = vmatprep.mubr.bf16.mxu0 0
        %1349 = vmatmul.mubr.bf16.gmra.mrb[0].mxu0 %v1117
        %v1350 = vpop.f32.mrb[0].mxu0
        %v1351 = vadd.f32 %v1156, %v1350
        %v1352 = vpop.f32.mrb[0].mxu0
        %v1353 = vadd.f32 %v1160, %v1352
        %v1354 = vpop.f32.mrb[0].mxu0
        %v1355 = vadd.f32 %v1156, %v1354
        %v1356 = vpop.f32.mrb[0].mxu0
        %v1357 = vadd.f32 %v1160, %v1356
        %1358 = vmatprep.mubr.bf16.mxu0 0
        %1359 = vmatmul.mubr.bf16.gmra.mrb[0].mxu0 %v1118
        %v1360 = vpop.f32.mrb[0].mxu0
        %v1361 = vadd.f32 %v1156, %v1360
        %v1362 = vpop.f32.mrb[0].mxu0
        %v1363 = vadd.f32 %v1160, %v1362
        %v1364 = vpop.f32.mrb[0].mxu0
        %v1365 = vadd.f32 %v1156, %v1364
        %v1366 = vpop.f32.mrb[0].mxu0
        %v1367 = vadd.f32 %v1160, %v1366
        %1368 = vdwg.mxu0
        %1369 = vmatprep.subr.bf16.mxu0 0
        %1370 = vmatpush1.bf16.msra.mxu0 %v1250
        %1371 = vmatprep.subr.bf16.mxu0 0
        %1372 = vmatpush1.bf16.msra.mxu0 %v1253
        %1373 = vmatprep.subr.bf16.mxu0 0
        %1374 = vmatpush1.bf16.msra.mxu0 %v1256
        %1375 = vmatprep.subr.bf16.mxu0 0
        %1376 = vmatpush1.bf16.msra.mxu0 %v1259
        %1377 = vmatprep.subr.bf16.mxu0 0
        %1378 = vmatpush1.bf16.msra.mxu0 %v1262
        %1379 = vmatprep.subr.bf16.mxu0 0
        %1380 = vmatpush1.bf16.msra.mxu0 %v1265
        %1381 = vmatprep.subr.bf16.mxu0 0
        %1382 = vmatpush1.bf16.msra.mxu0 %v1268
        %1383 = vmatprep.subr.bf16.mxu0 0
        %1384 = vmatpush1.bf16.msra.mxu0 %v1271
        %1385 = vmatprep.subr.bf16.mxu0 0
        %1386 = vmatpush1.bf16.msra.mxu0 0
        %1387 = vmatprep.subr.bf16.mxu0 0
        %1388 = vmatpush1.bf16.msra.mxu0 0
        %1389 = vmatprep.subr.bf16.mxu0 0
        %1390 = vmatpush1.bf16.msra.mxu0 0
        %1391 = vmatprep.subr.bf16.mxu0 0
        %1392 = vmatpush1.bf16.msra.mxu0 0
        %1393 = vmatprep.subr.bf16.mxu0 0
        %1394 = vmatpush1.bf16.msra.mxu0 0
        %1395 = vmatprep.subr.bf16.mxu0 0
        %1396 = vmatpush1.bf16.msra.mxu0 0
        %1397 = vmatprep.subr.bf16.mxu0 0
        %1398 = vmatpush1.bf16.msra.mxu0 0
        %1399 = vmatprep.subr.bf16.mxu0 0
        %1400 = vmatpush1.bf16.msra.mxu0 0
        %1401 = vmatprep.mubr.bf16.mxu0 0
        %1402 = vmatmul.mubr.bf16.gmra.mrb[0].mxu0 %v1115
        %v1403 = vpop.f32.mrb[0].mxu0
        %v1404 = vadd.f32 %v1164, %v1403
        %v1405 = vpop.f32.mrb[0].mxu0
        %v1406 = vpop.f32.mrb[0].mxu0
        %v1407 = vadd.f32 %v1164, %v1406
        %v1408 = vpop.f32.mrb[0].mxu0
        %1409 = vmatprep.mubr.bf16.mxu0 0
        %1410 = vmatmul.mubr.bf16.gmra.mrb[0].mxu0 %v1116
        %v1411 = vpop.f32.mrb[0].mxu0
        %v1412 = vadd.f32 %v1164, %v1411
        %v1413 = vpop.f32.mrb[0].mxu0
        %v1414 = vpop.f32.mrb[0].mxu0
        %v1415 = vadd.f32 %v1164, %v1414
        %v1416 = vpop.f32.mrb[0].mxu0
        %1417 = vmatprep.mubr.bf16.mxu0 0
        %1418 = vmatmul.mubr.bf16.gmra.mrb[0].mxu0 %v1117
        %v1419 = vpop.f32.mrb[0].mxu0
        %v1420 = vadd.f32 %v1164, %v1419
        %v1421 = vpop.f32.mrb[0].mxu0
        %v1422 = vpop.f32.mrb[0].mxu0
        %v1423 = vadd.f32 %v1164, %v1422
        %v1424 = vpop.f32.mrb[0].mxu0
        %1425 = vmatprep.mubr.bf16.mxu0 0
        %1426 = vmatmul.mubr.bf16.gmra.mrb[0].mxu0 %v1118
        %v1427 = vpop.f32.mrb[0].mxu0
        %v1428 = vadd.f32 %v1164, %v1427
        %v1429 = vpop.f32.mrb[0].mxu0
        %v1430 = vpop.f32.mrb[0].mxu0
        %v1431 = vadd.f32 %v1164, %v1430
        %v1432 = vpop.f32.mrb[0].mxu0
        %1433 = vdwg.mxu0
        %v1434 = vpack.c.bf16 %v1335, %v1331
        %v1435 = vpack.c.bf16 %v1345, %v1341
        %v1436 = vpack.c.bf16 %v1355, %v1351
        %v1437 = vpack.c.bf16 %v1365, %v1361
        %v1438 = vpack.c.bf16 %v1337, %v1333
        %v1439 = vpack.c.bf16 %v1347, %v1343
        %v1440 = vpack.c.bf16 %v1357, %v1353
        %v1441 = vpack.c.bf16 %v1367, %v1363
        %v1442 = vpack.c.bf16 %v1407, %v1404
        %v1443 = vpack.c.bf16 %v1415, %v1412
        %v1444 = vpack.c.bf16 %v1423, %v1420
        %v1445 = vpack.c.bf16 %v1431, %v1428
        %vm1446 = vcmask 261120
        %v1448 = vsel %vm1446, %v1434, 0
        %v1451 = vsel %vm1446, %v1435, 0
        %v1454 = vsel %vm1446, %v1436, 0
        %v1457 = vsel %vm1446, %v1437, 0
        %v1460 = vsel %vm1446, %v1438, 0
        %v1463 = vsel %vm1446, %v1439, 0
        %v1466 = vsel %vm1446, %v1440, 0
        %v1469 = vsel %vm1446, %v1441, 0
        %1471 = vmatprep.subr.bf16.mxu0 0
        %1472 = vmatpush1.bf16.xpose.msra.mxu0 %v1460
        %1473 = vmatprep.subr.bf16.mxu0 0
        %1474 = vmatpush1.bf16.xpose.msra.mxu0 %v1463
        %1475 = vmatprep.subr.bf16.mxu0 0
        %1476 = vmatpush1.bf16.xpose.msra.mxu0 %v1466
        %1477 = vmatprep.subr.bf16.mxu0 0
        %1478 = vmatpush1.bf16.xpose.msra.mxu0 %v1469
        %1479 = vmatprep.subr.bf16.mxu0 0
        %1480 = vmatpush1.bf16.xpose.msra.mxu0 0
        %1481 = vmatprep.subr.bf16.mxu0 0
        %1482 = vmatpush1.bf16.xpose.msra.mxu0 0
        %1483 = vmatprep.subr.bf16.mxu0 0
        %1484 = vmatpush1.bf16.xpose.msra.mxu0 0
        %1485 = vmatprep.subr.bf16.mxu0 0
        %1486 = vmatpush1.bf16.xpose.msra.mxu0 0
        %1487 = vmatprep.subr.bf16.mxu0 0
        %1488 = vmatpush1.bf16.xpose.msra.mxu0 0
        %1489 = vmatprep.subr.bf16.mxu0 0
        %1490 = vmatpush1.bf16.xpose.msra.mxu0 0
        %1491 = vmatprep.subr.bf16.mxu0 0
        %1492 = vmatpush1.bf16.xpose.msra.mxu0 0
        %1493 = vmatprep.subr.bf16.mxu0 0
        %1494 = vmatpush1.bf16.xpose.msra.mxu0 0
        %1495 = vmatprep.subr.bf16.mxu0 0
        %1496 = vmatpush1.bf16.xpose.msra.mxu0 0
        %1497 = vmatprep.subr.bf16.mxu0 0
        %1498 = vmatpush1.bf16.xpose.msra.mxu0 0
        %1499 = vmatprep.subr.bf16.mxu0 0
        %1500 = vmatpush1.bf16.xpose.msra.mxu0 0
        %1501 = vmatprep.subr.bf16.mxu0 0
        %1502 = vmatpush1.bf16.xpose.msra.mxu0 0
        %1503 = vmatprep.mubr.bf16.mxu0 0
        %1504 = vmatmul.mubr.bf16.gmra.mrb[0].mxu0 %v1448
        %v1505 = vpop.f32.mrb[0].mxu0
        %v1506 = vadd.f32 0.0, %v1505
        %v1507 = vpop.f32.mrb[0].mxu0
        %v1508 = vpop.f32.mrb[0].mxu0
        %v1509 = vadd.f32 0.0, %v1508
        %v1510 = vpop.f32.mrb[0].mxu0
        %1511 = vmatprep.mubr.bf16.mxu0 0
        %1512 = vmatmul.mubr.bf16.gmra.mrb[0].mxu0 %v1451
        %v1513 = vpop.f32.mrb[0].mxu0
        %v1514 = vadd.f32 0.0, %v1513
        %v1515 = vpop.f32.mrb[0].mxu0
        %v1516 = vpop.f32.mrb[0].mxu0
        %v1517 = vadd.f32 0.0, %v1516
        %v1518 = vpop.f32.mrb[0].mxu0
        %1519 = vmatprep.mubr.bf16.mxu0 0
        %1520 = vmatmul.mubr.bf16.gmra.mrb[0].mxu0 %v1454
        %v1521 = vpop.f32.mrb[0].mxu0
        %v1522 = vadd.f32 0.0, %v1521
        %v1523 = vpop.f32.mrb[0].mxu0
        %v1524 = vpop.f32.mrb[0].mxu0
        %v1525 = vadd.f32 0.0, %v1524
        %v1526 = vpop.f32.mrb[0].mxu0
        %1527 = vmatprep.mubr.bf16.mxu0 0
        %1528 = vmatmul.mubr.bf16.gmra.mrb[0].mxu0 %v1457
        %v1529 = vpop.f32.mrb[0].mxu0
        %v1530 = vadd.f32 0.0, %v1529
        %v1531 = vpop.f32.mrb[0].mxu0
        %v1532 = vpop.f32.mrb[0].mxu0
        %v1533 = vadd.f32 0.0, %v1532
        %v1534 = vpop.f32.mrb[0].mxu0
        %1535 = vdwg.mxu0
        %vm1536 = vcmask 523264
        %v1537 = vsel %vm1536, %v1506, -inf
        %1538 = vmax.xlane.f32.xlu0 %v1537
        %v1539 = vpop.xlane.xlu0 %1538
        %v1540 = vsel %vm1536, %v1509, -inf
        %1541 = vmax.xlane.f32.xlu0 %v1540
        %v1542 = vpop.xlane.xlu0 %1541
        %v1543 = vsel %vm1536, %v1514, -inf
        %1544 = vmax.xlane.f32.xlu0 %v1543
        %v1545 = vpop.xlane.xlu0 %1544
        %v1546 = vsel %vm1536, %v1517, -inf
        %1547 = vmax.xlane.f32.xlu0 %v1546
        %v1548 = vpop.xlane.xlu0 %1547
        %v1549 = vsel %vm1536, %v1522, -inf
        %1550 = vmax.xlane.f32.xlu0 %v1549
        %v1551 = vpop.xlane.xlu0 %1550
        %v1552 = vsel %vm1536, %v1525, -inf
        %1553 = vmax.xlane.f32.xlu0 %v1552
        %v1554 = vpop.xlane.xlu0 %1553
        %v1555 = vsel %vm1536, %v1530, -inf
        %1556 = vmax.xlane.f32.xlu0 %v1555
        %v1557 = vpop.xlane.xlu0 %1556
        %v1558 = vsel %vm1536, %v1533, -inf
        %1559 = vmax.xlane.f32.xlu0 %v1558
        %v1560 = vpop.xlane.xlu0 %1559
        %v1561 = vsub.f32 %v1506, %v1539
        %v1562 = vsub.f32 %v1509, %v1542
        %v1563 = vsub.f32 %v1514, %v1545
        %v1564 = vsub.f32 %v1517, %v1548
        %v1565 = vsub.f32 %v1522, %v1551
        %v1566 = vsub.f32 %v1525, %v1554
        %v1567 = vsub.f32 %v1530, %v1557
        %v1568 = vsub.f32 %v1533, %v1560
        %v1569 = vmul.f32 %v1561, 1.442695
        %v1570 = vpow.pop %v1569
        %v1571 = vmul.f32 %v1562, 1.442695
        %v1572 = vpow.pop %v1571
        %v1573 = vmul.f32 %v1563, 1.442695
        %v1574 = vpow.pop %v1573
        %v1575 = vmul.f32 %v1564, 1.442695
        %v1576 = vpow.pop %v1575
        %v1577 = vmul.f32 %v1565, 1.442695
        %v1578 = vpow.pop %v1577
        %v1579 = vmul.f32 %v1566, 1.442695
        %v1580 = vpow.pop %v1579
        %v1581 = vmul.f32 %v1567, 1.442695
        %v1582 = vpow.pop %v1581
        %v1583 = vmul.f32 %v1568, 1.442695
        %v1584 = vpow.pop %v1583
        %v1585 = vsel %vm1536, %v1570, 0.0
        %1586 = vadd.xlane.f32.xlu0 %v1585
        %v1587 = vpop.xlane.xlu0 %1586
        %v1588 = vsel %vm1536, %v1572, 0.0
        %1589 = vadd.xlane.f32.xlu0 %v1588
        %v1590 = vpop.xlane.xlu0 %1589
        %v1591 = vsel %vm1536, %v1574, 0.0
        %1592 = vadd.xlane.f32.xlu0 %v1591
        %v1593 = vpop.xlane.xlu0 %1592
        %v1594 = vsel %vm1536, %v1576, 0.0
        %1595 = vadd.xlane.f32.xlu0 %v1594
        %v1596 = vpop.xlane.xlu0 %1595
        %v1597 = vsel %vm1536, %v1578, 0.0
        %1598 = vadd.xlane.f32.xlu0 %v1597
        %v1599 = vpop.xlane.xlu0 %1598
        %v1600 = vsel %vm1536, %v1580, 0.0
        %1601 = vadd.xlane.f32.xlu0 %v1600
        %v1602 = vpop.xlane.xlu0 %1601
        %v1603 = vsel %vm1536, %v1582, 0.0
        %1604 = vadd.xlane.f32.xlu0 %v1603
        %v1605 = vpop.xlane.xlu0 %1604
        %v1606 = vsel %vm1536, %v1584, 0.0
        %1607 = vadd.xlane.f32.xlu0 %v1606
        %v1608 = vpop.xlane.xlu0 %1607
        %v1609 = vrcp.pop %v1587
        %v1610 = vrcp.pop %v1590
        %v1611 = vrcp.pop %v1593
        %v1612 = vrcp.pop %v1596
        %v1613 = vrcp.pop %v1599
        %v1614 = vrcp.pop %v1602
        %v1615 = vrcp.pop %v1605
        %v1616 = vrcp.pop %v1608
        %v1617 = vpack.c.bf16 %v1572, %v1570
        %v1618 = vpack.c.bf16 %v1576, %v1574
        %v1619 = vpack.c.bf16 %v1580, %v1578
        %v1620 = vpack.c.bf16 %v1584, %v1582
        %v1622 = vsel %vm1536, %v1617, 0
        %v1625 = vsel %vm1536, %v1618, 0
        %v1628 = vsel %vm1536, %v1619, 0
        %v1631 = vsel %vm1536, %v1620, 0
        %1633 = vmatprep.subr.bf16.mxu0 0
        %1634 = vmatpush1.bf16.msra.mxu0 %v1442
        %1635 = vmatprep.subr.bf16.mxu0 0
        %1636 = vmatpush1.bf16.msra.mxu0 %v1443
        %1637 = vmatprep.subr.bf16.mxu0 0
        %1638 = vmatpush1.bf16.msra.mxu0 %v1444
        %1639 = vmatprep.subr.bf16.mxu0 0
        %1640 = vmatpush1.bf16.msra.mxu0 %v1445
        %1641 = vmatprep.subr.bf16.mxu0 0
        %1642 = vmatpush1.bf16.msra.mxu0 0
        %1643 = vmatprep.subr.bf16.mxu0 0
        %1644 = vmatpush1.bf16.msra.mxu0 0
        %1645 = vmatprep.subr.bf16.mxu0 0
        %1646 = vmatpush1.bf16.msra.mxu0 0
        %1647 = vmatprep.subr.bf16.mxu0 0
        %1648 = vmatpush1.bf16.msra.mxu0 0
        %1649 = vmatprep.subr.bf16.mxu0 0
        %1650 = vmatpush1.bf16.msra.mxu0 0
        %1651 = vmatprep.subr.bf16.mxu0 0
        %1652 = vmatpush1.bf16.msra.mxu0 0
        %1653 = vmatprep.subr.bf16.mxu0 0
        %1654 = vmatpush1.bf16.msra.mxu0 0
        %1655 = vmatprep.subr.bf16.mxu0 0
        %1656 = vmatpush1.bf16.msra.mxu0 0
        %1657 = vmatprep.subr.bf16.mxu0 0
        %1658 = vmatpush1.bf16.msra.mxu0 0
        %1659 = vmatprep.subr.bf16.mxu0 0
        %1660 = vmatpush1.bf16.msra.mxu0 0
        %1661 = vmatprep.subr.bf16.mxu0 0
        %1662 = vmatpush1.bf16.msra.mxu0 0
        %1663 = vmatprep.subr.bf16.mxu0 0
        %1664 = vmatpush1.bf16.msra.mxu0 0
        %1665 = vmatprep.mubr.bf16.mxu0 0
        %1666 = vmatmul.mubr.bf16.gmra.mrb[0].mxu0 %v1622
        %v1667 = vpop.f32.mrb[0].mxu0
        %v1668 = vadd.f32 0.0, %v1667
        %v1669 = vpop.f32.mrb[0].mxu0
        %v1670 = vpop.f32.mrb[0].mxu0
        %v1671 = vadd.f32 0.0, %v1670
        %v1672 = vpop.f32.mrb[0].mxu0
        %1673 = vmatprep.mubr.bf16.mxu0 0
        %1674 = vmatmul.mubr.bf16.gmra.mrb[0].mxu0 %v1625
        %v1675 = vpop.f32.mrb[0].mxu0
        %v1676 = vadd.f32 0.0, %v1675
        %v1677 = vpop.f32.mrb[0].mxu0
        %v1678 = vpop.f32.mrb[0].mxu0
        %v1679 = vadd.f32 0.0, %v1678
        %v1680 = vpop.f32.mrb[0].mxu0
        %1681 = vmatprep.mubr.bf16.mxu0 0
        %1682 = vmatmul.mubr.bf16.gmra.mrb[0].mxu0 %v1628
        %v1683 = vpop.f32.mrb[0].mxu0
        %v1684 = vadd.f32 0.0, %v1683
        %v1685 = vpop.f32.mrb[0].mxu0
        %v1686 = vpop.f32.mrb[0].mxu0
        %v1687 = vadd.f32 0.0, %v1686
        %v1688 = vpop.f32.mrb[0].mxu0
        %1689 = vmatprep.mubr.bf16.mxu0 0
        %1690 = vmatmul.mubr.bf16.gmra.mrb[0].mxu0 %v1631
        %v1691 = vpop.f32.mrb[0].mxu0
        %v1692 = vadd.f32 0.0, %v1691
        %v1693 = vpop.f32.mrb[0].mxu0
        %v1694 = vpop.f32.mrb[0].mxu0
        %v1695 = vadd.f32 0.0, %v1694
        %v1696 = vpop.f32.mrb[0].mxu0
        %1697 = vdwg.mxu0
        %v1698 = vmul.f32 %v1668, %v1609
        %v1699 = vmul.f32 %v1671, %v1610
        %v1700 = vmul.f32 %v1676, %v1611
        %v1701 = vmul.f32 %v1679, %v1612
        %v1702 = vmul.f32 %v1684, %v1613
        %v1703 = vmul.f32 %v1687, %v1614
        %v1704 = vmul.f32 %v1692, %v1615
        %v1705 = vmul.f32 %v1695, %v1616
        %v1706 = vpack.c.bf16 %v1699, %v1698
        %v1707 = vpack.c.bf16 %v1701, %v1700
        %v1708 = vpack.c.bf16 %v1703, %v1702
        %v1709 = vpack.c.bf16 %v1705, %v1704
        %v1710 = vld [vmem:[#allocation9] sm:$0xf]
        %v1711 = vld [vmem:[#allocation9 + $0x4] sm:$0xf]
        %v1712 = vld [vmem:[#allocation9 + $0x8] sm:$0xf]
        %v1713 = vld [vmem:[#allocation9 + $0xc] sm:$0xf]
        %1718 = vrot.lane.b32.xlu0 %v1434, 96
        %v1719 = vpop.permute.xlu0 %1718
        %1720 = vrot.lane.b32.xlu0 %v1435, 96
        %v1721 = vpop.permute.xlu0 %1720
        %1722 = vrot.lane.b32.xlu0 %v1436, 96
        %v1723 = vpop.permute.xlu0 %1722
        %1724 = vrot.lane.b32.xlu0 %v1437, 96
        %v1725 = vpop.permute.xlu0 %1724
        %1730 = vrot.lane.b32.xlu0 %v1438, 96
        %v1731 = vpop.permute.xlu0 %1730
        %1732 = vrot.lane.b32.xlu0 %v1439, 96
        %v1733 = vpop.permute.xlu0 %1732
        %1734 = vrot.lane.b32.xlu0 %v1440, 96
        %v1735 = vpop.permute.xlu0 %1734
        %1736 = vrot.lane.b32.xlu0 %v1441, 96
        %v1737 = vpop.permute.xlu0 %1736
        %v1739 = vsel %vm1446, %v1719, 0
        %v1742 = vsel %vm1446, %v1721, 0
        %v1745 = vsel %vm1446, %v1723, 0
        %v1748 = vsel %vm1446, %v1725, 0
        %v1751 = vsel %vm1446, %v1731, 0
        %v1754 = vsel %vm1446, %v1733, 0
        %v1757 = vsel %vm1446, %v1735, 0
        %v1760 = vsel %vm1446, %v1737, 0
        %1762 = vmatprep.subr.bf16.mxu0 0
        %1763 = vmatpush1.bf16.xpose.msra.mxu0 %v1751
        %1764 = vmatprep.subr.bf16.mxu0 0
        %1765 = vmatpush1.bf16.xpose.msra.mxu0 %v1754
        %1766 = vmatprep.subr.bf16.mxu0 0
        %1767 = vmatpush1.bf16.xpose.msra.mxu0 %v1757
        %1768 = vmatprep.subr.bf16.mxu0 0
        %1769 = vmatpush1.bf16.xpose.msra.mxu0 %v1760
        %1770 = vmatprep.subr.bf16.mxu0 0
        %1771 = vmatpush1.bf16.xpose.msra.mxu0 0
        %1772 = vmatprep.subr.bf16.mxu0 0
        %1773 = vmatpush1.bf16.xpose.msra.mxu0 0
        %1774 = vmatprep.subr.bf16.mxu0 0
        %1775 = vmatpush1.bf16.xpose.msra.mxu0 0
        %1776 = vmatprep.subr.bf16.mxu0 0
        %1777 = vmatpush1.bf16.xpose.msra.mxu0 0
        %1778 = vmatprep.subr.bf16.mxu0 0
        %1779 = vmatpush1.bf16.xpose.msra.mxu0 0
        %1780 = vmatprep.subr.bf16.mxu0 0
        %1781 = vmatpush1.bf16.xpose.msra.mxu0 0
        %1782 = vmatprep.subr.bf16.mxu0 0
        %1783 = vmatpush1.bf16.xpose.msra.mxu0 0
        %1784 = vmatprep.subr.bf16.mxu0 0
        %1785 = vmatpush1.bf16.xpose.msra.mxu0 0
        %1786 = vmatprep.subr.bf16.mxu0 0
        %1787 = vmatpush1.bf16.xpose.msra.mxu0 0
        %1788 = vmatprep.subr.bf16.mxu0 0
        %1789 = vmatpush1.bf16.xpose.msra.mxu0 0
        %1790 = vmatprep.subr.bf16.mxu0 0
        %1791 = vmatpush1.bf16.xpose.msra.mxu0 0
        %1792 = vmatprep.subr.bf16.mxu0 0
        %1793 = vmatpush1.bf16.xpose.msra.mxu0 0
        %1794 = vmatprep.mubr.bf16.mxu0 0
        %1795 = vmatmul.mubr.bf16.gmra.mrb[0].mxu0 %v1739
        %v1796 = vpop.f32.mrb[0].mxu0
        %v1797 = vadd.f32 0.0, %v1796
        %v1798 = vpop.f32.mrb[0].mxu0
        %v1799 = vpop.f32.mrb[0].mxu0
        %v1800 = vadd.f32 0.0, %v1799
        %v1801 = vpop.f32.mrb[0].mxu0
        %1802 = vmatprep.mubr.bf16.mxu0 0
        %1803 = vmatmul.mubr.bf16.gmra.mrb[0].mxu0 %v1742
        %v1804 = vpop.f32.mrb[0].mxu0
        %v1805 = vadd.f32 0.0, %v1804
        %v1806 = vpop.f32.mrb[0].mxu0
        %v1807 = vpop.f32.mrb[0].mxu0
        %v1808 = vadd.f32 0.0, %v1807
        %v1809 = vpop.f32.mrb[0].mxu0
        %1810 = vmatprep.mubr.bf16.mxu0 0
        %1811 = vmatmul.mubr.bf16.gmra.mrb[0].mxu0 %v1745
        %v1812 = vpop.f32.mrb[0].mxu0
        %v1813 = vadd.f32 0.0, %v1812
        %v1814 = vpop.f32.mrb[0].mxu0
        %v1815 = vpop.f32.mrb[0].mxu0
        %v1816 = vadd.f32 0.0, %v1815
        %v1817 = vpop.f32.mrb[0].mxu0
        %1818 = vmatprep.mubr.bf16.mxu0 0
        %1819 = vmatmul.mubr.bf16.gmra.mrb[0].mxu0 %v1748
        %v1820 = vpop.f32.mrb[0].mxu0
        %v1821 = vadd.f32 0.0, %v1820
        %v1822 = vpop.f32.mrb[0].mxu0
        %v1823 = vpop.f32.mrb[0].mxu0
        %v1824 = vadd.f32 0.0, %v1823
        %v1825 = vpop.f32.mrb[0].mxu0
        %1826 = vdwg.mxu0
        %v1827 = vsel %vm1536, %v1797, -inf
        %1828 = vmax.xlane.f32.xlu0 %v1827
        %v1829 = vpop.xlane.xlu0 %1828
        %v1830 = vsel %vm1536, %v1800, -inf
        %1831 = vmax.xlane.f32.xlu0 %v1830
        %v1832 = vpop.xlane.xlu0 %1831
        %v1833 = vsel %vm1536, %v1805, -inf
        %1834 = vmax.xlane.f32.xlu0 %v1833
        %v1835 = vpop.xlane.xlu0 %1834
        %v1836 = vsel %vm1536, %v1808, -inf
        %1837 = vmax.xlane.f32.xlu0 %v1836
        %v1838 = vpop.xlane.xlu0 %1837
        %v1839 = vsel %vm1536, %v1813, -inf
        %1840 = vmax.xlane.f32.xlu0 %v1839
        %v1841 = vpop.xlane.xlu0 %1840
        %v1842 = vsel %vm1536, %v1816, -inf
        %1843 = vmax.xlane.f32.xlu0 %v1842
        %v1844 = vpop.xlane.xlu0 %1843
        %v1845 = vsel %vm1536, %v1821, -inf
        %1846 = vmax.xlane.f32.xlu0 %v1845
        %v1847 = vpop.xlane.xlu0 %1846
        %v1848 = vsel %vm1536, %v1824, -inf
        %1849 = vmax.xlane.f32.xlu0 %v1848
        %v1850 = vpop.xlane.xlu0 %1849
        %v1851 = vsub.f32 %v1797, %v1829
        %v1852 = vsub.f32 %v1800, %v1832
        %v1853 = vsub.f32 %v1805, %v1835
        %v1854 = vsub.f32 %v1808, %v1838
        %v1855 = vsub.f32 %v1813, %v1841
        %v1856 = vsub.f32 %v1816, %v1844
        %v1857 = vsub.f32 %v1821, %v1847
        %v1858 = vsub.f32 %v1824, %v1850
        %v1859 = vmul.f32 %v1851, 1.442695
        %v1860 = vpow.pop %v1859
        %v1861 = vmul.f32 %v1852, 1.442695
        %v1862 = vpow.pop %v1861
        %v1863 = vmul.f32 %v1853, 1.442695
        %v1864 = vpow.pop %v1863
        %v1865 = vmul.f32 %v1854, 1.442695
        %v1866 = vpow.pop %v1865
        %v1867 = vmul.f32 %v1855, 1.442695
        %v1868 = vpow.pop %v1867
        %v1869 = vmul.f32 %v1856, 1.442695
        %v1870 = vpow.pop %v1869
        %v1871 = vmul.f32 %v1857, 1.442695
        %v1872 = vpow.pop %v1871
        %v1873 = vmul.f32 %v1858, 1.442695
        %v1874 = vpow.pop %v1873
        %v1875 = vsel %vm1536, %v1860, 0.0
        %1876 = vadd.xlane.f32.xlu0 %v1875
        %v1877 = vpop.xlane.xlu0 %1876
        %v1878 = vsel %vm1536, %v1862, 0.0
        %1879 = vadd.xlane.f32.xlu0 %v1878
        %v1880 = vpop.xlane.xlu0 %1879
        %v1881 = vsel %vm1536, %v1864, 0.0
        %1882 = vadd.xlane.f32.xlu0 %v1881
        %v1883 = vpop.xlane.xlu0 %1882
        %v1884 = vsel %vm1536, %v1866, 0.0
        %1885 = vadd.xlane.f32.xlu0 %v1884
        %v1886 = vpop.xlane.xlu0 %1885
        %v1887 = vsel %vm1536, %v1868, 0.0
        %1888 = vadd.xlane.f32.xlu0 %v1887
        %v1889 = vpop.xlane.xlu0 %1888
        %v1890 = vsel %vm1536, %v1870, 0.0
        %1891 = vadd.xlane.f32.xlu0 %v1890
        %v1892 = vpop.xlane.xlu0 %1891
        %v1893 = vsel %vm1536, %v1872, 0.0
        %1894 = vadd.xlane.f32.xlu0 %v1893
        %v1895 = vpop.xlane.xlu0 %1894
        %v1896 = vsel %vm1536, %v1874, 0.0
        %1897 = vadd.xlane.f32.xlu0 %v1896
        %v1898 = vpop.xlane.xlu0 %1897
        %v1899 = vrcp.pop %v1877
        %v1900 = vrcp.pop %v1880
        %v1901 = vrcp.pop %v1883
        %v1902 = vrcp.pop %v1886
        %v1903 = vrcp.pop %v1889
        %v1904 = vrcp.pop %v1892
        %v1905 = vrcp.pop %v1895
        %v1906 = vrcp.pop %v1898
        %v1907 = vpack.c.bf16 %v1862, %v1860
        %v1908 = vpack.c.bf16 %v1866, %v1864
        %v1909 = vpack.c.bf16 %v1870, %v1868
        %v1910 = vpack.c.bf16 %v1874, %v1872
        %1915 = vrot.lane.b32.xlu0 %v1442, 96
        %v1916 = vpop.permute.xlu0 %1915
        %1917 = vrot.lane.b32.xlu0 %v1443, 96
        %v1918 = vpop.permute.xlu0 %1917
        %1919 = vrot.lane.b32.xlu0 %v1444, 96
        %v1920 = vpop.permute.xlu0 %1919
        %1921 = vrot.lane.b32.xlu0 %v1445, 96
        %v1922 = vpop.permute.xlu0 %1921
        %v1928 = vsel %vm1536, %v1907, 0
        %v1931 = vsel %vm1536, %v1908, 0
        %v1934 = vsel %vm1536, %v1909, 0
        %v1937 = vsel %vm1536, %v1910, 0
        %1939 = vmatprep.subr.bf16.mxu0 0
        %1940 = vmatpush1.bf16.msra.mxu0 %v1916
        %1941 = vmatprep.subr.bf16.mxu0 0
        %1942 = vmatpush1.bf16.msra.mxu0 %v1918
        %1943 = vmatprep.subr.bf16.mxu0 0
        %1944 = vmatpush1.bf16.msra.mxu0 %v1920
        %1945 = vmatprep.subr.bf16.mxu0 0
        %1946 = vmatpush1.bf16.msra.mxu0 %v1922
        %1947 = vmatprep.subr.bf16.mxu0 0
        %1948 = vmatpush1.bf16.msra.mxu0 0
        %1949 = vmatprep.subr.bf16.mxu0 0
        %1950 = vmatpush1.bf16.msra.mxu0 0
        %1951 = vmatprep.subr.bf16.mxu0 0
        %1952 = vmatpush1.bf16.msra.mxu0 0
        %1953 = vmatprep.subr.bf16.mxu0 0
        %1954 = vmatpush1.bf16.msra.mxu0 0
        %1955 = vmatprep.subr.bf16.mxu0 0
        %1956 = vmatpush1.bf16.msra.mxu0 0
        %1957 = vmatprep.subr.bf16.mxu0 0
        %1958 = vmatpush1.bf16.msra.mxu0 0
        %1959 = vmatprep.subr.bf16.mxu0 0
        %1960 = vmatpush1.bf16.msra.mxu0 0
        %1961 = vmatprep.subr.bf16.mxu0 0
        %1962 = vmatpush1.bf16.msra.mxu0 0
        %1963 = vmatprep.subr.bf16.mxu0 0
        %1964 = vmatpush1.bf16.msra.mxu0 0
        %1965 = vmatprep.subr.bf16.mxu0 0
        %1966 = vmatpush1.bf16.msra.mxu0 0
        %1967 = vmatprep.subr.bf16.mxu0 0
        %1968 = vmatpush1.bf16.msra.mxu0 0
        %1969 = vmatprep.subr.bf16.mxu0 0
        %1970 = vmatpush1.bf16.msra.mxu0 0
        %1971 = vmatprep.mubr.bf16.mxu0 0
        %1972 = vmatmul.mubr.bf16.gmra.mrb[0].mxu0 %v1928
        %v1973 = vpop.f32.mrb[0].mxu0
        %v1974 = vadd.f32 0.0, %v1973
        %v1975 = vpop.f32.mrb[0].mxu0
        %v1976 = vpop.f32.mrb[0].mxu0
        %v1977 = vadd.f32 0.0, %v1976
        %v1978 = vpop.f32.mrb[0].mxu0
        %1979 = vmatprep.mubr.bf16.mxu0 0
        %1980 = vmatmul.mubr.bf16.gmra.mrb[0].mxu0 %v1931
        %v1981 = vpop.f32.mrb[0].mxu0
        %v1982 = vadd.f32 0.0, %v1981
        %v1983 = vpop.f32.mrb[0].mxu0
        %v1984 = vpop.f32.mrb[0].mxu0
        %v1985 = vadd.f32 0.0, %v1984
        %v1986 = vpop.f32.mrb[0].mxu0
        %1987 = vmatprep.mubr.bf16.mxu0 0
        %1988 = vmatmul.mubr.bf16.gmra.mrb[0].mxu0 %v1934
        %v1989 = vpop.f32.mrb[0].mxu0
        %v1990 = vadd.f32 0.0, %v1989
        %v1991 = vpop.f32.mrb[0].mxu0
        %v1992 = vpop.f32.mrb[0].mxu0
        %v1993 = vadd.f32 0.0, %v1992
        %v1994 = vpop.f32.mrb[0].mxu0
        %1995 = vmatprep.mubr.bf16.mxu0 0
        %1996 = vmatmul.mubr.bf16.gmra.mrb[0].mxu0 %v1937
        %v1997 = vpop.f32.mrb[0].mxu0
        %v1998 = vadd.f32 0.0, %v1997
        %v1999 = vpop.f32.mrb[0].mxu0
        %v2000 = vpop.f32.mrb[0].mxu0
        %v2001 = vadd.f32 0.0, %v2000
        %v2002 = vpop.f32.mrb[0].mxu0
        %2003 = vdwg.mxu0
        %v2004 = vmul.f32 %v1974, %v1899
        %v2005 = vmul.f32 %v1977, %v1900
        %v2006 = vmul.f32 %v1982, %v1901
        %v2007 = vmul.f32 %v1985, %v1902
        %v2008 = vmul.f32 %v1990, %v1903
        %v2009 = vmul.f32 %v1993, %v1904
        %v2010 = vmul.f32 %v1998, %v1905
        %v2011 = vmul.f32 %v2001, %v1906
        %v2012 = vpack.c.bf16 %v2005, %v2004
        %v2013 = vpack.c.bf16 %v2007, %v2006
        %v2014 = vpack.c.bf16 %v2009, %v2008
        %v2015 = vpack.c.bf16 %v2011, %v2010
        %v2016 = vld [vmem:[#allocation9 + $0x10] sm:$0xf]
        %v2017 = vld [vmem:[#allocation9 + $0x14] sm:$0xf]
        %v2018 = vld [vmem:[#allocation9 + $0x18] sm:$0xf]
        %v2019 = vld [vmem:[#allocation9 + $0x1c] sm:$0xf]
        %v2024 = vunpack.c.l.b16 %v2016
        %v2025 = vunpack.c.l.b16 %v2017
        %v2026 = vunpack.c.l.b16 %v2018
        %v2027 = vunpack.c.l.b16 %v2019
        %v2028 = vpack.c.b16 %v2025, %v2024
        %v2029 = vpack.c.b16 %v2027, %v2026
        %v2033 = vsel %vm1446, %v2012, 0
        %v2036 = vsel %vm1446, %v2013, 0
        %v2039 = vsel %vm1446, %v2014, 0
        %v2042 = vsel %vm1446, %v2015, 0
        %2044 = vmatprep.subr.bf16.mxu0 0
        %2045 = vmatpush1.bf16.msra.mxu0 %v2028
        %2046 = vmatprep.subr.bf16.mxu0 0
        %2047 = vmatpush1.bf16.msra.mxu0 %v2029
        %2048 = vmatprep.subr.bf16.mxu0 0
        %2049 = vmatpush1.bf16.msra.mxu0 0
        %2050 = vmatprep.subr.bf16.mxu0 0
        %2051 = vmatpush1.bf16.msra.mxu0 0
        %2052 = vmatprep.subr.bf16.mxu0 0
        %2053 = vmatpush1.bf16.msra.mxu0 0
        %2054 = vmatprep.subr.bf16.mxu0 0
        %2055 = vmatpush1.bf16.msra.mxu0 0
        %2056 = vmatprep.subr.bf16.mxu0 0
        %2057 = vmatpush1.bf16.msra.mxu0 0
        %2058 = vmatprep.subr.bf16.mxu0 0
        %2059 = vmatpush1.bf16.msra.mxu0 0
        %2060 = vmatprep.subr.bf16.mxu0 0
        %2061 = vmatpush1.bf16.msra.mxu0 0
        %2062 = vmatprep.subr.bf16.mxu0 0
        %2063 = vmatpush1.bf16.msra.mxu0 0
        %2064 = vmatprep.subr.bf16.mxu0 0
        %2065 = vmatpush1.bf16.msra.mxu0 0
        %2066 = vmatprep.subr.bf16.mxu0 0
        %2067 = vmatpush1.bf16.msra.mxu0 0
        %2068 = vmatprep.subr.bf16.mxu0 0
        %2069 = vmatpush1.bf16.msra.mxu0 0
        %2070 = vmatprep.subr.bf16.mxu0 0
        %2071 = vmatpush1.bf16.msra.mxu0 0
        %2072 = vmatprep.subr.bf16.mxu0 0
        %2073 = vmatpush1.bf16.msra.mxu0 0
        %2074 = vmatprep.subr.bf16.mxu0 0
        %2075 = vmatpush1.bf16.msra.mxu0 0
        %2076 = vmatprep.mubr.bf16.mxu0 0
        %2077 = vmatmul.mubr.bf16.gmra.mrb[0].mxu0 %v2033
        %v2078 = vpop.f32.mrb[0].mxu0
        %v2079 = vadd.f32 0.0, %v2078
        %v2080 = vpop.f32.mrb[0].mxu0
        %v2081 = vpop.f32.mrb[0].mxu0
        %v2082 = vadd.f32 0.0, %v2081
        %v2083 = vpop.f32.mrb[0].mxu0
        %2084 = vmatprep.mubr.bf16.mxu0 0
        %2085 = vmatmul.mubr.bf16.gmra.mrb[0].mxu0 %v2036
        %v2086 = vpop.f32.mrb[0].mxu0
        %v2087 = vadd.f32 0.0, %v2086
        %v2088 = vpop.f32.mrb[0].mxu0
        %v2089 = vpop.f32.mrb[0].mxu0
        %v2090 = vadd.f32 0.0, %v2089
        %v2091 = vpop.f32.mrb[0].mxu0
        %2092 = vmatprep.mubr.bf16.mxu0 0
        %2093 = vmatmul.mubr.bf16.gmra.mrb[0].mxu0 %v2039
        %v2094 = vpop.f32.mrb[0].mxu0
        %v2095 = vadd.f32 0.0, %v2094
        %v2096 = vpop.f32.mrb[0].mxu0
        %v2097 = vpop.f32.mrb[0].mxu0
        %v2098 = vadd.f32 0.0, %v2097
        %v2099 = vpop.f32.mrb[0].mxu0
        %2100 = vmatprep.mubr.bf16.mxu0 0
        %2101 = vmatmul.mubr.bf16.gmra.mrb[0].mxu0 %v2042
        %v2102 = vpop.f32.mrb[0].mxu0
        %v2103 = vadd.f32 0.0, %v2102
        %v2104 = vpop.f32.mrb[0].mxu0
        %v2105 = vpop.f32.mrb[0].mxu0
        %v2106 = vadd.f32 0.0, %v2105
        %v2107 = vpop.f32.mrb[0].mxu0
        %2108 = vdwg.mxu0
        %v2113 = vunpack.c.l.b16 %v1710
        %v2114 = vunpack.c.l.b16 %v1711
        %v2115 = vunpack.c.l.b16 %v1712
        %v2116 = vunpack.c.l.b16 %v1713
        %v2117 = vpack.c.b16 %v2114, %v2113
        %v2118 = vpack.c.b16 %v2116, %v2115
        %v2122 = vsel %vm1446, %v1706, 0
        %v2125 = vsel %vm1446, %v1707, 0
        %v2128 = vsel %vm1446, %v1708, 0
        %v2131 = vsel %vm1446, %v1709, 0
        %2133 = vmatprep.subr.bf16.mxu0 0
        %2134 = vmatpush1.bf16.msra.mxu0 %v2117
        %2135 = vmatprep.subr.bf16.mxu0 0
        %2136 = vmatpush1.bf16.msra.mxu0 %v2118
        %2137 = vmatprep.subr.bf16.mxu0 0
        %2138 = vmatpush1.bf16.msra.mxu0 0
        %2139 = vmatprep.subr.bf16.mxu0 0
        %2140 = vmatpush1.bf16.msra.mxu0 0
        %2141 = vmatprep.subr.bf16.mxu0 0
        %2142 = vmatpush1.bf16.msra.mxu0 0
        %2143 = vmatprep.subr.bf16.mxu0 0
        %2144 = vmatpush1.bf16.msra.mxu0 0
        %2145 = vmatprep.subr.bf16.mxu0 0
        %2146 = vmatpush1.bf16.msra.mxu0 0
        %2147 = vmatprep.subr.bf16.mxu0 0
        %2148 = vmatpush1.bf16.msra.mxu0 0
        %2149 = vmatprep.subr.bf16.mxu0 0
        %2150 = vmatpush1.bf16.msra.mxu0 0
        %2151 = vmatprep.subr.bf16.mxu0 0
        %2152 = vmatpush1.bf16.msra.mxu0 0
        %2153 = vmatprep.subr.bf16.mxu0 0
        %2154 = vmatpush1.bf16.msra.mxu0 0
        %2155 = vmatprep.subr.bf16.mxu0 0
        %2156 = vmatpush1.bf16.msra.mxu0 0
        %2157 = vmatprep.subr.bf16.mxu0 0
        %2158 = vmatpush1.bf16.msra.mxu0 0
        %2159 = vmatprep.subr.bf16.mxu0 0
        %2160 = vmatpush1.bf16.msra.mxu0 0
        %2161 = vmatprep.subr.bf16.mxu0 0
        %2162 = vmatpush1.bf16.msra.mxu0 0
        %2163 = vmatprep.subr.bf16.mxu0 0
        %2164 = vmatpush1.bf16.msra.mxu0 0
        %2165 = vmatprep.mubr.bf16.mxu0 0
        %2166 = vmatmul.mubr.bf16.gmra.mrb[0].mxu0 %v2122
        %v2167 = vpop.f32.mrb[0].mxu0
        %v2168 = vadd.f32 %v2079, %v2167
        %v2169 = vpop.f32.mrb[0].mxu0
        %v2170 = vpop.f32.mrb[0].mxu0
        %v2171 = vadd.f32 %v2082, %v2170
        %v2172 = vpop.f32.mrb[0].mxu0
        %2173 = vmatprep.mubr.bf16.mxu0 0
        %2174 = vmatmul.mubr.bf16.gmra.mrb[0].mxu0 %v2125
        %v2175 = vpop.f32.mrb[0].mxu0
        %v2176 = vadd.f32 %v2087, %v2175
        %v2177 = vpop.f32.mrb[0].mxu0
        %v2178 = vpop.f32.mrb[0].mxu0
        %v2179 = vadd.f32 %v2090, %v2178
        %v2180 = vpop.f32.mrb[0].mxu0
        %2181 = vmatprep.mubr.bf16.mxu0 0
        %2182 = vmatmul.mubr.bf16.gmra.mrb[0].mxu0 %v2128
        %v2183 = vpop.f32.mrb[0].mxu0
        %v2184 = vadd.f32 %v2095, %v2183
        %v2185 = vpop.f32.mrb[0].mxu0
        %v2186 = vpop.f32.mrb[0].mxu0
        %v2187 = vadd.f32 %v2098, %v2186
        %v2188 = vpop.f32.mrb[0].mxu0
        %2189 = vmatprep.mubr.bf16.mxu0 0
        %2190 = vmatmul.mubr.bf16.gmra.mrb[0].mxu0 %v2131
        %v2191 = vpop.f32.mrb[0].mxu0
        %v2192 = vadd.f32 %v2103, %v2191
        %v2193 = vpop.f32.mrb[0].mxu0
        %v2194 = vpop.f32.mrb[0].mxu0
        %v2195 = vadd.f32 %v2106, %v2194
        %v2196 = vpop.f32.mrb[0].mxu0
        %2197 = vdwg.mxu0
        %2198 = vrot.lane.b32.xlu0 %v1434, 64
        %v2199 = vpop.permute.xlu0 %2198
        %2200 = vrot.lane.b32.xlu0 %v1435, 64
        %v2201 = vpop.permute.xlu0 %2200
        %2202 = vrot.lane.b32.xlu0 %v1436, 64
        %v2203 = vpop.permute.xlu0 %2202
        %2204 = vrot.lane.b32.xlu0 %v1437, 64
        %v2205 = vpop.permute.xlu0 %2204
        %2206 = vrot.lane.b32.xlu0 %v1438, 64
        %v2207 = vpop.permute.xlu0 %2206
        %2208 = vrot.lane.b32.xlu0 %v1439, 64
        %v2209 = vpop.permute.xlu0 %2208
        %2210 = vrot.lane.b32.xlu0 %v1440, 64
        %v2211 = vpop.permute.xlu0 %2210
        %2212 = vrot.lane.b32.xlu0 %v1441, 64
        %v2213 = vpop.permute.xlu0 %2212
        %v2215 = vsel %vm1446, %v2199, 0
        %v2218 = vsel %vm1446, %v2201, 0
        %v2221 = vsel %vm1446, %v2203, 0
        %v2224 = vsel %vm1446, %v2205, 0
        %v2227 = vsel %vm1446, %v2207, 0
        %v2230 = vsel %vm1446, %v2209, 0
        %v2233 = vsel %vm1446, %v2211, 0
        %v2236 = vsel %vm1446, %v2213, 0
        %2238 = vmatprep.subr.bf16.mxu0 0
        %2239 = vmatpush1.bf16.xpose.msra.mxu0 %v2227
        %2240 = vmatprep.subr.bf16.mxu0 0
        %2241 = vmatpush1.bf16.xpose.msra.mxu0 %v2230
        %2242 = vmatprep.subr.bf16.mxu0 0
        %2243 = vmatpush1.bf16.xpose.msra.mxu0 %v2233
        %2244 = vmatprep.subr.bf16.mxu0 0
        %2245 = vmatpush1.bf16.xpose.msra.mxu0 %v2236
        %2246 = vmatprep.subr.bf16.mxu0 0
        %2247 = vmatpush1.bf16.xpose.msra.mxu0 0
        %2248 = vmatprep.subr.bf16.mxu0 0
        %2249 = vmatpush1.bf16.xpose.msra.mxu0 0
        %2250 = vmatprep.subr.bf16.mxu0 0
        %2251 = vmatpush1.bf16.xpose.msra.mxu0 0
        %2252 = vmatprep.subr.bf16.mxu0 0
        %2253 = vmatpush1.bf16.xpose.msra.mxu0 0
        %2254 = vmatprep.subr.bf16.mxu0 0
        %2255 = vmatpush1.bf16.xpose.msra.mxu0 0
        %2256 = vmatprep.subr.bf16.mxu0 0
        %2257 = vmatpush1.bf16.xpose.msra.mxu0 0
        %2258 = vmatprep.subr.bf16.mxu0 0
        %2259 = vmatpush1.bf16.xpose.msra.mxu0 0
        %2260 = vmatprep.subr.bf16.mxu0 0
        %2261 = vmatpush1.bf16.xpose.msra.mxu0 0
        %2262 = vmatprep.subr.bf16.mxu0 0
        %2263 = vmatpush1.bf16.xpose.msra.mxu0 0
        %2264 = vmatprep.subr.bf16.mxu0 0
        %2265 = vmatpush1.bf16.xpose.msra.mxu0 0
        %2266 = vmatprep.subr.bf16.mxu0 0
        %2267 = vmatpush1.bf16.xpose.msra.mxu0 0
        %2268 = vmatprep.subr.bf16.mxu0 0
        %2269 = vmatpush1.bf16.xpose.msra.mxu0 0
        %2270 = vmatprep.mubr.bf16.mxu0 0
        %2271 = vmatmul.mubr.bf16.gmra.mrb[0].mxu0 %v2215
        %v2272 = vpop.f32.mrb[0].mxu0
        %v2273 = vadd.f32 0.0, %v2272
        %v2274 = vpop.f32.mrb[0].mxu0
        %v2275 = vpop.f32.mrb[0].mxu0
        %v2276 = vadd.f32 0.0, %v2275
        %v2277 = vpop.f32.mrb[0].mxu0
        %2278 = vmatprep.mubr.bf16.mxu0 0
        %2279 = vmatmul.mubr.bf16.gmra.mrb[0].mxu0 %v2218
        %v2280 = vpop.f32.mrb[0].mxu0
        %v2281 = vadd.f32 0.0, %v2280
        %v2282 = vpop.f32.mrb[0].mxu0
        %v2283 = vpop.f32.mrb[0].mxu0
        %v2284 = vadd.f32 0.0, %v2283
        %v2285 = vpop.f32.mrb[0].mxu0
        %2286 = vmatprep.mubr.bf16.mxu0 0
        %2287 = vmatmul.mubr.bf16.gmra.mrb[0].mxu0 %v2221
        %v2288 = vpop.f32.mrb[0].mxu0
        %v2289 = vadd.f32 0.0, %v2288
        %v2290 = vpop.f32.mrb[0].mxu0
        %v2291 = vpop.f32.mrb[0].mxu0
        %v2292 = vadd.f32 0.0, %v2291
        %v2293 = vpop.f32.mrb[0].mxu0
        %2294 = vmatprep.mubr.bf16.mxu0 0
        %2295 = vmatmul.mubr.bf16.gmra.mrb[0].mxu0 %v2224
        %v2296 = vpop.f32.mrb[0].mxu0
        %v2297 = vadd.f32 0.0, %v2296
        %v2298 = vpop.f32.mrb[0].mxu0
        %v2299 = vpop.f32.mrb[0].mxu0
        %v2300 = vadd.f32 0.0, %v2299
        %v2301 = vpop.f32.mrb[0].mxu0
        %2302 = vdwg.mxu0
        %v2303 = vsel %vm1536, %v2273, -inf
        %2304 = vmax.xlane.f32.xlu0 %v2303
        %v2305 = vpop.xlane.xlu0 %2304
        %v2306 = vsel %vm1536, %v2276, -inf
        %2307 = vmax.xlane.f32.xlu0 %v2306
        %v2308 = vpop.xlane.xlu0 %2307
        %v2309 = vsel %vm1536, %v2281, -inf
        %2310 = vmax.xlane.f32.xlu0 %v2309
        %v2311 = vpop.xlane.xlu0 %2310
        %v2312 = vsel %vm1536, %v2284, -inf
        %2313 = vmax.xlane.f32.xlu0 %v2312
        %v2314 = vpop.xlane.xlu0 %2313
        %v2315 = vsel %vm1536, %v2289, -inf
        %2316 = vmax.xlane.f32.xlu0 %v2315
        %v2317 = vpop.xlane.xlu0 %2316
        %v2318 = vsel %vm1536, %v2292, -inf
        %2319 = vmax.xlane.f32.xlu0 %v2318
        %v2320 = vpop.xlane.xlu0 %2319
        %v2321 = vsel %vm1536, %v2297, -inf
        %2322 = vmax.xlane.f32.xlu0 %v2321
        %v2323 = vpop.xlane.xlu0 %2322
        %v2324 = vsel %vm1536, %v2300, -inf
        %2325 = vmax.xlane.f32.xlu0 %v2324
        %v2326 = vpop.xlane.xlu0 %2325
        %v2327 = vsub.f32 %v2273, %v2305
        %v2328 = vsub.f32 %v2276, %v2308
        %v2329 = vsub.f32 %v2281, %v2311
        %v2330 = vsub.f32 %v2284, %v2314
        %v2331 = vsub.f32 %v2289, %v2317
        %v2332 = vsub.f32 %v2292, %v2320
        %v2333 = vsub.f32 %v2297, %v2323
        %v2334 = vsub.f32 %v2300, %v2326
        %v2335 = vmul.f32 %v2327, 1.442695
        %v2336 = vpow.pop %v2335
        %v2337 = vmul.f32 %v2328, 1.442695
        %v2338 = vpow.pop %v2337
        %v2339 = vmul.f32 %v2329, 1.442695
        %v2340 = vpow.pop %v2339
        %v2341 = vmul.f32 %v2330, 1.442695
        %v2342 = vpow.pop %v2341
        %v2343 = vmul.f32 %v2331, 1.442695
        %v2344 = vpow.pop %v2343
        %v2345 = vmul.f32 %v2332, 1.442695
        %v2346 = vpow.pop %v2345
        %v2347 = vmul.f32 %v2333, 1.442695
        %v2348 = vpow.pop %v2347
        %v2349 = vmul.f32 %v2334, 1.442695
        %v2350 = vpow.pop %v2349
        %v2351 = vsel %vm1536, %v2336, 0.0
        %2352 = vadd.xlane.f32.xlu0 %v2351
        %v2353 = vpop.xlane.xlu0 %2352
        %v2354 = vsel %vm1536, %v2338, 0.0
        %2355 = vadd.xlane.f32.xlu0 %v2354
        %v2356 = vpop.xlane.xlu0 %2355
        %v2357 = vsel %vm1536, %v2340, 0.0
        %2358 = vadd.xlane.f32.xlu0 %v2357
        %v2359 = vpop.xlane.xlu0 %2358
        %v2360 = vsel %vm1536, %v2342, 0.0
        %2361 = vadd.xlane.f32.xlu0 %v2360
        %v2362 = vpop.xlane.xlu0 %2361
        %v2363 = vsel %vm1536, %v2344, 0.0
        %2364 = vadd.xlane.f32.xlu0 %v2363
        %v2365 = vpop.xlane.xlu0 %2364
        %v2366 = vsel %vm1536, %v2346, 0.0
        %2367 = vadd.xlane.f32.xlu0 %v2366
        %v2368 = vpop.xlane.xlu0 %2367
        %v2369 = vsel %vm1536, %v2348, 0.0
        %2370 = vadd.xlane.f32.xlu0 %v2369
        %v2371 = vpop.xlane.xlu0 %2370
        %v2372 = vsel %vm1536, %v2350, 0.0
        %2373 = vadd.xlane.f32.xlu0 %v2372
        %v2374 = vpop.xlane.xlu0 %2373
        %v2375 = vrcp.pop %v2353
        %v2376 = vrcp.pop %v2356
        %v2377 = vrcp.pop %v2359
        %v2378 = vrcp.pop %v2362
        %v2379 = vrcp.pop %v2365
        %v2380 = vrcp.pop %v2368
        %v2381 = vrcp.pop %v2371
        %v2382 = vrcp.pop %v2374
        %v2383 = vpack.c.bf16 %v2338, %v2336
        %v2384 = vpack.c.bf16 %v2342, %v2340
        %v2385 = vpack.c.bf16 %v2346, %v2344
        %v2386 = vpack.c.bf16 %v2350, %v2348
        %2387 = vrot.lane.b32.xlu0 %v1442, 64
        %v2388 = vpop.permute.xlu0 %2387
        %2389 = vrot.lane.b32.xlu0 %v1443, 64
        %v2390 = vpop.permute.xlu0 %2389
        %2391 = vrot.lane.b32.xlu0 %v1444, 64
        %v2392 = vpop.permute.xlu0 %2391
        %2393 = vrot.lane.b32.xlu0 %v1445, 64
        %v2394 = vpop.permute.xlu0 %2393
        %v2400 = vsel %vm1536, %v2383, 0
        %v2403 = vsel %vm1536, %v2384, 0
        %v2406 = vsel %vm1536, %v2385, 0
        %v2409 = vsel %vm1536, %v2386, 0
        %2411 = vmatprep.subr.bf16.mxu0 0
        %2412 = vmatpush1.bf16.msra.mxu0 %v2388
        %2413 = vmatprep.subr.bf16.mxu0 0
        %2414 = vmatpush1.bf16.msra.mxu0 %v2390
        %2415 = vmatprep.subr.bf16.mxu0 0
        %2416 = vmatpush1.bf16.msra.mxu0 %v2392
        %2417 = vmatprep.subr.bf16.mxu0 0
        %2418 = vmatpush1.bf16.msra.mxu0 %v2394
        %2419 = vmatprep.subr.bf16.mxu0 0
        %2420 = vmatpush1.bf16.msra.mxu0 0
        %2421 = vmatprep.subr.bf16.mxu0 0
        %2422 = vmatpush1.bf16.msra.mxu0 0
        %2423 = vmatprep.subr.bf16.mxu0 0
        %2424 = vmatpush1.bf16.msra.mxu0 0
        %2425 = vmatprep.subr.bf16.mxu0 0
        %2426 = vmatpush1.bf16.msra.mxu0 0
        %2427 = vmatprep.subr.bf16.mxu0 0
        %2428 = vmatpush1.bf16.msra.mxu0 0
        %2429 = vmatprep.subr.bf16.mxu0 0
        %2430 = vmatpush1.bf16.msra.mxu0 0
        %2431 = vmatprep.subr.bf16.mxu0 0
        %2432 = vmatpush1.bf16.msra.mxu0 0
        %2433 = vmatprep.subr.bf16.mxu0 0
        %2434 = vmatpush1.bf16.msra.mxu0 0
        %2435 = vmatprep.subr.bf16.mxu0 0
        %2436 = vmatpush1.bf16.msra.mxu0 0
        %2437 = vmatprep.subr.bf16.mxu0 0
        %2438 = vmatpush1.bf16.msra.mxu0 0
        %2439 = vmatprep.subr.bf16.mxu0 0
        %2440 = vmatpush1.bf16.msra.mxu0 0
        %2441 = vmatprep.subr.bf16.mxu0 0
        %2442 = vmatpush1.bf16.msra.mxu0 0
        %2443 = vmatprep.mubr.bf16.mxu0 0
        %2444 = vmatmul.mubr.bf16.gmra.mrb[0].mxu0 %v2400
        %v2445 = vpop.f32.mrb[0].mxu0
        %v2446 = vadd.f32 0.0, %v2445
        %v2447 = vpop.f32.mrb[0].mxu0
        %v2448 = vpop.f32.mrb[0].mxu0
        %v2449 = vadd.f32 0.0, %v2448
        %v2450 = vpop.f32.mrb[0].mxu0
        %2451 = vmatprep.mubr.bf16.mxu0 0
        %2452 = vmatmul.mubr.bf16.gmra.mrb[0].mxu0 %v2403
        %v2453 = vpop.f32.mrb[0].mxu0
        %v2454 = vadd.f32 0.0, %v2453
        %v2455 = vpop.f32.mrb[0].mxu0
        %v2456 = vpop.f32.mrb[0].mxu0
        %v2457 = vadd.f32 0.0, %v2456
        %v2458 = vpop.f32.mrb[0].mxu0
        %2459 = vmatprep.mubr.bf16.mxu0 0
        %2460 = vmatmul.mubr.bf16.gmra.mrb[0].mxu0 %v2406
        %v2461 = vpop.f32.mrb[0].mxu0
        %v2462 = vadd.f32 0.0, %v2461
        %v2463 = vpop.f32.mrb[0].mxu0
        %v2464 = vpop.f32.mrb[0].mxu0
        %v2465 = vadd.f32 0.0, %v2464
        %v2466 = vpop.f32.mrb[0].mxu0
        %2467 = vmatprep.mubr.bf16.mxu0 0
        %2468 = vmatmul.mubr.bf16.gmra.mrb[0].mxu0 %v2409
        %v2469 = vpop.f32.mrb[0].mxu0
        %v2470 = vadd.f32 0.0, %v2469
        %v2471 = vpop.f32.mrb[0].mxu0
        %v2472 = vpop.f32.mrb[0].mxu0
        %v2473 = vadd.f32 0.0, %v2472
        %v2474 = vpop.f32.mrb[0].mxu0
        %2475 = vdwg.mxu0
        %v2476 = vmul.f32 %v2446, %v2375
        %v2477 = vmul.f32 %v2449, %v2376
        %v2478 = vmul.f32 %v2454, %v2377
        %v2479 = vmul.f32 %v2457, %v2378
        %v2480 = vmul.f32 %v2462, %v2379
        %v2481 = vmul.f32 %v2465, %v2380
        %v2482 = vmul.f32 %v2470, %v2381
        %v2483 = vmul.f32 %v2473, %v2382
        %v2484 = vpack.c.bf16 %v2477, %v2476
        %v2485 = vpack.c.bf16 %v2479, %v2478
        %v2486 = vpack.c.bf16 %v2481, %v2480
        %v2487 = vpack.c.bf16 %v2483, %v2482
        %v2488 = vld [vmem:[#allocation9 + $0x20] sm:$0xf]
        %v2489 = vld [vmem:[#allocation9 + $0x24] sm:$0xf]
        %v2490 = vld [vmem:[#allocation9 + $0x28] sm:$0xf]
        %v2491 = vld [vmem:[#allocation9 + $0x2c] sm:$0xf]
        %v2496 = vunpack.c.l.b16 %v2488
        %v2497 = vunpack.c.l.b16 %v2489
        %v2498 = vunpack.c.l.b16 %v2490
        %v2499 = vunpack.c.l.b16 %v2491
        %v2500 = vpack.c.b16 %v2497, %v2496
        %v2501 = vpack.c.b16 %v2499, %v2498
        %v2505 = vsel %vm1446, %v2484, 0
        %v2508 = vsel %vm1446, %v2485, 0
        %v2511 = vsel %vm1446, %v2486, 0
        %v2514 = vsel %vm1446, %v2487, 0
        %2516 = vmatprep.subr.bf16.mxu0 0
        %2517 = vmatpush1.bf16.msra.mxu0 %v2500
        %2518 = vmatprep.subr.bf16.mxu0 0
        %2519 = vmatpush1.bf16.msra.mxu0 %v2501
        %2520 = vmatprep.subr.bf16.mxu0 0
        %2521 = vmatpush1.bf16.msra.mxu0 0
        %2522 = vmatprep.subr.bf16.mxu0 0
        %2523 = vmatpush1.bf16.msra.mxu0 0
        %2524 = vmatprep.subr.bf16.mxu0 0
        %2525 = vmatpush1.bf16.msra.mxu0 0
        %2526 = vmatprep.subr.bf16.mxu0 0
        %2527 = vmatpush1.bf16.msra.mxu0 0
        %2528 = vmatprep.subr.bf16.mxu0 0
        %2529 = vmatpush1.bf16.msra.mxu0 0
        %2530 = vmatprep.subr.bf16.mxu0 0
        %2531 = vmatpush1.bf16.msra.mxu0 0
        %2532 = vmatprep.subr.bf16.mxu0 0
        %2533 = vmatpush1.bf16.msra.mxu0 0
        %2534 = vmatprep.subr.bf16.mxu0 0
        %2535 = vmatpush1.bf16.msra.mxu0 0
        %2536 = vmatprep.subr.bf16.mxu0 0
        %2537 = vmatpush1.bf16.msra.mxu0 0
        %2538 = vmatprep.subr.bf16.mxu0 0
        %2539 = vmatpush1.bf16.msra.mxu0 0
        %2540 = vmatprep.subr.bf16.mxu0 0
        %2541 = vmatpush1.bf16.msra.mxu0 0
        %2542 = vmatprep.subr.bf16.mxu0 0
        %2543 = vmatpush1.bf16.msra.mxu0 0
        %2544 = vmatprep.subr.bf16.mxu0 0
        %2545 = vmatpush1.bf16.msra.mxu0 0
        %2546 = vmatprep.subr.bf16.mxu0 0
        %2547 = vmatpush1.bf16.msra.mxu0 0
        %2548 = vmatprep.mubr.bf16.mxu0 0
        %2549 = vmatmul.mubr.bf16.gmra.mrb[0].mxu0 %v2505
        %v2550 = vpop.f32.mrb[0].mxu0
        %v2551 = vadd.f32 0.0, %v2550
        %v2552 = vpop.f32.mrb[0].mxu0
        %v2553 = vpop.f32.mrb[0].mxu0
        %v2554 = vadd.f32 0.0, %v2553
        %v2555 = vpop.f32.mrb[0].mxu0
        %2556 = vmatprep.mubr.bf16.mxu0 0
        %2557 = vmatmul.mubr.bf16.gmra.mrb[0].mxu0 %v2508
        %v2558 = vpop.f32.mrb[0].mxu0
        %v2559 = vadd.f32 0.0, %v2558
        %v2560 = vpop.f32.mrb[0].mxu0
        %v2561 = vpop.f32.mrb[0].mxu0
        %v2562 = vadd.f32 0.0, %v2561
        %v2563 = vpop.f32.mrb[0].mxu0
        %2564 = vmatprep.mubr.bf16.mxu0 0
        %2565 = vmatmul.mubr.bf16.gmra.mrb[0].mxu0 %v2511
        %v2566 = vpop.f32.mrb[0].mxu0
        %v2567 = vadd.f32 0.0, %v2566
        %v2568 = vpop.f32.mrb[0].mxu0
        %v2569 = vpop.f32.mrb[0].mxu0
        %v2570 = vadd.f32 0.0, %v2569
        %v2571 = vpop.f32.mrb[0].mxu0
        %2572 = vmatprep.mubr.bf16.mxu0 0
        %2573 = vmatmul.mubr.bf16.gmra.mrb[0].mxu0 %v2514
        %v2574 = vpop.f32.mrb[0].mxu0
        %v2575 = vadd.f32 0.0, %v2574
        %v2576 = vpop.f32.mrb[0].mxu0
        %v2577 = vpop.f32.mrb[0].mxu0
        %v2578 = vadd.f32 0.0, %v2577
        %v2579 = vpop.f32.mrb[0].mxu0
        %2580 = vdwg.mxu0
        %v2581 = vadd.f32 %v2168, %v2551
        %v2582 = vadd.f32 %v2171, %v2554
        %v2583 = vadd.f32 %v2176, %v2559
        %v2584 = vadd.f32 %v2179, %v2562
        %v2585 = vadd.f32 %v2184, %v2567
        %v2586 = vadd.f32 %v2187, %v2570
        %v2587 = vadd.f32 %v2192, %v2575
        %v2588 = vadd.f32 %v2195, %v2578
        %2589 = vrot.lane.b32.xlu0 %v1434, 32
        %v2590 = vpop.permute.xlu0 %2589
        %2591 = vrot.lane.b32.xlu0 %v1435, 32
        %v2592 = vpop.permute.xlu0 %2591
        %2593 = vrot.lane.b32.xlu0 %v1436, 32
        %v2594 = vpop.permute.xlu0 %2593
        %2595 = vrot.lane.b32.xlu0 %v1437, 32
        %v2596 = vpop.permute.xlu0 %2595
        %2597 = vrot.lane.b32.xlu0 %v1438, 32
        %v2598 = vpop.permute.xlu0 %2597
        %2599 = vrot.lane.b32.xlu0 %v1439, 32
        %v2600 = vpop.permute.xlu0 %2599
        %2601 = vrot.lane.b32.xlu0 %v1440, 32
        %v2602 = vpop.permute.xlu0 %2601
        %2603 = vrot.lane.b32.xlu0 %v1441, 32
        %v2604 = vpop.permute.xlu0 %2603
        %v2606 = vsel %vm1446, %v2590, 0
        %v2609 = vsel %vm1446, %v2592, 0
        %v2612 = vsel %vm1446, %v2594, 0
        %v2615 = vsel %vm1446, %v2596, 0
        %v2618 = vsel %vm1446, %v2598, 0
        %v2621 = vsel %vm1446, %v2600, 0
        %v2624 = vsel %vm1446, %v2602, 0
        %v2627 = vsel %vm1446, %v2604, 0
        %2629 = vmatprep.subr.bf16.mxu0 0
        %2630 = vmatpush1.bf16.xpose.msra.mxu0 %v2618
        %2631 = vmatprep.subr.bf16.mxu0 0
        %2632 = vmatpush1.bf16.xpose.msra.mxu0 %v2621
        %2633 = vmatprep.subr.bf16.mxu0 0
        %2634 = vmatpush1.bf16.xpose.msra.mxu0 %v2624
        %2635 = vmatprep.subr.bf16.mxu0 0
        %2636 = vmatpush1.bf16.xpose.msra.mxu0 %v2627
        %2637 = vmatprep.subr.bf16.mxu0 0
        %2638 = vmatpush1.bf16.xpose.msra.mxu0 0
        %2639 = vmatprep.subr.bf16.mxu0 0
        %2640 = vmatpush1.bf16.xpose.msra.mxu0 0
        %2641 = vmatprep.subr.bf16.mxu0 0
        %2642 = vmatpush1.bf16.xpose.msra.mxu0 0
        %2643 = vmatprep.subr.bf16.mxu0 0
        %2644 = vmatpush1.bf16.xpose.msra.mxu0 0
        %2645 = vmatprep.subr.bf16.mxu0 0
        %2646 = vmatpush1.bf16.xpose.msra.mxu0 0
        %2647 = vmatprep.subr.bf16.mxu0 0
        %2648 = vmatpush1.bf16.xpose.msra.mxu0 0
        %2649 = vmatprep.subr.bf16.mxu0 0
        %2650 = vmatpush1.bf16.xpose.msra.mxu0 0
        %2651 = vmatprep.subr.bf16.mxu0 0
        %2652 = vmatpush1.bf16.xpose.msra.mxu0 0
        %2653 = vmatprep.subr.bf16.mxu0 0
        %2654 = vmatpush1.bf16.xpose.msra.mxu0 0
        %2655 = vmatprep.subr.bf16.mxu0 0
        %2656 = vmatpush1.bf16.xpose.msra.mxu0 0
        %2657 = vmatprep.subr.bf16.mxu0 0
        %2658 = vmatpush1.bf16.xpose.msra.mxu0 0
        %2659 = vmatprep.subr.bf16.mxu0 0
        %2660 = vmatpush1.bf16.xpose.msra.mxu0 0
        %2661 = vmatprep.mubr.bf16.mxu0 0
        %2662 = vmatmul.mubr.bf16.gmra.mrb[0].mxu0 %v2606
        %v2663 = vpop.f32.mrb[0].mxu0
        %v2664 = vadd.f32 0.0, %v2663
        %v2665 = vpop.f32.mrb[0].mxu0
        %v2666 = vpop.f32.mrb[0].mxu0
        %v2667 = vadd.f32 0.0, %v2666
        %v2668 = vpop.f32.mrb[0].mxu0
        %2669 = vmatprep.mubr.bf16.mxu0 0
        %2670 = vmatmul.mubr.bf16.gmra.mrb[0].mxu0 %v2609
        %v2671 = vpop.f32.mrb[0].mxu0
        %v2672 = vadd.f32 0.0, %v2671
        %v2673 = vpop.f32.mrb[0].mxu0
        %v2674 = vpop.f32.mrb[0].mxu0
        %v2675 = vadd.f32 0.0, %v2674
        %v2676 = vpop.f32.mrb[0].mxu0
        %2677 = vmatprep.mubr.bf16.mxu0 0
        %2678 = vmatmul.mubr.bf16.gmra.mrb[0].mxu0 %v2612
        %v2679 = vpop.f32.mrb[0].mxu0
        %v2680 = vadd.f32 0.0, %v2679
        %v2681 = vpop.f32.mrb[0].mxu0
        %v2682 = vpop.f32.mrb[0].mxu0
        %v2683 = vadd.f32 0.0, %v2682
        %v2684 = vpop.f32.mrb[0].mxu0
        %2685 = vmatprep.mubr.bf16.mxu0 0
        %2686 = vmatmul.mubr.bf16.gmra.mrb[0].mxu0 %v2615
        %v2687 = vpop.f32.mrb[0].mxu0
        %v2688 = vadd.f32 0.0, %v2687
        %v2689 = vpop.f32.mrb[0].mxu0
        %v2690 = vpop.f32.mrb[0].mxu0
        %v2691 = vadd.f32 0.0, %v2690
        %v2692 = vpop.f32.mrb[0].mxu0
        %2693 = vdwg.mxu0
        %v2694 = vsel %vm1536, %v2664, -inf
        %2695 = vmax.xlane.f32.xlu0 %v2694
        %v2696 = vpop.xlane.xlu0 %2695
        %v2697 = vsel %vm1536, %v2667, -inf
        %2698 = vmax.xlane.f32.xlu0 %v2697
        %v2699 = vpop.xlane.xlu0 %2698
        %v2700 = vsel %vm1536, %v2672, -inf
        %2701 = vmax.xlane.f32.xlu0 %v2700
        %v2702 = vpop.xlane.xlu0 %2701
        %v2703 = vsel %vm1536, %v2675, -inf
        %2704 = vmax.xlane.f32.xlu0 %v2703
        %v2705 = vpop.xlane.xlu0 %2704
        %v2706 = vsel %vm1536, %v2680, -inf
        %2707 = vmax.xlane.f32.xlu0 %v2706
        %v2708 = vpop.xlane.xlu0 %2707
        %v2709 = vsel %vm1536, %v2683, -inf
        %2710 = vmax.xlane.f32.xlu0 %v2709
        %v2711 = vpop.xlane.xlu0 %2710
        %v2712 = vsel %vm1536, %v2688, -inf
        %2713 = vmax.xlane.f32.xlu0 %v2712
        %v2714 = vpop.xlane.xlu0 %2713
        %v2715 = vsel %vm1536, %v2691, -inf
        %2716 = vmax.xlane.f32.xlu0 %v2715
        %v2717 = vpop.xlane.xlu0 %2716
        %v2718 = vsub.f32 %v2664, %v2696
        %v2719 = vsub.f32 %v2667, %v2699
        %v2720 = vsub.f32 %v2672, %v2702
        %v2721 = vsub.f32 %v2675, %v2705
        %v2722 = vsub.f32 %v2680, %v2708
        %v2723 = vsub.f32 %v2683, %v2711
        %v2724 = vsub.f32 %v2688, %v2714
        %v2725 = vsub.f32 %v2691, %v2717
        %v2726 = vmul.f32 %v2718, 1.442695
        %v2727 = vpow.pop %v2726
        %v2728 = vmul.f32 %v2719, 1.442695
        %v2729 = vpow.pop %v2728
        %v2730 = vmul.f32 %v2720, 1.442695
        %v2731 = vpow.pop %v2730
        %v2732 = vmul.f32 %v2721, 1.442695
        %v2733 = vpow.pop %v2732
        %v2734 = vmul.f32 %v2722, 1.442695
        %v2735 = vpow.pop %v2734
        %v2736 = vmul.f32 %v2723, 1.442695
        %v2737 = vpow.pop %v2736
        %v2738 = vmul.f32 %v2724, 1.442695
        %v2739 = vpow.pop %v2738
        %v2740 = vmul.f32 %v2725, 1.442695
        %v2741 = vpow.pop %v2740
        %v2742 = vsel %vm1536, %v2727, 0.0
        %2743 = vadd.xlane.f32.xlu0 %v2742
        %v2744 = vpop.xlane.xlu0 %2743
        %v2745 = vsel %vm1536, %v2729, 0.0
        %2746 = vadd.xlane.f32.xlu0 %v2745
        %v2747 = vpop.xlane.xlu0 %2746
        %v2748 = vsel %vm1536, %v2731, 0.0
        %2749 = vadd.xlane.f32.xlu0 %v2748
        %v2750 = vpop.xlane.xlu0 %2749
        %v2751 = vsel %vm1536, %v2733, 0.0
        %2752 = vadd.xlane.f32.xlu0 %v2751
        %v2753 = vpop.xlane.xlu0 %2752
        %v2754 = vsel %vm1536, %v2735, 0.0
        %2755 = vadd.xlane.f32.xlu0 %v2754
        %v2756 = vpop.xlane.xlu0 %2755
        %v2757 = vsel %vm1536, %v2737, 0.0
        %2758 = vadd.xlane.f32.xlu0 %v2757
        %v2759 = vpop.xlane.xlu0 %2758
        %v2760 = vsel %vm1536, %v2739, 0.0
        %2761 = vadd.xlane.f32.xlu0 %v2760
        %v2762 = vpop.xlane.xlu0 %2761
        %v2763 = vsel %vm1536, %v2741, 0.0
        %2764 = vadd.xlane.f32.xlu0 %v2763
        %v2765 = vpop.xlane.xlu0 %2764
        %v2766 = vrcp.pop %v2744
        %v2767 = vrcp.pop %v2747
        %v2768 = vrcp.pop %v2750
        %v2769 = vrcp.pop %v2753
        %v2770 = vrcp.pop %v2756
        %v2771 = vrcp.pop %v2759
        %v2772 = vrcp.pop %v2762
        %v2773 = vrcp.pop %v2765
        %v2774 = vpack.c.bf16 %v2729, %v2727
        %v2775 = vpack.c.bf16 %v2733, %v2731
        %v2776 = vpack.c.bf16 %v2737, %v2735
        %v2777 = vpack.c.bf16 %v2741, %v2739
        %2778 = vrot.lane.b32.xlu0 %v1442, 32
        %v2779 = vpop.permute.xlu0 %2778
        %2780 = vrot.lane.b32.xlu0 %v1443, 32
        %v2781 = vpop.permute.xlu0 %2780
        %2782 = vrot.lane.b32.xlu0 %v1444, 32
        %v2783 = vpop.permute.xlu0 %2782
        %2784 = vrot.lane.b32.xlu0 %v1445, 32
        %v2785 = vpop.permute.xlu0 %2784
        %v2791 = vsel %vm1536, %v2774, 0
        %v2794 = vsel %vm1536, %v2775, 0
        %v2797 = vsel %vm1536, %v2776, 0
        %v2800 = vsel %vm1536, %v2777, 0
        %2802 = vmatprep.subr.bf16.mxu0 0
        %2803 = vmatpush1.bf16.msra.mxu0 %v2779
        %2804 = vmatprep.subr.bf16.mxu0 0
        %2805 = vmatpush1.bf16.msra.mxu0 %v2781
        %2806 = vmatprep.subr.bf16.mxu0 0
        %2807 = vmatpush1.bf16.msra.mxu0 %v2783
        %2808 = vmatprep.subr.bf16.mxu0 0
        %2809 = vmatpush1.bf16.msra.mxu0 %v2785
        %2810 = vmatprep.subr.bf16.mxu0 0
        %2811 = vmatpush1.bf16.msra.mxu0 0
        %2812 = vmatprep.subr.bf16.mxu0 0
        %2813 = vmatpush1.bf16.msra.mxu0 0
        %2814 = vmatprep.subr.bf16.mxu0 0
        %2815 = vmatpush1.bf16.msra.mxu0 0
        %2816 = vmatprep.subr.bf16.mxu0 0
        %2817 = vmatpush1.bf16.msra.mxu0 0
        %2818 = vmatprep.subr.bf16.mxu0 0
        %2819 = vmatpush1.bf16.msra.mxu0 0
        %2820 = vmatprep.subr.bf16.mxu0 0
        %2821 = vmatpush1.bf16.msra.mxu0 0
        %2822 = vmatprep.subr.bf16.mxu0 0
        %2823 = vmatpush1.bf16.msra.mxu0 0
        %2824 = vmatprep.subr.bf16.mxu0 0
        %2825 = vmatpush1.bf16.msra.mxu0 0
        %2826 = vmatprep.subr.bf16.mxu0 0
        %2827 = vmatpush1.bf16.msra.mxu0 0
        %2828 = vmatprep.subr.bf16.mxu0 0
        %2829 = vmatpush1.bf16.msra.mxu0 0
        %2830 = vmatprep.subr.bf16.mxu0 0
        %2831 = vmatpush1.bf16.msra.mxu0 0
        %2832 = vmatprep.subr.bf16.mxu0 0
        %2833 = vmatpush1.bf16.msra.mxu0 0
        %2834 = vmatprep.mubr.bf16.mxu0 0
        %2835 = vmatmul.mubr.bf16.gmra.mrb[0].mxu0 %v2791
        %v2836 = vpop.f32.mrb[0].mxu0
        %v2837 = vadd.f32 0.0, %v2836
        %v2838 = vpop.f32.mrb[0].mxu0
        %v2839 = vpop.f32.mrb[0].mxu0
        %v2840 = vadd.f32 0.0, %v2839
        %v2841 = vpop.f32.mrb[0].mxu0
        %2842 = vmatprep.mubr.bf16.mxu0 0
        %2843 = vmatmul.mubr.bf16.gmra.mrb[0].mxu0 %v2794
        %v2844 = vpop.f32.mrb[0].mxu0
        %v2845 = vadd.f32 0.0, %v2844
        %v2846 = vpop.f32.mrb[0].mxu0
        %v2847 = vpop.f32.mrb[0].mxu0
        %v2848 = vadd.f32 0.0, %v2847
        %v2849 = vpop.f32.mrb[0].mxu0
        %2850 = vmatprep.mubr.bf16.mxu0 0
        %2851 = vmatmul.mubr.bf16.gmra.mrb[0].mxu0 %v2797
        %v2852 = vpop.f32.mrb[0].mxu0
        %v2853 = vadd.f32 0.0, %v2852
        %v2854 = vpop.f32.mrb[0].mxu0
        %v2855 = vpop.f32.mrb[0].mxu0
        %v2856 = vadd.f32 0.0, %v2855
        %v2857 = vpop.f32.mrb[0].mxu0
        %2858 = vmatprep.mubr.bf16.mxu0 0
        %2859 = vmatmul.mubr.bf16.gmra.mrb[0].mxu0 %v2800
        %v2860 = vpop.f32.mrb[0].mxu0
        %v2861 = vadd.f32 0.0, %v2860
        %v2862 = vpop.f32.mrb[0].mxu0
        %v2863 = vpop.f32.mrb[0].mxu0
        %v2864 = vadd.f32 0.0, %v2863
        %v2865 = vpop.f32.mrb[0].mxu0
        %2866 = vdwg.mxu0
        %v2867 = vmul.f32 %v2837, %v2766
        %v2868 = vmul.f32 %v2840, %v2767
        %v2869 = vmul.f32 %v2845, %v2768
        %v2870 = vmul.f32 %v2848, %v2769
        %v2871 = vmul.f32 %v2853, %v2770
        %v2872 = vmul.f32 %v2856, %v2771
        %v2873 = vmul.f32 %v2861, %v2772
        %v2874 = vmul.f32 %v2864, %v2773
        %v2875 = vpack.c.bf16 %v2868, %v2867
        %v2876 = vpack.c.bf16 %v2870, %v2869
        %v2877 = vpack.c.bf16 %v2872, %v2871
        %v2878 = vpack.c.bf16 %v2874, %v2873
        %v2879 = vld [vmem:[#allocation9 + $0x30] sm:$0xf]
        %v2880 = vld [vmem:[#allocation9 + $0x34] sm:$0xf]
        %v2881 = vld [vmem:[#allocation9 + $0x38] sm:$0xf]
        %v2882 = vld [vmem:[#allocation9 + $0x3c] sm:$0xf]
        %v2887 = vunpack.c.l.b16 %v2879
        %v2888 = vunpack.c.l.b16 %v2880
        %v2889 = vunpack.c.l.b16 %v2881
        %v2890 = vunpack.c.l.b16 %v2882
        %v2891 = vpack.c.b16 %v2888, %v2887
        %v2892 = vpack.c.b16 %v2890, %v2889
        %v2896 = vsel %vm1446, %v2875, 0
        %v2899 = vsel %vm1446, %v2876, 0
        %v2902 = vsel %vm1446, %v2877, 0
        %v2905 = vsel %vm1446, %v2878, 0
        %2907 = vmatprep.subr.bf16.mxu0 0
        %2908 = vmatpush1.bf16.msra.mxu0 %v2891
        %2909 = vmatprep.subr.bf16.mxu0 0
        %2910 = vmatpush1.bf16.msra.mxu0 %v2892
        %2911 = vmatprep.subr.bf16.mxu0 0
        %2912 = vmatpush1.bf16.msra.mxu0 0
        %2913 = vmatprep.subr.bf16.mxu0 0
        %2914 = vmatpush1.bf16.msra.mxu0 0
        %2915 = vmatprep.subr.bf16.mxu0 0
        %2916 = vmatpush1.bf16.msra.mxu0 0
        %2917 = vmatprep.subr.bf16.mxu0 0
        %2918 = vmatpush1.bf16.msra.mxu0 0
        %2919 = vmatprep.subr.bf16.mxu0 0
        %2920 = vmatpush1.bf16.msra.mxu0 0
        %2921 = vmatprep.subr.bf16.mxu0 0
        %2922 = vmatpush1.bf16.msra.mxu0 0
        %2923 = vmatprep.subr.bf16.mxu0 0
        %2924 = vmatpush1.bf16.msra.mxu0 0
        %2925 = vmatprep.subr.bf16.mxu0 0
        %2926 = vmatpush1.bf16.msra.mxu0 0
        %2927 = vmatprep.subr.bf16.mxu0 0
        %2928 = vmatpush1.bf16.msra.mxu0 0
        %2929 = vmatprep.subr.bf16.mxu0 0
        %2930 = vmatpush1.bf16.msra.mxu0 0
        %2931 = vmatprep.subr.bf16.mxu0 0
        %2932 = vmatpush1.bf16.msra.mxu0 0
        %2933 = vmatprep.subr.bf16.mxu0 0
        %2934 = vmatpush1.bf16.msra.mxu0 0
        %2935 = vmatprep.subr.bf16.mxu0 0
        %2936 = vmatpush1.bf16.msra.mxu0 0
        %2937 = vmatprep.subr.bf16.mxu0 0
        %2938 = vmatpush1.bf16.msra.mxu0 0
        %2939 = vmatprep.mubr.bf16.mxu0 0
        %2940 = vmatmul.mubr.bf16.gmra.mrb[0].mxu0 %v2896
        %v2941 = vpop.f32.mrb[0].mxu0
        %v2942 = vadd.f32 0.0, %v2941
        %v2943 = vpop.f32.mrb[0].mxu0
        %v2944 = vpop.f32.mrb[0].mxu0
        %v2945 = vadd.f32 0.0, %v2944
        %v2946 = vpop.f32.mrb[0].mxu0
        %2947 = vmatprep.mubr.bf16.mxu0 0
        %2948 = vmatmul.mubr.bf16.gmra.mrb[0].mxu0 %v2899
        %v2949 = vpop.f32.mrb[0].mxu0
        %v2950 = vadd.f32 0.0, %v2949
        %v2951 = vpop.f32.mrb[0].mxu0
        %v2952 = vpop.f32.mrb[0].mxu0
        %v2953 = vadd.f32 0.0, %v2952
        %v2954 = vpop.f32.mrb[0].mxu0
        %2955 = vmatprep.mubr.bf16.mxu0 0
        %2956 = vmatmul.mubr.bf16.gmra.mrb[0].mxu0 %v2902
        %v2957 = vpop.f32.mrb[0].mxu0
        %v2958 = vadd.f32 0.0, %v2957
        %v2959 = vpop.f32.mrb[0].mxu0
        %v2960 = vpop.f32.mrb[0].mxu0
        %v2961 = vadd.f32 0.0, %v2960
        %v2962 = vpop.f32.mrb[0].mxu0
        %2963 = vmatprep.mubr.bf16.mxu0 0
        %2964 = vmatmul.mubr.bf16.gmra.mrb[0].mxu0 %v2905
        %v2965 = vpop.f32.mrb[0].mxu0
        %v2966 = vadd.f32 0.0, %v2965
        %v2967 = vpop.f32.mrb[0].mxu0
        %v2968 = vpop.f32.mrb[0].mxu0
        %v2969 = vadd.f32 0.0, %v2968
        %v2970 = vpop.f32.mrb[0].mxu0
        %2971 = vdwg.mxu0
        %v2972 = vadd.f32 %v2581, %v2942
        %v2973 = vadd.f32 %v2582, %v2945
        %v2974 = vadd.f32 %v2583, %v2950
        %v2975 = vadd.f32 %v2584, %v2953
        %v2976 = vadd.f32 %v2585, %v2958
        %v2977 = vadd.f32 %v2586, %v2961
        %v2978 = vadd.f32 %v2587, %v2966
        %v2979 = vadd.f32 %v2588, %v2969
        %v2980 = vld [vmem:[%s7] sm:$0x1]
        %v2982 = vlaneseq
        %v2983 = vshrl.u32 %v2982, 7
        %v2984 = vsub.s32 0, %v2983
        %v2985 = vrot.slane %v2980, %v2984
        %v2987 = vadd.f32 %v2972, %v2985
        %v2988 = vadd.f32 %v2973, %v2985
        %v2989 = vadd.f32 %v2974, %v2985
        %v2990 = vadd.f32 %v2975, %v2985
        %v2991 = vadd.f32 %v2976, %v2985
        %v2992 = vadd.f32 %v2977, %v2985
        %v2993 = vadd.f32 %v2978, %v2985
        %v2994 = vadd.f32 %v2979, %v2985
        %v2995 = vlaneseq
        %v2996 = vshrl.u32 %v2995, 7
        %v2997 = vsub.s32 0, %v2996
        %v2998 = vrot.slane %v954, %v2997
        %v2999 = vmul.f32 %v2998, %v2987
        %v3000 = vmul.f32 %v2998, %v2988
        %v3001 = vmul.f32 %v2998, %v2989
        %v3002 = vmul.f32 %v2998, %v2990
        %v3003 = vmul.f32 %v2998, %v2991
        %v3004 = vmul.f32 %v2998, %v2992
        %v3005 = vmul.f32 %v2998, %v2993
        %v3006 = vmul.f32 %v2998, %v2994
        %v3007 = vadd.f32 %v541, %v2999
        %v3008 = vadd.f32 %v542, %v3000
        %v3009 = vadd.f32 %v543, %v3001
        %v3010 = vadd.f32 %v544, %v3002
        %v3011 = vadd.f32 %v545, %v3003
        %v3012 = vadd.f32 %v546, %v3004
        %v3013 = vadd.f32 %v547, %v3005
        %v3014 = vadd.f32 %v548, %v3006
        %3015 = vadd.xlane.f32.xlu0 %v3007
        %v3016 = vpop.xlane.xlu0 %3015
        %3017 = vadd.xlane.f32.xlu0 %v3008
        %v3018 = vpop.xlane.xlu0 %3017
        %3019 = vadd.xlane.f32.xlu0 %v3009
        %v3020 = vpop.xlane.xlu0 %3019
        %3021 = vadd.xlane.f32.xlu0 %v3010
        %v3022 = vpop.xlane.xlu0 %3021
        %3023 = vadd.xlane.f32.xlu0 %v3011
        %v3024 = vpop.xlane.xlu0 %3023
        %3025 = vadd.xlane.f32.xlu0 %v3012
        %v3026 = vpop.xlane.xlu0 %3025
        %3027 = vadd.xlane.f32.xlu0 %v3013
        %v3028 = vpop.xlane.xlu0 %3027
        %3029 = vadd.xlane.f32.xlu0 %v3014
        %v3030 = vpop.xlane.xlu0 %3029
        %v3031 = vmul.f32 %v3016, %v1017
        %v3032 = vmul.f32 %v3018, %v1017
        %v3033 = vmul.f32 %v3020, %v1017
        %v3034 = vmul.f32 %v3022, %v1017
        %v3035 = vmul.f32 %v3024, %v1017
        %v3036 = vmul.f32 %v3026, %v1017
        %v3037 = vmul.f32 %v3028, %v1017
        %v3038 = vmul.f32 %v3030, %v1017
        %v3039 = vsub.f32 %v3007, %v3031
        %v3040 = vsub.f32 %v3008, %v3032
        %v3041 = vsub.f32 %v3009, %v3033
        %v3042 = vsub.f32 %v3010, %v3034
        %v3043 = vsub.f32 %v3011, %v3035
        %v3044 = vsub.f32 %v3012, %v3036
        %v3045 = vsub.f32 %v3013, %v3037
        %v3046 = vsub.f32 %v3014, %v3038
        %v3047 = vmul.f32 %v3039, %v3039
        %v3048 = vmul.f32 %v3040, %v3040
        %v3049 = vmul.f32 %v3041, %v3041
        %v3050 = vmul.f32 %v3042, %v3042
        %v3051 = vmul.f32 %v3043, %v3043
        %v3052 = vmul.f32 %v3044, %v3044
        %v3053 = vmul.f32 %v3045, %v3045
        %v3054 = vmul.f32 %v3046, %v3046
        %3055 = vadd.xlane.f32.xlu0 %v3047
        %v3056 = vpop.xlane.xlu0 %3055
        %3057 = vadd.xlane.f32.xlu0 %v3048
        %v3058 = vpop.xlane.xlu0 %3057
        %3059 = vadd.xlane.f32.xlu0 %v3049
        %v3060 = vpop.xlane.xlu0 %3059
        %3061 = vadd.xlane.f32.xlu0 %v3050
        %v3062 = vpop.xlane.xlu0 %3061
        %3063 = vadd.xlane.f32.xlu0 %v3051
        %v3064 = vpop.xlane.xlu0 %3063
        %3065 = vadd.xlane.f32.xlu0 %v3052
        %v3066 = vpop.xlane.xlu0 %3065
        %3067 = vadd.xlane.f32.xlu0 %v3053
        %v3068 = vpop.xlane.xlu0 %3067
        %3069 = vadd.xlane.f32.xlu0 %v3054
        %v3070 = vpop.xlane.xlu0 %3069
        %v3071 = vmul.f32 %v3056, %v1017
        %v3072 = vmul.f32 %v3058, %v1017
        %v3073 = vmul.f32 %v3060, %v1017
        %v3074 = vmul.f32 %v3062, %v1017
        %v3075 = vmul.f32 %v3064, %v1017
        %v3076 = vmul.f32 %v3066, %v1017
        %v3077 = vmul.f32 %v3068, %v1017
        %v3078 = vmul.f32 %v3070, %v1017
        %v3079 = vadd.f32 %v3071, 1e-06
        %v3080 = vadd.f32 %v3072, 1e-06
        %v3081 = vadd.f32 %v3073, 1e-06
        %v3082 = vadd.f32 %v3074, 1e-06
        %v3083 = vadd.f32 %v3075, 1e-06
        %v3084 = vadd.f32 %v3076, 1e-06
        %v3085 = vadd.f32 %v3077, 1e-06
        %v3086 = vadd.f32 %v3078, 1e-06
        %v3087 = vrsqrt.pop %v3079
        %v3088 = vrsqrt.pop %v3080
        %v3089 = vrsqrt.pop %v3081
        %v3090 = vrsqrt.pop %v3082
        %v3091 = vrsqrt.pop %v3083
        %v3092 = vrsqrt.pop %v3084
        %v3093 = vrsqrt.pop %v3085
        %v3094 = vrsqrt.pop %v3086
        %v3095 = vmul.f32 %v3039, %v3087
        %v3096 = vmul.f32 %v3040, %v3088
        %v3097 = vmul.f32 %v3041, %v3089
        %v3098 = vmul.f32 %v3042, %v3090
        %v3099 = vmul.f32 %v3043, %v3091
        %v3100 = vmul.f32 %v3044, %v3092
        %v3101 = vmul.f32 %v3045, %v3093
        %v3102 = vmul.f32 %v3046, %v3094
        %v3103 = vadd.f32 %v995, 1.0
        %v3104 = vlaneseq
        %v3105 = vshrl.u32 %v3104, 7
        %v3106 = vsub.s32 0, %v3105
        %v3107 = vrot.slane %v3103, %v3106
        %v3108 = vmul.f32 %v3095, %v3107
        %v3109 = vmul.f32 %v3096, %v3107
        %v3110 = vmul.f32 %v3097, %v3107
        %v3111 = vmul.f32 %v3098, %v3107
        %v3112 = vmul.f32 %v3099, %v3107
        %v3113 = vmul.f32 %v3100, %v3107
        %v3114 = vmul.f32 %v3101, %v3107
        %v3115 = vmul.f32 %v3102, %v3107
        %v3116 = vlaneseq
        %v3117 = vshrl.u32 %v3116, 7
        %v3118 = vsub.s32 0, %v3117
        %v3119 = vrot.slane %v956, %v3118
        %v3120 = vadd.f32 %v3108, %v3119
        %v3121 = vadd.f32 %v3109, %v3119
        %v3122 = vadd.f32 %v3110, %v3119
        %v3123 = vadd.f32 %v3111, %v3119
        %v3124 = vadd.f32 %v3112, %v3119
        %v3125 = vadd.f32 %v3113, %v3119
        %v3126 = vadd.f32 %v3114, %v3119
        %v3127 = vadd.f32 %v3115, %v3119
        %v3128 = vpack.c.bf16 %v3121, %v3120
        %v3129 = vpack.c.bf16 %v3123, %v3122
        %v3130 = vpack.c.bf16 %v3125, %v3124
        %v3131 = vpack.c.bf16 %v3127, %v3126
        %v3132 = vld [vmem:[#allocation10] sm:$0xff]
        %v3133 = vld [vmem:[#allocation10 + $0x8] sm:$0xff]
        %v3134 = vld [vmem:[#allocation10 + $0x10] sm:$0xff]
        %v3135 = vld [vmem:[#allocation10 + $0x18] sm:$0xff]
        %v3136 = vld [vmem:[#allocation10 + $0x20] sm:$0xff]
        %v3137 = vld [vmem:[#allocation10 + $0x28] sm:$0xff]
        %v3138 = vld [vmem:[#allocation10 + $0x30] sm:$0xff]
        %v3139 = vld [vmem:[#allocation10 + $0x38] sm:$0xff]
        %v3140 = vld [vmem:[#allocation10 + $0x40] sm:$0xff]
        %v3141 = vld [vmem:[#allocation10 + $0x48] sm:$0xff]
        %v3142 = vld [vmem:[#allocation10 + $0x50] sm:$0xff]
        %v3143 = vld [vmem:[#allocation10 + $0x58] sm:$0xff]
        %v3144 = vld [vmem:[#allocation10 + $0x60] sm:$0xff]
        %v3145 = vld [vmem:[#allocation10 + $0x68] sm:$0xff]
        %v3146 = vld [vmem:[#allocation10 + $0x70] sm:$0xff]
        %v3147 = vld [vmem:[#allocation10 + $0x78] sm:$0xff]
        %v3148 = vld [vmem:[#allocation10 + $0x80] sm:$0xff]
        %v3149 = vld [vmem:[#allocation10 + $0x88] sm:$0xff]
        %v3150 = vld [vmem:[#allocation10 + $0x90] sm:$0xff]
        %v3151 = vld [vmem:[#allocation10 + $0x98] sm:$0xff]
        %v3152 = vld [vmem:[#allocation10 + $0xa0] sm:$0xff]
        %v3153 = vld [vmem:[#allocation10 + $0xa8] sm:$0xff]
        %v3154 = vld [vmem:[#allocation10 + $0xb0] sm:$0xff]
        %v3155 = vld [vmem:[#allocation10 + $0xb8] sm:$0xff]
        %v3156 = vld [vmem:[#allocation10 + $0xc0] sm:$0xff]
        %v3157 = vld [vmem:[#allocation10 + $0xc8] sm:$0xff]
        %v3158 = vld [vmem:[#allocation10 + $0xd0] sm:$0xff]
        %v3159 = vld [vmem:[#allocation10 + $0xd8] sm:$0xff]
        %v3160 = vld [vmem:[#allocation10 + $0xe0] sm:$0xff]
        %v3161 = vld [vmem:[#allocation10 + $0xe8] sm:$0xff]
        %v3162 = vld [vmem:[#allocation10 + $0xf0] sm:$0xff]
        %v3163 = vld [vmem:[#allocation10 + $0xf8] sm:$0xff]
        %v3164 = vld [vmem:[%s9] sm:$0xf]
        %v3166 = vlaneseq
        %v3167 = vshrl.u32 %v3166, 7
        %v3168 = vsub.s32 0, %v3167
        %v3169 = vrot.slane %v3164, %v3168
        %v3170 = vlaneseq
        %v3171 = vshrl.u32 %v3170, 7
        %v3172 = vsub.s32 1, %v3171
        %v3173 = vrot.slane %v3164, %v3172
        %v3174 = vlaneseq
        %v3175 = vshrl.u32 %v3174, 7
        %v3176 = vsub.s32 2, %v3175
        %v3177 = vrot.slane %v3164, %v3176
        %v3178 = vlaneseq
        %v3179 = vshrl.u32 %v3178, 7
        %v3180 = vsub.s32 3, %v3179
        %v3181 = vrot.slane %v3164, %v3180
        %v3218 = vunpack.c.l.b16 %v3132
        %v3219 = vunpack.c.h.b16 %v3132
        %v3220 = vunpack.c.l.b16 %v3133
        %v3221 = vunpack.c.h.b16 %v3133
        %v3222 = vunpack.c.l.b16 %v3134
        %v3223 = vunpack.c.h.b16 %v3134
        %v3224 = vunpack.c.l.b16 %v3135
        %v3225 = vunpack.c.h.b16 %v3135
        %v3226 = vunpack.c.l.b16 %v3136
        %v3227 = vunpack.c.h.b16 %v3136
        %v3228 = vunpack.c.l.b16 %v3137
        %v3229 = vunpack.c.h.b16 %v3137
        %v3230 = vunpack.c.l.b16 %v3138
        %v3231 = vunpack.c.h.b16 %v3138
        %v3232 = vunpack.c.l.b16 %v3139
        %v3233 = vunpack.c.h.b16 %v3139
        %v3234 = vunpack.c.l.b16 %v3140
        %v3235 = vunpack.c.h.b16 %v3140
        %v3236 = vunpack.c.l.b16 %v3141
        %v3237 = vunpack.c.h.b16 %v3141
        %v3238 = vunpack.c.l.b16 %v3142
        %v3239 = vunpack.c.h.b16 %v3142
        %v3240 = vunpack.c.l.b16 %v3143
        %v3241 = vunpack.c.h.b16 %v3143
        %v3242 = vunpack.c.l.b16 %v3144
        %v3243 = vunpack.c.h.b16 %v3144
        %v3244 = vunpack.c.l.b16 %v3145
        %v3245 = vunpack.c.h.b16 %v3145
        %v3246 = vunpack.c.l.b16 %v3146
        %v3247 = vunpack.c.h.b16 %v3146
        %v3248 = vunpack.c.l.b16 %v3147
        %v3249 = vunpack.c.h.b16 %v3147
        %v3250 = vunpack.c.l.b16 %v3148
        %v3251 = vunpack.c.h.b16 %v3148
        %v3252 = vunpack.c.l.b16 %v3149
        %v3253 = vunpack.c.h.b16 %v3149
        %v3254 = vunpack.c.l.b16 %v3150
        %v3255 = vunpack.c.h.b16 %v3150
        %v3256 = vunpack.c.l.b16 %v3151
        %v3257 = vunpack.c.h.b16 %v3151
        %v3258 = vunpack.c.l.b16 %v3152
        %v3259 = vunpack.c.h.b16 %v3152
        %v3260 = vunpack.c.l.b16 %v3153
        %v3261 = vunpack.c.h.b16 %v3153
        %v3262 = vunpack.c.l.b16 %v3154
        %v3263 = vunpack.c.h.b16 %v3154
        %v3264 = vunpack.c.l.b16 %v3155
        %v3265 = vunpack.c.h.b16 %v3155
        %v3266 = vunpack.c.l.b16 %v3156
        %v3267 = vunpack.c.h.b16 %v3156
        %v3268 = vunpack.c.l.b16 %v3157
        %v3269 = vunpack.c.h.b16 %v3157
        %v3270 = vunpack.c.l.b16 %v3158
        %v3271 = vunpack.c.h.b16 %v3158
        %v3272 = vunpack.c.l.b16 %v3159
        %v3273 = vunpack.c.h.b16 %v3159
        %v3274 = vunpack.c.l.b16 %v3160
        %v3275 = vunpack.c.h.b16 %v3160
        %v3276 = vunpack.c.l.b16 %v3161
        %v3277 = vunpack.c.h.b16 %v3161
        %v3278 = vunpack.c.l.b16 %v3162
        %v3279 = vunpack.c.h.b16 %v3162
        %v3280 = vunpack.c.l.b16 %v3163
        %v3281 = vunpack.c.h.b16 %v3163
        %v3282 = vpack.c.b16 %v3222, %v3218
        %v3283 = vpack.c.b16 %v3223, %v3219
        %v3284 = vpack.c.b16 %v3224, %v3220
        %v3285 = vpack.c.b16 %v3225, %v3221
        %v3286 = vpack.c.b16 %v3230, %v3226
        %v3287 = vpack.c.b16 %v3231, %v3227
        %v3288 = vpack.c.b16 %v3232, %v3228
        %v3289 = vpack.c.b16 %v3233, %v3229
        %v3290 = vpack.c.b16 %v3238, %v3234
        %v3291 = vpack.c.b16 %v3239, %v3235
        %v3292 = vpack.c.b16 %v3240, %v3236
        %v3293 = vpack.c.b16 %v3241, %v3237
        %v3294 = vpack.c.b16 %v3246, %v3242
        %v3295 = vpack.c.b16 %v3247, %v3243
        %v3296 = vpack.c.b16 %v3248, %v3244
        %v3297 = vpack.c.b16 %v3249, %v3245
        %v3298 = vpack.c.b16 %v3254, %v3250
        %v3299 = vpack.c.b16 %v3255, %v3251
        %v3300 = vpack.c.b16 %v3256, %v3252
        %v3301 = vpack.c.b16 %v3257, %v3253
        %v3302 = vpack.c.b16 %v3262, %v3258
        %v3303 = vpack.c.b16 %v3263, %v3259
        %v3304 = vpack.c.b16 %v3264, %v3260
        %v3305 = vpack.c.b16 %v3265, %v3261
        %v3306 = vpack.c.b16 %v3270, %v3266
        %v3307 = vpack.c.b16 %v3271, %v3267
        %v3308 = vpack.c.b16 %v3272, %v3268
        %v3309 = vpack.c.b16 %v3273, %v3269
        %v3310 = vpack.c.b16 %v3278, %v3274
        %v3311 = vpack.c.b16 %v3279, %v3275
        %v3312 = vpack.c.b16 %v3280, %v3276
        %v3313 = vpack.c.b16 %v3281, %v3277
        %3346 = vmatprep.subr.bf16.mxu0 %v3283
        %3347 = vmatpush1.bf16.msra.mxu0 %v3282
        %3348 = vmatprep.subr.bf16.mxu0 %v3287
        %3349 = vmatpush1.bf16.msra.mxu0 %v3286
        %3350 = vmatprep.subr.bf16.mxu0 %v3291
        %3351 = vmatpush1.bf16.msra.mxu0 %v3290
        %3352 = vmatprep.subr.bf16.mxu0 %v3295
        %3353 = vmatpush1.bf16.msra.mxu0 %v3294
        %3354 = vmatprep.subr.bf16.mxu0 %v3299
        %3355 = vmatpush1.bf16.msra.mxu0 %v3298
        %3356 = vmatprep.subr.bf16.mxu0 %v3303
        %3357 = vmatpush1.bf16.msra.mxu0 %v3302
        %3358 = vmatprep.subr.bf16.mxu0 %v3307
        %3359 = vmatpush1.bf16.msra.mxu0 %v3306
        %3360 = vmatprep.subr.bf16.mxu0 %v3311
        %3361 = vmatpush1.bf16.msra.mxu0 %v3310
        %3362 = vmatprep.subr.bf16.mxu0 0
        %3363 = vmatpush1.bf16.msra.mxu0 0
        %3364 = vmatprep.subr.bf16.mxu0 0
        %3365 = vmatpush1.bf16.msra.mxu0 0
        %3366 = vmatprep.subr.bf16.mxu0 0
        %3367 = vmatpush1.bf16.msra.mxu0 0
        %3368 = vmatprep.subr.bf16.mxu0 0
        %3369 = vmatpush1.bf16.msra.mxu0 0
        %3370 = vmatprep.subr.bf16.mxu0 0
        %3371 = vmatpush1.bf16.msra.mxu0 0
        %3372 = vmatprep.subr.bf16.mxu0 0
        %3373 = vmatpush1.bf16.msra.mxu0 0
        %3374 = vmatprep.subr.bf16.mxu0 0
        %3375 = vmatpush1.bf16.msra.mxu0 0
        %3376 = vmatprep.subr.bf16.mxu0 0
        %3377 = vmatpush1.bf16.msra.mxu0 0
        %3378 = vmatprep.mubr.bf16.mxu0 0
        %3379 = vmatmul.mubr.bf16.gmra.mrb[0].mxu0 %v3128
        %v3380 = vpop.f32.mrb[0].mxu0
        %v3381 = vadd.f32 %v3169, %v3380
        %v3382 = vpop.f32.mrb[0].mxu0
        %v3383 = vadd.f32 %v3173, %v3382
        %v3384 = vpop.f32.mrb[0].mxu0
        %v3385 = vadd.f32 %v3169, %v3384
        %v3386 = vpop.f32.mrb[0].mxu0
        %v3387 = vadd.f32 %v3173, %v3386
        %3388 = vmatprep.mubr.bf16.mxu0 0
        %3389 = vmatmul.mubr.bf16.gmra.mrb[0].mxu0 %v3129
        %v3390 = vpop.f32.mrb[0].mxu0
        %v3391 = vadd.f32 %v3169, %v3390
        %v3392 = vpop.f32.mrb[0].mxu0
        %v3393 = vadd.f32 %v3173, %v3392
        %v3394 = vpop.f32.mrb[0].mxu0
        %v3395 = vadd.f32 %v3169, %v3394
        %v3396 = vpop.f32.mrb[0].mxu0
        %v3397 = vadd.f32 %v3173, %v3396
        %3398 = vmatprep.mubr.bf16.mxu0 0
        %3399 = vmatmul.mubr.bf16.gmra.mrb[0].mxu0 %v3130
        %v3400 = vpop.f32.mrb[0].mxu0
        %v3401 = vadd.f32 %v3169, %v3400
        %v3402 = vpop.f32.mrb[0].mxu0
        %v3403 = vadd.f32 %v3173, %v3402
        %v3404 = vpop.f32.mrb[0].mxu0
        %v3405 = vadd.f32 %v3169, %v3404
        %v3406 = vpop.f32.mrb[0].mxu0
        %v3407 = vadd.f32 %v3173, %v3406
        %3408 = vmatprep.mubr.bf16.mxu0 0
        %3409 = vmatmul.mubr.bf16.gmra.mrb[0].mxu0 %v3131
        %v3410 = vpop.f32.mrb[0].mxu0
        %v3411 = vadd.f32 %v3169, %v3410
        %v3412 = vpop.f32.mrb[0].mxu0
        %v3413 = vadd.f32 %v3173, %v3412
        %v3414 = vpop.f32.mrb[0].mxu0
        %v3415 = vadd.f32 %v3169, %v3414
        %v3416 = vpop.f32.mrb[0].mxu0
        %v3417 = vadd.f32 %v3173, %v3416
        %3418 = vdwg.mxu0
        %3419 = vmatprep.subr.bf16.mxu0 %v3285
        %3420 = vmatpush1.bf16.msra.mxu0 %v3284
        %3421 = vmatprep.subr.bf16.mxu0 %v3289
        %3422 = vmatpush1.bf16.msra.mxu0 %v3288
        %3423 = vmatprep.subr.bf16.mxu0 %v3293
        %3424 = vmatpush1.bf16.msra.mxu0 %v3292
        %3425 = vmatprep.subr.bf16.mxu0 %v3297
        %3426 = vmatpush1.bf16.msra.mxu0 %v3296
        %3427 = vmatprep.subr.bf16.mxu0 %v3301
        %3428 = vmatpush1.bf16.msra.mxu0 %v3300
        %3429 = vmatprep.subr.bf16.mxu0 %v3305
        %3430 = vmatpush1.bf16.msra.mxu0 %v3304
        %3431 = vmatprep.subr.bf16.mxu0 %v3309
        %3432 = vmatpush1.bf16.msra.mxu0 %v3308
        %3433 = vmatprep.subr.bf16.mxu0 %v3313
        %3434 = vmatpush1.bf16.msra.mxu0 %v3312
        %3435 = vmatprep.subr.bf16.mxu0 0
        %3436 = vmatpush1.bf16.msra.mxu0 0
        %3437 = vmatprep.subr.bf16.mxu0 0
        %3438 = vmatpush1.bf16.msra.mxu0 0
        %3439 = vmatprep.subr.bf16.mxu0 0
        %3440 = vmatpush1.bf16.msra.mxu0 0
        %3441 = vmatprep.subr.bf16.mxu0 0
        %3442 = vmatpush1.bf16.msra.mxu0 0
        %3443 = vmatprep.subr.bf16.mxu0 0
        %3444 = vmatpush1.bf16.msra.mxu0 0
        %3445 = vmatprep.subr.bf16.mxu0 0
        %3446 = vmatpush1.bf16.msra.mxu0 0
        %3447 = vmatprep.subr.bf16.mxu0 0
        %3448 = vmatpush1.bf16.msra.mxu0 0
        %3449 = vmatprep.subr.bf16.mxu0 0
        %3450 = vmatpush1.bf16.msra.mxu0 0
        %3451 = vmatprep.mubr.bf16.mxu0 0
        %3452 = vmatmul.mubr.bf16.gmra.mrb[0].mxu0 %v3128
        %v3453 = vpop.f32.mrb[0].mxu0
        %v3454 = vadd.f32 %v3177, %v3453
        %v3455 = vpop.f32.mrb[0].mxu0
        %v3456 = vadd.f32 %v3181, %v3455
        %v3457 = vpop.f32.mrb[0].mxu0
        %v3458 = vadd.f32 %v3177, %v3457
        %v3459 = vpop.f32.mrb[0].mxu0
        %v3460 = vadd.f32 %v3181, %v3459
        %3461 = vmatprep.mubr.bf16.mxu0 0
        %3462 = vmatmul.mubr.bf16.gmra.mrb[0].mxu0 %v3129
        %v3463 = vpop.f32.mrb[0].mxu0
        %v3464 = vadd.f32 %v3177, %v3463
        %v3465 = vpop.f32.mrb[0].mxu0
        %v3466 = vadd.f32 %v3181, %v3465
        %v3467 = vpop.f32.mrb[0].mxu0
        %v3468 = vadd.f32 %v3177, %v3467
        %v3469 = vpop.f32.mrb[0].mxu0
        %v3470 = vadd.f32 %v3181, %v3469
        %3471 = vmatprep.mubr.bf16.mxu0 0
        %3472 = vmatmul.mubr.bf16.gmra.mrb[0].mxu0 %v3130
        %v3473 = vpop.f32.mrb[0].mxu0
        %v3474 = vadd.f32 %v3177, %v3473
        %v3475 = vpop.f32.mrb[0].mxu0
        %v3476 = vadd.f32 %v3181, %v3475
        %v3477 = vpop.f32.mrb[0].mxu0
        %v3478 = vadd.f32 %v3177, %v3477
        %v3479 = vpop.f32.mrb[0].mxu0
        %v3480 = vadd.f32 %v3181, %v3479
        %3481 = vmatprep.mubr.bf16.mxu0 0
        %3482 = vmatmul.mubr.bf16.gmra.mrb[0].mxu0 %v3131
        %v3483 = vpop.f32.mrb[0].mxu0
        %v3484 = vadd.f32 %v3177, %v3483
        %v3485 = vpop.f32.mrb[0].mxu0
        %v3486 = vadd.f32 %v3181, %v3485
        %v3487 = vpop.f32.mrb[0].mxu0
        %v3488 = vadd.f32 %v3177, %v3487
        %v3489 = vpop.f32.mrb[0].mxu0
        %v3490 = vadd.f32 %v3181, %v3489
        %3491 = vdwg.mxu0
        %v3492 = vmul.f32 %v3381, %v3381
        %v3493 = vmul.f32 %v3383, %v3383
        %v3494 = vmul.f32 %v3454, %v3454
        %v3495 = vmul.f32 %v3456, %v3456
        %v3496 = vmul.f32 %v3385, %v3385
        %v3497 = vmul.f32 %v3387, %v3387
        %v3498 = vmul.f32 %v3458, %v3458
        %v3499 = vmul.f32 %v3460, %v3460
        %v3500 = vmul.f32 %v3391, %v3391
        %v3501 = vmul.f32 %v3393, %v3393
        %v3502 = vmul.f32 %v3464, %v3464
        %v3503 = vmul.f32 %v3466, %v3466
        %v3504 = vmul.f32 %v3395, %v3395
        %v3505 = vmul.f32 %v3397, %v3397
        %v3506 = vmul.f32 %v3468, %v3468
        %v3507 = vmul.f32 %v3470, %v3470
        %v3508 = vmul.f32 %v3401, %v3401
        %v3509 = vmul.f32 %v3403, %v3403
        %v3510 = vmul.f32 %v3474, %v3474
        %v3511 = vmul.f32 %v3476, %v3476
        %v3512 = vmul.f32 %v3405, %v3405
        %v3513 = vmul.f32 %v3407, %v3407
        %v3514 = vmul.f32 %v3478, %v3478
        %v3515 = vmul.f32 %v3480, %v3480
        %v3516 = vmul.f32 %v3411, %v3411
        %v3517 = vmul.f32 %v3413, %v3413
        %v3518 = vmul.f32 %v3484, %v3484
        %v3519 = vmul.f32 %v3486, %v3486
        %v3520 = vmul.f32 %v3415, %v3415
        %v3521 = vmul.f32 %v3417, %v3417
        %v3522 = vmul.f32 %v3488, %v3488
        %v3523 = vmul.f32 %v3490, %v3490
        %v3524 = vmul.f32 %v3381, 0.5
        %v3525 = vmul.f32 %v3383, 0.5
        %v3526 = vmul.f32 %v3454, 0.5
        %v3527 = vmul.f32 %v3456, 0.5
        %v3528 = vmul.f32 %v3385, 0.5
        %v3529 = vmul.f32 %v3387, 0.5
        %v3530 = vmul.f32 %v3458, 0.5
        %v3531 = vmul.f32 %v3460, 0.5
        %v3532 = vmul.f32 %v3391, 0.5
        %v3533 = vmul.f32 %v3393, 0.5
        %v3534 = vmul.f32 %v3464, 0.5
        %v3535 = vmul.f32 %v3466, 0.5
        %v3536 = vmul.f32 %v3395, 0.5
        %v3537 = vmul.f32 %v3397, 0.5
        %v3538 = vmul.f32 %v3468, 0.5
        %v3539 = vmul.f32 %v3470, 0.5
        %v3540 = vmul.f32 %v3401, 0.5
        %v3541 = vmul.f32 %v3403, 0.5
        %v3542 = vmul.f32 %v3474, 0.5
        %v3543 = vmul.f32 %v3476, 0.5
        %v3544 = vmul.f32 %v3405, 0.5
        %v3545 = vmul.f32 %v3407, 0.5
        %v3546 = vmul.f32 %v3478, 0.5
        %v3547 = vmul.f32 %v3480, 0.5
        %v3548 = vmul.f32 %v3411, 0.5
        %v3549 = vmul.f32 %v3413, 0.5
        %v3550 = vmul.f32 %v3484, 0.5
        %v3551 = vmul.f32 %v3486, 0.5
        %v3552 = vmul.f32 %v3415, 0.5
        %v3553 = vmul.f32 %v3417, 0.5
        %v3554 = vmul.f32 %v3488, 0.5
        %v3555 = vmul.f32 %v3490, 0.5
        %v3556 = vmul.f32 %v3381, 0.044715
        %v3557 = vmul.f32 %v3383, 0.044715
        %v3558 = vmul.f32 %v3454, 0.044715
        %v3559 = vmul.f32 %v3456, 0.044715
        %v3560 = vmul.f32 %v3385, 0.044715
        %v3561 = vmul.f32 %v3387, 0.044715
        %v3562 = vmul.f32 %v3458, 0.044715
        %v3563 = vmul.f32 %v3460, 0.044715
        %v3564 = vmul.f32 %v3391, 0.044715
        %v3565 = vmul.f32 %v3393, 0.044715
        %v3566 = vmul.f32 %v3464, 0.044715
        %v3567 = vmul.f32 %v3466, 0.044715
        %v3568 = vmul.f32 %v3395, 0.044715
        %v3569 = vmul.f32 %v3397, 0.044715
        %v3570 = vmul.f32 %v3468, 0.044715
        %v3571 = vmul.f32 %v3470, 0.044715
        %v3572 = vmul.f32 %v3401, 0.044715
        %v3573 = vmul.f32 %v3403, 0.044715
        %v3574 = vmul.f32 %v3474, 0.044715
        %v3575 = vmul.f32 %v3476, 0.044715
        %v3576 = vmul.f32 %v3405, 0.044715
        %v3577 = vmul.f32 %v3407, 0.044715
        %v3578 = vmul.f32 %v3478, 0.044715
        %v3579 = vmul.f32 %v3480, 0.044715
        %v3580 = vmul.f32 %v3411, 0.044715
        %v3581 = vmul.f32 %v3413, 0.044715
        %v3582 = vmul.f32 %v3484, 0.044715
        %v3583 = vmul.f32 %v3486, 0.044715
        %v3584 = vmul.f32 %v3415, 0.044715
        %v3585 = vmul.f32 %v3417, 0.044715
        %v3586 = vmul.f32 %v3488, 0.044715
        %v3587 = vmul.f32 %v3490, 0.044715
        %v3588 = vmul.f32 %v3556, %v3492
        %v3589 = vmul.f32 %v3557, %v3493
        %v3590 = vmul.f32 %v3558, %v3494
        %v3591 = vmul.f32 %v3559, %v3495
        %v3592 = vmul.f32 %v3560, %v3496
        %v3593 = vmul.f32 %v3561, %v3497
        %v3594 = vmul.f32 %v3562, %v3498
        %v3595 = vmul.f32 %v3563, %v3499
        %v3596 = vmul.f32 %v3564, %v3500
        %v3597 = vmul.f32 %v3565, %v3501
        %v3598 = vmul.f32 %v3566, %v3502
        %v3599 = vmul.f32 %v3567, %v3503
        %v3600 = vmul.f32 %v3568, %v3504
        %v3601 = vmul.f32 %v3569, %v3505
        %v3602 = vmul.f32 %v3570, %v3506
        %v3603 = vmul.f32 %v3571, %v3507
        %v3604 = vmul.f32 %v3572, %v3508
        %v3605 = vmul.f32 %v3573, %v3509
        %v3606 = vmul.f32 %v3574, %v3510
        %v3607 = vmul.f32 %v3575, %v3511
        %v3608 = vmul.f32 %v3576, %v3512
        %v3609 = vmul.f32 %v3577, %v3513
        %v3610 = vmul.f32 %v3578, %v3514
        %v3611 = vmul.f32 %v3579, %v3515
        %v3612 = vmul.f32 %v3580, %v3516
        %v3613 = vmul.f32 %v3581, %v3517
        %v3614 = vmul.f32 %v3582, %v3518
        %v3615 = vmul.f32 %v3583, %v3519
        %v3616 = vmul.f32 %v3584, %v3520
        %v3617 = vmul.f32 %v3585, %v3521
        %v3618 = vmul.f32 %v3586, %v3522
        %v3619 = vmul.f32 %v3587, %v3523
        %v3620 = vadd.f32 %v3381, %v3588
        %v3621 = vadd.f32 %v3383, %v3589
        %v3622 = vadd.f32 %v3454, %v3590
        %v3623 = vadd.f32 %v3456, %v3591
        %v3624 = vadd.f32 %v3385, %v3592
        %v3625 = vadd.f32 %v3387, %v3593
        %v3626 = vadd.f32 %v3458, %v3594
        %v3627 = vadd.f32 %v3460, %v3595
        %v3628 = vadd.f32 %v3391, %v3596
        %v3629 = vadd.f32 %v3393, %v3597
        %v3630 = vadd.f32 %v3464, %v3598
        %v3631 = vadd.f32 %v3466, %v3599
        %v3632 = vadd.f32 %v3395, %v3600
        %v3633 = vadd.f32 %v3397, %v3601
        %v3634 = vadd.f32 %v3468, %v3602
        %v3635 = vadd.f32 %v3470, %v3603
        %v3636 = vadd.f32 %v3401, %v3604
        %v3637 = vadd.f32 %v3403, %v3605
        %v3638 = vadd.f32 %v3474, %v3606
        %v3639 = vadd.f32 %v3476, %v3607
        %v3640 = vadd.f32 %v3405, %v3608
        %v3641 = vadd.f32 %v3407, %v3609
        %v3642 = vadd.f32 %v3478, %v3610
        %v3643 = vadd.f32 %v3480, %v3611
        %v3644 = vadd.f32 %v3411, %v3612
        %v3645 = vadd.f32 %v3413, %v3613
        %v3646 = vadd.f32 %v3484, %v3614
        %v3647 = vadd.f32 %v3486, %v3615
        %v3648 = vadd.f32 %v3415, %v3616
        %v3649 = vadd.f32 %v3417, %v3617
        %v3650 = vadd.f32 %v3488, %v3618
        %v3651 = vadd.f32 %v3490, %v3619
        %v3652 = vmul.f32 %v3620, 0.7978846
        %v3653 = vmul.f32 %v3621, 0.7978846
        %v3654 = vmul.f32 %v3622, 0.7978846
        %v3655 = vmul.f32 %v3623, 0.7978846
        %v3656 = vmul.f32 %v3624, 0.7978846
        %v3657 = vmul.f32 %v3625, 0.7978846
        %v3658 = vmul.f32 %v3626, 0.7978846
        %v3659 = vmul.f32 %v3627, 0.7978846
        %v3660 = vmul.f32 %v3628, 0.7978846
        %v3661 = vmul.f32 %v3629, 0.7978846
        %v3662 = vmul.f32 %v3630, 0.7978846
        %v3663 = vmul.f32 %v3631, 0.7978846
        %v3664 = vmul.f32 %v3632, 0.7978846
        %v3665 = vmul.f32 %v3633, 0.7978846
        %v3666 = vmul.f32 %v3634, 0.7978846
        %v3667 = vmul.f32 %v3635, 0.7978846
        %v3668 = vmul.f32 %v3636, 0.7978846
        %v3669 = vmul.f32 %v3637, 0.7978846
        %v3670 = vmul.f32 %v3638, 0.7978846
        %v3671 = vmul.f32 %v3639, 0.7978846
        %v3672 = vmul.f32 %v3640, 0.7978846
        %v3673 = vmul.f32 %v3641, 0.7978846
        %v3674 = vmul.f32 %v3642, 0.7978846
        %v3675 = vmul.f32 %v3643, 0.7978846
        %v3676 = vmul.f32 %v3644, 0.7978846
        %v3677 = vmul.f32 %v3645, 0.7978846
        %v3678 = vmul.f32 %v3646, 0.7978846
        %v3679 = vmul.f32 %v3647, 0.7978846
        %v3680 = vmul.f32 %v3648, 0.7978846
        %v3681 = vmul.f32 %v3649, 0.7978846
        %v3682 = vmul.f32 %v3650, 0.7978846
        %v3683 = vmul.f32 %v3651, 0.7978846
        %v3684 = vtanh.pop %v3652
        %v3685 = vtanh.pop %v3653
        %v3686 = vtanh.pop %v3654
        %v3687 = vtanh.pop %v3655
        %v3688 = vtanh.pop %v3656
        %v3689 = vtanh.pop %v3657
        %v3690 = vtanh.pop %v3658
        %v3691 = vtanh.pop %v3659
        %v3692 = vtanh.pop %v3660
        %v3693 = vtanh.pop %v3661
        %v3694 = vtanh.pop %v3662
        %v3695 = vtanh.pop %v3663
        %v3696 = vtanh.pop %v3664
        %v3697 = vtanh.pop %v3665
        %v3698 = vtanh.pop %v3666
        %v3699 = vtanh.pop %v3667
        %v3700 = vtanh.pop %v3668
        %v3701 = vtanh.pop %v3669
        %v3702 = vtanh.pop %v3670
        %v3703 = vtanh.pop %v3671
        %v3704 = vtanh.pop %v3672
        %v3705 = vtanh.pop %v3673
        %v3706 = vtanh.pop %v3674
        %v3707 = vtanh.pop %v3675
        %v3708 = vtanh.pop %v3676
        %v3709 = vtanh.pop %v3677
        %v3710 = vtanh.pop %v3678
        %v3711 = vtanh.pop %v3679
        %v3712 = vtanh.pop %v3680
        %v3713 = vtanh.pop %v3681
        %v3714 = vtanh.pop %v3682
        %v3715 = vtanh.pop %v3683
        %v3716 = vadd.f32 %v3684, 1.0
        %v3717 = vadd.f32 %v3685, 1.0
        %v3718 = vadd.f32 %v3686, 1.0
        %v3719 = vadd.f32 %v3687, 1.0
        %v3720 = vadd.f32 %v3688, 1.0
        %v3721 = vadd.f32 %v3689, 1.0
        %v3722 = vadd.f32 %v3690, 1.0
        %v3723 = vadd.f32 %v3691, 1.0
        %v3724 = vadd.f32 %v3692, 1.0
        %v3725 = vadd.f32 %v3693, 1.0
        %v3726 = vadd.f32 %v3694, 1.0
        %v3727 = vadd.f32 %v3695, 1.0
        %v3728 = vadd.f32 %v3696, 1.0
        %v3729 = vadd.f32 %v3697, 1.0
        %v3730 = vadd.f32 %v3698, 1.0
        %v3731 = vadd.f32 %v3699, 1.0
        %v3732 = vadd.f32 %v3700, 1.0
        %v3733 = vadd.f32 %v3701, 1.0
        %v3734 = vadd.f32 %v3702, 1.0
        %v3735 = vadd.f32 %v3703, 1.0
        %v3736 = vadd.f32 %v3704, 1.0
        %v3737 = vadd.f32 %v3705, 1.0
        %v3738 = vadd.f32 %v3706, 1.0
        %v3739 = vadd.f32 %v3707, 1.0
        %v3740 = vadd.f32 %v3708, 1.0
        %v3741 = vadd.f32 %v3709, 1.0
        %v3742 = vadd.f32 %v3710, 1.0
        %v3743 = vadd.f32 %v3711, 1.0
        %v3744 = vadd.f32 %v3712, 1.0
        %v3745 = vadd.f32 %v3713, 1.0
        %v3746 = vadd.f32 %v3714, 1.0
        %v3747 = vadd.f32 %v3715, 1.0
        %v3748 = vmul.f32 %v3524, %v3716
        %v3749 = vmul.f32 %v3525, %v3717
        %v3750 = vmul.f32 %v3526, %v3718
        %v3751 = vmul.f32 %v3527, %v3719
        %v3752 = vmul.f32 %v3528, %v3720
        %v3753 = vmul.f32 %v3529, %v3721
        %v3754 = vmul.f32 %v3530, %v3722
        %v3755 = vmul.f32 %v3531, %v3723
        %v3756 = vmul.f32 %v3532, %v3724
        %v3757 = vmul.f32 %v3533, %v3725
        %v3758 = vmul.f32 %v3534, %v3726
        %v3759 = vmul.f32 %v3535, %v3727
        %v3760 = vmul.f32 %v3536, %v3728
        %v3761 = vmul.f32 %v3537, %v3729
        %v3762 = vmul.f32 %v3538, %v3730
        %v3763 = vmul.f32 %v3539, %v3731
        %v3764 = vmul.f32 %v3540, %v3732
        %v3765 = vmul.f32 %v3541, %v3733
        %v3766 = vmul.f32 %v3542, %v3734
        %v3767 = vmul.f32 %v3543, %v3735
        %v3768 = vmul.f32 %v3544, %v3736
        %v3769 = vmul.f32 %v3545, %v3737
        %v3770 = vmul.f32 %v3546, %v3738
        %v3771 = vmul.f32 %v3547, %v3739
        %v3772 = vmul.f32 %v3548, %v3740
        %v3773 = vmul.f32 %v3549, %v3741
        %v3774 = vmul.f32 %v3550, %v3742
        %v3775 = vmul.f32 %v3551, %v3743
        %v3776 = vmul.f32 %v3552, %v3744
        %v3777 = vmul.f32 %v3553, %v3745
        %v3778 = vmul.f32 %v3554, %v3746
        %v3779 = vmul.f32 %v3555, %v3747
        %v3780 = vpack.c.bf16 %v3752, %v3748
        %v3781 = vpack.c.bf16 %v3753, %v3749
        %v3782 = vpack.c.bf16 %v3754, %v3750
        %v3783 = vpack.c.bf16 %v3755, %v3751
        %v3784 = vpack.c.bf16 %v3760, %v3756
        %v3785 = vpack.c.bf16 %v3761, %v3757
        %v3786 = vpack.c.bf16 %v3762, %v3758
        %v3787 = vpack.c.bf16 %v3763, %v3759
        %v3788 = vpack.c.bf16 %v3768, %v3764
        %v3789 = vpack.c.bf16 %v3769, %v3765
        %v3790 = vpack.c.bf16 %v3770, %v3766
        %v3791 = vpack.c.bf16 %v3771, %v3767
        %v3792 = vpack.c.bf16 %v3776, %v3772
        %v3793 = vpack.c.bf16 %v3777, %v3773
        %v3794 = vpack.c.bf16 %v3778, %v3774
        %v3795 = vpack.c.bf16 %v3779, %v3775
        %v3796 = vld [vmem:[#allocation12] sm:$0xf]
        %v3797 = vld [vmem:[#allocation12 + $0x4] sm:$0xf]
        %v3798 = vld [vmem:[#allocation12 + $0x8] sm:$0xf]
        %v3799 = vld [vmem:[#allocation12 + $0xc] sm:$0xf]
        %v3800 = vld [vmem:[#allocation12 + $0x10] sm:$0xf]
        %v3801 = vld [vmem:[#allocation12 + $0x14] sm:$0xf]
        %v3802 = vld [vmem:[#allocation12 + $0x18] sm:$0xf]
        %v3803 = vld [vmem:[#allocation12 + $0x1c] sm:$0xf]
        %v3804 = vld [vmem:[#allocation12 + $0x20] sm:$0xf]
        %v3805 = vld [vmem:[#allocation12 + $0x24] sm:$0xf]
        %v3806 = vld [vmem:[#allocation12 + $0x28] sm:$0xf]
        %v3807 = vld [vmem:[#allocation12 + $0x2c] sm:$0xf]
        %v3808 = vld [vmem:[#allocation12 + $0x30] sm:$0xf]
        %v3809 = vld [vmem:[#allocation12 + $0x34] sm:$0xf]
        %v3810 = vld [vmem:[#allocation12 + $0x38] sm:$0xf]
        %v3811 = vld [vmem:[#allocation12 + $0x3c] sm:$0xf]
        %v3812 = vld [vmem:[#allocation12 + $0x40] sm:$0xf]
        %v3813 = vld [vmem:[#allocation12 + $0x44] sm:$0xf]
        %v3814 = vld [vmem:[#allocation12 + $0x48] sm:$0xf]
        %v3815 = vld [vmem:[#allocation12 + $0x4c] sm:$0xf]
        %v3816 = vld [vmem:[#allocation12 + $0x50] sm:$0xf]
        %v3817 = vld [vmem:[#allocation12 + $0x54] sm:$0xf]
        %v3818 = vld [vmem:[#allocation12 + $0x58] sm:$0xf]
        %v3819 = vld [vmem:[#allocation12 + $0x5c] sm:$0xf]
        %v3820 = vld [vmem:[#allocation12 + $0x60] sm:$0xf]
        %v3821 = vld [vmem:[#allocation12 + $0x64] sm:$0xf]
        %v3822 = vld [vmem:[#allocation12 + $0x68] sm:$0xf]
        %v3823 = vld [vmem:[#allocation12 + $0x6c] sm:$0xf]
        %v3824 = vld [vmem:[#allocation12 + $0x70] sm:$0xf]
        %v3825 = vld [vmem:[#allocation12 + $0x74] sm:$0xf]
        %v3826 = vld [vmem:[#allocation12 + $0x78] sm:$0xf]
        %v3827 = vld [vmem:[#allocation12 + $0x7c] sm:$0xf]
        %v3828 = vld [vmem:[#allocation12 + $0x80] sm:$0xf]
        %v3829 = vld [vmem:[#allocation12 + $0x84] sm:$0xf]
        %v3830 = vld [vmem:[#allocation12 + $0x88] sm:$0xf]
        %v3831 = vld [vmem:[#allocation12 + $0x8c] sm:$0xf]
        %v3832 = vld [vmem:[#allocation12 + $0x90] sm:$0xf]
        %v3833 = vld [vmem:[#allocation12 + $0x94] sm:$0xf]
        %v3834 = vld [vmem:[#allocation12 + $0x98] sm:$0xf]
        %v3835 = vld [vmem:[#allocation12 + $0x9c] sm:$0xf]
        %v3836 = vld [vmem:[#allocation12 + $0xa0] sm:$0xf]
        %v3837 = vld [vmem:[#allocation12 + $0xa4] sm:$0xf]
        %v3838 = vld [vmem:[#allocation12 + $0xa8] sm:$0xf]
        %v3839 = vld [vmem:[#allocation12 + $0xac] sm:$0xf]
        %v3840 = vld [vmem:[#allocation12 + $0xb0] sm:$0xf]
        %v3841 = vld [vmem:[#allocation12 + $0xb4] sm:$0xf]
        %v3842 = vld [vmem:[#allocation12 + $0xb8] sm:$0xf]
        %v3843 = vld [vmem:[#allocation12 + $0xbc] sm:$0xf]
        %v3844 = vld [vmem:[#allocation12 + $0xc0] sm:$0xf]
        %v3845 = vld [vmem:[#allocation12 + $0xc4] sm:$0xf]
        %v3846 = vld [vmem:[#allocation12 + $0xc8] sm:$0xf]
        %v3847 = vld [vmem:[#allocation12 + $0xcc] sm:$0xf]
        %v3848 = vld [vmem:[#allocation12 + $0xd0] sm:$0xf]
        %v3849 = vld [vmem:[#allocation12 + $0xd4] sm:$0xf]
        %v3850 = vld [vmem:[#allocation12 + $0xd8] sm:$0xf]
        %v3851 = vld [vmem:[#allocation12 + $0xdc] sm:$0xf]
        %v3852 = vld [vmem:[#allocation12 + $0xe0] sm:$0xf]
        %v3853 = vld [vmem:[#allocation12 + $0xe4] sm:$0xf]
        %v3854 = vld [vmem:[#allocation12 + $0xe8] sm:$0xf]
        %v3855 = vld [vmem:[#allocation12 + $0xec] sm:$0xf]
        %v3856 = vld [vmem:[#allocation12 + $0xf0] sm:$0xf]
        %v3857 = vld [vmem:[#allocation12 + $0xf4] sm:$0xf]
        %v3858 = vld [vmem:[#allocation12 + $0xf8] sm:$0xf]
        %v3859 = vld [vmem:[#allocation12 + $0xfc] sm:$0xf]
        %v3860 = vld [vmem:[%s11] sm:$0x1]
        %v3862 = vlaneseq
        %v3863 = vshrl.u32 %v3862, 7
        %v3864 = vsub.s32 0, %v3863
        %v3865 = vrot.slane %v3860, %v3864
        %v3931 = vunpack.c.l.b16 %v3796
        %v3932 = vunpack.c.l.b16 %v3797
        %v3933 = vunpack.c.l.b16 %v3798
        %v3934 = vunpack.c.l.b16 %v3799
        %v3935 = vunpack.c.l.b16 %v3800
        %v3936 = vunpack.c.l.b16 %v3801
        %v3937 = vunpack.c.l.b16 %v3802
        %v3938 = vunpack.c.l.b16 %v3803
        %v3939 = vunpack.c.l.b16 %v3804
        %v3940 = vunpack.c.l.b16 %v3805
        %v3941 = vunpack.c.l.b16 %v3806
        %v3942 = vunpack.c.l.b16 %v3807
        %v3943 = vunpack.c.l.b16 %v3808
        %v3944 = vunpack.c.l.b16 %v3809
        %v3945 = vunpack.c.l.b16 %v3810
        %v3946 = vunpack.c.l.b16 %v3811
        %v3947 = vunpack.c.l.b16 %v3812
        %v3948 = vunpack.c.l.b16 %v3813
        %v3949 = vunpack.c.l.b16 %v3814
        %v3950 = vunpack.c.l.b16 %v3815
        %v3951 = vunpack.c.l.b16 %v3816
        %v3952 = vunpack.c.l.b16 %v3817
        %v3953 = vunpack.c.l.b16 %v3818
        %v3954 = vunpack.c.l.b16 %v3819
        %v3955 = vunpack.c.l.b16 %v3820
        %v3956 = vunpack.c.l.b16 %v3821
        %v3957 = vunpack.c.l.b16 %v3822
        %v3958 = vunpack.c.l.b16 %v3823
        %v3959 = vunpack.c.l.b16 %v3824
        %v3960 = vunpack.c.l.b16 %v3825
        %v3961 = vunpack.c.l.b16 %v3826
        %v3962 = vunpack.c.l.b16 %v3827
        %v3963 = vunpack.c.l.b16 %v3828
        %v3964 = vunpack.c.l.b16 %v3829
        %v3965 = vunpack.c.l.b16 %v3830
        %v3966 = vunpack.c.l.b16 %v3831
        %v3967 = vunpack.c.l.b16 %v3832
        %v3968 = vunpack.c.l.b16 %v3833
        %v3969 = vunpack.c.l.b16 %v3834
        %v3970 = vunpack.c.l.b16 %v3835
        %v3971 = vunpack.c.l.b16 %v3836
        %v3972 = vunpack.c.l.b16 %v3837
        %v3973 = vunpack.c.l.b16 %v3838
        %v3974 = vunpack.c.l.b16 %v3839
        %v3975 = vunpack.c.l.b16 %v3840
        %v3976 = vunpack.c.l.b16 %v3841
        %v3977 = vunpack.c.l.b16 %v3842
        %v3978 = vunpack.c.l.b16 %v3843
        %v3979 = vunpack.c.l.b16 %v3844
        %v3980 = vunpack.c.l.b16 %v3845
        %v3981 = vunpack.c.l.b16 %v3846
        %v3982 = vunpack.c.l.b16 %v3847
        %v3983 = vunpack.c.l.b16 %v3848
        %v3984 = vunpack.c.l.b16 %v3849
        %v3985 = vunpack.c.l.b16 %v3850
        %v3986 = vunpack.c.l.b16 %v3851
        %v3987 = vunpack.c.l.b16 %v3852
        %v3988 = vunpack.c.l.b16 %v3853
        %v3989 = vunpack.c.l.b16 %v3854
        %v3990 = vunpack.c.l.b16 %v3855
        %v3991 = vunpack.c.l.b16 %v3856
        %v3992 = vunpack.c.l.b16 %v3857
        %v3993 = vunpack.c.l.b16 %v3858
        %v3994 = vunpack.c.l.b16 %v3859
        %v3995 = vpack.c.b16 %v3932, %v3931
        %v3996 = vpack.c.b16 %v3934, %v3933
        %v3997 = vpack.c.b16 %v3936, %v3935
        %v3998 = vpack.c.b16 %v3938, %v3937
        %v3999 = vpack.c.b16 %v3940, %v3939
        %v4000 = vpack.c.b16 %v3942, %v3941
        %v4001 = vpack.c.b16 %v3944, %v3943
        %v4002 = vpack.c.b16 %v3946, %v3945
        %v4003 = vpack.c.b16 %v3948, %v3947
        %v4004 = vpack.c.b16 %v3950, %v3949
        %v4005 = vpack.c.b16 %v3952, %v3951
        %v4006 = vpack.c.b16 %v3954, %v3953
        %v4007 = vpack.c.b16 %v3956, %v3955
        %v4008 = vpack.c.b16 %v3958, %v3957
        %v4009 = vpack.c.b16 %v3960, %v3959
        %v4010 = vpack.c.b16 %v3962, %v3961
        %v4011 = vpack.c.b16 %v3964, %v3963
        %v4012 = vpack.c.b16 %v3966, %v3965
        %v4013 = vpack.c.b16 %v3968, %v3967
        %v4014 = vpack.c.b16 %v3970, %v3969
        %v4015 = vpack.c.b16 %v3972, %v3971
        %v4016 = vpack.c.b16 %v3974, %v3973
        %v4017 = vpack.c.b16 %v3976, %v3975
        %v4018 = vpack.c.b16 %v3978, %v3977
        %v4019 = vpack.c.b16 %v3980, %v3979
        %v4020 = vpack.c.b16 %v3982, %v3981
        %v4021 = vpack.c.b16 %v3984, %v3983
        %v4022 = vpack.c.b16 %v3986, %v3985
        %v4023 = vpack.c.b16 %v3988, %v3987
        %v4024 = vpack.c.b16 %v3990, %v3989
        %v4025 = vpack.c.b16 %v3992, %v3991
        %v4026 = vpack.c.b16 %v3994, %v3993
        %4059 = vmatprep.subr.bf16.mxu0 0
        %4060 = vmatpush1.bf16.msra.mxu0 %v3995
        %4061 = vmatprep.subr.bf16.mxu0 0
        %4062 = vmatpush1.bf16.msra.mxu0 %v3996
        %4063 = vmatprep.subr.bf16.mxu0 0
        %4064 = vmatpush1.bf16.msra.mxu0 %v3997
        %4065 = vmatprep.subr.bf16.mxu0 0
        %4066 = vmatpush1.bf16.msra.mxu0 %v3998
        %4067 = vmatprep.subr.bf16.mxu0 0
        %4068 = vmatpush1.bf16.msra.mxu0 %v3999
        %4069 = vmatprep.subr.bf16.mxu0 0
        %4070 = vmatpush1.bf16.msra.mxu0 %v4000
        %4071 = vmatprep.subr.bf16.mxu0 0
        %4072 = vmatpush1.bf16.msra.mxu0 %v4001
        %4073 = vmatprep.subr.bf16.mxu0 0
        %4074 = vmatpush1.bf16.msra.mxu0 %v4002
        %4075 = vmatprep.subr.bf16.mxu0 0
        %4076 = vmatpush1.bf16.msra.mxu0 %v4003
        %4077 = vmatprep.subr.bf16.mxu0 0
        %4078 = vmatpush1.bf16.msra.mxu0 %v4004
        %4079 = vmatprep.subr.bf16.mxu0 0
        %4080 = vmatpush1.bf16.msra.mxu0 %v4005
        %4081 = vmatprep.subr.bf16.mxu0 0
        %4082 = vmatpush1.bf16.msra.mxu0 %v4006
        %4083 = vmatprep.subr.bf16.mxu0 0
        %4084 = vmatpush1.bf16.msra.mxu0 %v4007
        %4085 = vmatprep.subr.bf16.mxu0 0
        %4086 = vmatpush1.bf16.msra.mxu0 %v4008
        %4087 = vmatprep.subr.bf16.mxu0 0
        %4088 = vmatpush1.bf16.msra.mxu0 %v4009
        %4089 = vmatprep.subr.bf16.mxu0 0
        %4090 = vmatpush1.bf16.msra.mxu0 %v4010
        %4091 = vmatprep.mubr.bf16.mxu0 %v3781
        %4092 = vmatmul.mubr.bf16.gmra.mrb[0].mxu0 %v3780
        %v4093 = vpop.f32.mrb[0].mxu0
        %v4094 = vadd.f32 %v3865, %v4093
        %v4095 = vpop.f32.mrb[0].mxu0
        %v4096 = vpop.f32.mrb[0].mxu0
        %v4097 = vadd.f32 %v3865, %v4096
        %v4098 = vpop.f32.mrb[0].mxu0
        %4099 = vmatprep.mubr.bf16.mxu0 %v3785
        %4100 = vmatmul.mubr.bf16.gmra.mrb[0].mxu0 %v3784
        %v4101 = vpop.f32.mrb[0].mxu0
        %v4102 = vadd.f32 %v3865, %v4101
        %v4103 = vpop.f32.mrb[0].mxu0
        %v4104 = vpop.f32.mrb[0].mxu0
        %v4105 = vadd.f32 %v3865, %v4104
        %v4106 = vpop.f32.mrb[0].mxu0
        %4107 = vmatprep.mubr.bf16.mxu0 %v3789
        %4108 = vmatmul.mubr.bf16.gmra.mrb[0].mxu0 %v3788
        %v4109 = vpop.f32.mrb[0].mxu0
        %v4110 = vadd.f32 %v3865, %v4109
        %v4111 = vpop.f32.mrb[0].mxu0
        %v4112 = vpop.f32.mrb[0].mxu0
        %v4113 = vadd.f32 %v3865, %v4112
        %v4114 = vpop.f32.mrb[0].mxu0
        %4115 = vmatprep.mubr.bf16.mxu0 %v3793
        %4116 = vmatmul.mubr.bf16.gmra.mrb[0].mxu0 %v3792
        %v4117 = vpop.f32.mrb[0].mxu0
        %v4118 = vadd.f32 %v3865, %v4117
        %v4119 = vpop.f32.mrb[0].mxu0
        %v4120 = vpop.f32.mrb[0].mxu0
        %v4121 = vadd.f32 %v3865, %v4120
        %v4122 = vpop.f32.mrb[0].mxu0
        %4123 = vdwg.mxu0
        %4124 = vmatprep.subr.bf16.mxu0 0
        %4125 = vmatpush1.bf16.msra.mxu0 %v4011
        %4126 = vmatprep.subr.bf16.mxu0 0
        %4127 = vmatpush1.bf16.msra.mxu0 %v4012
        %4128 = vmatprep.subr.bf16.mxu0 0
        %4129 = vmatpush1.bf16.msra.mxu0 %v4013
        %4130 = vmatprep.subr.bf16.mxu0 0
        %4131 = vmatpush1.bf16.msra.mxu0 %v4014
        %4132 = vmatprep.subr.bf16.mxu0 0
        %4133 = vmatpush1.bf16.msra.mxu0 %v4015
        %4134 = vmatprep.subr.bf16.mxu0 0
        %4135 = vmatpush1.bf16.msra.mxu0 %v4016
        %4136 = vmatprep.subr.bf16.mxu0 0
        %4137 = vmatpush1.bf16.msra.mxu0 %v4017
        %4138 = vmatprep.subr.bf16.mxu0 0
        %4139 = vmatpush1.bf16.msra.mxu0 %v4018
        %4140 = vmatprep.subr.bf16.mxu0 0
        %4141 = vmatpush1.bf16.msra.mxu0 %v4019
        %4142 = vmatprep.subr.bf16.mxu0 0
        %4143 = vmatpush1.bf16.msra.mxu0 %v4020
        %4144 = vmatprep.subr.bf16.mxu0 0
        %4145 = vmatpush1.bf16.msra.mxu0 %v4021
        %4146 = vmatprep.subr.bf16.mxu0 0
        %4147 = vmatpush1.bf16.msra.mxu0 %v4022
        %4148 = vmatprep.subr.bf16.mxu0 0
        %4149 = vmatpush1.bf16.msra.mxu0 %v4023
        %4150 = vmatprep.subr.bf16.mxu0 0
        %4151 = vmatpush1.bf16.msra.mxu0 %v4024
        %4152 = vmatprep.subr.bf16.mxu0 0
        %4153 = vmatpush1.bf16.msra.mxu0 %v4025
        %4154 = vmatprep.subr.bf16.mxu0 0
        %4155 = vmatpush1.bf16.msra.mxu0 %v4026
        %4156 = vmatprep.mubr.bf16.mxu0 %v3783
        %4157 = vmatmul.mubr.bf16.gmra.mrb[0].mxu0 %v3782
        %v4158 = vpop.f32.mrb[0].mxu0
        %v4159 = vadd.f32 %v4094, %v4158
        %v4160 = vpop.f32.mrb[0].mxu0
        %v4161 = vpop.f32.mrb[0].mxu0
        %v4162 = vadd.f32 %v4097, %v4161
        %v4163 = vpop.f32.mrb[0].mxu0
        %4164 = vmatprep.mubr.bf16.mxu0 %v3787
        %4165 = vmatmul.mubr.bf16.gmra.mrb[0].mxu0 %v3786
        %v4166 = vpop.f32.mrb[0].mxu0
        %v4167 = vadd.f32 %v4102, %v4166
        %v4168 = vpop.f32.mrb[0].mxu0
        %v4169 = vpop.f32.mrb[0].mxu0
        %v4170 = vadd.f32 %v4105, %v4169
        %v4171 = vpop.f32.mrb[0].mxu0
        %4172 = vmatprep.mubr.bf16.mxu0 %v3791
        %4173 = vmatmul.mubr.bf16.gmra.mrb[0].mxu0 %v3790
        %v4174 = vpop.f32.mrb[0].mxu0
        %v4175 = vadd.f32 %v4110, %v4174
        %v4176 = vpop.f32.mrb[0].mxu0
        %v4177 = vpop.f32.mrb[0].mxu0
        %v4178 = vadd.f32 %v4113, %v4177
        %v4179 = vpop.f32.mrb[0].mxu0
        %4180 = vmatprep.mubr.bf16.mxu0 %v3795
        %4181 = vmatmul.mubr.bf16.gmra.mrb[0].mxu0 %v3794
        %v4182 = vpop.f32.mrb[0].mxu0
        %v4183 = vadd.f32 %v4118, %v4182
        %v4184 = vpop.f32.mrb[0].mxu0
        %v4185 = vpop.f32.mrb[0].mxu0
        %v4186 = vadd.f32 %v4121, %v4185
        %v4187 = vpop.f32.mrb[0].mxu0
        %4188 = vdwg.mxu0
        %v4189 = vlaneseq
        %v4190 = vshrl.u32 %v4189, 7
        %v4191 = vsub.s32 0, %v4190
        %v4192 = vrot.slane %v997, %v4191
        %v4193 = vmul.f32 %v4192, %v4159
        %v4194 = vmul.f32 %v4192, %v4162
        %v4195 = vmul.f32 %v4192, %v4167
        %v4196 = vmul.f32 %v4192, %v4170
        %v4197 = vmul.f32 %v4192, %v4175
        %v4198 = vmul.f32 %v4192, %v4178
        %v4199 = vmul.f32 %v4192, %v4183
        %v4200 = vmul.f32 %v4192, %v4186
        %v4201 = vadd.f32 %v3007, %v4193
        %v4202 = vadd.f32 %v3008, %v4194
        %v4203 = vadd.f32 %v3009, %v4195
        %v4204 = vadd.f32 %v3010, %v4196
        %v4205 = vadd.f32 %v3011, %v4197
        %v4206 = vadd.f32 %v3012, %v4198
        %v4207 = vadd.f32 %v3013, %v4199
        %v4208 = vadd.f32 %v3014, %v4200
        %4209 = vst [vmem:[%s539] sm:$0xff] %v4201
        %4210 = vst [vmem:[%s539 + $0x8] sm:$0xff] %v4202
        %4211 = vst [vmem:[%s539 + $0x10] sm:$0xff] %v4203
        %4212 = vst [vmem:[%s539 + $0x18] sm:$0xff] %v4204
        %4213 = vst [vmem:[%s539 + $0x20] sm:$0xff] %v4205
        %4214 = vst [vmem:[%s539 + $0x28] sm:$0xff] %v4206
        %4215 = vst [vmem:[%s539 + $0x30] sm:$0xff] %v4207
        %4216 = vst [vmem:[%s539 + $0x38] sm:$0xff] %v4208
        %p4217 = scmp.lt.s32.totalorder %s31, 7
        %s4218 = scalar_select %p4217, %s31, 7
        %s4219 = smul.addr %s4218, 8
        %s4220 = smul.addr %s4219, 8
        %s4221 = scalar_lea.vmem %s12, %s4220
        // Predicated region
        $region97: #{fwd.2} parent=67 // pred_check
          %p4222 = pneg %p311
        $region98: #{fwd.2} parent=67 // pred_check_branch
          %4224 = sbr.rel (%p4222) target = $region100
        $region99: #{fwd.2} parent=67 // pred_region
          _
        $region100: #{fwd.2} parent=67 // pred_fallthru
          _
      $region68: #{fwd.2} parent=5 // pred_fallthru
        _
      %p4225 = scmp.le.s32.totalorder 2, %s26
      // Predicated region
      $region101: #{fwd.2} parent=5 // pred_check
        %p4226 = pneg %p4225
      $region102: #{fwd.2} parent=5 // pred_check_branch
        %4228 = sbr.rel (%p4226) target = $region104
      $region103: #{fwd.2} parent=5 // pred_region
        %s4229 = ssub.s32 %s26, 2
        // Predicated region
        $region105: #{fwd.2} parent=103 // pred_check
          %p4230 = pneg %p317
        $region106: #{fwd.2} parent=103 // pred_check_branch
          %4232 = sbr.rel (%p4230) target = $region108
        $region107: #{fwd.2} parent=103 // pred_region
          %p4233 = scmp.lt.s32.totalorder %s32, 7
          %s4234 = scalar_select %p4233, %s32, 7
          %s4235 = smul.addr %s4234, 8
          %s4236 = smul.addr %s4235, 8
          %s4237 = scalar_lea.vmem %s12, %s4236
        $region108: #{fwd.2} parent=103 // pred_fallthru
          _
      $region104: #{fwd.2} parent=5 // pred_fallthru
        _
    $region6: #{fwd.2} parent=1 // loop_footer
      %s30 = sadd.s32 1, %s26
    $region7: #{fwd.2} parent=1 // loop_footer_branch
      %25 = sbr.rel target = $region3
    $region8: #{fwd.2} parent=1 // loop_exit
      _
    %4238 = vsyncpa [#allocation3], 1
    %s4239 = scalar_lea.sflag [#allocation3], 1
    %4240 = vsyncpa %s4239, 1
    %4241 = vsyncpa [#allocation5], 1
    %s4242 = scalar_lea.sflag [#allocation5], 1
    %4243 = vsyncpa %s4242, 1
    %4244 = vsyncpa [#allocation8], 1
    %4245 = vsyncpa [#allocation11], 1

</llo_original>
